<compile_context>
chip_gen: v7x
topology: tpu7x:2x2x1
jax: 0.10.0
libtpu: 0.0.40
codegen_flags: <defaults>
</compile_context>

<pallas_src>
import math
from functools import partial

import numpy as np
import jax
import jax.numpy as jnp
from jax.experimental import pallas as pl
from jax.experimental.pallas import tpu as pltpu


_ARB = pltpu.CompilerParams(dimension_semantics=("arbitrary",))


def _full_spec(shape):
    """BlockSpec covering the whole (small) array as a single VMEM block."""
    nd = len(shape)
    return pl.BlockSpec(shape, lambda *_, nd=nd: (0,) * nd)


# ----------------------------------------------------------------------------
# In-kernel helpers (operate on traced values)
# ----------------------------------------------------------------------------
def _ln(x, g, b, eps):
    """LayerNorm over the lane (last) dim, f32 math."""
    mu = jnp.mean(x, axis=-1, keepdims=True)
    d = x - mu
    var = jnp.mean(d * d, axis=-1, keepdims=True)
    return d * jax.lax.rsqrt(var + eps) * g + b


def _ffn(y, w1, b1, w2, b2):
    """ReLU MLP; w1/w2 are bf16, biases f32, f32 accumulation."""
    h = jnp.dot(y.astype(jnp.bfloat16), w1, preferred_element_type=jnp.float32) + b1
    h = jnp.maximum(h, 0.0)
    return jnp.dot(h.astype(jnp.bfloat16), w2, preferred_element_type=jnp.float32) + b2


def _mha_heads(q, k, v, B, Lq, Lk, num_heads):
    """Per-head scaled-dot-product attention, batched over B.

    q: (B*Lq, E) f32, k/v: (B*Lk, E) f32 (already projected).
    Returns the head-concatenated context (B*Lq, E) f32 so the caller can do a
    single full-width (K=E) out-projection.
    """
    E = q.shape[-1]
    dh = E // num_heads
    scale = 1.0 / math.sqrt(dh)
    outs = []
    for h in range(num_heads):                       # static unroll
        sl = slice(h * dh, (h + 1) * dh)
        q_h = q[:, sl].reshape(B, Lq, dh).astype(jnp.bfloat16)
        k_h = k[:, sl].reshape(B, Lk, dh).astype(jnp.bfloat16)
        v_h = v[:, sl].reshape(B, Lk, dh).astype(jnp.bfloat16)
        s = jnp.einsum('bqd,bkd->bqk', q_h, k_h,
                       preferred_element_type=jnp.float32) * scale
        s = s - jnp.max(s, axis=-1, keepdims=True)
        p = jnp.exp(s)
        p = p * pl.reciprocal(jnp.sum(p, axis=-1, keepdims=True), approx=True)
        o_h = jnp.einsum('bqk,bkd->bqd', p.astype(jnp.bfloat16), v_h,
                         preferred_element_type=jnp.float32)
        outs.append(o_h.reshape(B * Lq, dh))
    return jnp.concatenate(outs, axis=-1)            # (B*Lq, E) f32


# ----------------------------------------------------------------------------
# Pallas kernels
# ----------------------------------------------------------------------------
def _patch_embed_kernel(p_ref, w_ref, b_ref, pe_ref, o_ref):
    """Conv-as-GEMM (stride==kernel==patch) + conv bias + positional encoding.

    p_ref: (B, L, K) bf16 im2col patches, w_ref: (K, E) bf16,
    b_ref: (1, E) f32, pe_ref: (L, E) f32 (broadcast over B in-kernel).
    """
    B, L, K = p_ref.shape
    acc = jnp.dot(p_ref[...].reshape(B * L, K), w_ref[...],
                  preferred_element_type=jnp.float32)
    acc = acc.reshape(B, L, -1) + b_ref[...] + pe_ref[...]
    o_ref[...] = acc.astype(o_ref.dtype)


def _atm_block_kernel(x_ref, pool_ref, wq_ref, bq_ref, wkv_ref, bkv_ref,
                      wo_ref, bo_ref, ln1g_ref, ln1b_ref, w1_ref, b1_ref,
                      w2_ref, b2_ref, ln2g_ref, ln2b_ref, o_ref,
                      *, num_heads, eps):
    """One ATM merge step (fused): in-VMEM mean pooling (as a small constant
    pooling matrix on the MXU), cross-attention (pooled queries -> pre-pool
    tokens), out-proj, residual, LN1, ReLU FFN, residual, LN2."""
    B, Lk, E = x_ref.shape
    Lq = pool_ref.shape[0]
    x = x_ref[...].astype(jnp.float32)                # (B, Lk, E)
    xb = x.astype(jnp.bfloat16)
    pool = jnp.broadcast_to(pool_ref[...].astype(jnp.bfloat16)[None],
                            (B, Lq, Lk))
    # pooled queries, computed from the kv block already resident in VMEM
    q_tok = jnp.einsum('bqk,bke->bqe', pool, xb,
                       preferred_element_type=jnp.float32)     # (B, Lq, E)
    q_flat = q_tok.reshape(B * Lq, E)

    q = (jnp.dot(q_flat.astype(jnp.bfloat16), wq_ref[...],
                 preferred_element_type=jnp.float32) + bq_ref[...])
    kv = (jnp.dot(xb.reshape(B * Lk, E), wkv_ref[...],
                  preferred_element_type=jnp.float32) + bkv_ref[...])
    k, v = kv[:, :E], kv[:, E:]

    heads = _mha_heads(q, k, v, B, Lq, Lk, num_heads)
    attn = (jnp.dot(heads.astype(jnp.bfloat16), wo_ref[...],
                    preferred_element_type=jnp.float32) + bo_ref[...])
    y = _ln(q_flat + attn, ln1g_ref[...], ln1b_ref[...], eps)
    y2 = _ln(y + _ffn(y, w1_ref[...], b1_ref[...], w2_ref[...], b2_ref[...]),
             ln2g_ref[...], ln2b_ref[...], eps)
    o_ref[...] = y2.reshape(B, Lq, E).astype(o_ref.dtype)


def _encoder_stack_kernel(x_ref, wqkv_ref, bqkv_ref, wo_ref, bo_ref,
                          ln1g_ref, ln1b_ref, w1_ref, b1_ref, w2_ref, b2_ref,
                          ln2g_ref, ln2b_ref, fcw_ref, fcb_ref,
                          o_ref, logits_ref, *, num_heads, eps):
    """All encoder layers in one kernel: grid=(num_layers,), residual stream
    resident in VMEM (o_ref has a constant block index).  Post-LN block:
    y = LN1(x + MHA(x)); y2 = LN2(y + FFN(y)).  Classifier GEMM on the cls
    token is fused into the last grid step."""
    layer = pl.program_id(0)

    @pl.when(layer == 0)
    def _():
        o_ref[...] = x_ref[...]            # seed the VMEM-resident stream once

    B, L, E = o_ref.shape
    M = B * L
    x = o_ref[...].astype(jnp.float32).reshape(M, E)
    xb = x.astype(jnp.bfloat16)

    qkv = (jnp.dot(xb, wqkv_ref[0], preferred_element_type=jnp.float32)
           + bqkv_ref[0])                                       # (M, 3E)
    q, k, v = qkv[:, :E], qkv[:, E:2 * E], qkv[:, 2 * E:]
    heads = _mha_heads(q, k, v, B, L, L, num_heads)
    attn = (jnp.dot(heads.astype(jnp.bfloat16), wo_ref[0],
                    preferred_element_type=jnp.float32) + bo_ref[0])
    y = _ln(x + attn, ln1g_ref[0], ln1b_ref[0], eps)
    y2 = _ln(y + _ffn(y, w1_ref[0], b1_ref[0], w2_ref[0], b2_ref[0]),
             ln2g_ref[0], ln2b_ref[0], eps)
    o_ref[...] = y2.reshape(B, L, E).astype(o_ref.dtype)

    @pl.when(layer == pl.num_programs(0) - 1)
    def _():
        cls = y2.reshape(B, L, E)[:, 0, :]                      # (B, E)
        logits_ref[...] = (jnp.dot(cls.astype(jnp.bfloat16), fcw_ref[...],
                                   preferred_element_type=jnp.float32)
                           + fcb_ref[...])


# ----------------------------------------------------------------------------
# Wrappers around pallas_call
# ----------------------------------------------------------------------------
def calculate_padding(img_dim, patch_dim):
    pad = [0, 0]
    if img_dim % patch_dim != 0:
        if img_dim % 2 == 1:
            pad[0] += 1
        pad[0] += (patch_dim - img_dim % patch_dim) // 2
        pad[1] += (patch_dim - img_dim % patch_dim) // 2
    return pad


def patch_embed_with_pe(images, params, cfg):
    """Batched PatchEmbed conv (one GEMM) fused with the PE add.

    images: (B, C, H, W) f32.  Returns ((B, Hp*Wp, E) f32, Hp, Wp).
    """
    B, C, H, W = images.shape
    p, E = cfg["patch"], cfg["E"]
    ph = calculate_padding(H, p)
    pw = calculate_padding(W, p)
    imgs = jnp.pad(images, ((0, 0), (0, 0), (ph[0], ph[1]), (pw[0], pw[1])))
    _, _, H2, W2 = imgs.shape
    Hp, Wp = H2 // p, W2 // p
    L, K = Hp * Wp, C * p * p
    # im2col in (C, ph, pw) order to match the conv-weight flattening.
    patches = (imgs.reshape(B, C, Hp, p, Wp, p)
               .transpose(0, 2, 4, 1, 3, 5)
               .reshape(B, L, K)).astype(jnp.bfloat16)
    # TODO(synk): FuzzyPositionalEncoding source unavailable; deterministic
    # (eval) path samples the learnable PE grid at the token coordinates
    # (assumes Hp <= pe_H and Wp <= pe_W, true for this config).
    pe = params["pe"][:Hp, :Wp, :].reshape(L, E)

    out = pl.pallas_call(
        _patch_embed_kernel,
        grid=(1,),
        in_specs=[_full_spec((B, L, K)), _full_spec((K, E)),
                  _full_spec((1, E)), _full_spec((L, E))],
        out_specs=_full_spec((B, L, E)),
        out_shape=jax.ShapeDtypeStruct((B, L, E), jnp.float32),
        compiler_params=_ARB,
    )(patches, params["patch_w"], params["patch_b"], pe)
    return out, Hp, Wp


def _pool_matrix(H, W, nH, nW):
    """Mean-pooling (H, W) -> (nH, nW) as an (nH*nW, H*W) matrix (trace-time
    constant).  TODO(synk): requires H % nH == 0 and W % nW == 0 (true here);
    general adaptive pooling would use torch-style fractional windows."""
    kh, kw = H // nH, W // nW
    P = np.zeros((nH * nW, H * W), np.float32)
    inv = 1.0 / float(kh * kw)
    for i in range(nH):
        for j in range(nW):
            for a in range(kh):
                for b in range(kw):
                    P[i * nW + j, (i * kh + a) * W + (j * kw + b)] = inv
    return jnp.asarray(P)


def atm_block(x, pool, p, num_heads):
    """One fused ATM merge step.  x: (B, Lk, E), pool: (Lq, Lk)."""
    B, Lk, E = x.shape
    Lq = pool.shape[0]
    weights = (p["wq"], p["bq"], p["wkv"], p["bkv"], p["wo"], p["bo"],
               p["ln1_g"], p["ln1_b"], p["w1"], p["b1"], p["w2"], p["b2"],
               p["ln2_g"], p["ln2_b"])
    w_specs = [_full_spec(w.shape) for w in weights]
    return pl.pallas_call(
        partial(_atm_block_kernel, num_heads=num_heads, eps=1e-5),
        grid=(1,),
        in_specs=[_full_spec((B, Lk, E)), _full_spec((Lq, Lk))] + w_specs,
        out_specs=_full_spec((B, Lq, E)),
        out_shape=jax.ShapeDtypeStruct((B, Lq, E), x.dtype),
        compiler_params=_ARB,
    )(x, pool, *weights)


def encoder_stack(x, lp, fc_w, fc_b, num_heads):
    """All encoder layers + classifier head in one pallas_call.

    x: (B, L, E); lp: dict of weights stacked over layers (leading dim NL);
    fc_w: (E, 128) bf16 (pre-padded), fc_b: (1, 128) f32.
    Returns logits (B, 128) f32.
    """
    B, L, E = x.shape
    NL = lp["wqkv"].shape[0]
    Np = fc_w.shape[1]
    names = ("wqkv", "bqkv", "wo", "bo", "ln1_g", "ln1_b",
             "w1", "b1", "w2", "b2", "ln2_g", "ln2_b")
    weights = tuple(lp[n] for n in names)

    def layer_spec(arr):
        nd = arr.ndim - 1
        return pl.BlockSpec((1,) + arr.shape[1:],
                            lambda l, nd=nd: (l,) + (0,) * nd)

    in_specs = ([pl.BlockSpec((B, L, E), lambda l: (0, 0, 0))]
                + [layer_spec(w) for w in weights]
                + [pl.BlockSpec(fc_w.shape, lambda l: (0, 0)),
                   pl.BlockSpec(fc_b.shape, lambda l: (0, 0))])
    out_specs = (pl.BlockSpec((B, L, E), lambda l: (0, 0, 0)),   # VMEM-resident
                 pl.BlockSpec((B, Np), lambda l: (0, 0)))
    out_shape = (jax.ShapeDtypeStruct((B, L, E), x.dtype),
                 jax.ShapeDtypeStruct((B, Np), jnp.float32))
    _, logits = pl.pallas_call(
        partial(_encoder_stack_kernel, num_heads=num_heads, eps=1e-5),
        grid=(NL,),
        in_specs=in_specs,
        out_specs=out_specs,
        out_shape=out_shape,
        compiler_params=_ARB,                      # layers are sequential
    )(x, *weights, fc_w, fc_b)
    return logits


def vitar_forward(images, params, cfg):
    """images: (B, C, H, W) float32, NCHW like the PyTorch reference."""
    B = images.shape[0]
    E, Gh, Gt = cfg["E"], cfg["Gh"], cfg["Gt"]

    tok, Hp, Wp = patch_embed_with_pe(images, params, cfg)    # (B, Hp*Wp, E)

    # Adaptive Token Merger.
    # TODO(synk): AdaptiveTokenMerger source unavailable; follows the ViTAR
    # paper's GridAttention (pooled queries cross-attend pre-pool tokens) +
    # FFN structure with weights shared across merge iterations.
    H, W = Hp, Wp
    x = tok
    while H > Gh or W > Gt:
        nH = max(-(-H // 2), Gh)
        nW = max(-(-W // 2), Gt)
        P = _pool_matrix(H, W, nH, nW)
        x = atm_block(x, P, params["atm"], cfg["atm_num_heads"])
        H, W = nH, nW

    # Reference flattens a channels-first (B, E, Gh, Gt) tensor with
    # x.reshape(B, -1, E); reproduce the same memory-order semantics.
    x = jnp.transpose(x, (0, 2, 1)).reshape(B, H * W, E)
    cls = jnp.broadcast_to(params["cls_token"], (B, 1, E)).astype(x.dtype)
    x = jnp.concatenate([cls, x], axis=1)                     # (B, 1+Gh*Gt, E)

    logits = encoder_stack(x, params["layers"], params["fc_w"], params["fc_b"],
                           cfg["num_heads"])
    return logits[:, :cfg["num_classes"]]


# ----------------------------------------------------------------------------
# Deterministic parameter initialization (shapes per the module __init__)
# ----------------------------------------------------------------------------
def init_params(key, cfg):
    E, Hd, C, p = cfg["E"], cfg["hidden_dim"], cfg["in_chans"], cfg["patch"]
    NL = cfg["num_layers"]
    keys = jax.random.split(key, 64)
    kit = iter(keys)

    def rnd(shape, dtype, scale=0.02):
        return (scale * jax.random.normal(next(kit), shape)).astype(dtype)

    bf16 = jnp.bfloat16
    f32 = jnp.float32

    atm = dict(
        wq=rnd((E, E), bf16), bq=rnd((1, E), f32),
        wkv=rnd((E, 2 * E), bf16), bkv=rnd((1, 2 * E), f32),
        wo=rnd((E, E), bf16), bo=rnd((1, E), f32),
        ln1_g=jnp.ones((1, E), f32), ln1_b=jnp.zeros((1, E), f32),
        w1=rnd((E, 4 * E), bf16), b1=rnd((1, 4 * E), f32),
        w2=rnd((4 * E, E), bf16), b2=rnd((1, E), f32),
        ln2_g=jnp.ones((1, E), f32), ln2_b=jnp.zeros((1, E), f32),
    )
    layers = dict(                                     # stacked over layers
        wqkv=rnd((NL, E, 3 * E), bf16), bqkv=rnd((NL, 1, 3 * E), f32),
        wo=rnd((NL, E, E), bf16), bo=rnd((NL, 1, E), f32),
        ln1_g=jnp.ones((NL, 1, E), f32), ln1_b=jnp.zeros((NL, 1, E), f32),
        w1=rnd((NL, E, Hd), bf16), b1=rnd((NL, 1, Hd), f32),
        w2=rnd((NL, Hd, E), bf16), b2=rnd((NL, 1, E), f32),
        ln2_g=jnp.ones((NL, 1, E), f32), ln2_b=jnp.zeros((NL, 1, E), f32),
    )
    Nc = cfg["num_classes"]
    Np = ((Nc + 127) // 128) * 128                     # lane-dense classifier
    fc_w = jnp.pad(rnd((E, Nc), f32), ((0, 0), (0, Np - Nc))).astype(bf16)
    fc_b = jnp.pad(rnd((1, Nc), f32), ((0, 0), (0, Np - Nc)))

    return dict(
        patch_w=rnd((C * p * p, E), bf16),             # conv weight, pre-flattened
        patch_b=rnd((1, E), f32),
        pe=rnd((cfg["pe_H"], cfg["pe_W"], E), f32),
        atm=atm,
        layers=layers,
        fc_w=fc_w, fc_b=fc_b,
        cls_token=jnp.zeros((1, 1, E), f32),           # zeros like torch init
    )


# ----------------------------------------------------------------------------
if __name__ == "__main__":
    # Small ViTAR config (patch_size=16 is hardcoded in the reference module,
    # so 64x64 images give a 4x4 token grid that the ATM merges to 2x2).
    # E=128 keeps every kernel output lane-dense.
    cfg = dict(
        E=128, hidden_dim=512, Gh=2, Gt=2, pe_H=8, pe_W=8,
        num_heads=4, num_layers=2, num_classes=10, atm_num_heads=4,
        in_chans=3, patch=16,
    )
    key = jax.random.PRNGKey(0)
    pkey, ikey = jax.random.split(key)
    params = init_params(pkey, cfg)
    images = jax.random.normal(ikey, (2, 3, 64, 64), dtype=jnp.float32)

    fwd = jax.jit(partial(vitar_forward, cfg=cfg))
    logits = jax.block_until_ready(fwd(images, params))
    assert logits.shape == (2, cfg["num_classes"]), logits.shape
    assert bool(jnp.all(jnp.isfinite(logits)))
    print("KERNEL_OK")
</pallas_src>

<mosaic_0001>
module attributes {stable_mosaic.version = 11 : i64} {
  func.func @_atm_block_kernel(%arg0: i32, %arg1: memref<2x16x128xf32, #tpu.memory_space<vmem>>, %arg2: memref<4x16xf32, #tpu.memory_space<vmem>>, %arg3: memref<128x128xbf16, #tpu.memory_space<vmem>>, %arg4: memref<1x128xf32, #tpu.memory_space<vmem>>, %arg5: memref<128x256xbf16, #tpu.memory_space<vmem>>, %arg6: memref<1x256xf32, #tpu.memory_space<vmem>>, %arg7: memref<128x128xbf16, #tpu.memory_space<vmem>>, %arg8: memref<1x128xf32, #tpu.memory_space<vmem>>, %arg9: memref<1x128xf32, #tpu.memory_space<vmem>>, %arg10: memref<1x128xf32, #tpu.memory_space<vmem>>, %arg11: memref<128x512xbf16, #tpu.memory_space<vmem>>, %arg12: memref<1x512xf32, #tpu.memory_space<vmem>>, %arg13: memref<512x128xbf16, #tpu.memory_space<vmem>>, %arg14: memref<1x128xf32, #tpu.memory_space<vmem>>, %arg15: memref<1x128xf32, #tpu.memory_space<vmem>>, %arg16: memref<1x128xf32, #tpu.memory_space<vmem>>, %arg17: memref<2x4x128xf32, #tpu.memory_space<vmem>>) attributes {dimension_semantics = [#tpu.dimension_semantics<arbitrary>], iteration_bounds = array<i64: 1>, scalar_prefetch = 0 : i64, scratch_operands = 0 : i64, tpu.core_type = #tpu.core_type<tc>, window_params = [{pipeline_mode = #tpu.pipeline_mode<synchronous>, transform_indices = @transform_0, window_bounds = array<i64: 2, 16, 128>}, {pipeline_mode = #tpu.pipeline_mode<synchronous>, transform_indices = @transform_1, window_bounds = array<i64: 4, 16>}, {pipeline_mode = #tpu.pipeline_mode<synchronous>, transform_indices = @transform_2, window_bounds = array<i64: 128, 128>}, {pipeline_mode = #tpu.pipeline_mode<synchronous>, transform_indices = @transform_3, window_bounds = array<i64: 1, 128>}, {pipeline_mode = #tpu.pipeline_mode<synchronous>, transform_indices = @transform_4, window_bounds = array<i64: 128, 256>}, {pipeline_mode = #tpu.pipeline_mode<synchronous>, transform_indices = @transform_5, window_bounds = array<i64: 1, 256>}, {pipeline_mode = #tpu.pipeline_mode<synchronous>, transform_indices = @transform_6, window_bounds = array<i64: 128, 128>}, {pipeline_mode = #tpu.pipeline_mode<synchronous>, transform_indices = @transform_7, window_bounds = array<i64: 1, 128>}, {pipeline_mode = #tpu.pipeline_mode<synchronous>, transform_indices = @transform_8, window_bounds = array<i64: 1, 128>}, {pipeline_mode = #tpu.pipeline_mode<synchronous>, transform_indices = @transform_9, window_bounds = array<i64: 1, 128>}, {pipeline_mode = #tpu.pipeline_mode<synchronous>, transform_indices = @transform_10, window_bounds = array<i64: 128, 512>}, {pipeline_mode = #tpu.pipeline_mode<synchronous>, transform_indices = @transform_11, window_bounds = array<i64: 1, 512>}, {pipeline_mode = #tpu.pipeline_mode<synchronous>, transform_indices = @transform_12, window_bounds = array<i64: 512, 128>}, {pipeline_mode = #tpu.pipeline_mode<synchronous>, transform_indices = @transform_13, window_bounds = array<i64: 1, 128>}, {pipeline_mode = #tpu.pipeline_mode<synchronous>, transform_indices = @transform_14, window_bounds = array<i64: 1, 128>}, {pipeline_mode = #tpu.pipeline_mode<synchronous>, transform_indices = @transform_15, window_bounds = array<i64: 1, 128>}, {pipeline_mode = #tpu.pipeline_mode<synchronous>, transform_indices = @transform_16, window_bounds = array<i64: 2, 4, 128>}]} {
    %c0 = arith.constant 0 : index
    %c0_0 = arith.constant 0 : index
    %c0_1 = arith.constant 0 : index
    %0 = vector.load %arg1[%c0, %c0_0, %c0_1] : memref<2x16x128xf32, #tpu.memory_space<vmem>>, vector<2x16x128xf32>
    %1 = arith.truncf %0 : vector<2x16x128xf32> to vector<2x16x128xbf16>
    %c0_2 = arith.constant 0 : index
    %c0_3 = arith.constant 0 : index
    %2 = vector.load %arg2[%c0_2, %c0_3] : memref<4x16xf32, #tpu.memory_space<vmem>>, vector<4x16xf32>
    %3 = arith.truncf %2 : vector<4x16xf32> to vector<4x16xbf16>
    %4 = vector.shape_cast %3 : vector<4x16xbf16> to vector<1x4x16xbf16>
    %5 = vector.shape_cast %4 : vector<1x4x16xbf16> to vector<1x4x16xbf16>
    %6 = vector.broadcast %5 : vector<1x4x16xbf16> to vector<2x4x16xbf16>
    "tpu.trace_start"() <{level = 10 : i32, message = "bqk,bke->bqe"}> : () -> ()
    %cst = arith.constant dense<0.000000e+00> : vector<2x4x128xf32>
    %7 = tpu.matmul %6, %1, %cst {dimension_numbers = #tpu.dot_dimension_numbers<[2], [1], [1], [2], [0, 0, 0, 1, 1, 2], [0], [0]>} : vector<2x4x16xbf16>, vector<2x16x128xbf16>, vector<2x4x128xf32> -> vector<2x4x128xf32>
    "tpu.trace_stop"() : () -> ()
    %8 = vector.shape_cast %7 : vector<2x4x128xf32> to vector<8x128xf32>
    %9 = arith.truncf %8 : vector<8x128xf32> to vector<8x128xbf16>
    %c0_4 = arith.constant 0 : index
    %c0_5 = arith.constant 0 : index
    %10 = vector.load %arg3[%c0_4, %c0_5] : memref<128x128xbf16, #tpu.memory_space<vmem>>, vector<128x128xbf16>
    %cst_6 = arith.constant dense<0.000000e+00> : vector<8x128xf32>
    %11 = tpu.matmul %9, %10, %cst_6 {dimension_numbers = #tpu.dot_dimension_numbers<[1], [0], [0], [1], [0, 0, 1, 1], [], []>} : vector<8x128xbf16>, vector<128x128xbf16>, vector<8x128xf32> -> vector<8x128xf32>
    %c0_7 = arith.constant 0 : index
    %c0_8 = arith.constant 0 : index
    %12 = vector.load %arg4[%c0_7, %c0_8] : memref<1x128xf32, #tpu.memory_space<vmem>>, vector<1x128xf32>
    %13 = vector.broadcast %12 : vector<1x128xf32> to vector<8x128xf32>
    %14 = arith.addf %11, %13 : vector<8x128xf32>
    %15 = vector.shape_cast %1 : vector<2x16x128xbf16> to vector<32x128xbf16>
    %c0_9 = arith.constant 0 : index
    %c0_10 = arith.constant 0 : index
    %16 = vector.load %arg5[%c0_9, %c0_10] : memref<128x256xbf16, #tpu.memory_space<vmem>>, vector<128x256xbf16>
    %cst_11 = arith.constant dense<0.000000e+00> : vector<32x256xf32>
    %17 = tpu.matmul %15, %16, %cst_11 {dimension_numbers = #tpu.dot_dimension_numbers<[1], [0], [0], [1], [0, 0, 1, 1], [], []>} : vector<32x128xbf16>, vector<128x256xbf16>, vector<32x256xf32> -> vector<32x256xf32>
    %c0_12 = arith.constant 0 : index
    %c0_13 = arith.constant 0 : index
    %18 = vector.load %arg6[%c0_12, %c0_13] : memref<1x256xf32, #tpu.memory_space<vmem>>, vector<1x256xf32>
    %19 = vector.broadcast %18 : vector<1x256xf32> to vector<32x256xf32>
    %20 = arith.addf %17, %19 : vector<32x256xf32>
    %21 = vector.extract_strided_slice %20 {offsets = [0, 0], sizes = [32, 128], strides = [1, 1]} : vector<32x256xf32> to vector<32x128xf32>
    %22 = vector.extract_strided_slice %20 {offsets = [0, 128], sizes = [32, 128], strides = [1, 1]} : vector<32x256xf32> to vector<32x128xf32>
    %23 = vector.extract_strided_slice %14 {offsets = [0, 0], sizes = [8, 32], strides = [1, 1]} : vector<8x128xf32> to vector<8x32xf32>
    %24 = vector.shape_cast %23 : vector<8x32xf32> to vector<2x4x32xf32>
    %25 = arith.truncf %24 : vector<2x4x32xf32> to vector<2x4x32xbf16>
    %26 = vector.extract_strided_slice %21 {offsets = [0, 0], sizes = [32, 32], strides = [1, 1]} : vector<32x128xf32> to vector<32x32xf32>
    %27 = vector.shape_cast %26 : vector<32x32xf32> to vector<2x16x32xf32>
    %28 = arith.truncf %27 : vector<2x16x32xf32> to vector<2x16x32xbf16>
    %29 = vector.extract_strided_slice %22 {offsets = [0, 0], sizes = [32, 32], strides = [1, 1]} : vector<32x128xf32> to vector<32x32xf32>
    %30 = vector.shape_cast %29 : vector<32x32xf32> to vector<2x16x32xf32>
    %31 = arith.truncf %30 : vector<2x16x32xf32> to vector<2x16x32xbf16>
    "tpu.trace_start"() <{level = 10 : i32, message = "bqd,bkd->bqk"}> : () -> ()
    %cst_14 = arith.constant dense<0.000000e+00> : vector<2x4x16xf32>
    %32 = tpu.matmul %25, %28, %cst_14 {dimension_numbers = #tpu.dot_dimension_numbers<[2], [2], [1], [1], [0, 0, 0, 1, 1, 1], [0], [0]>} : vector<2x4x32xbf16>, vector<2x16x32xbf16>, vector<2x4x16xf32> -> vector<2x4x16xf32>
    "tpu.trace_stop"() : () -> ()
    %cst_15 = arith.constant 0.176776692 : f32
    %33 = vector.broadcast %cst_15 : f32 to vector<2x4x16xf32>
    %34 = arith.mulf %32, %33 : vector<2x4x16xf32>
    %cst_16 = arith.constant dense<0xFF800000> : vector<2x4xf32>
    %35 = vector.multi_reduction <maximumf>, %34, %cst_16 [2] : vector<2x4x16xf32> to vector<2x4xf32>
    %36 = vector.shape_cast %35 : vector<2x4xf32> to vector<2x4x1xf32>
    %37 = vector.broadcast %36 : vector<2x4x1xf32> to vector<2x4x16xf32>
    %38 = arith.subf %34, %37 : vector<2x4x16xf32>
    %39 = math.exp %38 : vector<2x4x16xf32>
    %cst_17 = arith.constant dense<0.000000e+00> : vector<2x4xf32>
    %40 = vector.multi_reduction <add>, %39, %cst_17 [2] : vector<2x4x16xf32> to vector<2x4xf32>
    %41 = vector.shape_cast %40 : vector<2x4xf32> to vector<2x4x1xf32>
    %42 = tpu.reciprocal %41 {approx = true} : vector<2x4x1xf32> -> vector<2x4x1xf32>
    %43 = vector.broadcast %42 : vector<2x4x1xf32> to vector<2x4x16xf32>
    %44 = arith.mulf %39, %43 : vector<2x4x16xf32>
    %45 = arith.truncf %44 : vector<2x4x16xf32> to vector<2x4x16xbf16>
    "tpu.trace_start"() <{level = 10 : i32, message = "bqk,bkd->bqd"}> : () -> ()
    %cst_18 = arith.constant dense<0.000000e+00> : vector<2x4x32xf32>
    %46 = tpu.matmul %45, %31, %cst_18 {dimension_numbers = #tpu.dot_dimension_numbers<[2], [1], [1], [2], [0, 0, 0, 1, 1, 2], [0], [0]>} : vector<2x4x16xbf16>, vector<2x16x32xbf16>, vector<2x4x32xf32> -> vector<2x4x32xf32>
    "tpu.trace_stop"() : () -> ()
    %47 = vector.shape_cast %46 : vector<2x4x32xf32> to vector<8x32xf32>
    %48 = vector.extract_strided_slice %14 {offsets = [0, 32], sizes = [8, 32], strides = [1, 1]} : vector<8x128xf32> to vector<8x32xf32>
    %49 = vector.shape_cast %48 : vector<8x32xf32> to vector<2x4x32xf32>
    %50 = arith.truncf %49 : vector<2x4x32xf32> to vector<2x4x32xbf16>
    %51 = vector.extract_strided_slice %21 {offsets = [0, 32], sizes = [32, 32], strides = [1, 1]} : vector<32x128xf32> to vector<32x32xf32>
    %52 = vector.shape_cast %51 : vector<32x32xf32> to vector<2x16x32xf32>
    %53 = arith.truncf %52 : vector<2x16x32xf32> to vector<2x16x32xbf16>
    %54 = vector.extract_strided_slice %22 {offsets = [0, 32], sizes = [32, 32], strides = [1, 1]} : vector<32x128xf32> to vector<32x32xf32>
    %55 = vector.shape_cast %54 : vector<32x32xf32> to vector<2x16x32xf32>
    %56 = arith.truncf %55 : vector<2x16x32xf32> to vector<2x16x32xbf16>
    "tpu.trace_start"() <{level = 10 : i32, message = "bqd,bkd->bqk"}> : () -> ()
    %cst_19 = arith.constant dense<0.000000e+00> : vector<2x4x16xf32>
    %57 = tpu.matmul %50, %53, %cst_19 {dimension_numbers = #tpu.dot_dimension_numbers<[2], [2], [1], [1], [0, 0, 0, 1, 1, 1], [0], [0]>} : vector<2x4x32xbf16>, vector<2x16x32xbf16>, vector<2x4x16xf32> -> vector<2x4x16xf32>
    "tpu.trace_stop"() : () -> ()
    %cst_20 = arith.constant 0.176776692 : f32
    %58 = vector.broadcast %cst_20 : f32 to vector<2x4x16xf32>
    %59 = arith.mulf %57, %58 : vector<2x4x16xf32>
    %cst_21 = arith.constant dense<0xFF800000> : vector<2x4xf32>
    %60 = vector.multi_reduction <maximumf>, %59, %cst_21 [2] : vector<2x4x16xf32> to vector<2x4xf32>
    %61 = vector.shape_cast %60 : vector<2x4xf32> to vector<2x4x1xf32>
    %62 = vector.broadcast %61 : vector<2x4x1xf32> to vector<2x4x16xf32>
    %63 = arith.subf %59, %62 : vector<2x4x16xf32>
    %64 = math.exp %63 : vector<2x4x16xf32>
    %cst_22 = arith.constant dense<0.000000e+00> : vector<2x4xf32>
    %65 = vector.multi_reduction <add>, %64, %cst_22 [2] : vector<2x4x16xf32> to vector<2x4xf32>
    %66 = vector.shape_cast %65 : vector<2x4xf32> to vector<2x4x1xf32>
    %67 = tpu.reciprocal %66 {approx = true} : vector<2x4x1xf32> -> vector<2x4x1xf32>
    %68 = vector.broadcast %67 : vector<2x4x1xf32> to vector<2x4x16xf32>
    %69 = arith.mulf %64, %68 : vector<2x4x16xf32>
    %70 = arith.truncf %69 : vector<2x4x16xf32> to vector<2x4x16xbf16>
    "tpu.trace_start"() <{level = 10 : i32, message = "bqk,bkd->bqd"}> : () -> ()
    %cst_23 = arith.constant dense<0.000000e+00> : vector<2x4x32xf32>
    %71 = tpu.matmul %70, %56, %cst_23 {dimension_numbers = #tpu.dot_dimension_numbers<[2], [1], [1], [2], [0, 0, 0, 1, 1, 2], [0], [0]>} : vector<2x4x16xbf16>, vector<2x16x32xbf16>, vector<2x4x32xf32> -> vector<2x4x32xf32>
    "tpu.trace_stop"() : () -> ()
    %72 = vector.shape_cast %71 : vector<2x4x32xf32> to vector<8x32xf32>
    %73 = vector.extract_strided_slice %14 {offsets = [0, 64], sizes = [8, 32], strides = [1, 1]} : vector<8x128xf32> to vector<8x32xf32>
    %74 = vector.shape_cast %73 : vector<8x32xf32> to vector<2x4x32xf32>
    %75 = arith.truncf %74 : vector<2x4x32xf32> to vector<2x4x32xbf16>
    %76 = vector.extract_strided_slice %21 {offsets = [0, 64], sizes = [32, 32], strides = [1, 1]} : vector<32x128xf32> to vector<32x32xf32>
    %77 = vector.shape_cast %76 : vector<32x32xf32> to vector<2x16x32xf32>
    %78 = arith.truncf %77 : vector<2x16x32xf32> to vector<2x16x32xbf16>
    %79 = vector.extract_strided_slice %22 {offsets = [0, 64], sizes = [32, 32], strides = [1, 1]} : vector<32x128xf32> to vector<32x32xf32>
    %80 = vector.shape_cast %79 : vector<32x32xf32> to vector<2x16x32xf32>
    %81 = arith.truncf %80 : vector<2x16x32xf32> to vector<2x16x32xbf16>
    "tpu.trace_start"() <{level = 10 : i32, message = "bqd,bkd->bqk"}> : () -> ()
    %cst_24 = arith.constant dense<0.000000e+00> : vector<2x4x16xf32>
    %82 = tpu.matmul %75, %78, %cst_24 {dimension_numbers = #tpu.dot_dimension_numbers<[2], [2], [1], [1], [0, 0, 0, 1, 1, 1], [0], [0]>} : vector<2x4x32xbf16>, vector<2x16x32xbf16>, vector<2x4x16xf32> -> vector<2x4x16xf32>
    "tpu.trace_stop"() : () -> ()
    %cst_25 = arith.constant 0.176776692 : f32
    %83 = vector.broadcast %cst_25 : f32 to vector<2x4x16xf32>
    %84 = arith.mulf %82, %83 : vector<2x4x16xf32>
    %cst_26 = arith.constant dense<0xFF800000> : vector<2x4xf32>
    %85 = vector.multi_reduction <maximumf>, %84, %cst_26 [2] : vector<2x4x16xf32> to vector<2x4xf32>
    %86 = vector.shape_cast %85 : vector<2x4xf32> to vector<2x4x1xf32>
    %87 = vector.broadcast %86 : vector<2x4x1xf32> to vector<2x4x16xf32>
    %88 = arith.subf %84, %87 : vector<2x4x16xf32>
    %89 = math.exp %88 : vector<2x4x16xf32>
    %cst_27 = arith.constant dense<0.000000e+00> : vector<2x4xf32>
    %90 = vector.multi_reduction <add>, %89, %cst_27 [2] : vector<2x4x16xf32> to vector<2x4xf32>
    %91 = vector.shape_cast %90 : vector<2x4xf32> to vector<2x4x1xf32>
    %92 = tpu.reciprocal %91 {approx = true} : vector<2x4x1xf32> -> vector<2x4x1xf32>
    %93 = vector.broadcast %92 : vector<2x4x1xf32> to vector<2x4x16xf32>
    %94 = arith.mulf %89, %93 : vector<2x4x16xf32>
    %95 = arith.truncf %94 : vector<2x4x16xf32> to vector<2x4x16xbf16>
    "tpu.trace_start"() <{level = 10 : i32, message = "bqk,bkd->bqd"}> : () -> ()
    %cst_28 = arith.constant dense<0.000000e+00> : vector<2x4x32xf32>
    %96 = tpu.matmul %95, %81, %cst_28 {dimension_numbers = #tpu.dot_dimension_numbers<[2], [1], [1], [2], [0, 0, 0, 1, 1, 2], [0], [0]>} : vector<2x4x16xbf16>, vector<2x16x32xbf16>, vector<2x4x32xf32> -> vector<2x4x32xf32>
    "tpu.trace_stop"() : () -> ()
    %97 = vector.shape_cast %96 : vector<2x4x32xf32> to vector<8x32xf32>
    %98 = vector.extract_strided_slice %14 {offsets = [0, 96], sizes = [8, 32], strides = [1, 1]} : vector<8x128xf32> to vector<8x32xf32>
    %99 = vector.shape_cast %98 : vector<8x32xf32> to vector<2x4x32xf32>
    %100 = arith.truncf %99 : vector<2x4x32xf32> to vector<2x4x32xbf16>
    %101 = vector.extract_strided_slice %21 {offsets = [0, 96], sizes = [32, 32], strides = [1, 1]} : vector<32x128xf32> to vector<32x32xf32>
    %102 = vector.shape_cast %101 : vector<32x32xf32> to vector<2x16x32xf32>
    %103 = arith.truncf %102 : vector<2x16x32xf32> to vector<2x16x32xbf16>
    %104 = vector.extract_strided_slice %22 {offsets = [0, 96], sizes = [32, 32], strides = [1, 1]} : vector<32x128xf32> to vector<32x32xf32>
    %105 = vector.shape_cast %104 : vector<32x32xf32> to vector<2x16x32xf32>
    %106 = arith.truncf %105 : vector<2x16x32xf32> to vector<2x16x32xbf16>
    "tpu.trace_start"() <{level = 10 : i32, message = "bqd,bkd->bqk"}> : () -> ()
    %cst_29 = arith.constant dense<0.000000e+00> : vector<2x4x16xf32>
    %107 = tpu.matmul %100, %103, %cst_29 {dimension_numbers = #tpu.dot_dimension_numbers<[2], [2], [1], [1], [0, 0, 0, 1, 1, 1], [0], [0]>} : vector<2x4x32xbf16>, vector<2x16x32xbf16>, vector<2x4x16xf32> -> vector<2x4x16xf32>
    "tpu.trace_stop"() : () -> ()
    %cst_30 = arith.constant 0.176776692 : f32
    %108 = vector.broadcast %cst_30 : f32 to vector<2x4x16xf32>
    %109 = arith.mulf %107, %108 : vector<2x4x16xf32>
    %cst_31 = arith.constant dense<0xFF800000> : vector<2x4xf32>
    %110 = vector.multi_reduction <maximumf>, %109, %cst_31 [2] : vector<2x4x16xf32> to vector<2x4xf32>
    %111 = vector.shape_cast %110 : vector<2x4xf32> to vector<2x4x1xf32>
    %112 = vector.broadcast %111 : vector<2x4x1xf32> to vector<2x4x16xf32>
    %113 = arith.subf %109, %112 : vector<2x4x16xf32>
    %114 = math.exp %113 : vector<2x4x16xf32>
    %cst_32 = arith.constant dense<0.000000e+00> : vector<2x4xf32>
    %115 = vector.multi_reduction <add>, %114, %cst_32 [2] : vector<2x4x16xf32> to vector<2x4xf32>
    %116 = vector.shape_cast %115 : vector<2x4xf32> to vector<2x4x1xf32>
    %117 = tpu.reciprocal %116 {approx = true} : vector<2x4x1xf32> -> vector<2x4x1xf32>
    %118 = vector.broadcast %117 : vector<2x4x1xf32> to vector<2x4x16xf32>
    %119 = arith.mulf %114, %118 : vector<2x4x16xf32>
    %120 = arith.truncf %119 : vector<2x4x16xf32> to vector<2x4x16xbf16>
    "tpu.trace_start"() <{level = 10 : i32, message = "bqk,bkd->bqd"}> : () -> ()
    %cst_33 = arith.constant dense<0.000000e+00> : vector<2x4x32xf32>
    %121 = tpu.matmul %120, %106, %cst_33 {dimension_numbers = #tpu.dot_dimension_numbers<[2], [1], [1], [2], [0, 0, 0, 1, 1, 2], [0], [0]>} : vector<2x4x16xbf16>, vector<2x16x32xbf16>, vector<2x4x32xf32> -> vector<2x4x32xf32>
    "tpu.trace_stop"() : () -> ()
    %122 = vector.shape_cast %121 : vector<2x4x32xf32> to vector<8x32xf32>
    %123 = tpu.concatenate %47, %72, %97, %122 in 1 : vector<8x32xf32>, vector<8x32xf32>, vector<8x32xf32>, vector<8x32xf32> -> vector<8x128xf32>
    %124 = arith.truncf %123 : vector<8x128xf32> to vector<8x128xbf16>
    %c0_34 = arith.constant 0 : index
    %c0_35 = arith.constant 0 : index
    %125 = vector.load %arg7[%c0_34, %c0_35] : memref<128x128xbf16, #tpu.memory_space<vmem>>, vector<128x128xbf16>
    %cst_36 = arith.constant dense<0.000000e+00> : vector<8x128xf32>
    %126 = tpu.matmul %124, %125, %cst_36 {dimension_numbers = #tpu.dot_dimension_numbers<[1], [0], [0], [1], [0, 0, 1, 1], [], []>} : vector<8x128xbf16>, vector<128x128xbf16>, vector<8x128xf32> -> vector<8x128xf32>
    %c0_37 = arith.constant 0 : index
    %c0_38 = arith.constant 0 : index
    %127 = vector.load %arg8[%c0_37, %c0_38] : memref<1x128xf32, #tpu.memory_space<vmem>>, vector<1x128xf32>
    %128 = vector.broadcast %127 : vector<1x128xf32> to vector<8x128xf32>
    %129 = arith.addf %126, %128 : vector<8x128xf32>
    %130 = arith.addf %8, %129 : vector<8x128xf32>
    %c0_39 = arith.constant 0 : index
    %c0_40 = arith.constant 0 : index
    %131 = vector.load %arg9[%c0_39, %c0_40] : memref<1x128xf32, #tpu.memory_space<vmem>>, vector<1x128xf32>
    %c0_41 = arith.constant 0 : index
    %c0_42 = arith.constant 0 : index
    %132 = vector.load %arg10[%c0_41, %c0_42] : memref<1x128xf32, #tpu.memory_space<vmem>>, vector<1x128xf32>
    %cst_43 = arith.constant dense<0.000000e+00> : vector<8xf32>
    %133 = vector.multi_reduction <add>, %130, %cst_43 [1] : vector<8x128xf32> to vector<8xf32>
    %134 = vector.shape_cast %133 : vector<8xf32> to vector<8x1xf32>
    %cst_44 = arith.constant 1.280000e+02 : f32
    %135 = vector.broadcast %cst_44 : f32 to vector<8x1xf32>
    %136 = arith.divf %134, %135 : vector<8x1xf32>
    %137 = vector.broadcast %136 : vector<8x1xf32> to vector<8x128xf32>
    %138 = arith.subf %130, %137 : vector<8x128xf32>
    %139 = arith.mulf %138, %138 : vector<8x128xf32>
    %cst_45 = arith.constant dense<0.000000e+00> : vector<8xf32>
    %140 = vector.multi_reduction <add>, %139, %cst_45 [1] : vector<8x128xf32> to vector<8xf32>
    %141 = vector.shape_cast %140 : vector<8xf32> to vector<8x1xf32>
    %cst_46 = arith.constant 1.280000e+02 : f32
    %142 = vector.broadcast %cst_46 : f32 to vector<8x1xf32>
    %143 = arith.divf %141, %142 : vector<8x1xf32>
    %cst_47 = arith.constant 9.99999974E-6 : f32
    %144 = vector.broadcast %cst_47 : f32 to vector<8x1xf32>
    %145 = arith.addf %143, %144 : vector<8x1xf32>
    %146 = math.rsqrt %145 : vector<8x1xf32>
    %147 = vector.broadcast %146 : vector<8x1xf32> to vector<8x128xf32>
    %148 = arith.mulf %138, %147 : vector<8x128xf32>
    %149 = vector.broadcast %131 : vector<1x128xf32> to vector<8x128xf32>
    %150 = arith.mulf %148, %149 : vector<8x128xf32>
    %151 = vector.broadcast %132 : vector<1x128xf32> to vector<8x128xf32>
    %152 = arith.addf %150, %151 : vector<8x128xf32>
    %c0_48 = arith.constant 0 : index
    %c0_49 = arith.constant 0 : index
    %153 = vector.load %arg11[%c0_48, %c0_49] : memref<128x512xbf16, #tpu.memory_space<vmem>>, vector<128x512xbf16>
    %c0_50 = arith.constant 0 : index
    %c0_51 = arith.constant 0 : index
    %154 = vector.load %arg12[%c0_50, %c0_51] : memref<1x512xf32, #tpu.memory_space<vmem>>, vector<1x512xf32>
    %c0_52 = arith.constant 0 : index
    %c0_53 = arith.constant 0 : index
    %155 = vector.load %arg13[%c0_52, %c0_53] : memref<512x128xbf16, #tpu.memory_space<vmem>>, vector<512x128xbf16>
    %c0_54 = arith.constant 0 : index
    %c0_55 = arith.constant 0 : index
    %156 = vector.load %arg14[%c0_54, %c0_55] : memref<1x128xf32, #tpu.memory_space<vmem>>, vector<1x128xf32>
    %157 = arith.truncf %152 : vector<8x128xf32> to vector<8x128xbf16>
    %cst_56 = arith.constant dense<0.000000e+00> : vector<8x512xf32>
    %158 = tpu.matmul %157, %153, %cst_56 {dimension_numbers = #tpu.dot_dimension_numbers<[1], [0], [0], [1], [0, 0, 1, 1], [], []>} : vector<8x128xbf16>, vector<128x512xbf16>, vector<8x512xf32> -> vector<8x512xf32>
    %159 = vector.broadcast %154 : vector<1x512xf32> to vector<8x512xf32>
    %160 = arith.addf %158, %159 : vector<8x512xf32>
    %cst_57 = arith.constant 0.000000e+00 : f32
    %161 = vector.broadcast %cst_57 : f32 to vector<8x512xf32>
    %162 = arith.maximumf %160, %161 : vector<8x512xf32>
    %163 = arith.truncf %162 : vector<8x512xf32> to vector<8x512xbf16>
    %cst_58 = arith.constant dense<0.000000e+00> : vector<8x128xf32>
    %164 = tpu.matmul %163, %155, %cst_58 {dimension_numbers = #tpu.dot_dimension_numbers<[1], [0], [0], [1], [0, 0, 1, 1], [], []>} : vector<8x512xbf16>, vector<512x128xbf16>, vector<8x128xf32> -> vector<8x128xf32>
    %165 = vector.broadcast %156 : vector<1x128xf32> to vector<8x128xf32>
    %166 = arith.addf %164, %165 : vector<8x128xf32>
    %167 = arith.addf %152, %166 : vector<8x128xf32>
    %c0_59 = arith.constant 0 : index
    %c0_60 = arith.constant 0 : index
    %168 = vector.load %arg15[%c0_59, %c0_60] : memref<1x128xf32, #tpu.memory_space<vmem>>, vector<1x128xf32>
    %c0_61 = arith.constant 0 : index
    %c0_62 = arith.constant 0 : index
    %169 = vector.load %arg16[%c0_61, %c0_62] : memref<1x128xf32, #tpu.memory_space<vmem>>, vector<1x128xf32>
    %cst_63 = arith.constant dense<0.000000e+00> : vector<8xf32>
    %170 = vector.multi_reduction <add>, %167, %cst_63 [1] : vector<8x128xf32> to vector<8xf32>
    %171 = vector.shape_cast %170 : vector<8xf32> to vector<8x1xf32>
    %cst_64 = arith.constant 1.280000e+02 : f32
    %172 = vector.broadcast %cst_64 : f32 to vector<8x1xf32>
    %173 = arith.divf %171, %172 : vector<8x1xf32>
    %174 = vector.broadcast %173 : vector<8x1xf32> to vector<8x128xf32>
    %175 = arith.subf %167, %174 : vector<8x128xf32>
    %176 = arith.mulf %175, %175 : vector<8x128xf32>
    %cst_65 = arith.constant dense<0.000000e+00> : vector<8xf32>
    %177 = vector.multi_reduction <add>, %176, %cst_65 [1] : vector<8x128xf32> to vector<8xf32>
    %178 = vector.shape_cast %177 : vector<8xf32> to vector<8x1xf32>
    %cst_66 = arith.constant 1.280000e+02 : f32
    %179 = vector.broadcast %cst_66 : f32 to vector<8x1xf32>
    %180 = arith.divf %178, %179 : vector<8x1xf32>
    %cst_67 = arith.constant 9.99999974E-6 : f32
    %181 = vector.broadcast %cst_67 : f32 to vector<8x1xf32>
    %182 = arith.addf %180, %181 : vector<8x1xf32>
    %183 = math.rsqrt %182 : vector<8x1xf32>
    %184 = vector.broadcast %183 : vector<8x1xf32> to vector<8x128xf32>
    %185 = arith.mulf %175, %184 : vector<8x128xf32>
    %186 = vector.broadcast %168 : vector<1x128xf32> to vector<8x128xf32>
    %187 = arith.mulf %185, %186 : vector<8x128xf32>
    %188 = vector.broadcast %169 : vector<1x128xf32> to vector<8x128xf32>
    %189 = arith.addf %187, %188 : vector<8x128xf32>
    %190 = vector.shape_cast %189 : vector<8x128xf32> to vector<2x4x128xf32>
    %c0_68 = arith.constant 0 : index
    %c0_69 = arith.constant 0 : index
    %c0_70 = arith.constant 0 : index
    %191 = vector.load %arg17[%c0_68, %c0_69, %c0_70] : memref<2x4x128xf32, #tpu.memory_space<vmem>>, vector<2x4x128xf32>
    tpu.vector_store %arg17[%c0_68, %c0_69, %c0_70], %190 {strides = array<i32>} : memref<2x4x128xf32, #tpu.memory_space<vmem>>, vector<2x4x128xf32>,
    return
  }
  func.func @transform_0(%arg0: i32) -> (i32, i32, i32) {
    %c0_i32 = arith.constant 0 : i32
    %c0_i32_0 = arith.constant 0 : i32
    %c0_i32_1 = arith.constant 0 : i32
    %c0_i32_2 = arith.constant 0 : i32
    return %c0_i32, %c0_i32_0, %c0_i32_1 : i32, i32, i32
  }
  func.func @transform_1(%arg0: i32) -> (i32, i32) {
    %c0_i32 = arith.constant 0 : i32
    %c0_i32_0 = arith.constant 0 : i32
    %c0_i32_1 = arith.constant 0 : i32
    return %c0_i32, %c0_i32_0 : i32, i32
  }
  func.func @transform_2(%arg0: i32) -> (i32, i32) {
    %c0_i32 = arith.constant 0 : i32
    %c0_i32_0 = arith.constant 0 : i32
    %c0_i32_1 = arith.constant 0 : i32
    return %c0_i32, %c0_i32_0 : i32, i32
  }
  func.func @transform_3(%arg0: i32) -> (i32, i32) {
    %c0_i32 = arith.constant 0 : i32
    %c0_i32_0 = arith.constant 0 : i32
    %c0_i32_1 = arith.constant 0 : i32
    return %c0_i32, %c0_i32_0 : i32, i32
  }
  func.func @transform_4(%arg0: i32) -> (i32, i32) {
    %c0_i32 = arith.constant 0 : i32
    %c0_i32_0 = arith.constant 0 : i32
    %c0_i32_1 = arith.constant 0 : i32
    return %c0_i32, %c0_i32_0 : i32, i32
  }
  func.func @transform_5(%arg0: i32) -> (i32, i32) {
    %c0_i32 = arith.constant 0 : i32
    %c0_i32_0 = arith.constant 0 : i32
    %c0_i32_1 = arith.constant 0 : i32
    return %c0_i32, %c0_i32_0 : i32, i32
  }
  func.func @transform_6(%arg0: i32) -> (i32, i32) {
    %c0_i32 = arith.constant 0 : i32
    %c0_i32_0 = arith.constant 0 : i32
    %c0_i32_1 = arith.constant 0 : i32
    return %c0_i32, %c0_i32_0 : i32, i32
  }
  func.func @transform_7(%arg0: i32) -> (i32, i32) {
    %c0_i32 = arith.constant 0 : i32
    %c0_i32_0 = arith.constant 0 : i32
    %c0_i32_1 = arith.constant 0 : i32
    return %c0_i32, %c0_i32_0 : i32, i32
  }
  func.func @transform_8(%arg0: i32) -> (i32, i32) {
    %c0_i32 = arith.constant 0 : i32
    %c0_i32_0 = arith.constant 0 : i32
    %c0_i32_1 = arith.constant 0 : i32
    return %c0_i32, %c0_i32_0 : i32, i32
  }
  func.func @transform_9(%arg0: i32) -> (i32, i32) {
    %c0_i32 = arith.constant 0 : i32
    %c0_i32_0 = arith.constant 0 : i32
    %c0_i32_1 = arith.constant 0 : i32
    return %c0_i32, %c0_i32_0 : i32, i32
  }
  func.func @transform_10(%arg0: i32) -> (i32, i32) {
    %c0_i32 = arith.constant 0 : i32
    %c0_i32_0 = arith.constant 0 : i32
    %c0_i32_1 = arith.constant 0 : i32
    return %c0_i32, %c0_i32_0 : i32, i32
  }
  func.func @transform_11(%arg0: i32) -> (i32, i32) {
    %c0_i32 = arith.constant 0 : i32
    %c0_i32_0 = arith.constant 0 : i32
    %c0_i32_1 = arith.constant 0 : i32
    return %c0_i32, %c0_i32_0 : i32, i32
  }
  func.func @transform_12(%arg0: i32) -> (i32, i32) {
    %c0_i32 = arith.constant 0 : i32
    %c0_i32_0 = arith.constant 0 : i32
    %c0_i32_1 = arith.constant 0 : i32
    return %c0_i32, %c0_i32_0 : i32, i32
  }
  func.func @transform_13(%arg0: i32) -> (i32, i32) {
    %c0_i32 = arith.constant 0 : i32
    %c0_i32_0 = arith.constant 0 : i32
    %c0_i32_1 = arith.constant 0 : i32
    return %c0_i32, %c0_i32_0 : i32, i32
  }
  func.func @transform_14(%arg0: i32) -> (i32, i32) {
    %c0_i32 = arith.constant 0 : i32
    %c0_i32_0 = arith.constant 0 : i32
    %c0_i32_1 = arith.constant 0 : i32
    return %c0_i32, %c0_i32_0 : i32, i32
  }
  func.func @transform_15(%arg0: i32) -> (i32, i32) {
    %c0_i32 = arith.constant 0 : i32
    %c0_i32_0 = arith.constant 0 : i32
    %c0_i32_1 = arith.constant 0 : i32
    return %c0_i32, %c0_i32_0 : i32, i32
  }
  func.func @transform_16(%arg0: i32) -> (i32, i32, i32) {
    %c0_i32 = arith.constant 0 : i32
    %c0_i32_0 = arith.constant 0 : i32
    %c0_i32_1 = arith.constant 0 : i32
    %c0_i32_2 = arith.constant 0 : i32
    return %c0_i32, %c0_i32_0, %c0_i32_1 : i32, i32, i32
  }
}

module attributes {stable_mosaic.version = 11 : i64} {
  func.func @_patch_embed_kernel(%arg0: i32, %arg1: memref<2x16x768xbf16, #tpu.memory_space<vmem>>, %arg2: memref<768x128xbf16, #tpu.memory_space<vmem>>, %arg3: memref<1x128xf32, #tpu.memory_space<vmem>>, %arg4: memref<16x128xf32, #tpu.memory_space<vmem>>, %arg5: memref<2x16x128xf32, #tpu.memory_space<vmem>>) attributes {dimension_semantics = [#tpu.dimension_semantics<arbitrary>], iteration_bounds = array<i64: 1>, scalar_prefetch = 0 : i64, scratch_operands = 0 : i64, tpu.core_type = #tpu.core_type<tc>, window_params = [{pipeline_mode = #tpu.pipeline_mode<synchronous>, transform_indices = @transform_0, window_bounds = array<i64: 2, 16, 768>}, {pipeline_mode = #tpu.pipeline_mode<synchronous>, transform_indices = @transform_1, window_bounds = array<i64: 768, 128>}, {pipeline_mode = #tpu.pipeline_mode<synchronous>, transform_indices = @transform_2, window_bounds = array<i64: 1, 128>}, {pipeline_mode = #tpu.pipeline_mode<synchronous>, transform_indices = @transform_3, window_bounds = array<i64: 16, 128>}, {pipeline_mode = #tpu.pipeline_mode<synchronous>, transform_indices = @transform_4, window_bounds = array<i64: 2, 16, 128>}]} {
    %c0 = arith.constant 0 : index
    %c0_0 = arith.constant 0 : index
    %c0_1 = arith.constant 0 : index
    %0 = vector.load %arg1[%c0, %c0_0, %c0_1] : memref<2x16x768xbf16, #tpu.memory_space<vmem>>, vector<2x16x768xbf16>
    %1 = vector.shape_cast %0 : vector<2x16x768xbf16> to vector<32x768xbf16>
    %c0_2 = arith.constant 0 : index
    %c0_3 = arith.constant 0 : index
    %2 = vector.load %arg2[%c0_2, %c0_3] : memref<768x128xbf16, #tpu.memory_space<vmem>>, vector<768x128xbf16>
    %cst = arith.constant dense<0.000000e+00> : vector<32x128xf32>
    %3 = tpu.matmul %1, %2, %cst {dimension_numbers = #tpu.dot_dimension_numbers<[1], [0], [0], [1], [0, 0, 1, 1], [], []>} : vector<32x768xbf16>, vector<768x128xbf16>, vector<32x128xf32> -> vector<32x128xf32>
    %4 = vector.shape_cast %3 : vector<32x128xf32> to vector<2x16x128xf32>
    %c0_4 = arith.constant 0 : index
    %c0_5 = arith.constant 0 : index
    %5 = vector.load %arg3[%c0_4, %c0_5] : memref<1x128xf32, #tpu.memory_space<vmem>>, vector<1x128xf32>
    %6 = vector.shape_cast %5 : vector<1x128xf32> to vector<1x1x128xf32>
    %7 = vector.broadcast %6 : vector<1x1x128xf32> to vector<2x16x128xf32>
    %8 = arith.addf %4, %7 : vector<2x16x128xf32>
    %c0_6 = arith.constant 0 : index
    %c0_7 = arith.constant 0 : index
    %9 = vector.load %arg4[%c0_6, %c0_7] : memref<16x128xf32, #tpu.memory_space<vmem>>, vector<16x128xf32>
    %10 = vector.shape_cast %9 : vector<16x128xf32> to vector<1x16x128xf32>
    %11 = vector.broadcast %10 : vector<1x16x128xf32> to vector<2x16x128xf32>
    %12 = arith.addf %8, %11 : vector<2x16x128xf32>
    %c0_8 = arith.constant 0 : index
    %c0_9 = arith.constant 0 : index
    %c0_10 = arith.constant 0 : index
    %13 = vector.load %arg5[%c0_8, %c0_9, %c0_10] : memref<2x16x128xf32, #tpu.memory_space<vmem>>, vector<2x16x128xf32>
    tpu.vector_store %arg5[%c0_8, %c0_9, %c0_10], %12 {strides = array<i32>} : memref<2x16x128xf32, #tpu.memory_space<vmem>>, vector<2x16x128xf32>,
    return
  }
  func.func @transform_0(%arg0: i32) -> (i32, i32, i32) {
    %c0_i32 = arith.constant 0 : i32
    %c0_i32_0 = arith.constant 0 : i32
    %c0_i32_1 = arith.constant 0 : i32
    %c0_i32_2 = arith.constant 0 : i32
    return %c0_i32, %c0_i32_0, %c0_i32_1 : i32, i32, i32
  }
  func.func @transform_1(%arg0: i32) -> (i32, i32) {
    %c0_i32 = arith.constant 0 : i32
    %c0_i32_0 = arith.constant 0 : i32
    %c0_i32_1 = arith.constant 0 : i32
    return %c0_i32, %c0_i32_0 : i32, i32
  }
  func.func @transform_2(%arg0: i32) -> (i32, i32) {
    %c0_i32 = arith.constant 0 : i32
    %c0_i32_0 = arith.constant 0 : i32
    %c0_i32_1 = arith.constant 0 : i32
    return %c0_i32, %c0_i32_0 : i32, i32
  }
  func.func @transform_3(%arg0: i32) -> (i32, i32) {
    %c0_i32 = arith.constant 0 : i32
    %c0_i32_0 = arith.constant 0 : i32
    %c0_i32_1 = arith.constant 0 : i32
    return %c0_i32, %c0_i32_0 : i32, i32
  }
  func.func @transform_4(%arg0: i32) -> (i32, i32, i32) {
    %c0_i32 = arith.constant 0 : i32
    %c0_i32_0 = arith.constant 0 : i32
    %c0_i32_1 = arith.constant 0 : i32
    %c0_i32_2 = arith.constant 0 : i32
    return %c0_i32, %c0_i32_0, %c0_i32_1 : i32, i32, i32
  }
}

module attributes {stable_mosaic.version = 11 : i64} {
  func.func @_encoder_stack_kernel(%arg0: i32, %arg1: memref<2x5x128xf32, #tpu.memory_space<vmem>>, %arg2: memref<1x128x384xbf16, #tpu.memory_space<vmem>>, %arg3: memref<1x1x384xf32, #tpu.memory_space<vmem>>, %arg4: memref<1x128x128xbf16, #tpu.memory_space<vmem>>, %arg5: memref<1x1x128xf32, #tpu.memory_space<vmem>>, %arg6: memref<1x1x128xf32, #tpu.memory_space<vmem>>, %arg7: memref<1x1x128xf32, #tpu.memory_space<vmem>>, %arg8: memref<1x128x512xbf16, #tpu.memory_space<vmem>>, %arg9: memref<1x1x512xf32, #tpu.memory_space<vmem>>, %arg10: memref<1x512x128xbf16, #tpu.memory_space<vmem>>, %arg11: memref<1x1x128xf32, #tpu.memory_space<vmem>>, %arg12: memref<1x1x128xf32, #tpu.memory_space<vmem>>, %arg13: memref<1x1x128xf32, #tpu.memory_space<vmem>>, %arg14: memref<128x128xbf16, #tpu.memory_space<vmem>>, %arg15: memref<1x128xf32, #tpu.memory_space<vmem>>, %arg16: memref<2x5x128xf32, #tpu.memory_space<vmem>>, %arg17: memref<2x128xf32, #tpu.memory_space<vmem>>) attributes {dimension_semantics = [#tpu.dimension_semantics<arbitrary>], iteration_bounds = array<i64: 2>, scalar_prefetch = 0 : i64, scratch_operands = 0 : i64, tpu.core_type = #tpu.core_type<tc>, window_params = [{pipeline_mode = #tpu.pipeline_mode<synchronous>, transform_indices = @transform_0, window_bounds = array<i64: 2, 5, 128>}, {transform_indices = @transform_1, window_bounds = array<i64: 1, 128, 384>}, {transform_indices = @transform_2, window_bounds = array<i64: 1, 1, 384>}, {transform_indices = @transform_3, window_bounds = array<i64: 1, 128, 128>}, {transform_indices = @transform_4, window_bounds = array<i64: 1, 1, 128>}, {transform_indices = @transform_5, window_bounds = array<i64: 1, 1, 128>}, {transform_indices = @transform_6, window_bounds = array<i64: 1, 1, 128>}, {transform_indices = @transform_7, window_bounds = array<i64: 1, 128, 512>}, {transform_indices = @transform_8, window_bounds = array<i64: 1, 1, 512>}, {transform_indices = @transform_9, window_bounds = array<i64: 1, 512, 128>}, {transform_indices = @transform_10, window_bounds = array<i64: 1, 1, 128>}, {transform_indices = @transform_11, window_bounds = array<i64: 1, 1, 128>}, {transform_indices = @transform_12, window_bounds = array<i64: 1, 1, 128>}, {pipeline_mode = #tpu.pipeline_mode<synchronous>, transform_indices = @transform_13, window_bounds = array<i64: 128, 128>}, {pipeline_mode = #tpu.pipeline_mode<synchronous>, transform_indices = @transform_14, window_bounds = array<i64: 1, 128>}, {pipeline_mode = #tpu.pipeline_mode<synchronous>, transform_indices = @transform_15, window_bounds = array<i64: 2, 5, 128>}, {pipeline_mode = #tpu.pipeline_mode<synchronous>, transform_indices = @transform_16, window_bounds = array<i64: 2, 128>}]} {
    %c0_i32 = arith.constant 0 : i32
    %0 = arith.cmpi eq, %arg0, %c0_i32 : i32
    %1 = arith.extui %0 : i1 to i32
    %c0_i32_0 = arith.constant 0 : i32
    %2 = arith.cmpi ne, %1, %c0_i32_0 : i32
    scf.if %2 {
      %c0_77 = arith.constant 0 : index
      %c0_78 = arith.constant 0 : index
      %c0_79 = arith.constant 0 : index
      %198 = vector.load %arg1[%c0_77, %c0_78, %c0_79] : memref<2x5x128xf32, #tpu.memory_space<vmem>>, vector<2x5x128xf32>
      %c0_80 = arith.constant 0 : index
      %c0_81 = arith.constant 0 : index
      %c0_82 = arith.constant 0 : index
      %199 = vector.load %arg16[%c0_80, %c0_81, %c0_82] : memref<2x5x128xf32, #tpu.memory_space<vmem>>, vector<2x5x128xf32>
      tpu.vector_store %arg16[%c0_80, %c0_81, %c0_82], %198 {strides = array<i32>} : memref<2x5x128xf32, #tpu.memory_space<vmem>>, vector<2x5x128xf32>,
    } else {
    }
    %c0 = arith.constant 0 : index
    %c0_1 = arith.constant 0 : index
    %c0_2 = arith.constant 0 : index
    %3 = vector.load %arg16[%c0, %c0_1, %c0_2] : memref<2x5x128xf32, #tpu.memory_space<vmem>>, vector<2x5x128xf32>
    %4 = vector.shape_cast %3 : vector<2x5x128xf32> to vector<10x128xf32>
    %5 = arith.truncf %4 : vector<10x128xf32> to vector<10x128xbf16>
    %c0_3 = arith.constant 0 : index
    %c0_4 = arith.constant 0 : index
    %c0_5 = arith.constant 0 : index
    %6 = vector.load %arg2[%c0_3, %c0_4, %c0_5] : memref<1x128x384xbf16, #tpu.memory_space<vmem>>, vector<1x128x384xbf16>
    %7 = vector.shape_cast %6 : vector<1x128x384xbf16> to vector<128x384xbf16>
    %cst = arith.constant dense<0.000000e+00> : vector<10x384xf32>
    %8 = tpu.matmul %5, %7, %cst {dimension_numbers = #tpu.dot_dimension_numbers<[1], [0], [0], [1], [0, 0, 1, 1], [], []>} : vector<10x128xbf16>, vector<128x384xbf16>, vector<10x384xf32> -> vector<10x384xf32>
    %c0_6 = arith.constant 0 : index
    %c0_7 = arith.constant 0 : index
    %c0_8 = arith.constant 0 : index
    %9 = vector.load %arg3[%c0_6, %c0_7, %c0_8] : memref<1x1x384xf32, #tpu.memory_space<vmem>>, vector<1x1x384xf32>
    %10 = vector.shape_cast %9 : vector<1x1x384xf32> to vector<1x384xf32>
    %11 = vector.broadcast %10 : vector<1x384xf32> to vector<10x384xf32>
    %12 = arith.addf %8, %11 : vector<10x384xf32>
    %13 = vector.extract_strided_slice %12 {offsets = [0, 0], sizes = [10, 128], strides = [1, 1]} : vector<10x384xf32> to vector<10x128xf32>
    %14 = vector.extract_strided_slice %12 {offsets = [0, 128], sizes = [10, 128], strides = [1, 1]} : vector<10x384xf32> to vector<10x128xf32>
    %15 = vector.extract_strided_slice %12 {offsets = [0, 256], sizes = [10, 128], strides = [1, 1]} : vector<10x384xf32> to vector<10x128xf32>
    %16 = vector.extract_strided_slice %13 {offsets = [0, 0], sizes = [10, 32], strides = [1, 1]} : vector<10x128xf32> to vector<10x32xf32>
    %17 = vector.shape_cast %16 : vector<10x32xf32> to vector<2x5x32xf32>
    %18 = arith.truncf %17 : vector<2x5x32xf32> to vector<2x5x32xbf16>
    %19 = vector.extract_strided_slice %14 {offsets = [0, 0], sizes = [10, 32], strides = [1, 1]} : vector<10x128xf32> to vector<10x32xf32>
    %20 = vector.shape_cast %19 : vector<10x32xf32> to vector<2x5x32xf32>
    %21 = arith.truncf %20 : vector<2x5x32xf32> to vector<2x5x32xbf16>
    %22 = vector.extract_strided_slice %15 {offsets = [0, 0], sizes = [10, 32], strides = [1, 1]} : vector<10x128xf32> to vector<10x32xf32>
    %23 = vector.shape_cast %22 : vector<10x32xf32> to vector<2x5x32xf32>
    %24 = arith.truncf %23 : vector<2x5x32xf32> to vector<2x5x32xbf16>
    "tpu.trace_start"() <{level = 10 : i32, message = "bqd,bkd->bqk"}> : () -> ()
    %cst_9 = arith.constant dense<0.000000e+00> : vector<2x5x5xf32>
    %25 = tpu.matmul %18, %21, %cst_9 {dimension_numbers = #tpu.dot_dimension_numbers<[2], [2], [1], [1], [0, 0, 0, 1, 1, 1], [0], [0]>} : vector<2x5x32xbf16>, vector<2x5x32xbf16>, vector<2x5x5xf32> -> vector<2x5x5xf32>
    "tpu.trace_stop"() : () -> ()
    %cst_10 = arith.constant 0.176776692 : f32
    %26 = vector.broadcast %cst_10 : f32 to vector<2x5x5xf32>
    %27 = arith.mulf %25, %26 : vector<2x5x5xf32>
    %cst_11 = arith.constant dense<0xFF800000> : vector<2x5xf32>
    %28 = vector.multi_reduction <maximumf>, %27, %cst_11 [2] : vector<2x5x5xf32> to vector<2x5xf32>
    %29 = vector.shape_cast %28 : vector<2x5xf32> to vector<2x5x1xf32>
    %30 = vector.broadcast %29 : vector<2x5x1xf32> to vector<2x5x5xf32>
    %31 = arith.subf %27, %30 : vector<2x5x5xf32>
    %32 = math.exp %31 : vector<2x5x5xf32>
    %cst_12 = arith.constant dense<0.000000e+00> : vector<2x5xf32>
    %33 = vector.multi_reduction <add>, %32, %cst_12 [2] : vector<2x5x5xf32> to vector<2x5xf32>
    %34 = vector.shape_cast %33 : vector<2x5xf32> to vector<2x5x1xf32>
    %35 = tpu.reciprocal %34 {approx = true} : vector<2x5x1xf32> -> vector<2x5x1xf32>
    %36 = vector.broadcast %35 : vector<2x5x1xf32> to vector<2x5x5xf32>
    %37 = arith.mulf %32, %36 : vector<2x5x5xf32>
    %38 = arith.truncf %37 : vector<2x5x5xf32> to vector<2x5x5xbf16>
    "tpu.trace_start"() <{level = 10 : i32, message = "bqk,bkd->bqd"}> : () -> ()
    %cst_13 = arith.constant dense<0.000000e+00> : vector<2x5x32xf32>
    %39 = tpu.matmul %38, %24, %cst_13 {dimension_numbers = #tpu.dot_dimension_numbers<[2], [1], [1], [2], [0, 0, 0, 1, 1, 2], [0], [0]>} : vector<2x5x5xbf16>, vector<2x5x32xbf16>, vector<2x5x32xf32> -> vector<2x5x32xf32>
    "tpu.trace_stop"() : () -> ()
    %40 = vector.shape_cast %39 : vector<2x5x32xf32> to vector<10x32xf32>
    %41 = vector.extract_strided_slice %13 {offsets = [0, 32], sizes = [10, 32], strides = [1, 1]} : vector<10x128xf32> to vector<10x32xf32>
    %42 = vector.shape_cast %41 : vector<10x32xf32> to vector<2x5x32xf32>
    %43 = arith.truncf %42 : vector<2x5x32xf32> to vector<2x5x32xbf16>
    %44 = vector.extract_strided_slice %14 {offsets = [0, 32], sizes = [10, 32], strides = [1, 1]} : vector<10x128xf32> to vector<10x32xf32>
    %45 = vector.shape_cast %44 : vector<10x32xf32> to vector<2x5x32xf32>
    %46 = arith.truncf %45 : vector<2x5x32xf32> to vector<2x5x32xbf16>
    %47 = vector.extract_strided_slice %15 {offsets = [0, 32], sizes = [10, 32], strides = [1, 1]} : vector<10x128xf32> to vector<10x32xf32>
    %48 = vector.shape_cast %47 : vector<10x32xf32> to vector<2x5x32xf32>
    %49 = arith.truncf %48 : vector<2x5x32xf32> to vector<2x5x32xbf16>
    "tpu.trace_start"() <{level = 10 : i32, message = "bqd,bkd->bqk"}> : () -> ()
    %cst_14 = arith.constant dense<0.000000e+00> : vector<2x5x5xf32>
    %50 = tpu.matmul %43, %46, %cst_14 {dimension_numbers = #tpu.dot_dimension_numbers<[2], [2], [1], [1], [0, 0, 0, 1, 1, 1], [0], [0]>} : vector<2x5x32xbf16>, vector<2x5x32xbf16>, vector<2x5x5xf32> -> vector<2x5x5xf32>
    "tpu.trace_stop"() : () -> ()
    %cst_15 = arith.constant 0.176776692 : f32
    %51 = vector.broadcast %cst_15 : f32 to vector<2x5x5xf32>
    %52 = arith.mulf %50, %51 : vector<2x5x5xf32>
    %cst_16 = arith.constant dense<0xFF800000> : vector<2x5xf32>
    %53 = vector.multi_reduction <maximumf>, %52, %cst_16 [2] : vector<2x5x5xf32> to vector<2x5xf32>
    %54 = vector.shape_cast %53 : vector<2x5xf32> to vector<2x5x1xf32>
    %55 = vector.broadcast %54 : vector<2x5x1xf32> to vector<2x5x5xf32>
    %56 = arith.subf %52, %55 : vector<2x5x5xf32>
    %57 = math.exp %56 : vector<2x5x5xf32>
    %cst_17 = arith.constant dense<0.000000e+00> : vector<2x5xf32>
    %58 = vector.multi_reduction <add>, %57, %cst_17 [2] : vector<2x5x5xf32> to vector<2x5xf32>
    %59 = vector.shape_cast %58 : vector<2x5xf32> to vector<2x5x1xf32>
    %60 = tpu.reciprocal %59 {approx = true} : vector<2x5x1xf32> -> vector<2x5x1xf32>
    %61 = vector.broadcast %60 : vector<2x5x1xf32> to vector<2x5x5xf32>
    %62 = arith.mulf %57, %61 : vector<2x5x5xf32>
    %63 = arith.truncf %62 : vector<2x5x5xf32> to vector<2x5x5xbf16>
    "tpu.trace_start"() <{level = 10 : i32, message = "bqk,bkd->bqd"}> : () -> ()
    %cst_18 = arith.constant dense<0.000000e+00> : vector<2x5x32xf32>
    %64 = tpu.matmul %63, %49, %cst_18 {dimension_numbers = #tpu.dot_dimension_numbers<[2], [1], [1], [2], [0, 0, 0, 1, 1, 2], [0], [0]>} : vector<2x5x5xbf16>, vector<2x5x32xbf16>, vector<2x5x32xf32> -> vector<2x5x32xf32>
    "tpu.trace_stop"() : () -> ()
    %65 = vector.shape_cast %64 : vector<2x5x32xf32> to vector<10x32xf32>
    %66 = vector.extract_strided_slice %13 {offsets = [0, 64], sizes = [10, 32], strides = [1, 1]} : vector<10x128xf32> to vector<10x32xf32>
    %67 = vector.shape_cast %66 : vector<10x32xf32> to vector<2x5x32xf32>
    %68 = arith.truncf %67 : vector<2x5x32xf32> to vector<2x5x32xbf16>
    %69 = vector.extract_strided_slice %14 {offsets = [0, 64], sizes = [10, 32], strides = [1, 1]} : vector<10x128xf32> to vector<10x32xf32>
    %70 = vector.shape_cast %69 : vector<10x32xf32> to vector<2x5x32xf32>
    %71 = arith.truncf %70 : vector<2x5x32xf32> to vector<2x5x32xbf16>
    %72 = vector.extract_strided_slice %15 {offsets = [0, 64], sizes = [10, 32], strides = [1, 1]} : vector<10x128xf32> to vector<10x32xf32>
    %73 = vector.shape_cast %72 : vector<10x32xf32> to vector<2x5x32xf32>
    %74 = arith.truncf %73 : vector<2x5x32xf32> to vector<2x5x32xbf16>
    "tpu.trace_start"() <{level = 10 : i32, message = "bqd,bkd->bqk"}> : () -> ()
    %cst_19 = arith.constant dense<0.000000e+00> : vector<2x5x5xf32>
    %75 = tpu.matmul %68, %71, %cst_19 {dimension_numbers = #tpu.dot_dimension_numbers<[2], [2], [1], [1], [0, 0, 0, 1, 1, 1], [0], [0]>} : vector<2x5x32xbf16>, vector<2x5x32xbf16>, vector<2x5x5xf32> -> vector<2x5x5xf32>
    "tpu.trace_stop"() : () -> ()
    %cst_20 = arith.constant 0.176776692 : f32
    %76 = vector.broadcast %cst_20 : f32 to vector<2x5x5xf32>
    %77 = arith.mulf %75, %76 : vector<2x5x5xf32>
    %cst_21 = arith.constant dense<0xFF800000> : vector<2x5xf32>
    %78 = vector.multi_reduction <maximumf>, %77, %cst_21 [2] : vector<2x5x5xf32> to vector<2x5xf32>
    %79 = vector.shape_cast %78 : vector<2x5xf32> to vector<2x5x1xf32>
    %80 = vector.broadcast %79 : vector<2x5x1xf32> to vector<2x5x5xf32>
    %81 = arith.subf %77, %80 : vector<2x5x5xf32>
    %82 = math.exp %81 : vector<2x5x5xf32>
    %cst_22 = arith.constant dense<0.000000e+00> : vector<2x5xf32>
    %83 = vector.multi_reduction <add>, %82, %cst_22 [2] : vector<2x5x5xf32> to vector<2x5xf32>
    %84 = vector.shape_cast %83 : vector<2x5xf32> to vector<2x5x1xf32>
    %85 = tpu.reciprocal %84 {approx = true} : vector<2x5x1xf32> -> vector<2x5x1xf32>
    %86 = vector.broadcast %85 : vector<2x5x1xf32> to vector<2x5x5xf32>
    %87 = arith.mulf %82, %86 : vector<2x5x5xf32>
    %88 = arith.truncf %87 : vector<2x5x5xf32> to vector<2x5x5xbf16>
    "tpu.trace_start"() <{level = 10 : i32, message = "bqk,bkd->bqd"}> : () -> ()
    %cst_23 = arith.constant dense<0.000000e+00> : vector<2x5x32xf32>
    %89 = tpu.matmul %88, %74, %cst_23 {dimension_numbers = #tpu.dot_dimension_numbers<[2], [1], [1], [2], [0, 0, 0, 1, 1, 2], [0], [0]>} : vector<2x5x5xbf16>, vector<2x5x32xbf16>, vector<2x5x32xf32> -> vector<2x5x32xf32>
    "tpu.trace_stop"() : () -> ()
    %90 = vector.shape_cast %89 : vector<2x5x32xf32> to vector<10x32xf32>
    %91 = vector.extract_strided_slice %13 {offsets = [0, 96], sizes = [10, 32], strides = [1, 1]} : vector<10x128xf32> to vector<10x32xf32>
    %92 = vector.shape_cast %91 : vector<10x32xf32> to vector<2x5x32xf32>
    %93 = arith.truncf %92 : vector<2x5x32xf32> to vector<2x5x32xbf16>
    %94 = vector.extract_strided_slice %14 {offsets = [0, 96], sizes = [10, 32], strides = [1, 1]} : vector<10x128xf32> to vector<10x32xf32>
    %95 = vector.shape_cast %94 : vector<10x32xf32> to vector<2x5x32xf32>
    %96 = arith.truncf %95 : vector<2x5x32xf32> to vector<2x5x32xbf16>
    %97 = vector.extract_strided_slice %15 {offsets = [0, 96], sizes = [10, 32], strides = [1, 1]} : vector<10x128xf32> to vector<10x32xf32>
    %98 = vector.shape_cast %97 : vector<10x32xf32> to vector<2x5x32xf32>
    %99 = arith.truncf %98 : vector<2x5x32xf32> to vector<2x5x32xbf16>
    "tpu.trace_start"() <{level = 10 : i32, message = "bqd,bkd->bqk"}> : () -> ()
    %cst_24 = arith.constant dense<0.000000e+00> : vector<2x5x5xf32>
    %100 = tpu.matmul %93, %96, %cst_24 {dimension_numbers = #tpu.dot_dimension_numbers<[2], [2], [1], [1], [0, 0, 0, 1, 1, 1], [0], [0]>} : vector<2x5x32xbf16>, vector<2x5x32xbf16>, vector<2x5x5xf32> -> vector<2x5x5xf32>
    "tpu.trace_stop"() : () -> ()
    %cst_25 = arith.constant 0.176776692 : f32
    %101 = vector.broadcast %cst_25 : f32 to vector<2x5x5xf32>
    %102 = arith.mulf %100, %101 : vector<2x5x5xf32>
    %cst_26 = arith.constant dense<0xFF800000> : vector<2x5xf32>
    %103 = vector.multi_reduction <maximumf>, %102, %cst_26 [2] : vector<2x5x5xf32> to vector<2x5xf32>
    %104 = vector.shape_cast %103 : vector<2x5xf32> to vector<2x5x1xf32>
    %105 = vector.broadcast %104 : vector<2x5x1xf32> to vector<2x5x5xf32>
    %106 = arith.subf %102, %105 : vector<2x5x5xf32>
    %107 = math.exp %106 : vector<2x5x5xf32>
    %cst_27 = arith.constant dense<0.000000e+00> : vector<2x5xf32>
    %108 = vector.multi_reduction <add>, %107, %cst_27 [2] : vector<2x5x5xf32> to vector<2x5xf32>
    %109 = vector.shape_cast %108 : vector<2x5xf32> to vector<2x5x1xf32>
    %110 = tpu.reciprocal %109 {approx = true} : vector<2x5x1xf32> -> vector<2x5x1xf32>
    %111 = vector.broadcast %110 : vector<2x5x1xf32> to vector<2x5x5xf32>
    %112 = arith.mulf %107, %111 : vector<2x5x5xf32>
    %113 = arith.truncf %112 : vector<2x5x5xf32> to vector<2x5x5xbf16>
    "tpu.trace_start"() <{level = 10 : i32, message = "bqk,bkd->bqd"}> : () -> ()
    %cst_28 = arith.constant dense<0.000000e+00> : vector<2x5x32xf32>
    %114 = tpu.matmul %113, %99, %cst_28 {dimension_numbers = #tpu.dot_dimension_numbers<[2], [1], [1], [2], [0, 0, 0, 1, 1, 2], [0], [0]>} : vector<2x5x5xbf16>, vector<2x5x32xbf16>, vector<2x5x32xf32> -> vector<2x5x32xf32>
    "tpu.trace_stop"() : () -> ()
    %115 = vector.shape_cast %114 : vector<2x5x32xf32> to vector<10x32xf32>
    %116 = tpu.concatenate %40, %65, %90, %115 in 1 : vector<10x32xf32>, vector<10x32xf32>, vector<10x32xf32>, vector<10x32xf32> -> vector<10x128xf32>
    %117 = arith.truncf %116 : vector<10x128xf32> to vector<10x128xbf16>
    %c0_29 = arith.constant 0 : index
    %c0_30 = arith.constant 0 : index
    %c0_31 = arith.constant 0 : index
    %118 = vector.load %arg4[%c0_29, %c0_30, %c0_31] : memref<1x128x128xbf16, #tpu.memory_space<vmem>>, vector<1x128x128xbf16>
    %119 = vector.shape_cast %118 : vector<1x128x128xbf16> to vector<128x128xbf16>
    %cst_32 = arith.constant dense<0.000000e+00> : vector<10x128xf32>
    %120 = tpu.matmul %117, %119, %cst_32 {dimension_numbers = #tpu.dot_dimension_numbers<[1], [0], [0], [1], [0, 0, 1, 1], [], []>} : vector<10x128xbf16>, vector<128x128xbf16>, vector<10x128xf32> -> vector<10x128xf32>
    %c0_33 = arith.constant 0 : index
    %c0_34 = arith.constant 0 : index
    %c0_35 = arith.constant 0 : index
    %121 = vector.load %arg5[%c0_33, %c0_34, %c0_35] : memref<1x1x128xf32, #tpu.memory_space<vmem>>, vector<1x1x128xf32>
    %122 = vector.shape_cast %121 : vector<1x1x128xf32> to vector<1x128xf32>
    %123 = vector.broadcast %122 : vector<1x128xf32> to vector<10x128xf32>
    %124 = arith.addf %120, %123 : vector<10x128xf32>
    %125 = arith.addf %4, %124 : vector<10x128xf32>
    %c0_36 = arith.constant 0 : index
    %c0_37 = arith.constant 0 : index
    %c0_38 = arith.constant 0 : index
    %126 = vector.load %arg6[%c0_36, %c0_37, %c0_38] : memref<1x1x128xf32, #tpu.memory_space<vmem>>, vector<1x1x128xf32>
    %127 = vector.shape_cast %126 : vector<1x1x128xf32> to vector<1x128xf32>
    %c0_39 = arith.constant 0 : index
    %c0_40 = arith.constant 0 : index
    %c0_41 = arith.constant 0 : index
    %128 = vector.load %arg7[%c0_39, %c0_40, %c0_41] : memref<1x1x128xf32, #tpu.memory_space<vmem>>, vector<1x1x128xf32>
    %129 = vector.shape_cast %128 : vector<1x1x128xf32> to vector<1x128xf32>
    %cst_42 = arith.constant dense<0.000000e+00> : vector<10xf32>
    %130 = vector.multi_reduction <add>, %125, %cst_42 [1] : vector<10x128xf32> to vector<10xf32>
    %131 = vector.shape_cast %130 : vector<10xf32> to vector<10x1xf32>
    %cst_43 = arith.constant 1.280000e+02 : f32
    %132 = vector.broadcast %cst_43 : f32 to vector<10x1xf32>
    %133 = arith.divf %131, %132 : vector<10x1xf32>
    %134 = vector.broadcast %133 : vector<10x1xf32> to vector<10x128xf32>
    %135 = arith.subf %125, %134 : vector<10x128xf32>
    %136 = arith.mulf %135, %135 : vector<10x128xf32>
    %cst_44 = arith.constant dense<0.000000e+00> : vector<10xf32>
    %137 = vector.multi_reduction <add>, %136, %cst_44 [1] : vector<10x128xf32> to vector<10xf32>
    %138 = vector.shape_cast %137 : vector<10xf32> to vector<10x1xf32>
    %cst_45 = arith.constant 1.280000e+02 : f32
    %139 = vector.broadcast %cst_45 : f32 to vector<10x1xf32>
    %140 = arith.divf %138, %139 : vector<10x1xf32>
    %cst_46 = arith.constant 9.99999974E-6 : f32
    %141 = vector.broadcast %cst_46 : f32 to vector<10x1xf32>
    %142 = arith.addf %140, %141 : vector<10x1xf32>
    %143 = math.rsqrt %142 : vector<10x1xf32>
    %144 = vector.broadcast %143 : vector<10x1xf32> to vector<10x128xf32>
    %145 = arith.mulf %135, %144 : vector<10x128xf32>
    %146 = vector.broadcast %127 : vector<1x128xf32> to vector<10x128xf32>
    %147 = arith.mulf %145, %146 : vector<10x128xf32>
    %148 = vector.broadcast %129 : vector<1x128xf32> to vector<10x128xf32>
    %149 = arith.addf %147, %148 : vector<10x128xf32>
    %c0_47 = arith.constant 0 : index
    %c0_48 = arith.constant 0 : index
    %c0_49 = arith.constant 0 : index
    %150 = vector.load %arg8[%c0_47, %c0_48, %c0_49] : memref<1x128x512xbf16, #tpu.memory_space<vmem>>, vector<1x128x512xbf16>
    %151 = vector.shape_cast %150 : vector<1x128x512xbf16> to vector<128x512xbf16>
    %c0_50 = arith.constant 0 : index
    %c0_51 = arith.constant 0 : index
    %c0_52 = arith.constant 0 : index
    %152 = vector.load %arg9[%c0_50, %c0_51, %c0_52] : memref<1x1x512xf32, #tpu.memory_space<vmem>>, vector<1x1x512xf32>
    %153 = vector.shape_cast %152 : vector<1x1x512xf32> to vector<1x512xf32>
    %c0_53 = arith.constant 0 : index
    %c0_54 = arith.constant 0 : index
    %c0_55 = arith.constant 0 : index
    %154 = vector.load %arg10[%c0_53, %c0_54, %c0_55] : memref<1x512x128xbf16, #tpu.memory_space<vmem>>, vector<1x512x128xbf16>
    %155 = vector.shape_cast %154 : vector<1x512x128xbf16> to vector<512x128xbf16>
    %c0_56 = arith.constant 0 : index
    %c0_57 = arith.constant 0 : index
    %c0_58 = arith.constant 0 : index
    %156 = vector.load %arg11[%c0_56, %c0_57, %c0_58] : memref<1x1x128xf32, #tpu.memory_space<vmem>>, vector<1x1x128xf32>
    %157 = vector.shape_cast %156 : vector<1x1x128xf32> to vector<1x128xf32>
    %158 = arith.truncf %149 : vector<10x128xf32> to vector<10x128xbf16>
    %cst_59 = arith.constant dense<0.000000e+00> : vector<10x512xf32>
    %159 = tpu.matmul %158, %151, %cst_59 {dimension_numbers = #tpu.dot_dimension_numbers<[1], [0], [0], [1], [0, 0, 1, 1], [], []>} : vector<10x128xbf16>, vector<128x512xbf16>, vector<10x512xf32> -> vector<10x512xf32>
    %160 = vector.broadcast %153 : vector<1x512xf32> to vector<10x512xf32>
    %161 = arith.addf %159, %160 : vector<10x512xf32>
    %cst_60 = arith.constant 0.000000e+00 : f32
    %162 = vector.broadcast %cst_60 : f32 to vector<10x512xf32>
    %163 = arith.maximumf %161, %162 : vector<10x512xf32>
    %164 = arith.truncf %163 : vector<10x512xf32> to vector<10x512xbf16>
    %cst_61 = arith.constant dense<0.000000e+00> : vector<10x128xf32>
    %165 = tpu.matmul %164, %155, %cst_61 {dimension_numbers = #tpu.dot_dimension_numbers<[1], [0], [0], [1], [0, 0, 1, 1], [], []>} : vector<10x512xbf16>, vector<512x128xbf16>, vector<10x128xf32> -> vector<10x128xf32>
    %166 = vector.broadcast %157 : vector<1x128xf32> to vector<10x128xf32>
    %167 = arith.addf %165, %166 : vector<10x128xf32>
    %168 = arith.addf %149, %167 : vector<10x128xf32>
    %c0_62 = arith.constant 0 : index
    %c0_63 = arith.constant 0 : index
    %c0_64 = arith.constant 0 : index
    %169 = vector.load %arg12[%c0_62, %c0_63, %c0_64] : memref<1x1x128xf32, #tpu.memory_space<vmem>>, vector<1x1x128xf32>
    %170 = vector.shape_cast %169 : vector<1x1x128xf32> to vector<1x128xf32>
    %c0_65 = arith.constant 0 : index
    %c0_66 = arith.constant 0 : index
    %c0_67 = arith.constant 0 : index
    %171 = vector.load %arg13[%c0_65, %c0_66, %c0_67] : memref<1x1x128xf32, #tpu.memory_space<vmem>>, vector<1x1x128xf32>
    %172 = vector.shape_cast %171 : vector<1x1x128xf32> to vector<1x128xf32>
    %cst_68 = arith.constant dense<0.000000e+00> : vector<10xf32>
    %173 = vector.multi_reduction <add>, %168, %cst_68 [1] : vector<10x128xf32> to vector<10xf32>
    %174 = vector.shape_cast %173 : vector<10xf32> to vector<10x1xf32>
    %cst_69 = arith.constant 1.280000e+02 : f32
    %175 = vector.broadcast %cst_69 : f32 to vector<10x1xf32>
    %176 = arith.divf %174, %175 : vector<10x1xf32>
    %177 = vector.broadcast %176 : vector<10x1xf32> to vector<10x128xf32>
    %178 = arith.subf %168, %177 : vector<10x128xf32>
    %179 = arith.mulf %178, %178 : vector<10x128xf32>
    %cst_70 = arith.constant dense<0.000000e+00> : vector<10xf32>
    %180 = vector.multi_reduction <add>, %179, %cst_70 [1] : vector<10x128xf32> to vector<10xf32>
    %181 = vector.shape_cast %180 : vector<10xf32> to vector<10x1xf32>
    %cst_71 = arith.constant 1.280000e+02 : f32
    %182 = vector.broadcast %cst_71 : f32 to vector<10x1xf32>
    %183 = arith.divf %181, %182 : vector<10x1xf32>
    %cst_72 = arith.constant 9.99999974E-6 : f32
    %184 = vector.broadcast %cst_72 : f32 to vector<10x1xf32>
    %185 = arith.addf %183, %184 : vector<10x1xf32>
    %186 = math.rsqrt %185 : vector<10x1xf32>
    %187 = vector.broadcast %186 : vector<10x1xf32> to vector<10x128xf32>
    %188 = arith.mulf %178, %187 : vector<10x128xf32>
    %189 = vector.broadcast %170 : vector<1x128xf32> to vector<10x128xf32>
    %190 = arith.mulf %188, %189 : vector<10x128xf32>
    %191 = vector.broadcast %172 : vector<1x128xf32> to vector<10x128xf32>
    %192 = arith.addf %190, %191 : vector<10x128xf32>
    %193 = vector.shape_cast %192 : vector<10x128xf32> to vector<2x5x128xf32>
    %c0_73 = arith.constant 0 : index
    %c0_74 = arith.constant 0 : index
    %c0_75 = arith.constant 0 : index
    %194 = vector.load %arg16[%c0_73, %c0_74, %c0_75] : memref<2x5x128xf32, #tpu.memory_space<vmem>>, vector<2x5x128xf32>
    tpu.vector_store %arg16[%c0_73, %c0_74, %c0_75], %193 {strides = array<i32>} : memref<2x5x128xf32, #tpu.memory_space<vmem>>, vector<2x5x128xf32>,
    %c1_i32 = arith.constant 1 : i32
    %195 = arith.cmpi eq, %arg0, %c1_i32 : i32
    %196 = arith.extui %195 : i1 to i32
    %c0_i32_76 = arith.constant 0 : i32
    %197 = arith.cmpi ne, %196, %c0_i32_76 : i32
    scf.if %197 {
      %198 = vector.shape_cast %192 : vector<10x128xf32> to vector<2x5x128xf32>
      %199 = vector.extract_strided_slice %198 {offsets = [0, 0, 0], sizes = [2, 1, 128], strides = [1, 1, 1]} : vector<2x5x128xf32> to vector<2x1x128xf32>
      %200 = vector.shape_cast %199 : vector<2x1x128xf32> to vector<2x128xf32>
      %201 = arith.truncf %200 : vector<2x128xf32> to vector<2x128xbf16>
      %c0_77 = arith.constant 0 : index
      %c0_78 = arith.constant 0 : index
      %202 = vector.load %arg14[%c0_77, %c0_78] : memref<128x128xbf16, #tpu.memory_space<vmem>>, vector<128x128xbf16>
      %cst_79 = arith.constant dense<0.000000e+00> : vector<2x128xf32>
      %203 = tpu.matmul %201, %202, %cst_79 {dimension_numbers = #tpu.dot_dimension_numbers<[1], [0], [0], [1], [0, 0, 1, 1], [], []>} : vector<2x128xbf16>, vector<128x128xbf16>, vector<2x128xf32> -> vector<2x128xf32>
      %c0_80 = arith.constant 0 : index
      %c0_81 = arith.constant 0 : index
      %204 = vector.load %arg15[%c0_80, %c0_81] : memref<1x128xf32, #tpu.memory_space<vmem>>, vector<1x128xf32>
      %205 = vector.broadcast %204 : vector<1x128xf32> to vector<2x128xf32>
      %206 = arith.addf %203, %205 : vector<2x128xf32>
      %c0_82 = arith.constant 0 : index
      %c0_83 = arith.constant 0 : index
      %207 = vector.load %arg17[%c0_82, %c0_83] : memref<2x128xf32, #tpu.memory_space<vmem>>, vector<2x128xf32>
      tpu.vector_store %arg17[%c0_82, %c0_83], %206 {strides = array<i32>} : memref<2x128xf32, #tpu.memory_space<vmem>>, vector<2x128xf32>,
    } else {
    }
    return
  }
  func.func @transform_0(%arg0: i32) -> (i32, i32, i32) {
    %c0_i32 = arith.constant 0 : i32
    %c0_i32_0 = arith.constant 0 : i32
    %c0_i32_1 = arith.constant 0 : i32
    %c0_i32_2 = arith.constant 0 : i32
    return %c0_i32, %c0_i32_0, %c0_i32_1 : i32, i32, i32
  }
  func.func @transform_1(%arg0: i32) -> (i32, i32, i32) {
    %c0_i32 = arith.constant 0 : i32
    %c0_i32_0 = arith.constant 0 : i32
    %c0_i32_1 = arith.constant 0 : i32
    return %arg0, %c0_i32, %c0_i32_0 : i32, i32, i32
  }
  func.func @transform_2(%arg0: i32) -> (i32, i32, i32) {
    %c0_i32 = arith.constant 0 : i32
    %c0_i32_0 = arith.constant 0 : i32
    %c0_i32_1 = arith.constant 0 : i32
    return %arg0, %c0_i32, %c0_i32_0 : i32, i32, i32
  }
  func.func @transform_3(%arg0: i32) -> (i32, i32, i32) {
    %c0_i32 = arith.constant 0 : i32
    %c0_i32_0 = arith.constant 0 : i32
    %c0_i32_1 = arith.constant 0 : i32
    return %arg0, %c0_i32, %c0_i32_0 : i32, i32, i32
  }
  func.func @transform_4(%arg0: i32) -> (i32, i32, i32) {
    %c0_i32 = arith.constant 0 : i32
    %c0_i32_0 = arith.constant 0 : i32
    %c0_i32_1 = arith.constant 0 : i32
    return %arg0, %c0_i32, %c0_i32_0 : i32, i32, i32
  }
  func.func @transform_5(%arg0: i32) -> (i32, i32, i32) {
    %c0_i32 = arith.constant 0 : i32
    %c0_i32_0 = arith.constant 0 : i32
    %c0_i32_1 = arith.constant 0 : i32
    return %arg0, %c0_i32, %c0_i32_0 : i32, i32, i32
  }
  func.func @transform_6(%arg0: i32) -> (i32, i32, i32) {
    %c0_i32 = arith.constant 0 : i32
    %c0_i32_0 = arith.constant 0 : i32
    %c0_i32_1 = arith.constant 0 : i32
    return %arg0, %c0_i32, %c0_i32_0 : i32, i32, i32
  }
  func.func @transform_7(%arg0: i32) -> (i32, i32, i32) {
    %c0_i32 = arith.constant 0 : i32
    %c0_i32_0 = arith.constant 0 : i32
    %c0_i32_1 = arith.constant 0 : i32
    return %arg0, %c0_i32, %c0_i32_0 : i32, i32, i32
  }
  func.func @transform_8(%arg0: i32) -> (i32, i32, i32) {
    %c0_i32 = arith.constant 0 : i32
    %c0_i32_0 = arith.constant 0 : i32
    %c0_i32_1 = arith.constant 0 : i32
    return %arg0, %c0_i32, %c0_i32_0 : i32, i32, i32
  }
  func.func @transform_9(%arg0: i32) -> (i32, i32, i32) {
    %c0_i32 = arith.constant 0 : i32
    %c0_i32_0 = arith.constant 0 : i32
    %c0_i32_1 = arith.constant 0 : i32
    return %arg0, %c0_i32, %c0_i32_0 : i32, i32, i32
  }
  func.func @transform_10(%arg0: i32) -> (i32, i32, i32) {
    %c0_i32 = arith.constant 0 : i32
    %c0_i32_0 = arith.constant 0 : i32
    %c0_i32_1 = arith.constant 0 : i32
    return %arg0, %c0_i32, %c0_i32_0 : i32, i32, i32
  }
  func.func @transform_11(%arg0: i32) -> (i32, i32, i32) {
    %c0_i32 = arith.constant 0 : i32
    %c0_i32_0 = arith.constant 0 : i32
    %c0_i32_1 = arith.constant 0 : i32
    return %arg0, %c0_i32, %c0_i32_0 : i32, i32, i32
  }
  func.func @transform_12(%arg0: i32) -> (i32, i32, i32) {
    %c0_i32 = arith.constant 0 : i32
    %c0_i32_0 = arith.constant 0 : i32
    %c0_i32_1 = arith.constant 0 : i32
    return %arg0, %c0_i32, %c0_i32_0 : i32, i32, i32
  }
  func.func @transform_13(%arg0: i32) -> (i32, i32) {
    %c0_i32 = arith.constant 0 : i32
    %c0_i32_0 = arith.constant 0 : i32
    %c0_i32_1 = arith.constant 0 : i32
    return %c0_i32, %c0_i32_0 : i32, i32
  }
  func.func @transform_14(%arg0: i32) -> (i32, i32) {
    %c0_i32 = arith.constant 0 : i32
    %c0_i32_0 = arith.constant 0 : i32
    %c0_i32_1 = arith.constant 0 : i32
    return %c0_i32, %c0_i32_0 : i32, i32
  }
  func.func @transform_15(%arg0: i32) -> (i32, i32, i32) {
    %c0_i32 = arith.constant 0 : i32
    %c0_i32_0 = arith.constant 0 : i32
    %c0_i32_1 = arith.constant 0 : i32
    %c0_i32_2 = arith.constant 0 : i32
    return %c0_i32, %c0_i32_0, %c0_i32_1 : i32, i32, i32
  }
  func.func @transform_16(%arg0: i32) -> (i32, i32) {
    %c0_i32 = arith.constant 0 : i32
    %c0_i32_0 = arith.constant 0 : i32
    %c0_i32_1 = arith.constant 0 : i32
    return %c0_i32, %c0_i32_0 : i32, i32
  }
}

</mosaic_0001>

<llo_original>
// kernel: vitar_forward.3
$region0: #{vitar_forward.3}
  #allocation0 [shape = 'u32[]', space=smem, size = 0x4, offset = 0x4, fixed_abs, tag = 'smem constant byte address 0x4 - core index']
  #allocation1 [shape = 'u32[144,128]{1,0:T(1,128)}', space=vmem, size = 0x12000, scoped, tag = 'internal scratch']
  %s0 = inlined_call_operand.vmem [shape: bf16[2,16,768], index: 0, kind: input, shape index: {}]
  %s1 = inlined_call_operand.vmem [shape: bf16[768,128], index: 1, kind: input, shape index: {}]
  %s2 = inlined_call_operand.vmem [shape: f32[1,128], index: 2, kind: input, shape index: {}]
  %s3 = inlined_call_operand.vmem [shape: f32[16,128], index: 3, kind: input, shape index: {}]
  %s4 = inlined_call_operand.vmem [shape: f32[2,16,128], index: 4, kind: output, shape index: {}]
  %s5 = sld [smem:[#allocation0]]
  $region26: #{vitar_forward.3} parent=0
    _
  %s7 = ssub.s32 1, %s5
  %s8 = scalar_select 0, %s7, %s5
  // Predicated region
  $region2: #{vitar_forward.3} parent=0 // pred_check
    _
  $region3: #{vitar_forward.3} parent=0 // pred_check_branch
    %10 = sbr.rel (0) target = $region5
  $region4: #{vitar_forward.3} parent=0 // pred_region
    _
  $region5: #{vitar_forward.3} parent=0 // pred_fallthru
    _
  // Predicated region
  $region6: #{vitar_forward.3} parent=0 // pred_check
    _
  $region7: #{vitar_forward.3} parent=0 // pred_check_branch
    %12 = sbr.rel (0) target = $region9
  $region8: #{vitar_forward.3} parent=0 // pred_region
    _
  $region9: #{vitar_forward.3} parent=0 // pred_fallthru
    _
  // Predicated region
  $region10: #{vitar_forward.3} parent=0 // pred_check
    _
  $region11: #{vitar_forward.3} parent=0 // pred_check_branch
    %14 = sbr.rel (0) target = $region13
  $region12: #{vitar_forward.3} parent=0 // pred_region
    _
  $region13: #{vitar_forward.3} parent=0 // pred_fallthru
    _
  // Predicated region
  $region14: #{vitar_forward.3} parent=0 // pred_check
    _
  $region15: #{vitar_forward.3} parent=0 // pred_check_branch
    %16 = sbr.rel (0) target = $region17
  $region16: #{vitar_forward.3} parent=0 // pred_region
    _
  $region17: #{vitar_forward.3} parent=0 // pred_fallthru
    _
  %v18 = vld [vmem:[%s0] sm:$0xff]
  %v19 = vld [vmem:[%s0 + $0x8] sm:$0xff]
  %v20 = vld [vmem:[%s0 + $0x10] sm:$0xff]
  %v21 = vld [vmem:[%s0 + $0x18] sm:$0xff]
  %v22 = vld [vmem:[%s0 + $0x20] sm:$0xff]
  %v23 = vld [vmem:[%s0 + $0x28] sm:$0xff]
  %v24 = vld [vmem:[%s0 + $0x30] sm:$0xff]
  %v25 = vld [vmem:[%s0 + $0x38] sm:$0xff]
  %v26 = vld [vmem:[%s0 + $0x40] sm:$0xff]
  %v27 = vld [vmem:[%s0 + $0x48] sm:$0xff]
  %v28 = vld [vmem:[%s0 + $0x50] sm:$0xff]
  %v29 = vld [vmem:[%s0 + $0x58] sm:$0xff]
  %v30 = vld [vmem:[%s1] sm:$0xf]
  %v31 = vld [vmem:[%s1 + $0x4] sm:$0xf]
  %v32 = vld [vmem:[%s1 + $0x8] sm:$0xf]
  %v33 = vld [vmem:[%s1 + $0xc] sm:$0xf]
  %v34 = vld [vmem:[%s1 + $0x10] sm:$0xf]
  %v35 = vld [vmem:[%s1 + $0x14] sm:$0xf]
  %v36 = vld [vmem:[%s1 + $0x18] sm:$0xf]
  %v37 = vld [vmem:[%s1 + $0x1c] sm:$0xf]
  %v38 = vld [vmem:[%s1 + $0x20] sm:$0xf]
  %v39 = vld [vmem:[%s1 + $0x24] sm:$0xf]
  %v40 = vld [vmem:[%s1 + $0x28] sm:$0xf]
  %v41 = vld [vmem:[%s1 + $0x2c] sm:$0xf]
  %v42 = vld [vmem:[%s1 + $0x30] sm:$0xf]
  %v43 = vld [vmem:[%s1 + $0x34] sm:$0xf]
  %v44 = vld [vmem:[%s1 + $0x38] sm:$0xf]
  %v45 = vld [vmem:[%s1 + $0x3c] sm:$0xf]
  %v46 = vld [vmem:[%s1 + $0x40] sm:$0xf]
  %v47 = vld [vmem:[%s1 + $0x44] sm:$0xf]
  %v48 = vld [vmem:[%s1 + $0x48] sm:$0xf]
  %v49 = vld [vmem:[%s1 + $0x4c] sm:$0xf]
  %v50 = vld [vmem:[%s1 + $0x50] sm:$0xf]
  %v51 = vld [vmem:[%s1 + $0x54] sm:$0xf]
  %v52 = vld [vmem:[%s1 + $0x58] sm:$0xf]
  %v53 = vld [vmem:[%s1 + $0x5c] sm:$0xf]
  %v54 = vld [vmem:[%s1 + $0x60] sm:$0xf]
  %v55 = vld [vmem:[%s1 + $0x64] sm:$0xf]
  %v56 = vld [vmem:[%s1 + $0x68] sm:$0xf]
  %v57 = vld [vmem:[%s1 + $0x6c] sm:$0xf]
  %v58 = vld [vmem:[%s1 + $0x70] sm:$0xf]
  %v59 = vld [vmem:[%s1 + $0x74] sm:$0xf]
  %v60 = vld [vmem:[%s1 + $0x78] sm:$0xf]
  %v61 = vld [vmem:[%s1 + $0x7c] sm:$0xf]
  %v62 = vld [vmem:[%s1 + $0x80] sm:$0xf]
  %v63 = vld [vmem:[%s1 + $0x84] sm:$0xf]
  %v64 = vld [vmem:[%s1 + $0x88] sm:$0xf]
  %v65 = vld [vmem:[%s1 + $0x8c] sm:$0xf]
  %v66 = vld [vmem:[%s1 + $0x90] sm:$0xf]
  %v67 = vld [vmem:[%s1 + $0x94] sm:$0xf]
  %v68 = vld [vmem:[%s1 + $0x98] sm:$0xf]
  %v69 = vld [vmem:[%s1 + $0x9c] sm:$0xf]
  %v70 = vld [vmem:[%s1 + $0xa0] sm:$0xf]
  %v71 = vld [vmem:[%s1 + $0xa4] sm:$0xf]
  %v72 = vld [vmem:[%s1 + $0xa8] sm:$0xf]
  %v73 = vld [vmem:[%s1 + $0xac] sm:$0xf]
  %v74 = vld [vmem:[%s1 + $0xb0] sm:$0xf]
  %v75 = vld [vmem:[%s1 + $0xb4] sm:$0xf]
  %v76 = vld [vmem:[%s1 + $0xb8] sm:$0xf]
  %v77 = vld [vmem:[%s1 + $0xbc] sm:$0xf]
  %v78 = vld [vmem:[%s1 + $0xc0] sm:$0xf]
  %v79 = vld [vmem:[%s1 + $0xc4] sm:$0xf]
  %v80 = vld [vmem:[%s1 + $0xc8] sm:$0xf]
  %v81 = vld [vmem:[%s1 + $0xcc] sm:$0xf]
  %v82 = vld [vmem:[%s1 + $0xd0] sm:$0xf]
  %v83 = vld [vmem:[%s1 + $0xd4] sm:$0xf]
  %v84 = vld [vmem:[%s1 + $0xd8] sm:$0xf]
  %v85 = vld [vmem:[%s1 + $0xdc] sm:$0xf]
  %v86 = vld [vmem:[%s1 + $0xe0] sm:$0xf]
  %v87 = vld [vmem:[%s1 + $0xe4] sm:$0xf]
  %v88 = vld [vmem:[%s1 + $0xe8] sm:$0xf]
  %v89 = vld [vmem:[%s1 + $0xec] sm:$0xf]
  %v90 = vld [vmem:[%s1 + $0xf0] sm:$0xf]
  %v91 = vld [vmem:[%s1 + $0xf4] sm:$0xf]
  %v92 = vld [vmem:[%s1 + $0xf8] sm:$0xf]
  %v93 = vld [vmem:[%s1 + $0xfc] sm:$0xf]
  %v94 = vld [vmem:[%s1 + $0x100] sm:$0xf]
  %v95 = vld [vmem:[%s1 + $0x104] sm:$0xf]
  %v96 = vld [vmem:[%s1 + $0x108] sm:$0xf]
  %v97 = vld [vmem:[%s1 + $0x10c] sm:$0xf]
  %v98 = vld [vmem:[%s1 + $0x110] sm:$0xf]
  %v99 = vld [vmem:[%s1 + $0x114] sm:$0xf]
  %v100 = vld [vmem:[%s1 + $0x118] sm:$0xf]
  %v101 = vld [vmem:[%s1 + $0x11c] sm:$0xf]
  %v102 = vld [vmem:[%s1 + $0x120] sm:$0xf]
  %v103 = vld [vmem:[%s1 + $0x124] sm:$0xf]
  %v104 = vld [vmem:[%s1 + $0x128] sm:$0xf]
  %v105 = vld [vmem:[%s1 + $0x12c] sm:$0xf]
  %v106 = vld [vmem:[%s1 + $0x130] sm:$0xf]
  %v107 = vld [vmem:[%s1 + $0x134] sm:$0xf]
  %v108 = vld [vmem:[%s1 + $0x138] sm:$0xf]
  %v109 = vld [vmem:[%s1 + $0x13c] sm:$0xf]
  %v110 = vld [vmem:[%s1 + $0x140] sm:$0xf]
  %v111 = vld [vmem:[%s1 + $0x144] sm:$0xf]
  %v112 = vld [vmem:[%s1 + $0x148] sm:$0xf]
  %v113 = vld [vmem:[%s1 + $0x14c] sm:$0xf]
  %v114 = vld [vmem:[%s1 + $0x150] sm:$0xf]
  %v115 = vld [vmem:[%s1 + $0x154] sm:$0xf]
  %v116 = vld [vmem:[%s1 + $0x158] sm:$0xf]
  %v117 = vld [vmem:[%s1 + $0x15c] sm:$0xf]
  %v118 = vld [vmem:[%s1 + $0x160] sm:$0xf]
  %v119 = vld [vmem:[%s1 + $0x164] sm:$0xf]
  %v120 = vld [vmem:[%s1 + $0x168] sm:$0xf]
  %v121 = vld [vmem:[%s1 + $0x16c] sm:$0xf]
  %v122 = vld [vmem:[%s1 + $0x170] sm:$0xf]
  %v123 = vld [vmem:[%s1 + $0x174] sm:$0xf]
  %v124 = vld [vmem:[%s1 + $0x178] sm:$0xf]
  %v125 = vld [vmem:[%s1 + $0x17c] sm:$0xf]
  %v138 = vunpack.c.l.b16 %v18
  %v139 = vunpack.c.h.b16 %v18
  %v140 = vunpack.c.l.b16 %v19
  %v141 = vunpack.c.h.b16 %v19
  %v142 = vunpack.c.l.b16 %v20
  %v143 = vunpack.c.h.b16 %v20
  %v144 = vunpack.c.l.b16 %v21
  %v145 = vunpack.c.h.b16 %v21
  %v146 = vunpack.c.l.b16 %v22
  %v147 = vunpack.c.h.b16 %v22
  %v148 = vunpack.c.l.b16 %v23
  %v149 = vunpack.c.h.b16 %v23
  %v150 = vunpack.c.l.b16 %v24
  %v151 = vunpack.c.h.b16 %v24
  %v152 = vunpack.c.l.b16 %v25
  %v153 = vunpack.c.h.b16 %v25
  %v154 = vunpack.c.l.b16 %v26
  %v155 = vunpack.c.h.b16 %v26
  %v156 = vunpack.c.l.b16 %v27
  %v157 = vunpack.c.h.b16 %v27
  %v158 = vunpack.c.l.b16 %v28
  %v159 = vunpack.c.h.b16 %v28
  %v160 = vunpack.c.l.b16 %v29
  %v161 = vunpack.c.h.b16 %v29
  %v162 = vpack.c.b16 %v144, %v138
  %v163 = vpack.c.b16 %v145, %v139
  %v164 = vpack.c.b16 %v146, %v140
  %v165 = vpack.c.b16 %v147, %v141
  %v166 = vpack.c.b16 %v148, %v142
  %v167 = vpack.c.b16 %v149, %v143
  %v168 = vpack.c.b16 %v156, %v150
  %v169 = vpack.c.b16 %v157, %v151
  %v170 = vpack.c.b16 %v158, %v152
  %v171 = vpack.c.b16 %v159, %v153
  %v172 = vpack.c.b16 %v160, %v154
  %v173 = vpack.c.b16 %v161, %v155
  %v282 = vunpack.c.l.b16 %v30
  %v283 = vunpack.c.l.b16 %v31
  %v284 = vunpack.c.l.b16 %v32
  %v285 = vunpack.c.l.b16 %v33
  %v286 = vunpack.c.l.b16 %v34
  %v287 = vunpack.c.l.b16 %v35
  %v288 = vunpack.c.l.b16 %v36
  %v289 = vunpack.c.l.b16 %v37
  %v290 = vunpack.c.l.b16 %v38
  %v291 = vunpack.c.l.b16 %v39
  %v292 = vunpack.c.l.b16 %v40
  %v293 = vunpack.c.l.b16 %v41
  %v294 = vunpack.c.l.b16 %v42
  %v295 = vunpack.c.l.b16 %v43
  %v296 = vunpack.c.l.b16 %v44
  %v297 = vunpack.c.l.b16 %v45
  %v298 = vunpack.c.l.b16 %v46
  %v299 = vunpack.c.l.b16 %v47
  %v300 = vunpack.c.l.b16 %v48
  %v301 = vunpack.c.l.b16 %v49
  %v302 = vunpack.c.l.b16 %v50
  %v303 = vunpack.c.l.b16 %v51
  %v304 = vunpack.c.l.b16 %v52
  %v305 = vunpack.c.l.b16 %v53
  %v306 = vunpack.c.l.b16 %v54
  %v307 = vunpack.c.l.b16 %v55
  %v308 = vunpack.c.l.b16 %v56
  %v309 = vunpack.c.l.b16 %v57
  %v310 = vunpack.c.l.b16 %v58
  %v311 = vunpack.c.l.b16 %v59
  %v312 = vunpack.c.l.b16 %v60
  %v313 = vunpack.c.l.b16 %v61
  %v314 = vunpack.c.l.b16 %v62
  %v315 = vunpack.c.l.b16 %v63
  %v316 = vunpack.c.l.b16 %v64
  %v317 = vunpack.c.l.b16 %v65
  %v318 = vunpack.c.l.b16 %v66
  %v319 = vunpack.c.l.b16 %v67
  %v320 = vunpack.c.l.b16 %v68
  %v321 = vunpack.c.l.b16 %v69
  %v322 = vunpack.c.l.b16 %v70
  %v323 = vunpack.c.l.b16 %v71
  %v324 = vunpack.c.l.b16 %v72
  %v325 = vunpack.c.l.b16 %v73
  %v326 = vunpack.c.l.b16 %v74
  %v327 = vunpack.c.l.b16 %v75
  %v328 = vunpack.c.l.b16 %v76
  %v329 = vunpack.c.l.b16 %v77
  %v330 = vunpack.c.l.b16 %v78
  %v331 = vunpack.c.l.b16 %v79
  %v332 = vunpack.c.l.b16 %v80
  %v333 = vunpack.c.l.b16 %v81
  %v334 = vunpack.c.l.b16 %v82
  %v335 = vunpack.c.l.b16 %v83
  %v336 = vunpack.c.l.b16 %v84
  %v337 = vunpack.c.l.b16 %v85
  %v338 = vunpack.c.l.b16 %v86
  %v339 = vunpack.c.l.b16 %v87
  %v340 = vunpack.c.l.b16 %v88
  %v341 = vunpack.c.l.b16 %v89
  %v342 = vunpack.c.l.b16 %v90
  %v343 = vunpack.c.l.b16 %v91
  %v344 = vunpack.c.l.b16 %v92
  %v345 = vunpack.c.l.b16 %v93
  %v346 = vunpack.c.l.b16 %v94
  %v347 = vunpack.c.l.b16 %v95
  %v348 = vunpack.c.l.b16 %v96
  %v349 = vunpack.c.l.b16 %v97
  %v350 = vunpack.c.l.b16 %v98
  %v351 = vunpack.c.l.b16 %v99
  %v352 = vunpack.c.l.b16 %v100
  %v353 = vunpack.c.l.b16 %v101
  %v354 = vunpack.c.l.b16 %v102
  %v355 = vunpack.c.l.b16 %v103
  %v356 = vunpack.c.l.b16 %v104
  %v357 = vunpack.c.l.b16 %v105
  %v358 = vunpack.c.l.b16 %v106
  %v359 = vunpack.c.l.b16 %v107
  %v360 = vunpack.c.l.b16 %v108
  %v361 = vunpack.c.l.b16 %v109
  %v362 = vunpack.c.l.b16 %v110
  %v363 = vunpack.c.l.b16 %v111
  %v364 = vunpack.c.l.b16 %v112
  %v365 = vunpack.c.l.b16 %v113
  %v366 = vunpack.c.l.b16 %v114
  %v367 = vunpack.c.l.b16 %v115
  %v368 = vunpack.c.l.b16 %v116
  %v369 = vunpack.c.l.b16 %v117
  %v370 = vunpack.c.l.b16 %v118
  %v371 = vunpack.c.l.b16 %v119
  %v372 = vunpack.c.l.b16 %v120
  %v373 = vunpack.c.l.b16 %v121
  %v374 = vunpack.c.l.b16 %v122
  %v375 = vunpack.c.l.b16 %v123
  %v376 = vunpack.c.l.b16 %v124
  %v377 = vunpack.c.l.b16 %v125
  %v378 = vpack.c.b16 %v283, %v282
  %v379 = vpack.c.b16 %v285, %v284
  %v380 = vpack.c.b16 %v287, %v286
  %v381 = vpack.c.b16 %v289, %v288
  %v382 = vpack.c.b16 %v291, %v290
  %v383 = vpack.c.b16 %v293, %v292
  %v384 = vpack.c.b16 %v295, %v294
  %v385 = vpack.c.b16 %v297, %v296
  %v386 = vpack.c.b16 %v299, %v298
  %v387 = vpack.c.b16 %v301, %v300
  %v388 = vpack.c.b16 %v303, %v302
  %v389 = vpack.c.b16 %v305, %v304
  %v390 = vpack.c.b16 %v307, %v306
  %v391 = vpack.c.b16 %v309, %v308
  %v392 = vpack.c.b16 %v311, %v310
  %v393 = vpack.c.b16 %v313, %v312
  %v394 = vpack.c.b16 %v315, %v314
  %v395 = vpack.c.b16 %v317, %v316
  %v396 = vpack.c.b16 %v319, %v318
  %v397 = vpack.c.b16 %v321, %v320
  %v398 = vpack.c.b16 %v323, %v322
  %v399 = vpack.c.b16 %v325, %v324
  %v400 = vpack.c.b16 %v327, %v326
  %v401 = vpack.c.b16 %v329, %v328
  %v402 = vpack.c.b16 %v331, %v330
  %v403 = vpack.c.b16 %v333, %v332
  %v404 = vpack.c.b16 %v335, %v334
  %v405 = vpack.c.b16 %v337, %v336
  %v406 = vpack.c.b16 %v339, %v338
  %v407 = vpack.c.b16 %v341, %v340
  %v408 = vpack.c.b16 %v343, %v342
  %v409 = vpack.c.b16 %v345, %v344
  %v410 = vpack.c.b16 %v347, %v346
  %v411 = vpack.c.b16 %v349, %v348
  %v412 = vpack.c.b16 %v351, %v350
  %v413 = vpack.c.b16 %v353, %v352
  %v414 = vpack.c.b16 %v355, %v354
  %v415 = vpack.c.b16 %v357, %v356
  %v416 = vpack.c.b16 %v359, %v358
  %v417 = vpack.c.b16 %v361, %v360
  %v418 = vpack.c.b16 %v363, %v362
  %v419 = vpack.c.b16 %v365, %v364
  %v420 = vpack.c.b16 %v367, %v366
  %v421 = vpack.c.b16 %v369, %v368
  %v422 = vpack.c.b16 %v371, %v370
  %v423 = vpack.c.b16 %v373, %v372
  %v424 = vpack.c.b16 %v375, %v374
  %v425 = vpack.c.b16 %v377, %v376
  %474 = vmatprep.subr.bf16.mxu0 0
  %475 = vmatpush1.bf16.msra.mxu0 %v378
  %476 = vmatprep.subr.bf16.mxu0 0
  %477 = vmatpush1.bf16.msra.mxu0 %v379
  %478 = vmatprep.subr.bf16.mxu0 0
  %479 = vmatpush1.bf16.msra.mxu0 %v380
  %480 = vmatprep.subr.bf16.mxu0 0
  %481 = vmatpush1.bf16.msra.mxu0 %v381
  %482 = vmatprep.subr.bf16.mxu0 0
  %483 = vmatpush1.bf16.msra.mxu0 %v382
  %484 = vmatprep.subr.bf16.mxu0 0
  %485 = vmatpush1.bf16.msra.mxu0 %v383
  %486 = vmatprep.subr.bf16.mxu0 0
  %487 = vmatpush1.bf16.msra.mxu0 %v384
  %488 = vmatprep.subr.bf16.mxu0 0
  %489 = vmatpush1.bf16.msra.mxu0 %v385
  %490 = vmatprep.subr.bf16.mxu0 0
  %491 = vmatpush1.bf16.msra.mxu0 %v386
  %492 = vmatprep.subr.bf16.mxu0 0
  %493 = vmatpush1.bf16.msra.mxu0 %v387
  %494 = vmatprep.subr.bf16.mxu0 0
  %495 = vmatpush1.bf16.msra.mxu0 %v388
  %496 = vmatprep.subr.bf16.mxu0 0
  %497 = vmatpush1.bf16.msra.mxu0 %v389
  %498 = vmatprep.subr.bf16.mxu0 0
  %499 = vmatpush1.bf16.msra.mxu0 %v390
  %500 = vmatprep.subr.bf16.mxu0 0
  %501 = vmatpush1.bf16.msra.mxu0 %v391
  %502 = vmatprep.subr.bf16.mxu0 0
  %503 = vmatpush1.bf16.msra.mxu0 %v392
  %504 = vmatprep.subr.bf16.mxu0 0
  %505 = vmatpush1.bf16.msra.mxu0 %v393
  %506 = vmatprep.mubr.bf16.mxu0 %v163
  %507 = vmatmul.mubr.bf16.gmra.mrb[0].mxu0 %v162
  %v508 = vpop.f32.mrb[0].mxu0
  %v509 = vadd.f32 0.0, %v508
  %v510 = vpop.f32.mrb[0].mxu0
  %v511 = vpop.f32.mrb[0].mxu0
  %v512 = vadd.f32 0.0, %v511
  %v513 = vpop.f32.mrb[0].mxu0
  %514 = vmatprep.mubr.bf16.mxu0 %v169
  %515 = vmatmul.mubr.bf16.gmra.mrb[0].mxu0 %v168
  %v516 = vpop.f32.mrb[0].mxu0
  %v517 = vadd.f32 0.0, %v516
  %v518 = vpop.f32.mrb[0].mxu0
  %v519 = vpop.f32.mrb[0].mxu0
  %v520 = vadd.f32 0.0, %v519
  %v521 = vpop.f32.mrb[0].mxu0
  %522 = vdwg.mxu0
  %523 = vmatprep.subr.bf16.mxu0 0
  %524 = vmatpush1.bf16.msra.mxu0 %v394
  %525 = vmatprep.subr.bf16.mxu0 0
  %526 = vmatpush1.bf16.msra.mxu0 %v395
  %527 = vmatprep.subr.bf16.mxu0 0
  %528 = vmatpush1.bf16.msra.mxu0 %v396
  %529 = vmatprep.subr.bf16.mxu0 0
  %530 = vmatpush1.bf16.msra.mxu0 %v397
  %531 = vmatprep.subr.bf16.mxu0 0
  %532 = vmatpush1.bf16.msra.mxu0 %v398
  %533 = vmatprep.subr.bf16.mxu0 0
  %534 = vmatpush1.bf16.msra.mxu0 %v399
  %535 = vmatprep.subr.bf16.mxu0 0
  %536 = vmatpush1.bf16.msra.mxu0 %v400
  %537 = vmatprep.subr.bf16.mxu0 0
  %538 = vmatpush1.bf16.msra.mxu0 %v401
  %539 = vmatprep.subr.bf16.mxu0 0
  %540 = vmatpush1.bf16.msra.mxu0 %v402
  %541 = vmatprep.subr.bf16.mxu0 0
  %542 = vmatpush1.bf16.msra.mxu0 %v403
  %543 = vmatprep.subr.bf16.mxu0 0
  %544 = vmatpush1.bf16.msra.mxu0 %v404
  %545 = vmatprep.subr.bf16.mxu0 0
  %546 = vmatpush1.bf16.msra.mxu0 %v405
  %547 = vmatprep.subr.bf16.mxu0 0
  %548 = vmatpush1.bf16.msra.mxu0 %v406
  %549 = vmatprep.subr.bf16.mxu0 0
  %550 = vmatpush1.bf16.msra.mxu0 %v407
  %551 = vmatprep.subr.bf16.mxu0 0
  %552 = vmatpush1.bf16.msra.mxu0 %v408
  %553 = vmatprep.subr.bf16.mxu0 0
  %554 = vmatpush1.bf16.msra.mxu0 %v409
  %555 = vmatprep.mubr.bf16.mxu0 %v165
  %556 = vmatmul.mubr.bf16.gmra.mrb[0].mxu0 %v164
  %v557 = vpop.f32.mrb[0].mxu0
  %v558 = vadd.f32 %v509, %v557
  %v559 = vpop.f32.mrb[0].mxu0
  %v560 = vpop.f32.mrb[0].mxu0
  %v561 = vadd.f32 %v512, %v560
  %v562 = vpop.f32.mrb[0].mxu0
  %563 = vmatprep.mubr.bf16.mxu0 %v171
  %564 = vmatmul.mubr.bf16.gmra.mrb[0].mxu0 %v170
  %v565 = vpop.f32.mrb[0].mxu0
  %v566 = vadd.f32 %v517, %v565
  %v567 = vpop.f32.mrb[0].mxu0
  %v568 = vpop.f32.mrb[0].mxu0
  %v569 = vadd.f32 %v520, %v568
  %v570 = vpop.f32.mrb[0].mxu0
  %571 = vdwg.mxu0
  %572 = vmatprep.subr.bf16.mxu0 0
  %573 = vmatpush1.bf16.msra.mxu0 %v410
  %574 = vmatprep.subr.bf16.mxu0 0
  %575 = vmatpush1.bf16.msra.mxu0 %v411
  %576 = vmatprep.subr.bf16.mxu0 0
  %577 = vmatpush1.bf16.msra.mxu0 %v412
  %578 = vmatprep.subr.bf16.mxu0 0
  %579 = vmatpush1.bf16.msra.mxu0 %v413
  %580 = vmatprep.subr.bf16.mxu0 0
  %581 = vmatpush1.bf16.msra.mxu0 %v414
  %582 = vmatprep.subr.bf16.mxu0 0
  %583 = vmatpush1.bf16.msra.mxu0 %v415
  %584 = vmatprep.subr.bf16.mxu0 0
  %585 = vmatpush1.bf16.msra.mxu0 %v416
  %586 = vmatprep.subr.bf16.mxu0 0
  %587 = vmatpush1.bf16.msra.mxu0 %v417
  %588 = vmatprep.subr.bf16.mxu0 0
  %589 = vmatpush1.bf16.msra.mxu0 %v418
  %590 = vmatprep.subr.bf16.mxu0 0
  %591 = vmatpush1.bf16.msra.mxu0 %v419
  %592 = vmatprep.subr.bf16.mxu0 0
  %593 = vmatpush1.bf16.msra.mxu0 %v420
  %594 = vmatprep.subr.bf16.mxu0 0
  %595 = vmatpush1.bf16.msra.mxu0 %v421
  %596 = vmatprep.subr.bf16.mxu0 0
  %597 = vmatpush1.bf16.msra.mxu0 %v422
  %598 = vmatprep.subr.bf16.mxu0 0
  %599 = vmatpush1.bf16.msra.mxu0 %v423
  %600 = vmatprep.subr.bf16.mxu0 0
  %601 = vmatpush1.bf16.msra.mxu0 %v424
  %602 = vmatprep.subr.bf16.mxu0 0
  %603 = vmatpush1.bf16.msra.mxu0 %v425
  %604 = vmatprep.mubr.bf16.mxu0 %v167
  %605 = vmatmul.mubr.bf16.gmra.mrb[0].mxu0 %v166
  %v606 = vpop.f32.mrb[0].mxu0
  %v607 = vadd.f32 %v558, %v606
  %v608 = vpop.f32.mrb[0].mxu0
  %v609 = vpop.f32.mrb[0].mxu0
  %v610 = vadd.f32 %v561, %v609
  %v611 = vpop.f32.mrb[0].mxu0
  %612 = vmatprep.mubr.bf16.mxu0 %v173
  %613 = vmatmul.mubr.bf16.gmra.mrb[0].mxu0 %v172
  %v614 = vpop.f32.mrb[0].mxu0
  %v615 = vadd.f32 %v566, %v614
  %v616 = vpop.f32.mrb[0].mxu0
  %v617 = vpop.f32.mrb[0].mxu0
  %v618 = vadd.f32 %v569, %v617
  %v619 = vpop.f32.mrb[0].mxu0
  %620 = vdwg.mxu0
  %v621 = vld [vmem:[%s2] sm:$0x1]
  %v623 = vlaneseq
  %v624 = vshrl.u32 %v623, 7
  %v625 = vsub.s32 0, %v624
  %v626 = vrot.slane %v621, %v625
  %v628 = vadd.f32 %v607, %v626
  %v629 = vadd.f32 %v610, %v626
  %v630 = vadd.f32 %v615, %v626
  %v631 = vadd.f32 %v618, %v626
  %v632 = vld [vmem:[%s3] sm:$0xff]
  %v633 = vld [vmem:[%s3 + $0x8] sm:$0xff]
  %v634 = vadd.f32 %v628, %v632
  %v635 = vadd.f32 %v629, %v633
  %v636 = vadd.f32 %v630, %v632
  %v637 = vadd.f32 %v631, %v633
  %638 = vst [vmem:[%s4] sm:$0xff] %v634
  %639 = vst [vmem:[%s4 + $0x8] sm:$0xff] %v635
  %640 = vst [vmem:[%s4 + $0x10] sm:$0xff] %v636
  %641 = vst [vmem:[%s4 + $0x18] sm:$0xff] %v637
  // Predicated region
  $region18: #{vitar_forward.3} parent=0 // pred_check
    _
  $region19: #{vitar_forward.3} parent=0 // pred_check_branch
    %643 = sbr.rel (0) target = $region21
  $region20: #{vitar_forward.3} parent=0 // pred_region
    _
  $region21: #{vitar_forward.3} parent=0 // pred_fallthru
    _
  // Predicated region
  $region22: #{vitar_forward.3} parent=0 // pred_check
    _
  $region23: #{vitar_forward.3} parent=0 // pred_check_branch
    %645 = sbr.rel (0) target = $region25
  $region24: #{vitar_forward.3} parent=0 // pred_region
    _
  $region25: #{vitar_forward.3} parent=0 // pred_fallthru
    _

// kernel: vitar_forward.4
$region0: #{vitar_forward.4}
  #allocation0 [shape = 'u32[]', space=smem, size = 0x4, offset = 0x4, fixed_abs, tag = 'smem constant byte address 0x4 - core index']
  #allocation1 [shape = 'u32[144,128]{1,0:T(1,128)}', space=vmem, size = 0x12000, scoped, tag = 'internal scratch']
  %s0 = inlined_call_operand.vmem [shape: f32[2,16,128], index: 0, kind: input, shape index: {}]
  %s1 = inlined_call_operand.vmem [shape: f32[4,16], index: 1, kind: input, shape index: {}]
  %s2 = inlined_call_operand.vmem [shape: bf16[128,128], index: 2, kind: input, shape index: {}]
  %s3 = inlined_call_operand.vmem [shape: f32[1,128], index: 3, kind: input, shape index: {}]
  %s4 = inlined_call_operand.vmem [shape: bf16[128,256], index: 4, kind: input, shape index: {}]
  %s5 = inlined_call_operand.vmem [shape: f32[1,256], index: 5, kind: input, shape index: {}]
  %s6 = inlined_call_operand.vmem [shape: bf16[128,128], index: 6, kind: input, shape index: {}]
  %s7 = inlined_call_operand.vmem [shape: f32[1,128], index: 7, kind: input, shape index: {}]
  %s8 = inlined_call_operand.vmem [shape: f32[1,128], index: 8, kind: input, shape index: {}]
  %s9 = inlined_call_operand.vmem [shape: f32[1,128], index: 9, kind: input, shape index: {}]
  %s10 = inlined_call_operand.vmem [shape: bf16[128,512], index: 10, kind: input, shape index: {}]
  %s11 = inlined_call_operand.vmem [shape: f32[1,512], index: 11, kind: input, shape index: {}]
  %s12 = inlined_call_operand.vmem [shape: bf16[512,128], index: 12, kind: input, shape index: {}]
  %s13 = inlined_call_operand.vmem [shape: f32[1,128], index: 13, kind: input, shape index: {}]
  %s14 = inlined_call_operand.vmem [shape: f32[1,128], index: 14, kind: input, shape index: {}]
  %s15 = inlined_call_operand.vmem [shape: f32[1,128], index: 15, kind: input, shape index: {}]
  %s16 = inlined_call_operand.vmem [shape: f32[2,4,128], index: 16, kind: output, shape index: {}]
  %s17 = sld [smem:[#allocation0]]
  $region74: #{vitar_forward.4} parent=0
    _
  %s19 = ssub.s32 1, %s17
  %s20 = scalar_select 0, %s19, %s17
  // Predicated region
  $region2: #{vitar_forward.4} parent=0 // pred_check
    _
  $region3: #{vitar_forward.4} parent=0 // pred_check_branch
    %22 = sbr.rel (0) target = $region5
  $region4: #{vitar_forward.4} parent=0 // pred_region
    _
  $region5: #{vitar_forward.4} parent=0 // pred_fallthru
    _
  // Predicated region
  $region6: #{vitar_forward.4} parent=0 // pred_check
    _
  $region7: #{vitar_forward.4} parent=0 // pred_check_branch
    %24 = sbr.rel (0) target = $region9
  $region8: #{vitar_forward.4} parent=0 // pred_region
    _
  $region9: #{vitar_forward.4} parent=0 // pred_fallthru
    _
  // Predicated region
  $region10: #{vitar_forward.4} parent=0 // pred_check
    _
  $region11: #{vitar_forward.4} parent=0 // pred_check_branch
    %26 = sbr.rel (0) target = $region13
  $region12: #{vitar_forward.4} parent=0 // pred_region
    _
  $region13: #{vitar_forward.4} parent=0 // pred_fallthru
    _
  // Predicated region
  $region14: #{vitar_forward.4} parent=0 // pred_check
    _
  $region15: #{vitar_forward.4} parent=0 // pred_check_branch
    %28 = sbr.rel (0) target = $region17
  $region16: #{vitar_forward.4} parent=0 // pred_region
    _
  $region17: #{vitar_forward.4} parent=0 // pred_fallthru
    _
  // Predicated region
  $region18: #{vitar_forward.4} parent=0 // pred_check
    _
  $region19: #{vitar_forward.4} parent=0 // pred_check_branch
    %30 = sbr.rel (0) target = $region21
  $region20: #{vitar_forward.4} parent=0 // pred_region
    _
  $region21: #{vitar_forward.4} parent=0 // pred_fallthru
    _
  // Predicated region
  $region22: #{vitar_forward.4} parent=0 // pred_check
    _
  $region23: #{vitar_forward.4} parent=0 // pred_check_branch
    %32 = sbr.rel (0) target = $region25
  $region24: #{vitar_forward.4} parent=0 // pred_region
    _
  $region25: #{vitar_forward.4} parent=0 // pred_fallthru
    _
  // Predicated region
  $region26: #{vitar_forward.4} parent=0 // pred_check
    _
  $region27: #{vitar_forward.4} parent=0 // pred_check_branch
    %34 = sbr.rel (0) target = $region29
  $region28: #{vitar_forward.4} parent=0 // pred_region
    _
  $region29: #{vitar_forward.4} parent=0 // pred_fallthru
    _
  // Predicated region
  $region30: #{vitar_forward.4} parent=0 // pred_check
    _
  $region31: #{vitar_forward.4} parent=0 // pred_check_branch
    %36 = sbr.rel (0) target = $region33
  $region32: #{vitar_forward.4} parent=0 // pred_region
    _
  $region33: #{vitar_forward.4} parent=0 // pred_fallthru
    _
  // Predicated region
  $region34: #{vitar_forward.4} parent=0 // pred_check
    _
  $region35: #{vitar_forward.4} parent=0 // pred_check_branch
    %38 = sbr.rel (0) target = $region37
  $region36: #{vitar_forward.4} parent=0 // pred_region
    _
  $region37: #{vitar_forward.4} parent=0 // pred_fallthru
    _
  // Predicated region
  $region38: #{vitar_forward.4} parent=0 // pred_check
    _
  $region39: #{vitar_forward.4} parent=0 // pred_check_branch
    %40 = sbr.rel (0) target = $region41
  $region40: #{vitar_forward.4} parent=0 // pred_region
    _
  $region41: #{vitar_forward.4} parent=0 // pred_fallthru
    _
  // Predicated region
  $region42: #{vitar_forward.4} parent=0 // pred_check
    _
  $region43: #{vitar_forward.4} parent=0 // pred_check_branch
    %42 = sbr.rel (0) target = $region45
  $region44: #{vitar_forward.4} parent=0 // pred_region
    _
  $region45: #{vitar_forward.4} parent=0 // pred_fallthru
    _
  // Predicated region
  $region46: #{vitar_forward.4} parent=0 // pred_check
    _
  $region47: #{vitar_forward.4} parent=0 // pred_check_branch
    %44 = sbr.rel (0) target = $region49
  $region48: #{vitar_forward.4} parent=0 // pred_region
    _
  $region49: #{vitar_forward.4} parent=0 // pred_fallthru
    _
  // Predicated region
  $region50: #{vitar_forward.4} parent=0 // pred_check
    _
  $region51: #{vitar_forward.4} parent=0 // pred_check_branch
    %46 = sbr.rel (0) target = $region53
  $region52: #{vitar_forward.4} parent=0 // pred_region
    _
  $region53: #{vitar_forward.4} parent=0 // pred_fallthru
    _
  // Predicated region
  $region54: #{vitar_forward.4} parent=0 // pred_check
    _
  $region55: #{vitar_forward.4} parent=0 // pred_check_branch
    %48 = sbr.rel (0) target = $region57
  $region56: #{vitar_forward.4} parent=0 // pred_region
    _
  $region57: #{vitar_forward.4} parent=0 // pred_fallthru
    _
  // Predicated region
  $region58: #{vitar_forward.4} parent=0 // pred_check
    _
  $region59: #{vitar_forward.4} parent=0 // pred_check_branch
    %50 = sbr.rel (0) target = $region61
  $region60: #{vitar_forward.4} parent=0 // pred_region
    _
  $region61: #{vitar_forward.4} parent=0 // pred_fallthru
    _
  // Predicated region
  $region62: #{vitar_forward.4} parent=0 // pred_check
    _
  $region63: #{vitar_forward.4} parent=0 // pred_check_branch
    %52 = sbr.rel (0) target = $region65
  $region64: #{vitar_forward.4} parent=0 // pred_region
    _
  $region65: #{vitar_forward.4} parent=0 // pred_fallthru
    _
  %v54 = vld [vmem:[%s0] sm:$0xff]
  %v55 = vld [vmem:[%s0 + $0x8] sm:$0xff]
  %v56 = vld [vmem:[%s0 + $0x10] sm:$0xff]
  %v57 = vld [vmem:[%s0 + $0x18] sm:$0xff]
  %v58 = vpack.c.bf16 %v55, %v54
  %v59 = vpack.c.bf16 %v57, %v56
  %v60 = vld [vmem:[%s1] sm:$0xf]
  %v61 = vpack.c.bf16 %v60, %v60
  %vm62 = vcmask 130048
  %v64 = vsel %vm62, %v61, 0
  %66 = vmatprep.subr.bf16.mxu0 0
  %67 = vmatpush1.bf16.msra.mxu0 %v58
  %68 = vmatprep.subr.bf16.mxu0 0
  %69 = vmatpush1.bf16.msra.mxu0 0
  %70 = vmatprep.subr.bf16.mxu0 0
  %71 = vmatpush1.bf16.msra.mxu0 0
  %72 = vmatprep.subr.bf16.mxu0 0
  %73 = vmatpush1.bf16.msra.mxu0 0
  %74 = vmatprep.subr.bf16.mxu0 0
  %75 = vmatpush1.bf16.msra.mxu0 0
  %76 = vmatprep.subr.bf16.mxu0 0
  %77 = vmatpush1.bf16.msra.mxu0 0
  %78 = vmatprep.subr.bf16.mxu0 0
  %79 = vmatpush1.bf16.msra.mxu0 0
  %80 = vmatprep.subr.bf16.mxu0 0
  %81 = vmatpush1.bf16.msra.mxu0 0
  %82 = vmatprep.subr.bf16.mxu0 0
  %83 = vmatpush1.bf16.msra.mxu0 0
  %84 = vmatprep.subr.bf16.mxu0 0
  %85 = vmatpush1.bf16.msra.mxu0 0
  %86 = vmatprep.subr.bf16.mxu0 0
  %87 = vmatpush1.bf16.msra.mxu0 0
  %88 = vmatprep.subr.bf16.mxu0 0
  %89 = vmatpush1.bf16.msra.mxu0 0
  %90 = vmatprep.subr.bf16.mxu0 0
  %91 = vmatpush1.bf16.msra.mxu0 0
  %92 = vmatprep.subr.bf16.mxu0 0
  %93 = vmatpush1.bf16.msra.mxu0 0
  %94 = vmatprep.subr.bf16.mxu0 0
  %95 = vmatpush1.bf16.msra.mxu0 0
  %96 = vmatprep.subr.bf16.mxu0 0
  %97 = vmatpush1.bf16.msra.mxu0 0
  %98 = vmatprep.mubr.bf16.mxu0 0
  %99 = vmatmul.mubr.bf16.gmra.mrb[0].mxu0 %v64
  %v100 = vpop.f32.mrb[0].mxu0
  %v101 = vadd.f32 0.0, %v100
  %v102 = vpop.f32.mrb[0].mxu0
  %v103 = vpop.f32.mrb[0].mxu0
  %v104 = vpop.f32.mrb[0].mxu0
  %105 = vdwg.mxu0
  %106 = vmatprep.subr.bf16.mxu0 0
  %107 = vmatpush1.bf16.msra.mxu0 %v59
  %108 = vmatprep.subr.bf16.mxu0 0
  %109 = vmatpush1.bf16.msra.mxu0 0
  %110 = vmatprep.subr.bf16.mxu0 0
  %111 = vmatpush1.bf16.msra.mxu0 0
  %112 = vmatprep.subr.bf16.mxu0 0
  %113 = vmatpush1.bf16.msra.mxu0 0
  %114 = vmatprep.subr.bf16.mxu0 0
  %115 = vmatpush1.bf16.msra.mxu0 0
  %116 = vmatprep.subr.bf16.mxu0 0
  %117 = vmatpush1.bf16.msra.mxu0 0
  %118 = vmatprep.subr.bf16.mxu0 0
  %119 = vmatpush1.bf16.msra.mxu0 0
  %120 = vmatprep.subr.bf16.mxu0 0
  %121 = vmatpush1.bf16.msra.mxu0 0
  %122 = vmatprep.subr.bf16.mxu0 0
  %123 = vmatpush1.bf16.msra.mxu0 0
  %124 = vmatprep.subr.bf16.mxu0 0
  %125 = vmatpush1.bf16.msra.mxu0 0
  %126 = vmatprep.subr.bf16.mxu0 0
  %127 = vmatpush1.bf16.msra.mxu0 0
  %128 = vmatprep.subr.bf16.mxu0 0
  %129 = vmatpush1.bf16.msra.mxu0 0
  %130 = vmatprep.subr.bf16.mxu0 0
  %131 = vmatpush1.bf16.msra.mxu0 0
  %132 = vmatprep.subr.bf16.mxu0 0
  %133 = vmatpush1.bf16.msra.mxu0 0
  %134 = vmatprep.subr.bf16.mxu0 0
  %135 = vmatpush1.bf16.msra.mxu0 0
  %136 = vmatprep.subr.bf16.mxu0 0
  %137 = vmatpush1.bf16.msra.mxu0 0
  %138 = vmatprep.mubr.bf16.mxu0 0
  %139 = vmatmul.mubr.bf16.gmra.mrb[0].mxu0 %v64
  %v140 = vpop.f32.mrb[0].mxu0
  %v141 = vadd.f32 0.0, %v140
  %v142 = vpop.f32.mrb[0].mxu0
  %v143 = vpop.f32.mrb[0].mxu0
  %v144 = vpop.f32.mrb[0].mxu0
  %145 = vdwg.mxu0
  %v148 = vcombine.low %v101, %v141
  %v150 = vpack.c.bf16 %v148, %v148
  %v151 = vld [vmem:[%s2] sm:$0xf]
  %v152 = vld [vmem:[%s2 + $0x4] sm:$0xf]
  %v153 = vld [vmem:[%s2 + $0x8] sm:$0xf]
  %v154 = vld [vmem:[%s2 + $0xc] sm:$0xf]
  %v155 = vld [vmem:[%s2 + $0x10] sm:$0xf]
  %v156 = vld [vmem:[%s2 + $0x14] sm:$0xf]
  %v157 = vld [vmem:[%s2 + $0x18] sm:$0xf]
  %v158 = vld [vmem:[%s2 + $0x1c] sm:$0xf]
  %v159 = vld [vmem:[%s2 + $0x20] sm:$0xf]
  %v160 = vld [vmem:[%s2 + $0x24] sm:$0xf]
  %v161 = vld [vmem:[%s2 + $0x28] sm:$0xf]
  %v162 = vld [vmem:[%s2 + $0x2c] sm:$0xf]
  %v163 = vld [vmem:[%s2 + $0x30] sm:$0xf]
  %v164 = vld [vmem:[%s2 + $0x34] sm:$0xf]
  %v165 = vld [vmem:[%s2 + $0x38] sm:$0xf]
  %v166 = vld [vmem:[%s2 + $0x3c] sm:$0xf]
  %v167 = vld [vmem:[%s3] sm:$0x1]
  %v169 = vlaneseq
  %v170 = vshrl.u32 %v169, 7
  %v171 = vsub.s32 0, %v170
  %v172 = vrot.slane %v167, %v171
  %v190 = vunpack.c.l.b16 %v151
  %v191 = vunpack.c.l.b16 %v152
  %v192 = vunpack.c.l.b16 %v153
  %v193 = vunpack.c.l.b16 %v154
  %v194 = vunpack.c.l.b16 %v155
  %v195 = vunpack.c.l.b16 %v156
  %v196 = vunpack.c.l.b16 %v157
  %v197 = vunpack.c.l.b16 %v158
  %v198 = vunpack.c.l.b16 %v159
  %v199 = vunpack.c.l.b16 %v160
  %v200 = vunpack.c.l.b16 %v161
  %v201 = vunpack.c.l.b16 %v162
  %v202 = vunpack.c.l.b16 %v163
  %v203 = vunpack.c.l.b16 %v164
  %v204 = vunpack.c.l.b16 %v165
  %v205 = vunpack.c.l.b16 %v166
  %v206 = vpack.c.b16 %v191, %v190
  %v207 = vpack.c.b16 %v193, %v192
  %v208 = vpack.c.b16 %v195, %v194
  %v209 = vpack.c.b16 %v197, %v196
  %v210 = vpack.c.b16 %v199, %v198
  %v211 = vpack.c.b16 %v201, %v200
  %v212 = vpack.c.b16 %v203, %v202
  %v213 = vpack.c.b16 %v205, %v204
  %222 = vmatprep.subr.bf16.mxu0 0
  %223 = vmatpush1.bf16.msra.mxu0 %v206
  %224 = vmatprep.subr.bf16.mxu0 0
  %225 = vmatpush1.bf16.msra.mxu0 %v207
  %226 = vmatprep.subr.bf16.mxu0 0
  %227 = vmatpush1.bf16.msra.mxu0 %v208
  %228 = vmatprep.subr.bf16.mxu0 0
  %229 = vmatpush1.bf16.msra.mxu0 %v209
  %230 = vmatprep.subr.bf16.mxu0 0
  %231 = vmatpush1.bf16.msra.mxu0 %v210
  %232 = vmatprep.subr.bf16.mxu0 0
  %233 = vmatpush1.bf16.msra.mxu0 %v211
  %234 = vmatprep.subr.bf16.mxu0 0
  %235 = vmatpush1.bf16.msra.mxu0 %v212
  %236 = vmatprep.subr.bf16.mxu0 0
  %237 = vmatpush1.bf16.msra.mxu0 %v213
  %238 = vmatprep.subr.bf16.mxu0 0
  %239 = vmatpush1.bf16.msra.mxu0 0
  %240 = vmatprep.subr.bf16.mxu0 0
  %241 = vmatpush1.bf16.msra.mxu0 0
  %242 = vmatprep.subr.bf16.mxu0 0
  %243 = vmatpush1.bf16.msra.mxu0 0
  %244 = vmatprep.subr.bf16.mxu0 0
  %245 = vmatpush1.bf16.msra.mxu0 0
  %246 = vmatprep.subr.bf16.mxu0 0
  %247 = vmatpush1.bf16.msra.mxu0 0
  %248 = vmatprep.subr.bf16.mxu0 0
  %249 = vmatpush1.bf16.msra.mxu0 0
  %250 = vmatprep.subr.bf16.mxu0 0
  %251 = vmatpush1.bf16.msra.mxu0 0
  %252 = vmatprep.subr.bf16.mxu0 0
  %253 = vmatpush1.bf16.msra.mxu0 0
  %254 = vmatprep.mubr.bf16.mxu0 0
  %255 = vmatmul.mubr.bf16.gmra.mrb[0].mxu0 %v150
  %v256 = vpop.f32.mrb[0].mxu0
  %v257 = vadd.f32 %v172, %v256
  %v258 = vpop.f32.mrb[0].mxu0
  %v259 = vpop.f32.mrb[0].mxu0
  %v260 = vpop.f32.mrb[0].mxu0
  %261 = vdwg.mxu0
  %v262 = vld [vmem:[%s4] sm:$0xff]
  %v263 = vld [vmem:[%s4 + $0x8] sm:$0xff]
  %v264 = vld [vmem:[%s4 + $0x10] sm:$0xff]
  %v265 = vld [vmem:[%s4 + $0x18] sm:$0xff]
  %v266 = vld [vmem:[%s4 + $0x20] sm:$0xff]
  %v267 = vld [vmem:[%s4 + $0x28] sm:$0xff]
  %v268 = vld [vmem:[%s4 + $0x30] sm:$0xff]
  %v269 = vld [vmem:[%s4 + $0x38] sm:$0xff]
  %v270 = vld [vmem:[%s4 + $0x40] sm:$0xff]
  %v271 = vld [vmem:[%s4 + $0x48] sm:$0xff]
  %v272 = vld [vmem:[%s4 + $0x50] sm:$0xff]
  %v273 = vld [vmem:[%s4 + $0x58] sm:$0xff]
  %v274 = vld [vmem:[%s4 + $0x60] sm:$0xff]
  %v275 = vld [vmem:[%s4 + $0x68] sm:$0xff]
  %v276 = vld [vmem:[%s4 + $0x70] sm:$0xff]
  %v277 = vld [vmem:[%s4 + $0x78] sm:$0xff]
  %v278 = vld [vmem:[%s5] sm:$0x3]
  %v280 = vlaneseq
  %v281 = vshrl.u32 %v280, 7
  %v282 = vsub.s32 0, %v281
  %v283 = vrot.slane %v278, %v282
  %v284 = vlaneseq
  %v285 = vshrl.u32 %v284, 7
  %v286 = vsub.s32 1, %v285
  %v287 = vrot.slane %v278, %v286
  %v306 = vunpack.c.l.b16 %v262
  %v307 = vunpack.c.h.b16 %v262
  %v308 = vunpack.c.l.b16 %v263
  %v309 = vunpack.c.h.b16 %v263
  %v310 = vunpack.c.l.b16 %v264
  %v311 = vunpack.c.h.b16 %v264
  %v312 = vunpack.c.l.b16 %v265
  %v313 = vunpack.c.h.b16 %v265
  %v314 = vunpack.c.l.b16 %v266
  %v315 = vunpack.c.h.b16 %v266
  %v316 = vunpack.c.l.b16 %v267
  %v317 = vunpack.c.h.b16 %v267
  %v318 = vunpack.c.l.b16 %v268
  %v319 = vunpack.c.h.b16 %v268
  %v320 = vunpack.c.l.b16 %v269
  %v321 = vunpack.c.h.b16 %v269
  %v322 = vunpack.c.l.b16 %v270
  %v323 = vunpack.c.h.b16 %v270
  %v324 = vunpack.c.l.b16 %v271
  %v325 = vunpack.c.h.b16 %v271
  %v326 = vunpack.c.l.b16 %v272
  %v327 = vunpack.c.h.b16 %v272
  %v328 = vunpack.c.l.b16 %v273
  %v329 = vunpack.c.h.b16 %v273
  %v330 = vunpack.c.l.b16 %v274
  %v331 = vunpack.c.h.b16 %v274
  %v332 = vunpack.c.l.b16 %v275
  %v333 = vunpack.c.h.b16 %v275
  %v334 = vunpack.c.l.b16 %v276
  %v335 = vunpack.c.h.b16 %v276
  %v336 = vunpack.c.l.b16 %v277
  %v337 = vunpack.c.h.b16 %v277
  %v338 = vpack.c.b16 %v308, %v306
  %v339 = vpack.c.b16 %v309, %v307
  %v340 = vpack.c.b16 %v312, %v310
  %v341 = vpack.c.b16 %v313, %v311
  %v342 = vpack.c.b16 %v316, %v314
  %v343 = vpack.c.b16 %v317, %v315
  %v344 = vpack.c.b16 %v320, %v318
  %v345 = vpack.c.b16 %v321, %v319
  %v346 = vpack.c.b16 %v324, %v322
  %v347 = vpack.c.b16 %v325, %v323
  %v348 = vpack.c.b16 %v328, %v326
  %v349 = vpack.c.b16 %v329, %v327
  %v350 = vpack.c.b16 %v332, %v330
  %v351 = vpack.c.b16 %v333, %v331
  %v352 = vpack.c.b16 %v336, %v334
  %v353 = vpack.c.b16 %v337, %v335
  %370 = vmatprep.subr.bf16.mxu0 %v339
  %371 = vmatpush1.bf16.msra.mxu0 %v338
  %372 = vmatprep.subr.bf16.mxu0 %v341
  %373 = vmatpush1.bf16.msra.mxu0 %v340
  %374 = vmatprep.subr.bf16.mxu0 %v343
  %375 = vmatpush1.bf16.msra.mxu0 %v342
  %376 = vmatprep.subr.bf16.mxu0 %v345
  %377 = vmatpush1.bf16.msra.mxu0 %v344
  %378 = vmatprep.subr.bf16.mxu0 %v347
  %379 = vmatpush1.bf16.msra.mxu0 %v346
  %380 = vmatprep.subr.bf16.mxu0 %v349
  %381 = vmatpush1.bf16.msra.mxu0 %v348
  %382 = vmatprep.subr.bf16.mxu0 %v351
  %383 = vmatpush1.bf16.msra.mxu0 %v350
  %384 = vmatprep.subr.bf16.mxu0 %v353
  %385 = vmatpush1.bf16.msra.mxu0 %v352
  %386 = vmatprep.subr.bf16.mxu0 0
  %387 = vmatpush1.bf16.msra.mxu0 0
  %388 = vmatprep.subr.bf16.mxu0 0
  %389 = vmatpush1.bf16.msra.mxu0 0
  %390 = vmatprep.subr.bf16.mxu0 0
  %391 = vmatpush1.bf16.msra.mxu0 0
  %392 = vmatprep.subr.bf16.mxu0 0
  %393 = vmatpush1.bf16.msra.mxu0 0
  %394 = vmatprep.subr.bf16.mxu0 0
  %395 = vmatpush1.bf16.msra.mxu0 0
  %396 = vmatprep.subr.bf16.mxu0 0
  %397 = vmatpush1.bf16.msra.mxu0 0
  %398 = vmatprep.subr.bf16.mxu0 0
  %399 = vmatpush1.bf16.msra.mxu0 0
  %400 = vmatprep.subr.bf16.mxu0 0
  %401 = vmatpush1.bf16.msra.mxu0 0
  %402 = vmatprep.mubr.bf16.mxu0 0
  %403 = vmatmul.mubr.bf16.gmra.mrb[0].mxu0 %v58
  %v404 = vpop.f32.mrb[0].mxu0
  %v405 = vadd.f32 %v283, %v404
  %v406 = vpop.f32.mrb[0].mxu0
  %v407 = vadd.f32 %v287, %v406
  %v408 = vpop.f32.mrb[0].mxu0
  %v409 = vadd.f32 %v283, %v408
  %v410 = vpop.f32.mrb[0].mxu0
  %v411 = vadd.f32 %v287, %v410
  %412 = vmatprep.mubr.bf16.mxu0 0
  %413 = vmatmul.mubr.bf16.gmra.mrb[0].mxu0 %v59
  %v414 = vpop.f32.mrb[0].mxu0
  %v415 = vadd.f32 %v283, %v414
  %v416 = vpop.f32.mrb[0].mxu0
  %v417 = vadd.f32 %v287, %v416
  %v418 = vpop.f32.mrb[0].mxu0
  %v419 = vadd.f32 %v283, %v418
  %v420 = vpop.f32.mrb[0].mxu0
  %v421 = vadd.f32 %v287, %v420
  %422 = vdwg.mxu0
  %v424 = vcombine.high %v257, %v257
  %v426 = vpack.c.bf16 %v257, %v257
  %v427 = vpack.c.bf16 %v424, %v424
  %v428 = vpack.c.bf16 %v409, %v405
  %v429 = vpack.c.bf16 %v419, %v415
  %v430 = vpack.c.bf16 %v411, %v407
  %v431 = vpack.c.bf16 %v421, %v417
  %vm432 = vcmask 261120
  %v434 = vsel %vm432, %v426, 0
  %v437 = vsel %vm432, %v428, 0
  %439 = vmatprep.subr.bf16.mxu0 0
  %440 = vmatpush1.bf16.xpose.msra.mxu0 %v437
  %441 = vmatprep.subr.bf16.mxu0 0
  %442 = vmatpush1.bf16.xpose.msra.mxu0 0
  %443 = vmatprep.subr.bf16.mxu0 0
  %444 = vmatpush1.bf16.xpose.msra.mxu0 0
  %445 = vmatprep.subr.bf16.mxu0 0
  %446 = vmatpush1.bf16.xpose.msra.mxu0 0
  %447 = vmatprep.subr.bf16.mxu0 0
  %448 = vmatpush1.bf16.xpose.msra.mxu0 0
  %449 = vmatprep.subr.bf16.mxu0 0
  %450 = vmatpush1.bf16.xpose.msra.mxu0 0
  %451 = vmatprep.subr.bf16.mxu0 0
  %452 = vmatpush1.bf16.xpose.msra.mxu0 0
  %453 = vmatprep.subr.bf16.mxu0 0
  %454 = vmatpush1.bf16.xpose.msra.mxu0 0
  %455 = vmatprep.subr.bf16.mxu0 0
  %456 = vmatpush1.bf16.xpose.msra.mxu0 0
  %457 = vmatprep.subr.bf16.mxu0 0
  %458 = vmatpush1.bf16.xpose.msra.mxu0 0
  %459 = vmatprep.subr.bf16.mxu0 0
  %460 = vmatpush1.bf16.xpose.msra.mxu0 0
  %461 = vmatprep.subr.bf16.mxu0 0
  %462 = vmatpush1.bf16.xpose.msra.mxu0 0
  %463 = vmatprep.subr.bf16.mxu0 0
  %464 = vmatpush1.bf16.xpose.msra.mxu0 0
  %465 = vmatprep.subr.bf16.mxu0 0
  %466 = vmatpush1.bf16.xpose.msra.mxu0 0
  %467 = vmatprep.subr.bf16.mxu0 0
  %468 = vmatpush1.bf16.xpose.msra.mxu0 0
  %469 = vmatprep.subr.bf16.mxu0 0
  %470 = vmatpush1.bf16.xpose.msra.mxu0 0
  %471 = vmatprep.mubr.bf16.mxu0 0
  %472 = vmatmul.mubr.bf16.gmra.mrb[0].mxu0 %v434
  %v473 = vpop.f32.mrb[0].mxu0
  %v474 = vadd.f32 0.0, %v473
  %v475 = vpop.f32.mrb[0].mxu0
  %v476 = vpop.f32.mrb[0].mxu0
  %v477 = vpop.f32.mrb[0].mxu0
  %478 = vdwg.mxu0
  %v480 = vsel %vm432, %v427, 0
  %v483 = vsel %vm432, %v429, 0
  %485 = vmatprep.subr.bf16.mxu0 0
  %486 = vmatpush1.bf16.xpose.msra.mxu0 %v483
  %487 = vmatprep.subr.bf16.mxu0 0
  %488 = vmatpush1.bf16.xpose.msra.mxu0 0
  %489 = vmatprep.subr.bf16.mxu0 0
  %490 = vmatpush1.bf16.xpose.msra.mxu0 0
  %491 = vmatprep.subr.bf16.mxu0 0
  %492 = vmatpush1.bf16.xpose.msra.mxu0 0
  %493 = vmatprep.subr.bf16.mxu0 0
  %494 = vmatpush1.bf16.xpose.msra.mxu0 0
  %495 = vmatprep.subr.bf16.mxu0 0
  %496 = vmatpush1.bf16.xpose.msra.mxu0 0
  %497 = vmatprep.subr.bf16.mxu0 0
  %498 = vmatpush1.bf16.xpose.msra.mxu0 0
  %499 = vmatprep.subr.bf16.mxu0 0
  %500 = vmatpush1.bf16.xpose.msra.mxu0 0
  %501 = vmatprep.subr.bf16.mxu0 0
  %502 = vmatpush1.bf16.xpose.msra.mxu0 0
  %503 = vmatprep.subr.bf16.mxu0 0
  %504 = vmatpush1.bf16.xpose.msra.mxu0 0
  %505 = vmatprep.subr.bf16.mxu0 0
  %506 = vmatpush1.bf16.xpose.msra.mxu0 0
  %507 = vmatprep.subr.bf16.mxu0 0
  %508 = vmatpush1.bf16.xpose.msra.mxu0 0
  %509 = vmatprep.subr.bf16.mxu0 0
  %510 = vmatpush1.bf16.xpose.msra.mxu0 0
  %511 = vmatprep.subr.bf16.mxu0 0
  %512 = vmatpush1.bf16.xpose.msra.mxu0 0
  %513 = vmatprep.subr.bf16.mxu0 0
  %514 = vmatpush1.bf16.xpose.msra.mxu0 0
  %515 = vmatprep.subr.bf16.mxu0 0
  %516 = vmatpush1.bf16.xpose.msra.mxu0 0
  %517 = vmatprep.mubr.bf16.mxu0 0
  %518 = vmatmul.mubr.bf16.gmra.mrb[0].mxu0 %v480
  %v519 = vpop.f32.mrb[0].mxu0
  %v520 = vadd.f32 0.0, %v519
  %v521 = vpop.f32.mrb[0].mxu0
  %v522 = vpop.f32.mrb[0].mxu0
  %v523 = vpop.f32.mrb[0].mxu0
  %524 = vdwg.mxu0
  %v525 = vmul.f32 %v474, 0.17677669
  %v526 = vmul.f32 %v520, 0.17677669
  %vm527 = vcmask 125952
  %v528 = vsel %vm527, %v525, -inf
  %529 = vmax.xlane.f32.xlu0 %v528
  %v530 = vpop.xlane.xlu0 %529
  %v531 = vsel %vm527, %v526, -inf
  %532 = vmax.xlane.f32.xlu0 %v531
  %v533 = vpop.xlane.xlu0 %532
  %v534 = vsub.f32 %v525, %v530
  %v535 = vsub.f32 %v526, %v533
  %v536 = vmul.f32 %v534, 1.442695
  %v537 = vpow.pop %v536
  %v538 = vmul.f32 %v535, 1.442695
  %v539 = vpow.pop %v538
  %v540 = vsel %vm527, %v537, 0.0
  %541 = vadd.xlane.f32.xlu0 %v540
  %v542 = vpop.xlane.xlu0 %541
  %v543 = vsel %vm527, %v539, 0.0
  %544 = vadd.xlane.f32.xlu0 %v543
  %v545 = vpop.xlane.xlu0 %544
  %v546 = vrcp.pop %v542
  %v547 = vrcp.pop %v545
  %v548 = vmul.f32 %v537, %v546
  %v549 = vmul.f32 %v539, %v547
  %v550 = vpack.c.bf16 %v548, %v548
  %v551 = vpack.c.bf16 %v549, %v549
  %v553 = vsel %vm62, %v550, 0
  %555 = vmatprep.subr.bf16.mxu0 0
  %556 = vmatpush1.bf16.msra.mxu0 %v430
  %557 = vmatprep.subr.bf16.mxu0 0
  %558 = vmatpush1.bf16.msra.mxu0 0
  %559 = vmatprep.subr.bf16.mxu0 0
  %560 = vmatpush1.bf16.msra.mxu0 0
  %561 = vmatprep.subr.bf16.mxu0 0
  %562 = vmatpush1.bf16.msra.mxu0 0
  %563 = vmatprep.subr.bf16.mxu0 0
  %564 = vmatpush1.bf16.msra.mxu0 0
  %565 = vmatprep.subr.bf16.mxu0 0
  %566 = vmatpush1.bf16.msra.mxu0 0
  %567 = vmatprep.subr.bf16.mxu0 0
  %568 = vmatpush1.bf16.msra.mxu0 0
  %569 = vmatprep.subr.bf16.mxu0 0
  %570 = vmatpush1.bf16.msra.mxu0 0
  %571 = vmatprep.subr.bf16.mxu0 0
  %572 = vmatpush1.bf16.msra.mxu0 0
  %573 = vmatprep.subr.bf16.mxu0 0
  %574 = vmatpush1.bf16.msra.mxu0 0
  %575 = vmatprep.subr.bf16.mxu0 0
  %576 = vmatpush1.bf16.msra.mxu0 0
  %577 = vmatprep.subr.bf16.mxu0 0
  %578 = vmatpush1.bf16.msra.mxu0 0
  %579 = vmatprep.subr.bf16.mxu0 0
  %580 = vmatpush1.bf16.msra.mxu0 0
  %581 = vmatprep.subr.bf16.mxu0 0
  %582 = vmatpush1.bf16.msra.mxu0 0
  %583 = vmatprep.subr.bf16.mxu0 0
  %584 = vmatpush1.bf16.msra.mxu0 0
  %585 = vmatprep.subr.bf16.mxu0 0
  %586 = vmatpush1.bf16.msra.mxu0 0
  %587 = vmatprep.mubr.bf16.mxu0 0
  %588 = vmatmul.mubr.bf16.gmra.mrb[0].mxu0 %v553
  %v589 = vpop.f32.mrb[0].mxu0
  %v590 = vadd.f32 0.0, %v589
  %v591 = vpop.f32.mrb[0].mxu0
  %v592 = vpop.f32.mrb[0].mxu0
  %v593 = vpop.f32.mrb[0].mxu0
  %594 = vdwg.mxu0
  %v596 = vsel %vm62, %v551, 0
  %598 = vmatprep.subr.bf16.mxu0 0
  %599 = vmatpush1.bf16.msra.mxu0 %v431
  %600 = vmatprep.subr.bf16.mxu0 0
  %601 = vmatpush1.bf16.msra.mxu0 0
  %602 = vmatprep.subr.bf16.mxu0 0
  %603 = vmatpush1.bf16.msra.mxu0 0
  %604 = vmatprep.subr.bf16.mxu0 0
  %605 = vmatpush1.bf16.msra.mxu0 0
  %606 = vmatprep.subr.bf16.mxu0 0
  %607 = vmatpush1.bf16.msra.mxu0 0
  %608 = vmatprep.subr.bf16.mxu0 0
  %609 = vmatpush1.bf16.msra.mxu0 0
  %610 = vmatprep.subr.bf16.mxu0 0
  %611 = vmatpush1.bf16.msra.mxu0 0
  %612 = vmatprep.subr.bf16.mxu0 0
  %613 = vmatpush1.bf16.msra.mxu0 0
  %614 = vmatprep.subr.bf16.mxu0 0
  %615 = vmatpush1.bf16.msra.mxu0 0
  %616 = vmatprep.subr.bf16.mxu0 0
  %617 = vmatpush1.bf16.msra.mxu0 0
  %618 = vmatprep.subr.bf16.mxu0 0
  %619 = vmatpush1.bf16.msra.mxu0 0
  %620 = vmatprep.subr.bf16.mxu0 0
  %621 = vmatpush1.bf16.msra.mxu0 0
  %622 = vmatprep.subr.bf16.mxu0 0
  %623 = vmatpush1.bf16.msra.mxu0 0
  %624 = vmatprep.subr.bf16.mxu0 0
  %625 = vmatpush1.bf16.msra.mxu0 0
  %626 = vmatprep.subr.bf16.mxu0 0
  %627 = vmatpush1.bf16.msra.mxu0 0
  %628 = vmatprep.subr.bf16.mxu0 0
  %629 = vmatpush1.bf16.msra.mxu0 0
  %630 = vmatprep.mubr.bf16.mxu0 0
  %631 = vmatmul.mubr.bf16.gmra.mrb[0].mxu0 %v596
  %v632 = vpop.f32.mrb[0].mxu0
  %v633 = vadd.f32 0.0, %v632
  %v634 = vpop.f32.mrb[0].mxu0
  %v635 = vpop.f32.mrb[0].mxu0
  %v636 = vpop.f32.mrb[0].mxu0
  %637 = vdwg.mxu0
  %639 = vrot.lane.b32.xlu0 %v426, 96
  %v640 = vpop.permute.xlu0 %639
  %642 = vrot.lane.b32.xlu0 %v428, 96
  %v643 = vpop.permute.xlu0 %642
  %v645 = vsel %vm432, %v640, 0
  %v648 = vsel %vm432, %v643, 0
  %650 = vmatprep.subr.bf16.mxu0 0
  %651 = vmatpush1.bf16.xpose.msra.mxu0 %v648
  %652 = vmatprep.subr.bf16.mxu0 0
  %653 = vmatpush1.bf16.xpose.msra.mxu0 0
  %654 = vmatprep.subr.bf16.mxu0 0
  %655 = vmatpush1.bf16.xpose.msra.mxu0 0
  %656 = vmatprep.subr.bf16.mxu0 0
  %657 = vmatpush1.bf16.xpose.msra.mxu0 0
  %658 = vmatprep.subr.bf16.mxu0 0
  %659 = vmatpush1.bf16.xpose.msra.mxu0 0
  %660 = vmatprep.subr.bf16.mxu0 0
  %661 = vmatpush1.bf16.xpose.msra.mxu0 0
  %662 = vmatprep.subr.bf16.mxu0 0
  %663 = vmatpush1.bf16.xpose.msra.mxu0 0
  %664 = vmatprep.subr.bf16.mxu0 0
  %665 = vmatpush1.bf16.xpose.msra.mxu0 0
  %666 = vmatprep.subr.bf16.mxu0 0
  %667 = vmatpush1.bf16.xpose.msra.mxu0 0
  %668 = vmatprep.subr.bf16.mxu0 0
  %669 = vmatpush1.bf16.xpose.msra.mxu0 0
  %670 = vmatprep.subr.bf16.mxu0 0
  %671 = vmatpush1.bf16.xpose.msra.mxu0 0
  %672 = vmatprep.subr.bf16.mxu0 0
  %673 = vmatpush1.bf16.xpose.msra.mxu0 0
  %674 = vmatprep.subr.bf16.mxu0 0
  %675 = vmatpush1.bf16.xpose.msra.mxu0 0
  %676 = vmatprep.subr.bf16.mxu0 0
  %677 = vmatpush1.bf16.xpose.msra.mxu0 0
  %678 = vmatprep.subr.bf16.mxu0 0
  %679 = vmatpush1.bf16.xpose.msra.mxu0 0
  %680 = vmatprep.subr.bf16.mxu0 0
  %681 = vmatpush1.bf16.xpose.msra.mxu0 0
  %682 = vmatprep.mubr.bf16.mxu0 0
  %683 = vmatmul.mubr.bf16.gmra.mrb[0].mxu0 %v645
  %v684 = vpop.f32.mrb[0].mxu0
  %v685 = vadd.f32 0.0, %v684
  %v686 = vpop.f32.mrb[0].mxu0
  %v687 = vpop.f32.mrb[0].mxu0
  %v688 = vpop.f32.mrb[0].mxu0
  %689 = vdwg.mxu0
  %691 = vrot.lane.b32.xlu0 %v427, 96
  %v692 = vpop.permute.xlu0 %691
  %694 = vrot.lane.b32.xlu0 %v429, 96
  %v695 = vpop.permute.xlu0 %694
  %v697 = vsel %vm432, %v692, 0
  %v700 = vsel %vm432, %v695, 0
  %702 = vmatprep.subr.bf16.mxu0 0
  %703 = vmatpush1.bf16.xpose.msra.mxu0 %v700
  %704 = vmatprep.subr.bf16.mxu0 0
  %705 = vmatpush1.bf16.xpose.msra.mxu0 0
  %706 = vmatprep.subr.bf16.mxu0 0
  %707 = vmatpush1.bf16.xpose.msra.mxu0 0
  %708 = vmatprep.subr.bf16.mxu0 0
  %709 = vmatpush1.bf16.xpose.msra.mxu0 0
  %710 = vmatprep.subr.bf16.mxu0 0
  %711 = vmatpush1.bf16.xpose.msra.mxu0 0
  %712 = vmatprep.subr.bf16.mxu0 0
  %713 = vmatpush1.bf16.xpose.msra.mxu0 0
  %714 = vmatprep.subr.bf16.mxu0 0
  %715 = vmatpush1.bf16.xpose.msra.mxu0 0
  %716 = vmatprep.subr.bf16.mxu0 0
  %717 = vmatpush1.bf16.xpose.msra.mxu0 0
  %718 = vmatprep.subr.bf16.mxu0 0
  %719 = vmatpush1.bf16.xpose.msra.mxu0 0
  %720 = vmatprep.subr.bf16.mxu0 0
  %721 = vmatpush1.bf16.xpose.msra.mxu0 0
  %722 = vmatprep.subr.bf16.mxu0 0
  %723 = vmatpush1.bf16.xpose.msra.mxu0 0
  %724 = vmatprep.subr.bf16.mxu0 0
  %725 = vmatpush1.bf16.xpose.msra.mxu0 0
  %726 = vmatprep.subr.bf16.mxu0 0
  %727 = vmatpush1.bf16.xpose.msra.mxu0 0
  %728 = vmatprep.subr.bf16.mxu0 0
  %729 = vmatpush1.bf16.xpose.msra.mxu0 0
  %730 = vmatprep.subr.bf16.mxu0 0
  %731 = vmatpush1.bf16.xpose.msra.mxu0 0
  %732 = vmatprep.subr.bf16.mxu0 0
  %733 = vmatpush1.bf16.xpose.msra.mxu0 0
  %734 = vmatprep.mubr.bf16.mxu0 0
  %735 = vmatmul.mubr.bf16.gmra.mrb[0].mxu0 %v697
  %v736 = vpop.f32.mrb[0].mxu0
  %v737 = vadd.f32 0.0, %v736
  %v738 = vpop.f32.mrb[0].mxu0
  %v739 = vpop.f32.mrb[0].mxu0
  %v740 = vpop.f32.mrb[0].mxu0
  %741 = vdwg.mxu0
  %v742 = vmul.f32 %v685, 0.17677669
  %v743 = vmul.f32 %v737, 0.17677669
  %v744 = vsel %vm527, %v742, -inf
  %745 = vmax.xlane.f32.xlu0 %v744
  %v746 = vpop.xlane.xlu0 %745
  %v747 = vsel %vm527, %v743, -inf
  %748 = vmax.xlane.f32.xlu0 %v747
  %v749 = vpop.xlane.xlu0 %748
  %v750 = vsub.f32 %v742, %v746
  %v751 = vsub.f32 %v743, %v749
  %v752 = vmul.f32 %v750, 1.442695
  %v753 = vpow.pop %v752
  %v754 = vmul.f32 %v751, 1.442695
  %v755 = vpow.pop %v754
  %v756 = vsel %vm527, %v753, 0.0
  %757 = vadd.xlane.f32.xlu0 %v756
  %v758 = vpop.xlane.xlu0 %757
  %v759 = vsel %vm527, %v755, 0.0
  %760 = vadd.xlane.f32.xlu0 %v759
  %v761 = vpop.xlane.xlu0 %760
  %v762 = vrcp.pop %v758
  %v763 = vrcp.pop %v761
  %v764 = vmul.f32 %v753, %v762
  %v765 = vmul.f32 %v755, %v763
  %v766 = vpack.c.bf16 %v764, %v764
  %v767 = vpack.c.bf16 %v765, %v765
  %769 = vrot.lane.b32.xlu0 %v430, 96
  %v770 = vpop.permute.xlu0 %769
  %v773 = vsel %vm62, %v766, 0
  %775 = vmatprep.subr.bf16.mxu0 0
  %776 = vmatpush1.bf16.msra.mxu0 %v770
  %777 = vmatprep.subr.bf16.mxu0 0
  %778 = vmatpush1.bf16.msra.mxu0 0
  %779 = vmatprep.subr.bf16.mxu0 0
  %780 = vmatpush1.bf16.msra.mxu0 0
  %781 = vmatprep.subr.bf16.mxu0 0
  %782 = vmatpush1.bf16.msra.mxu0 0
  %783 = vmatprep.subr.bf16.mxu0 0
  %784 = vmatpush1.bf16.msra.mxu0 0
  %785 = vmatprep.subr.bf16.mxu0 0
  %786 = vmatpush1.bf16.msra.mxu0 0
  %787 = vmatprep.subr.bf16.mxu0 0
  %788 = vmatpush1.bf16.msra.mxu0 0
  %789 = vmatprep.subr.bf16.mxu0 0
  %790 = vmatpush1.bf16.msra.mxu0 0
  %791 = vmatprep.subr.bf16.mxu0 0
  %792 = vmatpush1.bf16.msra.mxu0 0
  %793 = vmatprep.subr.bf16.mxu0 0
  %794 = vmatpush1.bf16.msra.mxu0 0
  %795 = vmatprep.subr.bf16.mxu0 0
  %796 = vmatpush1.bf16.msra.mxu0 0
  %797 = vmatprep.subr.bf16.mxu0 0
  %798 = vmatpush1.bf16.msra.mxu0 0
  %799 = vmatprep.subr.bf16.mxu0 0
  %800 = vmatpush1.bf16.msra.mxu0 0
  %801 = vmatprep.subr.bf16.mxu0 0
  %802 = vmatpush1.bf16.msra.mxu0 0
  %803 = vmatprep.subr.bf16.mxu0 0
  %804 = vmatpush1.bf16.msra.mxu0 0
  %805 = vmatprep.subr.bf16.mxu0 0
  %806 = vmatpush1.bf16.msra.mxu0 0
  %807 = vmatprep.mubr.bf16.mxu0 0
  %808 = vmatmul.mubr.bf16.gmra.mrb[0].mxu0 %v773
  %v809 = vpop.f32.mrb[0].mxu0
  %v810 = vadd.f32 0.0, %v809
  %v811 = vpop.f32.mrb[0].mxu0
  %v812 = vpop.f32.mrb[0].mxu0
  %v813 = vpop.f32.mrb[0].mxu0
  %814 = vdwg.mxu0
  %816 = vrot.lane.b32.xlu0 %v431, 96
  %v817 = vpop.permute.xlu0 %816
  %v820 = vsel %vm62, %v767, 0
  %822 = vmatprep.subr.bf16.mxu0 0
  %823 = vmatpush1.bf16.msra.mxu0 %v817
  %824 = vmatprep.subr.bf16.mxu0 0
  %825 = vmatpush1.bf16.msra.mxu0 0
  %826 = vmatprep.subr.bf16.mxu0 0
  %827 = vmatpush1.bf16.msra.mxu0 0
  %828 = vmatprep.subr.bf16.mxu0 0
  %829 = vmatpush1.bf16.msra.mxu0 0
  %830 = vmatprep.subr.bf16.mxu0 0
  %831 = vmatpush1.bf16.msra.mxu0 0
  %832 = vmatprep.subr.bf16.mxu0 0
  %833 = vmatpush1.bf16.msra.mxu0 0
  %834 = vmatprep.subr.bf16.mxu0 0
  %835 = vmatpush1.bf16.msra.mxu0 0
  %836 = vmatprep.subr.bf16.mxu0 0
  %837 = vmatpush1.bf16.msra.mxu0 0
  %838 = vmatprep.subr.bf16.mxu0 0
  %839 = vmatpush1.bf16.msra.mxu0 0
  %840 = vmatprep.subr.bf16.mxu0 0
  %841 = vmatpush1.bf16.msra.mxu0 0
  %842 = vmatprep.subr.bf16.mxu0 0
  %843 = vmatpush1.bf16.msra.mxu0 0
  %844 = vmatprep.subr.bf16.mxu0 0
  %845 = vmatpush1.bf16.msra.mxu0 0
  %846 = vmatprep.subr.bf16.mxu0 0
  %847 = vmatpush1.bf16.msra.mxu0 0
  %848 = vmatprep.subr.bf16.mxu0 0
  %849 = vmatpush1.bf16.msra.mxu0 0
  %850 = vmatprep.subr.bf16.mxu0 0
  %851 = vmatpush1.bf16.msra.mxu0 0
  %852 = vmatprep.subr.bf16.mxu0 0
  %853 = vmatpush1.bf16.msra.mxu0 0
  %854 = vmatprep.mubr.bf16.mxu0 0
  %855 = vmatmul.mubr.bf16.gmra.mrb[0].mxu0 %v820
  %v856 = vpop.f32.mrb[0].mxu0
  %v857 = vadd.f32 0.0, %v856
  %v858 = vpop.f32.mrb[0].mxu0
  %v859 = vpop.f32.mrb[0].mxu0
  %v860 = vpop.f32.mrb[0].mxu0
  %861 = vdwg.mxu0
  %862 = vrot.lane.b32.xlu0 %v426, 64
  %v863 = vpop.permute.xlu0 %862
  %864 = vrot.lane.b32.xlu0 %v428, 64
  %v865 = vpop.permute.xlu0 %864
  %v867 = vsel %vm432, %v863, 0
  %v870 = vsel %vm432, %v865, 0
  %872 = vmatprep.subr.bf16.mxu0 0
  %873 = vmatpush1.bf16.xpose.msra.mxu0 %v870
  %874 = vmatprep.subr.bf16.mxu0 0
  %875 = vmatpush1.bf16.xpose.msra.mxu0 0
  %876 = vmatprep.subr.bf16.mxu0 0
  %877 = vmatpush1.bf16.xpose.msra.mxu0 0
  %878 = vmatprep.subr.bf16.mxu0 0
  %879 = vmatpush1.bf16.xpose.msra.mxu0 0
  %880 = vmatprep.subr.bf16.mxu0 0
  %881 = vmatpush1.bf16.xpose.msra.mxu0 0
  %882 = vmatprep.subr.bf16.mxu0 0
  %883 = vmatpush1.bf16.xpose.msra.mxu0 0
  %884 = vmatprep.subr.bf16.mxu0 0
  %885 = vmatpush1.bf16.xpose.msra.mxu0 0
  %886 = vmatprep.subr.bf16.mxu0 0
  %887 = vmatpush1.bf16.xpose.msra.mxu0 0
  %888 = vmatprep.subr.bf16.mxu0 0
  %889 = vmatpush1.bf16.xpose.msra.mxu0 0
  %890 = vmatprep.subr.bf16.mxu0 0
  %891 = vmatpush1.bf16.xpose.msra.mxu0 0
  %892 = vmatprep.subr.bf16.mxu0 0
  %893 = vmatpush1.bf16.xpose.msra.mxu0 0
  %894 = vmatprep.subr.bf16.mxu0 0
  %895 = vmatpush1.bf16.xpose.msra.mxu0 0
  %896 = vmatprep.subr.bf16.mxu0 0
  %897 = vmatpush1.bf16.xpose.msra.mxu0 0
  %898 = vmatprep.subr.bf16.mxu0 0
  %899 = vmatpush1.bf16.xpose.msra.mxu0 0
  %900 = vmatprep.subr.bf16.mxu0 0
  %901 = vmatpush1.bf16.xpose.msra.mxu0 0
  %902 = vmatprep.subr.bf16.mxu0 0
  %903 = vmatpush1.bf16.xpose.msra.mxu0 0
  %904 = vmatprep.mubr.bf16.mxu0 0
  %905 = vmatmul.mubr.bf16.gmra.mrb[0].mxu0 %v867
  %v906 = vpop.f32.mrb[0].mxu0
  %v907 = vadd.f32 0.0, %v906
  %v908 = vpop.f32.mrb[0].mxu0
  %v909 = vpop.f32.mrb[0].mxu0
  %v910 = vpop.f32.mrb[0].mxu0
  %911 = vdwg.mxu0
  %912 = vrot.lane.b32.xlu0 %v427, 64
  %v913 = vpop.permute.xlu0 %912
  %914 = vrot.lane.b32.xlu0 %v429, 64
  %v915 = vpop.permute.xlu0 %914
  %v917 = vsel %vm432, %v913, 0
  %v920 = vsel %vm432, %v915, 0
  %922 = vmatprep.subr.bf16.mxu0 0
  %923 = vmatpush1.bf16.xpose.msra.mxu0 %v920
  %924 = vmatprep.subr.bf16.mxu0 0
  %925 = vmatpush1.bf16.xpose.msra.mxu0 0
  %926 = vmatprep.subr.bf16.mxu0 0
  %927 = vmatpush1.bf16.xpose.msra.mxu0 0
  %928 = vmatprep.subr.bf16.mxu0 0
  %929 = vmatpush1.bf16.xpose.msra.mxu0 0
  %930 = vmatprep.subr.bf16.mxu0 0
  %931 = vmatpush1.bf16.xpose.msra.mxu0 0
  %932 = vmatprep.subr.bf16.mxu0 0
  %933 = vmatpush1.bf16.xpose.msra.mxu0 0
  %934 = vmatprep.subr.bf16.mxu0 0
  %935 = vmatpush1.bf16.xpose.msra.mxu0 0
  %936 = vmatprep.subr.bf16.mxu0 0
  %937 = vmatpush1.bf16.xpose.msra.mxu0 0
  %938 = vmatprep.subr.bf16.mxu0 0
  %939 = vmatpush1.bf16.xpose.msra.mxu0 0
  %940 = vmatprep.subr.bf16.mxu0 0
  %941 = vmatpush1.bf16.xpose.msra.mxu0 0
  %942 = vmatprep.subr.bf16.mxu0 0
  %943 = vmatpush1.bf16.xpose.msra.mxu0 0
  %944 = vmatprep.subr.bf16.mxu0 0
  %945 = vmatpush1.bf16.xpose.msra.mxu0 0
  %946 = vmatprep.subr.bf16.mxu0 0
  %947 = vmatpush1.bf16.xpose.msra.mxu0 0
  %948 = vmatprep.subr.bf16.mxu0 0
  %949 = vmatpush1.bf16.xpose.msra.mxu0 0
  %950 = vmatprep.subr.bf16.mxu0 0
  %951 = vmatpush1.bf16.xpose.msra.mxu0 0
  %952 = vmatprep.subr.bf16.mxu0 0
  %953 = vmatpush1.bf16.xpose.msra.mxu0 0
  %954 = vmatprep.mubr.bf16.mxu0 0
  %955 = vmatmul.mubr.bf16.gmra.mrb[0].mxu0 %v917
  %v956 = vpop.f32.mrb[0].mxu0
  %v957 = vadd.f32 0.0, %v956
  %v958 = vpop.f32.mrb[0].mxu0
  %v959 = vpop.f32.mrb[0].mxu0
  %v960 = vpop.f32.mrb[0].mxu0
  %961 = vdwg.mxu0
  %v962 = vmul.f32 %v907, 0.17677669
  %v963 = vmul.f32 %v957, 0.17677669
  %v964 = vsel %vm527, %v962, -inf
  %965 = vmax.xlane.f32.xlu0 %v964
  %v966 = vpop.xlane.xlu0 %965
  %v967 = vsel %vm527, %v963, -inf
  %968 = vmax.xlane.f32.xlu0 %v967
  %v969 = vpop.xlane.xlu0 %968
  %v970 = vsub.f32 %v962, %v966
  %v971 = vsub.f32 %v963, %v969
  %v972 = vmul.f32 %v970, 1.442695
  %v973 = vpow.pop %v972
  %v974 = vmul.f32 %v971, 1.442695
  %v975 = vpow.pop %v974
  %v976 = vsel %vm527, %v973, 0.0
  %977 = vadd.xlane.f32.xlu0 %v976
  %v978 = vpop.xlane.xlu0 %977
  %v979 = vsel %vm527, %v975, 0.0
  %980 = vadd.xlane.f32.xlu0 %v979
  %v981 = vpop.xlane.xlu0 %980
  %v982 = vrcp.pop %v978
  %v983 = vrcp.pop %v981
  %v984 = vmul.f32 %v973, %v982
  %v985 = vmul.f32 %v975, %v983
  %v986 = vpack.c.bf16 %v984, %v984
  %v987 = vpack.c.bf16 %v985, %v985
  %988 = vrot.lane.b32.xlu0 %v430, 64
  %v989 = vpop.permute.xlu0 %988
  %v992 = vsel %vm62, %v986, 0
  %994 = vmatprep.subr.bf16.mxu0 0
  %995 = vmatpush1.bf16.msra.mxu0 %v989
  %996 = vmatprep.subr.bf16.mxu0 0
  %997 = vmatpush1.bf16.msra.mxu0 0
  %998 = vmatprep.subr.bf16.mxu0 0
  %999 = vmatpush1.bf16.msra.mxu0 0
  %1000 = vmatprep.subr.bf16.mxu0 0
  %1001 = vmatpush1.bf16.msra.mxu0 0
  %1002 = vmatprep.subr.bf16.mxu0 0
  %1003 = vmatpush1.bf16.msra.mxu0 0
  %1004 = vmatprep.subr.bf16.mxu0 0
  %1005 = vmatpush1.bf16.msra.mxu0 0
  %1006 = vmatprep.subr.bf16.mxu0 0
  %1007 = vmatpush1.bf16.msra.mxu0 0
  %1008 = vmatprep.subr.bf16.mxu0 0
  %1009 = vmatpush1.bf16.msra.mxu0 0
  %1010 = vmatprep.subr.bf16.mxu0 0
  %1011 = vmatpush1.bf16.msra.mxu0 0
  %1012 = vmatprep.subr.bf16.mxu0 0
  %1013 = vmatpush1.bf16.msra.mxu0 0
  %1014 = vmatprep.subr.bf16.mxu0 0
  %1015 = vmatpush1.bf16.msra.mxu0 0
  %1016 = vmatprep.subr.bf16.mxu0 0
  %1017 = vmatpush1.bf16.msra.mxu0 0
  %1018 = vmatprep.subr.bf16.mxu0 0
  %1019 = vmatpush1.bf16.msra.mxu0 0
  %1020 = vmatprep.subr.bf16.mxu0 0
  %1021 = vmatpush1.bf16.msra.mxu0 0
  %1022 = vmatprep.subr.bf16.mxu0 0
  %1023 = vmatpush1.bf16.msra.mxu0 0
  %1024 = vmatprep.subr.bf16.mxu0 0
  %1025 = vmatpush1.bf16.msra.mxu0 0
  %1026 = vmatprep.mubr.bf16.mxu0 0
  %1027 = vmatmul.mubr.bf16.gmra.mrb[0].mxu0 %v992
  %v1028 = vpop.f32.mrb[0].mxu0
  %v1029 = vadd.f32 0.0, %v1028
  %v1030 = vpop.f32.mrb[0].mxu0
  %v1031 = vpop.f32.mrb[0].mxu0
  %v1032 = vpop.f32.mrb[0].mxu0
  %1033 = vdwg.mxu0
  %1034 = vrot.lane.b32.xlu0 %v431, 64
  %v1035 = vpop.permute.xlu0 %1034
  %v1038 = vsel %vm62, %v987, 0
  %1040 = vmatprep.subr.bf16.mxu0 0
  %1041 = vmatpush1.bf16.msra.mxu0 %v1035
  %1042 = vmatprep.subr.bf16.mxu0 0
  %1043 = vmatpush1.bf16.msra.mxu0 0
  %1044 = vmatprep.subr.bf16.mxu0 0
  %1045 = vmatpush1.bf16.msra.mxu0 0
  %1046 = vmatprep.subr.bf16.mxu0 0
  %1047 = vmatpush1.bf16.msra.mxu0 0
  %1048 = vmatprep.subr.bf16.mxu0 0
  %1049 = vmatpush1.bf16.msra.mxu0 0
  %1050 = vmatprep.subr.bf16.mxu0 0
  %1051 = vmatpush1.bf16.msra.mxu0 0
  %1052 = vmatprep.subr.bf16.mxu0 0
  %1053 = vmatpush1.bf16.msra.mxu0 0
  %1054 = vmatprep.subr.bf16.mxu0 0
  %1055 = vmatpush1.bf16.msra.mxu0 0
  %1056 = vmatprep.subr.bf16.mxu0 0
  %1057 = vmatpush1.bf16.msra.mxu0 0
  %1058 = vmatprep.subr.bf16.mxu0 0
  %1059 = vmatpush1.bf16.msra.mxu0 0
  %1060 = vmatprep.subr.bf16.mxu0 0
  %1061 = vmatpush1.bf16.msra.mxu0 0
  %1062 = vmatprep.subr.bf16.mxu0 0
  %1063 = vmatpush1.bf16.msra.mxu0 0
  %1064 = vmatprep.subr.bf16.mxu0 0
  %1065 = vmatpush1.bf16.msra.mxu0 0
  %1066 = vmatprep.subr.bf16.mxu0 0
  %1067 = vmatpush1.bf16.msra.mxu0 0
  %1068 = vmatprep.subr.bf16.mxu0 0
  %1069 = vmatpush1.bf16.msra.mxu0 0
  %1070 = vmatprep.subr.bf16.mxu0 0
  %1071 = vmatpush1.bf16.msra.mxu0 0
  %1072 = vmatprep.mubr.bf16.mxu0 0
  %1073 = vmatmul.mubr.bf16.gmra.mrb[0].mxu0 %v1038
  %v1074 = vpop.f32.mrb[0].mxu0
  %v1075 = vadd.f32 0.0, %v1074
  %v1076 = vpop.f32.mrb[0].mxu0
  %v1077 = vpop.f32.mrb[0].mxu0
  %v1078 = vpop.f32.mrb[0].mxu0
  %1079 = vdwg.mxu0
  %1080 = vrot.lane.b32.xlu0 %v426, 32
  %v1081 = vpop.permute.xlu0 %1080
  %1082 = vrot.lane.b32.xlu0 %v428, 32
  %v1083 = vpop.permute.xlu0 %1082
  %v1085 = vsel %vm432, %v1081, 0
  %v1088 = vsel %vm432, %v1083, 0
  %1090 = vmatprep.subr.bf16.mxu0 0
  %1091 = vmatpush1.bf16.xpose.msra.mxu0 %v1088
  %1092 = vmatprep.subr.bf16.mxu0 0
  %1093 = vmatpush1.bf16.xpose.msra.mxu0 0
  %1094 = vmatprep.subr.bf16.mxu0 0
  %1095 = vmatpush1.bf16.xpose.msra.mxu0 0
  %1096 = vmatprep.subr.bf16.mxu0 0
  %1097 = vmatpush1.bf16.xpose.msra.mxu0 0
  %1098 = vmatprep.subr.bf16.mxu0 0
  %1099 = vmatpush1.bf16.xpose.msra.mxu0 0
  %1100 = vmatprep.subr.bf16.mxu0 0
  %1101 = vmatpush1.bf16.xpose.msra.mxu0 0
  %1102 = vmatprep.subr.bf16.mxu0 0
  %1103 = vmatpush1.bf16.xpose.msra.mxu0 0
  %1104 = vmatprep.subr.bf16.mxu0 0
  %1105 = vmatpush1.bf16.xpose.msra.mxu0 0
  %1106 = vmatprep.subr.bf16.mxu0 0
  %1107 = vmatpush1.bf16.xpose.msra.mxu0 0
  %1108 = vmatprep.subr.bf16.mxu0 0
  %1109 = vmatpush1.bf16.xpose.msra.mxu0 0
  %1110 = vmatprep.subr.bf16.mxu0 0
  %1111 = vmatpush1.bf16.xpose.msra.mxu0 0
  %1112 = vmatprep.subr.bf16.mxu0 0
  %1113 = vmatpush1.bf16.xpose.msra.mxu0 0
  %1114 = vmatprep.subr.bf16.mxu0 0
  %1115 = vmatpush1.bf16.xpose.msra.mxu0 0
  %1116 = vmatprep.subr.bf16.mxu0 0
  %1117 = vmatpush1.bf16.xpose.msra.mxu0 0
  %1118 = vmatprep.subr.bf16.mxu0 0
  %1119 = vmatpush1.bf16.xpose.msra.mxu0 0
  %1120 = vmatprep.subr.bf16.mxu0 0
  %1121 = vmatpush1.bf16.xpose.msra.mxu0 0
  %1122 = vmatprep.mubr.bf16.mxu0 0
  %1123 = vmatmul.mubr.bf16.gmra.mrb[0].mxu0 %v1085
  %v1124 = vpop.f32.mrb[0].mxu0
  %v1125 = vadd.f32 0.0, %v1124
  %v1126 = vpop.f32.mrb[0].mxu0
  %v1127 = vpop.f32.mrb[0].mxu0
  %v1128 = vpop.f32.mrb[0].mxu0
  %1129 = vdwg.mxu0
  %1130 = vrot.lane.b32.xlu0 %v427, 32
  %v1131 = vpop.permute.xlu0 %1130
  %1132 = vrot.lane.b32.xlu0 %v429, 32
  %v1133 = vpop.permute.xlu0 %1132
  %v1135 = vsel %vm432, %v1131, 0
  %v1138 = vsel %vm432, %v1133, 0
  %1140 = vmatprep.subr.bf16.mxu0 0
  %1141 = vmatpush1.bf16.xpose.msra.mxu0 %v1138
  %1142 = vmatprep.subr.bf16.mxu0 0
  %1143 = vmatpush1.bf16.xpose.msra.mxu0 0
  %1144 = vmatprep.subr.bf16.mxu0 0
  %1145 = vmatpush1.bf16.xpose.msra.mxu0 0
  %1146 = vmatprep.subr.bf16.mxu0 0
  %1147 = vmatpush1.bf16.xpose.msra.mxu0 0
  %1148 = vmatprep.subr.bf16.mxu0 0
  %1149 = vmatpush1.bf16.xpose.msra.mxu0 0
  %1150 = vmatprep.subr.bf16.mxu0 0
  %1151 = vmatpush1.bf16.xpose.msra.mxu0 0
  %1152 = vmatprep.subr.bf16.mxu0 0
  %1153 = vmatpush1.bf16.xpose.msra.mxu0 0
  %1154 = vmatprep.subr.bf16.mxu0 0
  %1155 = vmatpush1.bf16.xpose.msra.mxu0 0
  %1156 = vmatprep.subr.bf16.mxu0 0
  %1157 = vmatpush1.bf16.xpose.msra.mxu0 0
  %1158 = vmatprep.subr.bf16.mxu0 0
  %1159 = vmatpush1.bf16.xpose.msra.mxu0 0
  %1160 = vmatprep.subr.bf16.mxu0 0
  %1161 = vmatpush1.bf16.xpose.msra.mxu0 0
  %1162 = vmatprep.subr.bf16.mxu0 0
  %1163 = vmatpush1.bf16.xpose.msra.mxu0 0
  %1164 = vmatprep.subr.bf16.mxu0 0
  %1165 = vmatpush1.bf16.xpose.msra.mxu0 0
  %1166 = vmatprep.subr.bf16.mxu0 0
  %1167 = vmatpush1.bf16.xpose.msra.mxu0 0
  %1168 = vmatprep.subr.bf16.mxu0 0
  %1169 = vmatpush1.bf16.xpose.msra.mxu0 0
  %1170 = vmatprep.subr.bf16.mxu0 0
  %1171 = vmatpush1.bf16.xpose.msra.mxu0 0
  %1172 = vmatprep.mubr.bf16.mxu0 0
  %1173 = vmatmul.mubr.bf16.gmra.mrb[0].mxu0 %v1135
  %v1174 = vpop.f32.mrb[0].mxu0
  %v1175 = vadd.f32 0.0, %v1174
  %v1176 = vpop.f32.mrb[0].mxu0
  %v1177 = vpop.f32.mrb[0].mxu0
  %v1178 = vpop.f32.mrb[0].mxu0
  %1179 = vdwg.mxu0
  %v1180 = vmul.f32 %v1125, 0.17677669
  %v1181 = vmul.f32 %v1175, 0.17677669
  %v1182 = vsel %vm527, %v1180, -inf
  %1183 = vmax.xlane.f32.xlu0 %v1182
  %v1184 = vpop.xlane.xlu0 %1183
  %v1185 = vsel %vm527, %v1181, -inf
  %1186 = vmax.xlane.f32.xlu0 %v1185
  %v1187 = vpop.xlane.xlu0 %1186
  %v1188 = vsub.f32 %v1180, %v1184
  %v1189 = vsub.f32 %v1181, %v1187
  %v1190 = vmul.f32 %v1188, 1.442695
  %v1191 = vpow.pop %v1190
  %v1192 = vmul.f32 %v1189, 1.442695
  %v1193 = vpow.pop %v1192
  %v1194 = vsel %vm527, %v1191, 0.0
  %1195 = vadd.xlane.f32.xlu0 %v1194
  %v1196 = vpop.xlane.xlu0 %1195
  %v1197 = vsel %vm527, %v1193, 0.0
  %1198 = vadd.xlane.f32.xlu0 %v1197
  %v1199 = vpop.xlane.xlu0 %1198
  %v1200 = vrcp.pop %v1196
  %v1201 = vrcp.pop %v1199
  %v1202 = vmul.f32 %v1191, %v1200
  %v1203 = vmul.f32 %v1193, %v1201
  %v1204 = vpack.c.bf16 %v1202, %v1202
  %v1205 = vpack.c.bf16 %v1203, %v1203
  %1206 = vrot.lane.b32.xlu0 %v430, 32
  %v1207 = vpop.permute.xlu0 %1206
  %v1210 = vsel %vm62, %v1204, 0
  %1212 = vmatprep.subr.bf16.mxu0 0
  %1213 = vmatpush1.bf16.msra.mxu0 %v1207
  %1214 = vmatprep.subr.bf16.mxu0 0
  %1215 = vmatpush1.bf16.msra.mxu0 0
  %1216 = vmatprep.subr.bf16.mxu0 0
  %1217 = vmatpush1.bf16.msra.mxu0 0
  %1218 = vmatprep.subr.bf16.mxu0 0
  %1219 = vmatpush1.bf16.msra.mxu0 0
  %1220 = vmatprep.subr.bf16.mxu0 0
  %1221 = vmatpush1.bf16.msra.mxu0 0
  %1222 = vmatprep.subr.bf16.mxu0 0
  %1223 = vmatpush1.bf16.msra.mxu0 0
  %1224 = vmatprep.subr.bf16.mxu0 0
  %1225 = vmatpush1.bf16.msra.mxu0 0
  %1226 = vmatprep.subr.bf16.mxu0 0
  %1227 = vmatpush1.bf16.msra.mxu0 0
  %1228 = vmatprep.subr.bf16.mxu0 0
  %1229 = vmatpush1.bf16.msra.mxu0 0
  %1230 = vmatprep.subr.bf16.mxu0 0
  %1231 = vmatpush1.bf16.msra.mxu0 0
  %1232 = vmatprep.subr.bf16.mxu0 0
  %1233 = vmatpush1.bf16.msra.mxu0 0
  %1234 = vmatprep.subr.bf16.mxu0 0
  %1235 = vmatpush1.bf16.msra.mxu0 0
  %1236 = vmatprep.subr.bf16.mxu0 0
  %1237 = vmatpush1.bf16.msra.mxu0 0
  %1238 = vmatprep.subr.bf16.mxu0 0
  %1239 = vmatpush1.bf16.msra.mxu0 0
  %1240 = vmatprep.subr.bf16.mxu0 0
  %1241 = vmatpush1.bf16.msra.mxu0 0
  %1242 = vmatprep.subr.bf16.mxu0 0
  %1243 = vmatpush1.bf16.msra.mxu0 0
  %1244 = vmatprep.mubr.bf16.mxu0 0
  %1245 = vmatmul.mubr.bf16.gmra.mrb[0].mxu0 %v1210
  %v1246 = vpop.f32.mrb[0].mxu0
  %v1247 = vadd.f32 0.0, %v1246
  %v1248 = vpop.f32.mrb[0].mxu0
  %v1249 = vpop.f32.mrb[0].mxu0
  %v1250 = vpop.f32.mrb[0].mxu0
  %1251 = vdwg.mxu0
  %1252 = vrot.lane.b32.xlu0 %v431, 32
  %v1253 = vpop.permute.xlu0 %1252
  %v1256 = vsel %vm62, %v1205, 0
  %1258 = vmatprep.subr.bf16.mxu0 0
  %1259 = vmatpush1.bf16.msra.mxu0 %v1253
  %1260 = vmatprep.subr.bf16.mxu0 0
  %1261 = vmatpush1.bf16.msra.mxu0 0
  %1262 = vmatprep.subr.bf16.mxu0 0
  %1263 = vmatpush1.bf16.msra.mxu0 0
  %1264 = vmatprep.subr.bf16.mxu0 0
  %1265 = vmatpush1.bf16.msra.mxu0 0
  %1266 = vmatprep.subr.bf16.mxu0 0
  %1267 = vmatpush1.bf16.msra.mxu0 0
  %1268 = vmatprep.subr.bf16.mxu0 0
  %1269 = vmatpush1.bf16.msra.mxu0 0
  %1270 = vmatprep.subr.bf16.mxu0 0
  %1271 = vmatpush1.bf16.msra.mxu0 0
  %1272 = vmatprep.subr.bf16.mxu0 0
  %1273 = vmatpush1.bf16.msra.mxu0 0
  %1274 = vmatprep.subr.bf16.mxu0 0
  %1275 = vmatpush1.bf16.msra.mxu0 0
  %1276 = vmatprep.subr.bf16.mxu0 0
  %1277 = vmatpush1.bf16.msra.mxu0 0
  %1278 = vmatprep.subr.bf16.mxu0 0
  %1279 = vmatpush1.bf16.msra.mxu0 0
  %1280 = vmatprep.subr.bf16.mxu0 0
  %1281 = vmatpush1.bf16.msra.mxu0 0
  %1282 = vmatprep.subr.bf16.mxu0 0
  %1283 = vmatpush1.bf16.msra.mxu0 0
  %1284 = vmatprep.subr.bf16.mxu0 0
  %1285 = vmatpush1.bf16.msra.mxu0 0
  %1286 = vmatprep.subr.bf16.mxu0 0
  %1287 = vmatpush1.bf16.msra.mxu0 0
  %1288 = vmatprep.subr.bf16.mxu0 0
  %1289 = vmatpush1.bf16.msra.mxu0 0
  %1290 = vmatprep.mubr.bf16.mxu0 0
  %1291 = vmatmul.mubr.bf16.gmra.mrb[0].mxu0 %v1256
  %v1292 = vpop.f32.mrb[0].mxu0
  %v1293 = vadd.f32 0.0, %v1292
  %v1294 = vpop.f32.mrb[0].mxu0
  %v1295 = vpop.f32.mrb[0].mxu0
  %v1296 = vpop.f32.mrb[0].mxu0
  %1297 = vdwg.mxu0
  %v1300 = vcombine.low %v590, %v633
  %v1304 = vcombine.low %v810, %v857
  %1305 = vrot.lane.b32.xlu0 %v1304, 32
  %v1306 = vpop.permute.xlu0 %1305
  %v1310 = vcombine.low %v1029, %v1075
  %1311 = vrot.lane.b32.xlu0 %v1310, 64
  %v1312 = vpop.permute.xlu0 %1311
  %v1316 = vcombine.low %v1247, %v1293
  %1317 = vrot.lane.b32.xlu0 %v1316, 96
  %v1318 = vpop.permute.xlu0 %1317
  %v1320 = vsel %vm432, %v1300, %v1306
  %vm1321 = vcmask 523264
  %v1322 = vsel %vm1321, %v1320, %v1312
  %vm1323 = vcmask 785408
  %v1324 = vsel %vm1323, %v1322, %v1318
  %v1325 = vpack.c.bf16 %v1324, %v1324
  %v1326 = vld [vmem:[%s6] sm:$0xf]
  %v1327 = vld [vmem:[%s6 + $0x4] sm:$0xf]
  %v1328 = vld [vmem:[%s6 + $0x8] sm:$0xf]
  %v1329 = vld [vmem:[%s6 + $0xc] sm:$0xf]
  %v1330 = vld [vmem:[%s6 + $0x10] sm:$0xf]
  %v1331 = vld [vmem:[%s6 + $0x14] sm:$0xf]
  %v1332 = vld [vmem:[%s6 + $0x18] sm:$0xf]
  %v1333 = vld [vmem:[%s6 + $0x1c] sm:$0xf]
  %v1334 = vld [vmem:[%s6 + $0x20] sm:$0xf]
  %v1335 = vld [vmem:[%s6 + $0x24] sm:$0xf]
  %v1336 = vld [vmem:[%s6 + $0x28] sm:$0xf]
  %v1337 = vld [vmem:[%s6 + $0x2c] sm:$0xf]
  %v1338 = vld [vmem:[%s6 + $0x30] sm:$0xf]
  %v1339 = vld [vmem:[%s6 + $0x34] sm:$0xf]
  %v1340 = vld [vmem:[%s6 + $0x38] sm:$0xf]
  %v1341 = vld [vmem:[%s6 + $0x3c] sm:$0xf]
  %v1342 = vld [vmem:[%s7] sm:$0x1]
  %v1344 = vlaneseq
  %v1345 = vshrl.u32 %v1344, 7
  %v1346 = vsub.s32 0, %v1345
  %v1347 = vrot.slane %v1342, %v1346
  %v1365 = vunpack.c.l.b16 %v1326
  %v1366 = vunpack.c.l.b16 %v1327
  %v1367 = vunpack.c.l.b16 %v1328
  %v1368 = vunpack.c.l.b16 %v1329
  %v1369 = vunpack.c.l.b16 %v1330
  %v1370 = vunpack.c.l.b16 %v1331
  %v1371 = vunpack.c.l.b16 %v1332
  %v1372 = vunpack.c.l.b16 %v1333
  %v1373 = vunpack.c.l.b16 %v1334
  %v1374 = vunpack.c.l.b16 %v1335
  %v1375 = vunpack.c.l.b16 %v1336
  %v1376 = vunpack.c.l.b16 %v1337
  %v1377 = vunpack.c.l.b16 %v1338
  %v1378 = vunpack.c.l.b16 %v1339
  %v1379 = vunpack.c.l.b16 %v1340
  %v1380 = vunpack.c.l.b16 %v1341
  %v1381 = vpack.c.b16 %v1366, %v1365
  %v1382 = vpack.c.b16 %v1368, %v1367
  %v1383 = vpack.c.b16 %v1370, %v1369
  %v1384 = vpack.c.b16 %v1372, %v1371
  %v1385 = vpack.c.b16 %v1374, %v1373
  %v1386 = vpack.c.b16 %v1376, %v1375
  %v1387 = vpack.c.b16 %v1378, %v1377
  %v1388 = vpack.c.b16 %v1380, %v1379
  %1397 = vmatprep.subr.bf16.mxu0 0
  %1398 = vmatpush1.bf16.msra.mxu0 %v1381
  %1399 = vmatprep.subr.bf16.mxu0 0
  %1400 = vmatpush1.bf16.msra.mxu0 %v1382
  %1401 = vmatprep.subr.bf16.mxu0 0
  %1402 = vmatpush1.bf16.msra.mxu0 %v1383
  %1403 = vmatprep.subr.bf16.mxu0 0
  %1404 = vmatpush1.bf16.msra.mxu0 %v1384
  %1405 = vmatprep.subr.bf16.mxu0 0
  %1406 = vmatpush1.bf16.msra.mxu0 %v1385
  %1407 = vmatprep.subr.bf16.mxu0 0
  %1408 = vmatpush1.bf16.msra.mxu0 %v1386
  %1409 = vmatprep.subr.bf16.mxu0 0
  %1410 = vmatpush1.bf16.msra.mxu0 %v1387
  %1411 = vmatprep.subr.bf16.mxu0 0
  %1412 = vmatpush1.bf16.msra.mxu0 %v1388
  %1413 = vmatprep.subr.bf16.mxu0 0
  %1414 = vmatpush1.bf16.msra.mxu0 0
  %1415 = vmatprep.subr.bf16.mxu0 0
  %1416 = vmatpush1.bf16.msra.mxu0 0
  %1417 = vmatprep.subr.bf16.mxu0 0
  %1418 = vmatpush1.bf16.msra.mxu0 0
  %1419 = vmatprep.subr.bf16.mxu0 0
  %1420 = vmatpush1.bf16.msra.mxu0 0
  %1421 = vmatprep.subr.bf16.mxu0 0
  %1422 = vmatpush1.bf16.msra.mxu0 0
  %1423 = vmatprep.subr.bf16.mxu0 0
  %1424 = vmatpush1.bf16.msra.mxu0 0
  %1425 = vmatprep.subr.bf16.mxu0 0
  %1426 = vmatpush1.bf16.msra.mxu0 0
  %1427 = vmatprep.subr.bf16.mxu0 0
  %1428 = vmatpush1.bf16.msra.mxu0 0
  %1429 = vmatprep.mubr.bf16.mxu0 0
  %1430 = vmatmul.mubr.bf16.gmra.mrb[0].mxu0 %v1325
  %v1431 = vpop.f32.mrb[0].mxu0
  %v1432 = vadd.f32 %v1347, %v1431
  %v1433 = vpop.f32.mrb[0].mxu0
  %v1434 = vpop.f32.mrb[0].mxu0
  %v1435 = vpop.f32.mrb[0].mxu0
  %1436 = vdwg.mxu0
  %v1438 = vcombine.high %v1432, %v1432
  %v1440 = vadd.f32 %v101, %v1432
  %v1441 = vadd.f32 %v141, %v1438
  %v1442 = vld [vmem:[%s8] sm:$0x1]
  %v1443 = vld [vmem:[%s9] sm:$0x1]
  %v1446 = vcombine.low %v1440, %v1441
  %1448 = vadd.xlane.f32.xlu0 %v1446
  %v1449 = vpop.xlane.xlu0 %1448
  %v1450 = vrcp.pop 128.0
  %v1451 = vmul.f32 %v1449, %v1450
  %v1454 = vunpack.c.l.s4 839922192
  %v1455 = vunpack.c.0.s8 %v1454
  %v1456 = vlaneseq
  %v1457 = vshrl.u32 %v1456, 7
  %v1458 = vsub.s32 %v1455, %v1457
  %v1459 = vrot.slane %v1451, %v1458
  %v1461 = vunpack.c.l.s4 1985246804
  %v1462 = vunpack.c.0.s8 %v1461
  %v1463 = vlaneseq
  %v1464 = vshrl.u32 %v1463, 7
  %v1465 = vsub.s32 %v1462, %v1464
  %v1466 = vrot.slane %v1451, %v1465
  %v1469 = vsub.f32 %v1440, %v1459
  %v1470 = vsub.f32 %v1441, %v1466
  %v1471 = vmul.f32 %v1469, %v1469
  %v1472 = vmul.f32 %v1470, %v1470
  %v1475 = vcombine.low %v1471, %v1472
  %1477 = vadd.xlane.f32.xlu0 %v1475
  %v1478 = vpop.xlane.xlu0 %1477
  %v1479 = vmul.f32 %v1478, %v1450
  %v1480 = vadd.f32 %v1479, 1e-05
  %v1481 = vrsqrt.pop %v1480
  %v1484 = vunpack.c.l.s4 839922192
  %v1485 = vunpack.c.0.s8 %v1484
  %v1486 = vlaneseq
  %v1487 = vshrl.u32 %v1486, 7
  %v1488 = vsub.s32 %v1485, %v1487
  %v1489 = vrot.slane %v1481, %v1488
  %v1491 = vunpack.c.l.s4 1985246804
  %v1492 = vunpack.c.0.s8 %v1491
  %v1493 = vlaneseq
  %v1494 = vshrl.u32 %v1493, 7
  %v1495 = vsub.s32 %v1492, %v1494
  %v1496 = vrot.slane %v1481, %v1495
  %v1499 = vmul.f32 %v1469, %v1489
  %v1500 = vmul.f32 %v1470, %v1496
  %v1502 = vlaneseq
  %v1503 = vshrl.u32 %v1502, 7
  %v1504 = vsub.s32 0, %v1503
  %v1505 = vrot.slane %v1442, %v1504
  %v1507 = vcombine.high %v1505, %v1505
  %v1509 = vmul.f32 %v1499, %v1505
  %v1510 = vmul.f32 %v1500, %v1507
  %v1512 = vlaneseq
  %v1513 = vshrl.u32 %v1512, 7
  %v1514 = vsub.s32 0, %v1513
  %v1515 = vrot.slane %v1443, %v1514
  %v1517 = vcombine.high %v1515, %v1515
  %v1519 = vadd.f32 %v1509, %v1515
  %v1520 = vadd.f32 %v1510, %v1517
  %v1521 = vld [vmem:[%s10] sm:$0xff]
  %v1522 = vld [vmem:[%s10 + $0x8] sm:$0xff]
  %v1523 = vld [vmem:[%s10 + $0x10] sm:$0xff]
  %v1524 = vld [vmem:[%s10 + $0x18] sm:$0xff]
  %v1525 = vld [vmem:[%s10 + $0x20] sm:$0xff]
  %v1526 = vld [vmem:[%s10 + $0x28] sm:$0xff]
  %v1527 = vld [vmem:[%s10 + $0x30] sm:$0xff]
  %v1528 = vld [vmem:[%s10 + $0x38] sm:$0xff]
  %v1529 = vld [vmem:[%s10 + $0x40] sm:$0xff]
  %v1530 = vld [vmem:[%s10 + $0x48] sm:$0xff]
  %v1531 = vld [vmem:[%s10 + $0x50] sm:$0xff]
  %v1532 = vld [vmem:[%s10 + $0x58] sm:$0xff]
  %v1533 = vld [vmem:[%s10 + $0x60] sm:$0xff]
  %v1534 = vld [vmem:[%s10 + $0x68] sm:$0xff]
  %v1535 = vld [vmem:[%s10 + $0x70] sm:$0xff]
  %v1536 = vld [vmem:[%s10 + $0x78] sm:$0xff]
  %v1537 = vld [vmem:[%s10 + $0x80] sm:$0xff]
  %v1538 = vld [vmem:[%s10 + $0x88] sm:$0xff]
  %v1539 = vld [vmem:[%s10 + $0x90] sm:$0xff]
  %v1540 = vld [vmem:[%s10 + $0x98] sm:$0xff]
  %v1541 = vld [vmem:[%s10 + $0xa0] sm:$0xff]
  %v1542 = vld [vmem:[%s10 + $0xa8] sm:$0xff]
  %v1543 = vld [vmem:[%s10 + $0xb0] sm:$0xff]
  %v1544 = vld [vmem:[%s10 + $0xb8] sm:$0xff]
  %v1545 = vld [vmem:[%s10 + $0xc0] sm:$0xff]
  %v1546 = vld [vmem:[%s10 + $0xc8] sm:$0xff]
  %v1547 = vld [vmem:[%s10 + $0xd0] sm:$0xff]
  %v1548 = vld [vmem:[%s10 + $0xd8] sm:$0xff]
  %v1549 = vld [vmem:[%s10 + $0xe0] sm:$0xff]
  %v1550 = vld [vmem:[%s10 + $0xe8] sm:$0xff]
  %v1551 = vld [vmem:[%s10 + $0xf0] sm:$0xff]
  %v1552 = vld [vmem:[%s10 + $0xf8] sm:$0xff]
  %v1553 = vld [vmem:[%s11] sm:$0xf]
  %v1554 = vld [vmem:[%s12] sm:$0xf]
  %v1555 = vld [vmem:[%s12 + $0x4] sm:$0xf]
  %v1556 = vld [vmem:[%s12 + $0x8] sm:$0xf]
  %v1557 = vld [vmem:[%s12 + $0xc] sm:$0xf]
  %v1558 = vld [vmem:[%s12 + $0x10] sm:$0xf]
  %v1559 = vld [vmem:[%s12 + $0x14] sm:$0xf]
  %v1560 = vld [vmem:[%s12 + $0x18] sm:$0xf]
  %v1561 = vld [vmem:[%s12 + $0x1c] sm:$0xf]
  %v1562 = vld [vmem:[%s12 + $0x20] sm:$0xf]
  %v1563 = vld [vmem:[%s12 + $0x24] sm:$0xf]
  %v1564 = vld [vmem:[%s12 + $0x28] sm:$0xf]
  %v1565 = vld [vmem:[%s12 + $0x2c] sm:$0xf]
  %v1566 = vld [vmem:[%s12 + $0x30] sm:$0xf]
  %v1567 = vld [vmem:[%s12 + $0x34] sm:$0xf]
  %v1568 = vld [vmem:[%s12 + $0x38] sm:$0xf]
  %v1569 = vld [vmem:[%s12 + $0x3c] sm:$0xf]
  %v1570 = vld [vmem:[%s12 + $0x40] sm:$0xf]
  %v1571 = vld [vmem:[%s12 + $0x44] sm:$0xf]
  %v1572 = vld [vmem:[%s12 + $0x48] sm:$0xf]
  %v1573 = vld [vmem:[%s12 + $0x4c] sm:$0xf]
  %v1574 = vld [vmem:[%s12 + $0x50] sm:$0xf]
  %v1575 = vld [vmem:[%s12 + $0x54] sm:$0xf]
  %v1576 = vld [vmem:[%s12 + $0x58] sm:$0xf]
  %v1577 = vld [vmem:[%s12 + $0x5c] sm:$0xf]
  %v1578 = vld [vmem:[%s12 + $0x60] sm:$0xf]
  %v1579 = vld [vmem:[%s12 + $0x64] sm:$0xf]
  %v1580 = vld [vmem:[%s12 + $0x68] sm:$0xf]
  %v1581 = vld [vmem:[%s12 + $0x6c] sm:$0xf]
  %v1582 = vld [vmem:[%s12 + $0x70] sm:$0xf]
  %v1583 = vld [vmem:[%s12 + $0x74] sm:$0xf]
  %v1584 = vld [vmem:[%s12 + $0x78] sm:$0xf]
  %v1585 = vld [vmem:[%s12 + $0x7c] sm:$0xf]
  %v1586 = vld [vmem:[%s12 + $0x80] sm:$0xf]
  %v1587 = vld [vmem:[%s12 + $0x84] sm:$0xf]
  %v1588 = vld [vmem:[%s12 + $0x88] sm:$0xf]
  %v1589 = vld [vmem:[%s12 + $0x8c] sm:$0xf]
  %v1590 = vld [vmem:[%s12 + $0x90] sm:$0xf]
  %v1591 = vld [vmem:[%s12 + $0x94] sm:$0xf]
  %v1592 = vld [vmem:[%s12 + $0x98] sm:$0xf]
  %v1593 = vld [vmem:[%s12 + $0x9c] sm:$0xf]
  %v1594 = vld [vmem:[%s12 + $0xa0] sm:$0xf]
  %v1595 = vld [vmem:[%s12 + $0xa4] sm:$0xf]
  %v1596 = vld [vmem:[%s12 + $0xa8] sm:$0xf]
  %v1597 = vld [vmem:[%s12 + $0xac] sm:$0xf]
  %v1598 = vld [vmem:[%s12 + $0xb0] sm:$0xf]
  %v1599 = vld [vmem:[%s12 + $0xb4] sm:$0xf]
  %v1600 = vld [vmem:[%s12 + $0xb8] sm:$0xf]
  %v1601 = vld [vmem:[%s12 + $0xbc] sm:$0xf]
  %v1602 = vld [vmem:[%s12 + $0xc0] sm:$0xf]
  %v1603 = vld [vmem:[%s12 + $0xc4] sm:$0xf]
  %v1604 = vld [vmem:[%s12 + $0xc8] sm:$0xf]
  %v1605 = vld [vmem:[%s12 + $0xcc] sm:$0xf]
  %v1606 = vld [vmem:[%s12 + $0xd0] sm:$0xf]
  %v1607 = vld [vmem:[%s12 + $0xd4] sm:$0xf]
  %v1608 = vld [vmem:[%s12 + $0xd8] sm:$0xf]
  %v1609 = vld [vmem:[%s12 + $0xdc] sm:$0xf]
  %v1610 = vld [vmem:[%s12 + $0xe0] sm:$0xf]
  %v1611 = vld [vmem:[%s12 + $0xe4] sm:$0xf]
  %v1612 = vld [vmem:[%s12 + $0xe8] sm:$0xf]
  %v1613 = vld [vmem:[%s12 + $0xec] sm:$0xf]
  %v1614 = vld [vmem:[%s12 + $0xf0] sm:$0xf]
  %v1615 = vld [vmem:[%s12 + $0xf4] sm:$0xf]
  %v1616 = vld [vmem:[%s12 + $0xf8] sm:$0xf]
  %v1617 = vld [vmem:[%s12 + $0xfc] sm:$0xf]
  %v1618 = vld [vmem:[%s13] sm:$0x1]
  %v1621 = vcombine.low %v1519, %v1520
  %v1623 = vpack.c.bf16 %v1621, %v1621
  %v1625 = vlaneseq
  %v1626 = vshrl.u32 %v1625, 7
  %v1627 = vsub.s32 0, %v1626
  %v1628 = vrot.slane %v1553, %v1627
  %v1629 = vlaneseq
  %v1630 = vshrl.u32 %v1629, 7
  %v1631 = vsub.s32 1, %v1630
  %v1632 = vrot.slane %v1553, %v1631
  %v1633 = vlaneseq
  %v1634 = vshrl.u32 %v1633, 7
  %v1635 = vsub.s32 2, %v1634
  %v1636 = vrot.slane %v1553, %v1635
  %v1637 = vlaneseq
  %v1638 = vshrl.u32 %v1637, 7
  %v1639 = vsub.s32 3, %v1638
  %v1640 = vrot.slane %v1553, %v1639
  %v1677 = vunpack.c.l.b16 %v1521
  %v1678 = vunpack.c.h.b16 %v1521
  %v1679 = vunpack.c.l.b16 %v1522
  %v1680 = vunpack.c.h.b16 %v1522
  %v1681 = vunpack.c.l.b16 %v1523
  %v1682 = vunpack.c.h.b16 %v1523
  %v1683 = vunpack.c.l.b16 %v1524
  %v1684 = vunpack.c.h.b16 %v1524
  %v1685 = vunpack.c.l.b16 %v1525
  %v1686 = vunpack.c.h.b16 %v1525
  %v1687 = vunpack.c.l.b16 %v1526
  %v1688 = vunpack.c.h.b16 %v1526
  %v1689 = vunpack.c.l.b16 %v1527
  %v1690 = vunpack.c.h.b16 %v1527
  %v1691 = vunpack.c.l.b16 %v1528
  %v1692 = vunpack.c.h.b16 %v1528
  %v1693 = vunpack.c.l.b16 %v1529
  %v1694 = vunpack.c.h.b16 %v1529
  %v1695 = vunpack.c.l.b16 %v1530
  %v1696 = vunpack.c.h.b16 %v1530
  %v1697 = vunpack.c.l.b16 %v1531
  %v1698 = vunpack.c.h.b16 %v1531
  %v1699 = vunpack.c.l.b16 %v1532
  %v1700 = vunpack.c.h.b16 %v1532
  %v1701 = vunpack.c.l.b16 %v1533
  %v1702 = vunpack.c.h.b16 %v1533
  %v1703 = vunpack.c.l.b16 %v1534
  %v1704 = vunpack.c.h.b16 %v1534
  %v1705 = vunpack.c.l.b16 %v1535
  %v1706 = vunpack.c.h.b16 %v1535
  %v1707 = vunpack.c.l.b16 %v1536
  %v1708 = vunpack.c.h.b16 %v1536
  %v1709 = vunpack.c.l.b16 %v1537
  %v1710 = vunpack.c.h.b16 %v1537
  %v1711 = vunpack.c.l.b16 %v1538
  %v1712 = vunpack.c.h.b16 %v1538
  %v1713 = vunpack.c.l.b16 %v1539
  %v1714 = vunpack.c.h.b16 %v1539
  %v1715 = vunpack.c.l.b16 %v1540
  %v1716 = vunpack.c.h.b16 %v1540
  %v1717 = vunpack.c.l.b16 %v1541
  %v1718 = vunpack.c.h.b16 %v1541
  %v1719 = vunpack.c.l.b16 %v1542
  %v1720 = vunpack.c.h.b16 %v1542
  %v1721 = vunpack.c.l.b16 %v1543
  %v1722 = vunpack.c.h.b16 %v1543
  %v1723 = vunpack.c.l.b16 %v1544
  %v1724 = vunpack.c.h.b16 %v1544
  %v1725 = vunpack.c.l.b16 %v1545
  %v1726 = vunpack.c.h.b16 %v1545
  %v1727 = vunpack.c.l.b16 %v1546
  %v1728 = vunpack.c.h.b16 %v1546
  %v1729 = vunpack.c.l.b16 %v1547
  %v1730 = vunpack.c.h.b16 %v1547
  %v1731 = vunpack.c.l.b16 %v1548
  %v1732 = vunpack.c.h.b16 %v1548
  %v1733 = vunpack.c.l.b16 %v1549
  %v1734 = vunpack.c.h.b16 %v1549
  %v1735 = vunpack.c.l.b16 %v1550
  %v1736 = vunpack.c.h.b16 %v1550
  %v1737 = vunpack.c.l.b16 %v1551
  %v1738 = vunpack.c.h.b16 %v1551
  %v1739 = vunpack.c.l.b16 %v1552
  %v1740 = vunpack.c.h.b16 %v1552
  %v1741 = vpack.c.b16 %v1681, %v1677
  %v1742 = vpack.c.b16 %v1682, %v1678
  %v1743 = vpack.c.b16 %v1683, %v1679
  %v1744 = vpack.c.b16 %v1684, %v1680
  %v1745 = vpack.c.b16 %v1689, %v1685
  %v1746 = vpack.c.b16 %v1690, %v1686
  %v1747 = vpack.c.b16 %v1691, %v1687
  %v1748 = vpack.c.b16 %v1692, %v1688
  %v1749 = vpack.c.b16 %v1697, %v1693
  %v1750 = vpack.c.b16 %v1698, %v1694
  %v1751 = vpack.c.b16 %v1699, %v1695
  %v1752 = vpack.c.b16 %v1700, %v1696
  %v1753 = vpack.c.b16 %v1705, %v1701
  %v1754 = vpack.c.b16 %v1706, %v1702
  %v1755 = vpack.c.b16 %v1707, %v1703
  %v1756 = vpack.c.b16 %v1708, %v1704
  %v1757 = vpack.c.b16 %v1713, %v1709
  %v1758 = vpack.c.b16 %v1714, %v1710
  %v1759 = vpack.c.b16 %v1715, %v1711
  %v1760 = vpack.c.b16 %v1716, %v1712
  %v1761 = vpack.c.b16 %v1721, %v1717
  %v1762 = vpack.c.b16 %v1722, %v1718
  %v1763 = vpack.c.b16 %v1723, %v1719
  %v1764 = vpack.c.b16 %v1724, %v1720
  %v1765 = vpack.c.b16 %v1729, %v1725
  %v1766 = vpack.c.b16 %v1730, %v1726
  %v1767 = vpack.c.b16 %v1731, %v1727
  %v1768 = vpack.c.b16 %v1732, %v1728
  %v1769 = vpack.c.b16 %v1737, %v1733
  %v1770 = vpack.c.b16 %v1738, %v1734
  %v1771 = vpack.c.b16 %v1739, %v1735
  %v1772 = vpack.c.b16 %v1740, %v1736
  %1805 = vmatprep.subr.bf16.mxu0 %v1742
  %1806 = vmatpush1.bf16.msra.mxu0 %v1741
  %1807 = vmatprep.subr.bf16.mxu0 %v1746
  %1808 = vmatpush1.bf16.msra.mxu0 %v1745
  %1809 = vmatprep.subr.bf16.mxu0 %v1750
  %1810 = vmatpush1.bf16.msra.mxu0 %v1749
  %1811 = vmatprep.subr.bf16.mxu0 %v1754
  %1812 = vmatpush1.bf16.msra.mxu0 %v1753
  %1813 = vmatprep.subr.bf16.mxu0 %v1758
  %1814 = vmatpush1.bf16.msra.mxu0 %v1757
  %1815 = vmatprep.subr.bf16.mxu0 %v1762
  %1816 = vmatpush1.bf16.msra.mxu0 %v1761
  %1817 = vmatprep.subr.bf16.mxu0 %v1766
  %1818 = vmatpush1.bf16.msra.mxu0 %v1765
  %1819 = vmatprep.subr.bf16.mxu0 %v1770
  %1820 = vmatpush1.bf16.msra.mxu0 %v1769
  %1821 = vmatprep.subr.bf16.mxu0 0
  %1822 = vmatpush1.bf16.msra.mxu0 0
  %1823 = vmatprep.subr.bf16.mxu0 0
  %1824 = vmatpush1.bf16.msra.mxu0 0
  %1825 = vmatprep.subr.bf16.mxu0 0
  %1826 = vmatpush1.bf16.msra.mxu0 0
  %1827 = vmatprep.subr.bf16.mxu0 0
  %1828 = vmatpush1.bf16.msra.mxu0 0
  %1829 = vmatprep.subr.bf16.mxu0 0
  %1830 = vmatpush1.bf16.msra.mxu0 0
  %1831 = vmatprep.subr.bf16.mxu0 0
  %1832 = vmatpush1.bf16.msra.mxu0 0
  %1833 = vmatprep.subr.bf16.mxu0 0
  %1834 = vmatpush1.bf16.msra.mxu0 0
  %1835 = vmatprep.subr.bf16.mxu0 0
  %1836 = vmatpush1.bf16.msra.mxu0 0
  %1837 = vmatprep.mubr.bf16.mxu0 0
  %1838 = vmatmul.mubr.bf16.gmra.mrb[0].mxu0 %v1623
  %v1839 = vpop.f32.mrb[0].mxu0
  %v1840 = vadd.f32 %v1628, %v1839
  %v1841 = vpop.f32.mrb[0].mxu0
  %v1842 = vadd.f32 %v1632, %v1841
  %v1843 = vpop.f32.mrb[0].mxu0
  %v1844 = vpop.f32.mrb[0].mxu0
  %1845 = vdwg.mxu0
  %1846 = vmatprep.subr.bf16.mxu0 %v1744
  %1847 = vmatpush1.bf16.msra.mxu0 %v1743
  %1848 = vmatprep.subr.bf16.mxu0 %v1748
  %1849 = vmatpush1.bf16.msra.mxu0 %v1747
  %1850 = vmatprep.subr.bf16.mxu0 %v1752
  %1851 = vmatpush1.bf16.msra.mxu0 %v1751
  %1852 = vmatprep.subr.bf16.mxu0 %v1756
  %1853 = vmatpush1.bf16.msra.mxu0 %v1755
  %1854 = vmatprep.subr.bf16.mxu0 %v1760
  %1855 = vmatpush1.bf16.msra.mxu0 %v1759
  %1856 = vmatprep.subr.bf16.mxu0 %v1764
  %1857 = vmatpush1.bf16.msra.mxu0 %v1763
  %1858 = vmatprep.subr.bf16.mxu0 %v1768
  %1859 = vmatpush1.bf16.msra.mxu0 %v1767
  %1860 = vmatprep.subr.bf16.mxu0 %v1772
  %1861 = vmatpush1.bf16.msra.mxu0 %v1771
  %1862 = vmatprep.subr.bf16.mxu0 0
  %1863 = vmatpush1.bf16.msra.mxu0 0
  %1864 = vmatprep.subr.bf16.mxu0 0
  %1865 = vmatpush1.bf16.msra.mxu0 0
  %1866 = vmatprep.subr.bf16.mxu0 0
  %1867 = vmatpush1.bf16.msra.mxu0 0
  %1868 = vmatprep.subr.bf16.mxu0 0
  %1869 = vmatpush1.bf16.msra.mxu0 0
  %1870 = vmatprep.subr.bf16.mxu0 0
  %1871 = vmatpush1.bf16.msra.mxu0 0
  %1872 = vmatprep.subr.bf16.mxu0 0
  %1873 = vmatpush1.bf16.msra.mxu0 0
  %1874 = vmatprep.subr.bf16.mxu0 0
  %1875 = vmatpush1.bf16.msra.mxu0 0
  %1876 = vmatprep.subr.bf16.mxu0 0
  %1877 = vmatpush1.bf16.msra.mxu0 0
  %1878 = vmatprep.mubr.bf16.mxu0 0
  %1879 = vmatmul.mubr.bf16.gmra.mrb[0].mxu0 %v1623
  %v1880 = vpop.f32.mrb[0].mxu0
  %v1881 = vadd.f32 %v1636, %v1880
  %v1882 = vpop.f32.mrb[0].mxu0
  %v1883 = vadd.f32 %v1640, %v1882
  %v1884 = vpop.f32.mrb[0].mxu0
  %v1885 = vpop.f32.mrb[0].mxu0
  %1886 = vdwg.mxu0
  %v1887 = vmax.f32 %v1840, 0.0
  %v1888 = vmax.f32 %v1842, 0.0
  %v1889 = vmax.f32 %v1881, 0.0
  %v1890 = vmax.f32 %v1883, 0.0
  %v1891 = vpack.c.bf16 %v1887, %v1887
  %v1892 = vpack.c.bf16 %v1888, %v1888
  %v1893 = vpack.c.bf16 %v1889, %v1889
  %v1894 = vpack.c.bf16 %v1890, %v1890
  %v1896 = vlaneseq
  %v1897 = vshrl.u32 %v1896, 7
  %v1898 = vsub.s32 0, %v1897
  %v1899 = vrot.slane %v1618, %v1898
  %v1965 = vunpack.c.l.b16 %v1554
  %v1966 = vunpack.c.l.b16 %v1555
  %v1967 = vunpack.c.l.b16 %v1556
  %v1968 = vunpack.c.l.b16 %v1557
  %v1969 = vunpack.c.l.b16 %v1558
  %v1970 = vunpack.c.l.b16 %v1559
  %v1971 = vunpack.c.l.b16 %v1560
  %v1972 = vunpack.c.l.b16 %v1561
  %v1973 = vunpack.c.l.b16 %v1562
  %v1974 = vunpack.c.l.b16 %v1563
  %v1975 = vunpack.c.l.b16 %v1564
  %v1976 = vunpack.c.l.b16 %v1565
  %v1977 = vunpack.c.l.b16 %v1566
  %v1978 = vunpack.c.l.b16 %v1567
  %v1979 = vunpack.c.l.b16 %v1568
  %v1980 = vunpack.c.l.b16 %v1569
  %v1981 = vunpack.c.l.b16 %v1570
  %v1982 = vunpack.c.l.b16 %v1571
  %v1983 = vunpack.c.l.b16 %v1572
  %v1984 = vunpack.c.l.b16 %v1573
  %v1985 = vunpack.c.l.b16 %v1574
  %v1986 = vunpack.c.l.b16 %v1575
  %v1987 = vunpack.c.l.b16 %v1576
  %v1988 = vunpack.c.l.b16 %v1577
  %v1989 = vunpack.c.l.b16 %v1578
  %v1990 = vunpack.c.l.b16 %v1579
  %v1991 = vunpack.c.l.b16 %v1580
  %v1992 = vunpack.c.l.b16 %v1581
  %v1993 = vunpack.c.l.b16 %v1582
  %v1994 = vunpack.c.l.b16 %v1583
  %v1995 = vunpack.c.l.b16 %v1584
  %v1996 = vunpack.c.l.b16 %v1585
  %v1997 = vunpack.c.l.b16 %v1586
  %v1998 = vunpack.c.l.b16 %v1587
  %v1999 = vunpack.c.l.b16 %v1588
  %v2000 = vunpack.c.l.b16 %v1589
  %v2001 = vunpack.c.l.b16 %v1590
  %v2002 = vunpack.c.l.b16 %v1591
  %v2003 = vunpack.c.l.b16 %v1592
  %v2004 = vunpack.c.l.b16 %v1593
  %v2005 = vunpack.c.l.b16 %v1594
  %v2006 = vunpack.c.l.b16 %v1595
  %v2007 = vunpack.c.l.b16 %v1596
  %v2008 = vunpack.c.l.b16 %v1597
  %v2009 = vunpack.c.l.b16 %v1598
  %v2010 = vunpack.c.l.b16 %v1599
  %v2011 = vunpack.c.l.b16 %v1600
  %v2012 = vunpack.c.l.b16 %v1601
  %v2013 = vunpack.c.l.b16 %v1602
  %v2014 = vunpack.c.l.b16 %v1603
  %v2015 = vunpack.c.l.b16 %v1604
  %v2016 = vunpack.c.l.b16 %v1605
  %v2017 = vunpack.c.l.b16 %v1606
  %v2018 = vunpack.c.l.b16 %v1607
  %v2019 = vunpack.c.l.b16 %v1608
  %v2020 = vunpack.c.l.b16 %v1609
  %v2021 = vunpack.c.l.b16 %v1610
  %v2022 = vunpack.c.l.b16 %v1611
  %v2023 = vunpack.c.l.b16 %v1612
  %v2024 = vunpack.c.l.b16 %v1613
  %v2025 = vunpack.c.l.b16 %v1614
  %v2026 = vunpack.c.l.b16 %v1615
  %v2027 = vunpack.c.l.b16 %v1616
  %v2028 = vunpack.c.l.b16 %v1617
  %v2029 = vpack.c.b16 %v1966, %v1965
  %v2030 = vpack.c.b16 %v1968, %v1967
  %v2031 = vpack.c.b16 %v1970, %v1969
  %v2032 = vpack.c.b16 %v1972, %v1971
  %v2033 = vpack.c.b16 %v1974, %v1973
  %v2034 = vpack.c.b16 %v1976, %v1975
  %v2035 = vpack.c.b16 %v1978, %v1977
  %v2036 = vpack.c.b16 %v1980, %v1979
  %v2037 = vpack.c.b16 %v1982, %v1981
  %v2038 = vpack.c.b16 %v1984, %v1983
  %v2039 = vpack.c.b16 %v1986, %v1985
  %v2040 = vpack.c.b16 %v1988, %v1987
  %v2041 = vpack.c.b16 %v1990, %v1989
  %v2042 = vpack.c.b16 %v1992, %v1991
  %v2043 = vpack.c.b16 %v1994, %v1993
  %v2044 = vpack.c.b16 %v1996, %v1995
  %v2045 = vpack.c.b16 %v1998, %v1997
  %v2046 = vpack.c.b16 %v2000, %v1999
  %v2047 = vpack.c.b16 %v2002, %v2001
  %v2048 = vpack.c.b16 %v2004, %v2003
  %v2049 = vpack.c.b16 %v2006, %v2005
  %v2050 = vpack.c.b16 %v2008, %v2007
  %v2051 = vpack.c.b16 %v2010, %v2009
  %v2052 = vpack.c.b16 %v2012, %v2011
  %v2053 = vpack.c.b16 %v2014, %v2013
  %v2054 = vpack.c.b16 %v2016, %v2015
  %v2055 = vpack.c.b16 %v2018, %v2017
  %v2056 = vpack.c.b16 %v2020, %v2019
  %v2057 = vpack.c.b16 %v2022, %v2021
  %v2058 = vpack.c.b16 %v2024, %v2023
  %v2059 = vpack.c.b16 %v2026, %v2025
  %v2060 = vpack.c.b16 %v2028, %v2027
  %2093 = vmatprep.subr.bf16.mxu0 0
  %2094 = vmatpush1.bf16.msra.mxu0 %v2029
  %2095 = vmatprep.subr.bf16.mxu0 0
  %2096 = vmatpush1.bf16.msra.mxu0 %v2030
  %2097 = vmatprep.subr.bf16.mxu0 0
  %2098 = vmatpush1.bf16.msra.mxu0 %v2031
  %2099 = vmatprep.subr.bf16.mxu0 0
  %2100 = vmatpush1.bf16.msra.mxu0 %v2032
  %2101 = vmatprep.subr.bf16.mxu0 0
  %2102 = vmatpush1.bf16.msra.mxu0 %v2033
  %2103 = vmatprep.subr.bf16.mxu0 0
  %2104 = vmatpush1.bf16.msra.mxu0 %v2034
  %2105 = vmatprep.subr.bf16.mxu0 0
  %2106 = vmatpush1.bf16.msra.mxu0 %v2035
  %2107 = vmatprep.subr.bf16.mxu0 0
  %2108 = vmatpush1.bf16.msra.mxu0 %v2036
  %2109 = vmatprep.subr.bf16.mxu0 0
  %2110 = vmatpush1.bf16.msra.mxu0 %v2037
  %2111 = vmatprep.subr.bf16.mxu0 0
  %2112 = vmatpush1.bf16.msra.mxu0 %v2038
  %2113 = vmatprep.subr.bf16.mxu0 0
  %2114 = vmatpush1.bf16.msra.mxu0 %v2039
  %2115 = vmatprep.subr.bf16.mxu0 0
  %2116 = vmatpush1.bf16.msra.mxu0 %v2040
  %2117 = vmatprep.subr.bf16.mxu0 0
  %2118 = vmatpush1.bf16.msra.mxu0 %v2041
  %2119 = vmatprep.subr.bf16.mxu0 0
  %2120 = vmatpush1.bf16.msra.mxu0 %v2042
  %2121 = vmatprep.subr.bf16.mxu0 0
  %2122 = vmatpush1.bf16.msra.mxu0 %v2043
  %2123 = vmatprep.subr.bf16.mxu0 0
  %2124 = vmatpush1.bf16.msra.mxu0 %v2044
  %2125 = vmatprep.mubr.bf16.mxu0 %v1892
  %2126 = vmatmul.mubr.bf16.gmra.mrb[0].mxu0 %v1891
  %v2127 = vpop.f32.mrb[0].mxu0
  %v2128 = vadd.f32 %v1899, %v2127
  %v2129 = vpop.f32.mrb[0].mxu0
  %v2130 = vpop.f32.mrb[0].mxu0
  %v2131 = vpop.f32.mrb[0].mxu0
  %2132 = vdwg.mxu0
  %2133 = vmatprep.subr.bf16.mxu0 0
  %2134 = vmatpush1.bf16.msra.mxu0 %v2045
  %2135 = vmatprep.subr.bf16.mxu0 0
  %2136 = vmatpush1.bf16.msra.mxu0 %v2046
  %2137 = vmatprep.subr.bf16.mxu0 0
  %2138 = vmatpush1.bf16.msra.mxu0 %v2047
  %2139 = vmatprep.subr.bf16.mxu0 0
  %2140 = vmatpush1.bf16.msra.mxu0 %v2048
  %2141 = vmatprep.subr.bf16.mxu0 0
  %2142 = vmatpush1.bf16.msra.mxu0 %v2049
  %2143 = vmatprep.subr.bf16.mxu0 0
  %2144 = vmatpush1.bf16.msra.mxu0 %v2050
  %2145 = vmatprep.subr.bf16.mxu0 0
  %2146 = vmatpush1.bf16.msra.mxu0 %v2051
  %2147 = vmatprep.subr.bf16.mxu0 0
  %2148 = vmatpush1.bf16.msra.mxu0 %v2052
  %2149 = vmatprep.subr.bf16.mxu0 0
  %2150 = vmatpush1.bf16.msra.mxu0 %v2053
  %2151 = vmatprep.subr.bf16.mxu0 0
  %2152 = vmatpush1.bf16.msra.mxu0 %v2054
  %2153 = vmatprep.subr.bf16.mxu0 0
  %2154 = vmatpush1.bf16.msra.mxu0 %v2055
  %2155 = vmatprep.subr.bf16.mxu0 0
  %2156 = vmatpush1.bf16.msra.mxu0 %v2056
  %2157 = vmatprep.subr.bf16.mxu0 0
  %2158 = vmatpush1.bf16.msra.mxu0 %v2057
  %2159 = vmatprep.subr.bf16.mxu0 0
  %2160 = vmatpush1.bf16.msra.mxu0 %v2058
  %2161 = vmatprep.subr.bf16.mxu0 0
  %2162 = vmatpush1.bf16.msra.mxu0 %v2059
  %2163 = vmatprep.subr.bf16.mxu0 0
  %2164 = vmatpush1.bf16.msra.mxu0 %v2060
  %2165 = vmatprep.mubr.bf16.mxu0 %v1894
  %2166 = vmatmul.mubr.bf16.gmra.mrb[0].mxu0 %v1893
  %v2167 = vpop.f32.mrb[0].mxu0
  %v2168 = vadd.f32 %v2128, %v2167
  %v2169 = vpop.f32.mrb[0].mxu0
  %v2170 = vpop.f32.mrb[0].mxu0
  %v2171 = vpop.f32.mrb[0].mxu0
  %2172 = vdwg.mxu0
  %v2174 = vcombine.high %v2168, %v2168
  %v2176 = vadd.f32 %v1519, %v2168
  %v2177 = vadd.f32 %v1520, %v2174
  %v2178 = vld [vmem:[%s14] sm:$0x1]
  %v2179 = vld [vmem:[%s15] sm:$0x1]
  %v2182 = vcombine.low %v2176, %v2177
  %2184 = vadd.xlane.f32.xlu0 %v2182
  %v2185 = vpop.xlane.xlu0 %2184
  %v2186 = vmul.f32 %v2185, %v1450
  %v2189 = vunpack.c.l.s4 839922192
  %v2190 = vunpack.c.0.s8 %v2189
  %v2191 = vlaneseq
  %v2192 = vshrl.u32 %v2191, 7
  %v2193 = vsub.s32 %v2190, %v2192
  %v2194 = vrot.slane %v2186, %v2193
  %v2196 = vunpack.c.l.s4 1985246804
  %v2197 = vunpack.c.0.s8 %v2196
  %v2198 = vlaneseq
  %v2199 = vshrl.u32 %v2198, 7
  %v2200 = vsub.s32 %v2197, %v2199
  %v2201 = vrot.slane %v2186, %v2200
  %v2204 = vsub.f32 %v2176, %v2194
  %v2205 = vsub.f32 %v2177, %v2201
  %v2206 = vmul.f32 %v2204, %v2204
  %v2207 = vmul.f32 %v2205, %v2205
  %v2210 = vcombine.low %v2206, %v2207
  %2212 = vadd.xlane.f32.xlu0 %v2210
  %v2213 = vpop.xlane.xlu0 %2212
  %v2214 = vmul.f32 %v2213, %v1450
  %v2215 = vadd.f32 %v2214, 1e-05
  %v2216 = vrsqrt.pop %v2215
  %v2219 = vunpack.c.l.s4 839922192
  %v2220 = vunpack.c.0.s8 %v2219
  %v2221 = vlaneseq
  %v2222 = vshrl.u32 %v2221, 7
  %v2223 = vsub.s32 %v2220, %v2222
  %v2224 = vrot.slane %v2216, %v2223
  %v2226 = vunpack.c.l.s4 1985246804
  %v2227 = vunpack.c.0.s8 %v2226
  %v2228 = vlaneseq
  %v2229 = vshrl.u32 %v2228, 7
  %v2230 = vsub.s32 %v2227, %v2229
  %v2231 = vrot.slane %v2216, %v2230
  %v2234 = vmul.f32 %v2204, %v2224
  %v2235 = vmul.f32 %v2205, %v2231
  %v2237 = vlaneseq
  %v2238 = vshrl.u32 %v2237, 7
  %v2239 = vsub.s32 0, %v2238
  %v2240 = vrot.slane %v2178, %v2239
  %v2242 = vcombine.high %v2240, %v2240
  %v2244 = vmul.f32 %v2234, %v2240
  %v2245 = vmul.f32 %v2235, %v2242
  %v2247 = vlaneseq
  %v2248 = vshrl.u32 %v2247, 7
  %v2249 = vsub.s32 0, %v2248
  %v2250 = vrot.slane %v2179, %v2249
  %v2252 = vcombine.high %v2250, %v2250
  %v2254 = vadd.f32 %v2244, %v2250
  %v2255 = vadd.f32 %v2245, %v2252
  %2256 = vst [vmem:[%s16] sm:$0xf] %v2254
  %2257 = vst [vmem:[%s16 + $0x4] sm:$0xf] %v2255
  // Predicated region
  $region66: #{vitar_forward.4} parent=0 // pred_check
    _
  $region67: #{vitar_forward.4} parent=0 // pred_check_branch
    %2259 = sbr.rel (0) target = $region69
  $region68: #{vitar_forward.4} parent=0 // pred_region
    _
  $region69: #{vitar_forward.4} parent=0 // pred_fallthru
    _
  // Predicated region
  $region70: #{vitar_forward.4} parent=0 // pred_check
    _
  $region71: #{vitar_forward.4} parent=0 // pred_check_branch
    %2261 = sbr.rel (0) target = $region73
  $region72: #{vitar_forward.4} parent=0 // pred_region
    _
  $region73: #{vitar_forward.4} parent=0 // pred_fallthru
    _

// kernel: vitar_forward.5
$region0: #{vitar_forward.5}
  #allocation0 [shape = 'u32[]', space=smem, size = 0x4, offset = 0x4, fixed_abs, tag = 'smem constant byte address 0x4 - core index']
  #allocation1 [shape = 'u32[144,128]{1,0:T(1,128)}', space=vmem, size = 0x12000, scoped, tag = 'internal scratch']
  %s0 = inlined_call_operand.vmem [shape: f32[2,5,128], index: 0, kind: input, shape index: {}]
  %s1 = inlined_call_operand.vmem [shape: bf16[2,128,384], index: 1, kind: input, shape index: {}]
  %s2 = inlined_call_operand.vmem [shape: f32[2,1,384], index: 2, kind: input, shape index: {}]
  %s3 = inlined_call_operand.vmem [shape: bf16[2,128,128], index: 3, kind: input, shape index: {}]
  %s4 = inlined_call_operand.vmem [shape: f32[2,1,128], index: 4, kind: input, shape index: {}]
  %s5 = inlined_call_operand.vmem [shape: f32[2,1,128], index: 5, kind: input, shape index: {}]
  %s6 = inlined_call_operand.vmem [shape: f32[2,1,128], index: 6, kind: input, shape index: {}]
  %s7 = inlined_call_operand.vmem [shape: bf16[2,128,512], index: 7, kind: input, shape index: {}]
  %s8 = inlined_call_operand.vmem [shape: f32[2,1,512], index: 8, kind: input, shape index: {}]
  %s9 = inlined_call_operand.vmem [shape: bf16[2,512,128], index: 9, kind: input, shape index: {}]
  %s10 = inlined_call_operand.vmem [shape: f32[2,1,128], index: 10, kind: input, shape index: {}]
  %s11 = inlined_call_operand.vmem [shape: f32[2,1,128], index: 11, kind: input, shape index: {}]
  %s12 = inlined_call_operand.vmem [shape: f32[2,1,128], index: 12, kind: input, shape index: {}]
  %s13 = inlined_call_operand.vmem [shape: bf16[128,128], index: 13, kind: input, shape index: {}]
  %s14 = inlined_call_operand.vmem [shape: f32[1,128], index: 14, kind: input, shape index: {}]
  %s15 = inlined_call_operand.hbm [shape: f32[2,5,128], index: 15, kind: output, shape index: {0}]
  %s16 = inlined_call_operand.hbm [shape: f32[2,128], index: 16, kind: output, shape index: {1}]
  %17 = xla_tuple %s15, %s16
  %s18 = sld [smem:[#allocation0]]
  $region109: #{vitar_forward.5} parent=0
    _
  %s20 = ssub.s32 1, %s18
  %s21 = scalar_select 0, %s20, %s18
  $region1: #{vitar_forward.5} parent=0
    #allocation2 [shape = 'u8[8192]{0}', space=vmem, size = 0x2000, scoped, tag = 'output window, operand 0, single buffered']
    #allocation3 [shape = 's32[2]{0}', space=sflag, size = 0x8, scoped, tag = 'scoped memory for vitar_forward.5']
    #allocation4 [shape = 'u8[1024]{0}', space=vmem, size = 0x400, scoped, tag = 'output window, operand 1, single buffered']
    #allocation5 [shape = 's32[1]{0}', space=sflag, size = 0x4, scoped, tag = 'scoped memory for vitar_forward.5']
    %22 = vsyncpa [#allocation3], 0
    %23 = vsyncpa [#allocation5], 0
    loop: start=0, step=1, limit=4
    $region2: #{vitar_forward.5} parent=1 // loop_pre_header
      _
    $region3: #{vitar_forward.5} parent=1 // loop_header
      %s25 = sphi 0, %s29
      %p26 = scmp.ge.s32.totalorder %s25, 4
      %s33 = sphi 0, %s33
      %s35 = sphi 0, %s33
      %s36 = sphi 0, %s35
      %s50 = sphi 0, %s36
      %s56 = sphi 0, %s58
      %s59 = sphi 0, %s56
      %s60 = sphi 0, %s59
      %s76 = sphi 0, %s60
      %s82 = sphi 0, %s84
      %s85 = sphi 0, %s82
      %s86 = sphi 0, %s85
      %s102 = sphi 0, %s86
      %s108 = sphi 0, %s110
      %s111 = sphi 0, %s108
      %s112 = sphi 0, %s111
      %s128 = sphi 0, %s112
      %s134 = sphi 0, %s136
      %s137 = sphi 0, %s134
      %s138 = sphi 0, %s137
      %s154 = sphi 0, %s138
      %s160 = sphi 0, %s162
      %s163 = sphi 0, %s160
      %s164 = sphi 0, %s163
      %s180 = sphi 0, %s164
      %s186 = sphi 0, %s188
      %s189 = sphi 0, %s186
      %s190 = sphi 0, %s189
      %s206 = sphi 0, %s190
      %s212 = sphi 0, %s214
      %s215 = sphi 0, %s212
      %s216 = sphi 0, %s215
      %s232 = sphi 0, %s216
      %s238 = sphi 0, %s240
      %s241 = sphi 0, %s238
      %s242 = sphi 0, %s241
      %s258 = sphi 0, %s242
      %s264 = sphi 0, %s266
      %s267 = sphi 0, %s264
      %s268 = sphi 0, %s267
      %s284 = sphi 0, %s268
      %s290 = sphi 0, %s292
      %s293 = sphi 0, %s290
      %s294 = sphi 0, %s293
      %s310 = sphi 0, %s294
      %s316 = sphi 0, %s318
      %s319 = sphi 0, %s316
      %s320 = sphi 0, %s319
      %s336 = sphi 0, %s320
      %s342 = sphi 0, %s344
      %s345 = sphi 0, %s342
      %s346 = sphi 0, %s345
      %s362 = sphi 0, %s346
      %s366 = sphi 0, %s366
      %s368 = sphi 0, %s366
      %s369 = sphi 0, %s368
      %s383 = sphi 0, %s369
      %s387 = sphi 0, %s387
      %s389 = sphi 0, %s387
      %s390 = sphi 0, %s389
      %s404 = sphi 0, %s390
      %s408 = sphi 0, %s408
      %s410 = sphi 0, %s408
      %s411 = sphi 0, %s410
      %s425 = sphi 0, %s411
      %s429 = sphi 0, %s429
      %s431 = sphi 0, %s429
      %s432 = sphi 0, %s431
      %s446 = sphi 0, %s432
    $region4: #{vitar_forward.5} parent=1 // loop_header_branch
      %28 = sbr.rel (%p26) target = $region8
    $region5: #{vitar_forward.5} parent=1 // loop_body
      %s30 = ssub.s32 %s25, 1
      %s31 = ssub.s32 %s25, 2
      %s32 = sadd.s32 %s25, 1
      %s34 = sadd.s32 %s33, 1
      %p37 = scmp.eq.s32.totalorder %s25, 1
      %p38 = scmp.ne.s32.totalorder %s33, %s35
      %p39 = scmp.eq.s32.totalorder %s25, 0
      %p40 = por %p38, %p39
      %p41 = scmp.ne.s32.totalorder %s33, %s35
      %p42 = scmp.eq.s32.totalorder %s30, 1
      %p43 = por %p41, %p42
      %p44 = scmp.ne.s32.totalorder %s35, %s36
      %p45 = scmp.eq.s32.totalorder %s30, 0
      %p46 = por %p44, %p45
      %p47 = scmp.ne.s32.totalorder %s35, %s36
      %p48 = scmp.eq.s32.totalorder %s31, 1
      %p49 = por %p47, %p48
      %p51 = scmp.ne.s32.totalorder %s36, %s50
      %p52 = scmp.eq.s32.totalorder %s31, 0
      %p53 = por %p51, %p52
      %s54 = ssub.s32 %s25, %s32
      %p55 = scmp.eq.s32.totalorder %s54, 0
      %s57 = sadd.s32 %s56, 1
      %s58 = scalar_select %p55, %s56, %s57
      %p61 = pneg %p55
      %p62 = scmp.eq.s32.totalorder %s25, 1
      %p63 = por %p61, %p62
      %p64 = scmp.ne.s32.totalorder %s56, %s59
      %p65 = scmp.eq.s32.totalorder %s25, 0
      %p66 = por %p64, %p65
      %p67 = scmp.ne.s32.totalorder %s56, %s59
      %p68 = scmp.eq.s32.totalorder %s30, 1
      %p69 = por %p67, %p68
      %p70 = scmp.ne.s32.totalorder %s59, %s60
      %p71 = scmp.eq.s32.totalorder %s30, 0
      %p72 = por %p70, %p71
      %p73 = scmp.ne.s32.totalorder %s59, %s60
      %p74 = scmp.eq.s32.totalorder %s31, 1
      %p75 = por %p73, %p74
      %p77 = scmp.ne.s32.totalorder %s60, %s76
      %p78 = scmp.eq.s32.totalorder %s31, 0
      %p79 = por %p77, %p78
      %s80 = ssub.s32 %s25, %s32
      %p81 = scmp.eq.s32.totalorder %s80, 0
      %s83 = sadd.s32 %s82, 1
      %s84 = scalar_select %p81, %s82, %s83
      %p87 = pneg %p81
      %p88 = scmp.eq.s32.totalorder %s25, 1
      %p89 = por %p87, %p88
      %p90 = scmp.ne.s32.totalorder %s82, %s85
      %p91 = scmp.eq.s32.totalorder %s25, 0
      %p92 = por %p90, %p91
      %p93 = scmp.ne.s32.totalorder %s82, %s85
      %p94 = scmp.eq.s32.totalorder %s30, 1
      %p95 = por %p93, %p94
      %p96 = scmp.ne.s32.totalorder %s85, %s86
      %p97 = scmp.eq.s32.totalorder %s30, 0
      %p98 = por %p96, %p97
      %p99 = scmp.ne.s32.totalorder %s85, %s86
      %p100 = scmp.eq.s32.totalorder %s31, 1
      %p101 = por %p99, %p100
      %p103 = scmp.ne.s32.totalorder %s86, %s102
      %p104 = scmp.eq.s32.totalorder %s31, 0
      %p105 = por %p103, %p104
      %s106 = ssub.s32 %s25, %s32
      %p107 = scmp.eq.s32.totalorder %s106, 0
      %s109 = sadd.s32 %s108, 1
      %s110 = scalar_select %p107, %s108, %s109
      %p113 = pneg %p107
      %p114 = scmp.eq.s32.totalorder %s25, 1
      %p115 = por %p113, %p114
      %p116 = scmp.ne.s32.totalorder %s108, %s111
      %p117 = scmp.eq.s32.totalorder %s25, 0
      %p118 = por %p116, %p117
      %p119 = scmp.ne.s32.totalorder %s108, %s111
      %p120 = scmp.eq.s32.totalorder %s30, 1
      %p121 = por %p119, %p120
      %p122 = scmp.ne.s32.totalorder %s111, %s112
      %p123 = scmp.eq.s32.totalorder %s30, 0
      %p124 = por %p122, %p123
      %p125 = scmp.ne.s32.totalorder %s111, %s112
      %p126 = scmp.eq.s32.totalorder %s31, 1
      %p127 = por %p125, %p126
      %p129 = scmp.ne.s32.totalorder %s112, %s128
      %p130 = scmp.eq.s32.totalorder %s31, 0
      %p131 = por %p129, %p130
      %s132 = ssub.s32 %s25, %s32
      %p133 = scmp.eq.s32.totalorder %s132, 0
      %s135 = sadd.s32 %s134, 1
      %s136 = scalar_select %p133, %s134, %s135
      %p139 = pneg %p133
      %p140 = scmp.eq.s32.totalorder %s25, 1
      %p141 = por %p139, %p140
      %p142 = scmp.ne.s32.totalorder %s134, %s137
      %p143 = scmp.eq.s32.totalorder %s25, 0
      %p144 = por %p142, %p143
      %p145 = scmp.ne.s32.totalorder %s134, %s137
      %p146 = scmp.eq.s32.totalorder %s30, 1
      %p147 = por %p145, %p146
      %p148 = scmp.ne.s32.totalorder %s137, %s138
      %p149 = scmp.eq.s32.totalorder %s30, 0
      %p150 = por %p148, %p149
      %p151 = scmp.ne.s32.totalorder %s137, %s138
      %p152 = scmp.eq.s32.totalorder %s31, 1
      %p153 = por %p151, %p152
      %p155 = scmp.ne.s32.totalorder %s138, %s154
      %p156 = scmp.eq.s32.totalorder %s31, 0
      %p157 = por %p155, %p156
      %s158 = ssub.s32 %s25, %s32
      %p159 = scmp.eq.s32.totalorder %s158, 0
      %s161 = sadd.s32 %s160, 1
      %s162 = scalar_select %p159, %s160, %s161
      %p165 = pneg %p159
      %p166 = scmp.eq.s32.totalorder %s25, 1
      %p167 = por %p165, %p166
      %p168 = scmp.ne.s32.totalorder %s160, %s163
      %p169 = scmp.eq.s32.totalorder %s25, 0
      %p170 = por %p168, %p169
      %p171 = scmp.ne.s32.totalorder %s160, %s163
      %p172 = scmp.eq.s32.totalorder %s30, 1
      %p173 = por %p171, %p172
      %p174 = scmp.ne.s32.totalorder %s163, %s164
      %p175 = scmp.eq.s32.totalorder %s30, 0
      %p176 = por %p174, %p175
      %p177 = scmp.ne.s32.totalorder %s163, %s164
      %p178 = scmp.eq.s32.totalorder %s31, 1
      %p179 = por %p177, %p178
      %p181 = scmp.ne.s32.totalorder %s164, %s180
      %p182 = scmp.eq.s32.totalorder %s31, 0
      %p183 = por %p181, %p182
      %s184 = ssub.s32 %s25, %s32
      %p185 = scmp.eq.s32.totalorder %s184, 0
      %s187 = sadd.s32 %s186, 1
      %s188 = scalar_select %p185, %s186, %s187
      %p191 = pneg %p185
      %p192 = scmp.eq.s32.totalorder %s25, 1
      %p193 = por %p191, %p192
      %p194 = scmp.ne.s32.totalorder %s186, %s189
      %p195 = scmp.eq.s32.totalorder %s25, 0
      %p196 = por %p194, %p195
      %p197 = scmp.ne.s32.totalorder %s186, %s189
      %p198 = scmp.eq.s32.totalorder %s30, 1
      %p199 = por %p197, %p198
      %p200 = scmp.ne.s32.totalorder %s189, %s190
      %p201 = scmp.eq.s32.totalorder %s30, 0
      %p202 = por %p200, %p201
      %p203 = scmp.ne.s32.totalorder %s189, %s190
      %p204 = scmp.eq.s32.totalorder %s31, 1
      %p205 = por %p203, %p204
      %p207 = scmp.ne.s32.totalorder %s190, %s206
      %p208 = scmp.eq.s32.totalorder %s31, 0
      %p209 = por %p207, %p208
      %s210 = ssub.s32 %s25, %s32
      %p211 = scmp.eq.s32.totalorder %s210, 0
      %s213 = sadd.s32 %s212, 1
      %s214 = scalar_select %p211, %s212, %s213
      %p217 = pneg %p211
      %p218 = scmp.eq.s32.totalorder %s25, 1
      %p219 = por %p217, %p218
      %p220 = scmp.ne.s32.totalorder %s212, %s215
      %p221 = scmp.eq.s32.totalorder %s25, 0
      %p222 = por %p220, %p221
      %p223 = scmp.ne.s32.totalorder %s212, %s215
      %p224 = scmp.eq.s32.totalorder %s30, 1
      %p225 = por %p223, %p224
      %p226 = scmp.ne.s32.totalorder %s215, %s216
      %p227 = scmp.eq.s32.totalorder %s30, 0
      %p228 = por %p226, %p227
      %p229 = scmp.ne.s32.totalorder %s215, %s216
      %p230 = scmp.eq.s32.totalorder %s31, 1
      %p231 = por %p229, %p230
      %p233 = scmp.ne.s32.totalorder %s216, %s232
      %p234 = scmp.eq.s32.totalorder %s31, 0
      %p235 = por %p233, %p234
      %s236 = ssub.s32 %s25, %s32
      %p237 = scmp.eq.s32.totalorder %s236, 0
      %s239 = sadd.s32 %s238, 1
      %s240 = scalar_select %p237, %s238, %s239
      %p243 = pneg %p237
      %p244 = scmp.eq.s32.totalorder %s25, 1
      %p245 = por %p243, %p244
      %p246 = scmp.ne.s32.totalorder %s238, %s241
      %p247 = scmp.eq.s32.totalorder %s25, 0
      %p248 = por %p246, %p247
      %p249 = scmp.ne.s32.totalorder %s238, %s241
      %p250 = scmp.eq.s32.totalorder %s30, 1
      %p251 = por %p249, %p250
      %p252 = scmp.ne.s32.totalorder %s241, %s242
      %p253 = scmp.eq.s32.totalorder %s30, 0
      %p254 = por %p252, %p253
      %p255 = scmp.ne.s32.totalorder %s241, %s242
      %p256 = scmp.eq.s32.totalorder %s31, 1
      %p257 = por %p255, %p256
      %p259 = scmp.ne.s32.totalorder %s242, %s258
      %p260 = scmp.eq.s32.totalorder %s31, 0
      %p261 = por %p259, %p260
      %s262 = ssub.s32 %s25, %s32
      %p263 = scmp.eq.s32.totalorder %s262, 0
      %s265 = sadd.s32 %s264, 1
      %s266 = scalar_select %p263, %s264, %s265
      %p269 = pneg %p263
      %p270 = scmp.eq.s32.totalorder %s25, 1
      %p271 = por %p269, %p270
      %p272 = scmp.ne.s32.totalorder %s264, %s267
      %p273 = scmp.eq.s32.totalorder %s25, 0
      %p274 = por %p272, %p273
      %p275 = scmp.ne.s32.totalorder %s264, %s267
      %p276 = scmp.eq.s32.totalorder %s30, 1
      %p277 = por %p275, %p276
      %p278 = scmp.ne.s32.totalorder %s267, %s268
      %p279 = scmp.eq.s32.totalorder %s30, 0
      %p280 = por %p278, %p279
      %p281 = scmp.ne.s32.totalorder %s267, %s268
      %p282 = scmp.eq.s32.totalorder %s31, 1
      %p283 = por %p281, %p282
      %p285 = scmp.ne.s32.totalorder %s268, %s284
      %p286 = scmp.eq.s32.totalorder %s31, 0
      %p287 = por %p285, %p286
      %s288 = ssub.s32 %s25, %s32
      %p289 = scmp.eq.s32.totalorder %s288, 0
      %s291 = sadd.s32 %s290, 1
      %s292 = scalar_select %p289, %s290, %s291
      %p295 = pneg %p289
      %p296 = scmp.eq.s32.totalorder %s25, 1
      %p297 = por %p295, %p296
      %p298 = scmp.ne.s32.totalorder %s290, %s293
      %p299 = scmp.eq.s32.totalorder %s25, 0
      %p300 = por %p298, %p299
      %p301 = scmp.ne.s32.totalorder %s290, %s293
      %p302 = scmp.eq.s32.totalorder %s30, 1
      %p303 = por %p301, %p302
      %p304 = scmp.ne.s32.totalorder %s293, %s294
      %p305 = scmp.eq.s32.totalorder %s30, 0
      %p306 = por %p304, %p305
      %p307 = scmp.ne.s32.totalorder %s293, %s294
      %p308 = scmp.eq.s32.totalorder %s31, 1
      %p309 = por %p307, %p308
      %p311 = scmp.ne.s32.totalorder %s294, %s310
      %p312 = scmp.eq.s32.totalorder %s31, 0
      %p313 = por %p311, %p312
      %s314 = ssub.s32 %s25, %s32
      %p315 = scmp.eq.s32.totalorder %s314, 0
      %s317 = sadd.s32 %s316, 1
      %s318 = scalar_select %p315, %s316, %s317
      %p321 = pneg %p315
      %p322 = scmp.eq.s32.totalorder %s25, 1
      %p323 = por %p321, %p322
      %p324 = scmp.ne.s32.totalorder %s316, %s319
      %p325 = scmp.eq.s32.totalorder %s25, 0
      %p326 = por %p324, %p325
      %p327 = scmp.ne.s32.totalorder %s316, %s319
      %p328 = scmp.eq.s32.totalorder %s30, 1
      %p329 = por %p327, %p328
      %p330 = scmp.ne.s32.totalorder %s319, %s320
      %p331 = scmp.eq.s32.totalorder %s30, 0
      %p332 = por %p330, %p331
      %p333 = scmp.ne.s32.totalorder %s319, %s320
      %p334 = scmp.eq.s32.totalorder %s31, 1
      %p335 = por %p333, %p334
      %p337 = scmp.ne.s32.totalorder %s320, %s336
      %p338 = scmp.eq.s32.totalorder %s31, 0
      %p339 = por %p337, %p338
      %s340 = ssub.s32 %s25, %s32
      %p341 = scmp.eq.s32.totalorder %s340, 0
      %s343 = sadd.s32 %s342, 1
      %s344 = scalar_select %p341, %s342, %s343
      %p347 = pneg %p341
      %p348 = scmp.eq.s32.totalorder %s25, 1
      %p349 = por %p347, %p348
      %p350 = scmp.ne.s32.totalorder %s342, %s345
      %p351 = scmp.eq.s32.totalorder %s25, 0
      %p352 = por %p350, %p351
      %p353 = scmp.ne.s32.totalorder %s342, %s345
      %p354 = scmp.eq.s32.totalorder %s30, 1
      %p355 = por %p353, %p354
      %p356 = scmp.ne.s32.totalorder %s345, %s346
      %p357 = scmp.eq.s32.totalorder %s30, 0
      %p358 = por %p356, %p357
      %p359 = scmp.ne.s32.totalorder %s345, %s346
      %p360 = scmp.eq.s32.totalorder %s31, 1
      %p361 = por %p359, %p360
      %p363 = scmp.ne.s32.totalorder %s346, %s362
      %p364 = scmp.eq.s32.totalorder %s31, 0
      %p365 = por %p363, %p364
      %s367 = sadd.s32 %s366, 1
      %p370 = scmp.eq.s32.totalorder %s25, 1
      %p371 = scmp.ne.s32.totalorder %s366, %s368
      %p372 = scmp.eq.s32.totalorder %s25, 0
      %p373 = por %p371, %p372
      %p374 = scmp.ne.s32.totalorder %s366, %s368
      %p375 = scmp.eq.s32.totalorder %s30, 1
      %p376 = por %p374, %p375
      %p377 = scmp.ne.s32.totalorder %s368, %s369
      %p378 = scmp.eq.s32.totalorder %s30, 0
      %p379 = por %p377, %p378
      %p380 = scmp.ne.s32.totalorder %s368, %s369
      %p381 = scmp.eq.s32.totalorder %s31, 1
      %p382 = por %p380, %p381
      %p384 = scmp.ne.s32.totalorder %s369, %s383
      %p385 = scmp.eq.s32.totalorder %s31, 0
      %p386 = por %p384, %p385
      %s388 = sadd.s32 %s387, 1
      %p391 = scmp.eq.s32.totalorder %s25, 1
      %p392 = scmp.ne.s32.totalorder %s387, %s389
      %p393 = scmp.eq.s32.totalorder %s25, 0
      %p394 = por %p392, %p393
      %p395 = scmp.ne.s32.totalorder %s387, %s389
      %p396 = scmp.eq.s32.totalorder %s30, 1
      %p397 = por %p395, %p396
      %p398 = scmp.ne.s32.totalorder %s389, %s390
      %p399 = scmp.eq.s32.totalorder %s30, 0
      %p400 = por %p398, %p399
      %p401 = scmp.ne.s32.totalorder %s389, %s390
      %p402 = scmp.eq.s32.totalorder %s31, 1
      %p403 = por %p401, %p402
      %p405 = scmp.ne.s32.totalorder %s390, %s404
      %p406 = scmp.eq.s32.totalorder %s31, 0
      %p407 = por %p405, %p406
      %s409 = sadd.s32 %s408, 1
      %p412 = scmp.eq.s32.totalorder %s25, 1
      %p413 = scmp.ne.s32.totalorder %s408, %s410
      %p414 = scmp.eq.s32.totalorder %s25, 0
      %p415 = por %p413, %p414
      %p416 = scmp.ne.s32.totalorder %s408, %s410
      %p417 = scmp.eq.s32.totalorder %s30, 1
      %p418 = por %p416, %p417
      %p419 = scmp.ne.s32.totalorder %s410, %s411
      %p420 = scmp.eq.s32.totalorder %s30, 0
      %p421 = por %p419, %p420
      %p422 = scmp.ne.s32.totalorder %s410, %s411
      %p423 = scmp.eq.s32.totalorder %s31, 1
      %p424 = por %p422, %p423
      %p426 = scmp.ne.s32.totalorder %s411, %s425
      %p427 = scmp.eq.s32.totalorder %s31, 0
      %p428 = por %p426, %p427
      %s430 = sadd.s32 %s429, 1
      %p433 = scmp.eq.s32.totalorder %s25, 1
      %p434 = scmp.ne.s32.totalorder %s429, %s431
      %p435 = scmp.eq.s32.totalorder %s25, 0
      %p436 = por %p434, %p435
      %p437 = scmp.ne.s32.totalorder %s429, %s431
      %p438 = scmp.eq.s32.totalorder %s30, 1
      %p439 = por %p437, %p438
      %p440 = scmp.ne.s32.totalorder %s431, %s432
      %p441 = scmp.eq.s32.totalorder %s30, 0
      %p442 = por %p440, %p441
      %p443 = scmp.ne.s32.totalorder %s431, %s432
      %p444 = scmp.eq.s32.totalorder %s31, 1
      %p445 = por %p443, %p444
      %p447 = scmp.ne.s32.totalorder %s432, %s446
      %p448 = scmp.eq.s32.totalorder %s31, 0
      %p449 = por %p447, %p448
      %p450 = scmp.le.s32.totalorder 1, %s25
      %p451 = scmp.lt.s32.totalorder %s25, 3
      %p452 = pnand %p450, %p451
      %p453 = pneg %p452
      // Predicated region
      $region9: #{vitar_forward.5} parent=5 // pred_check
        _
      $region10: #{vitar_forward.5} parent=5 // pred_check_branch
        %455 = sbr.rel (%p452) target = $region12
      $region11: #{vitar_forward.5} parent=5 // pred_region
        %s456 = ssub.s32 %s25, 1
        // Predicated region
        $region13: #{vitar_forward.5} parent=11 // pred_check
          %p457 = pneg %p46
        $region14: #{vitar_forward.5} parent=11 // pred_check_branch
          %459 = sbr.rel (%p457) target = $region16
        $region15: #{vitar_forward.5} parent=11 // pred_region
          _
        $region16: #{vitar_forward.5} parent=11 // pred_fallthru
          _
        // Predicated region
        $region17: #{vitar_forward.5} parent=11 // pred_check
          %p460 = pneg %p379
        $region18: #{vitar_forward.5} parent=11 // pred_check_branch
          %462 = sbr.rel (%p460) target = $region20
        $region19: #{vitar_forward.5} parent=11 // pred_region
          _
        $region20: #{vitar_forward.5} parent=11 // pred_fallthru
          _
        // Predicated region
        $region21: #{vitar_forward.5} parent=11 // pred_check
          %p463 = pneg %p400
        $region22: #{vitar_forward.5} parent=11 // pred_check_branch
          %465 = sbr.rel (%p463) target = $region24
        $region23: #{vitar_forward.5} parent=11 // pred_region
          _
        $region24: #{vitar_forward.5} parent=11 // pred_fallthru
          _
      $region12: #{vitar_forward.5} parent=5 // pred_fallthru
        _
      %p466 = scmp.lt.s32.totalorder %s25, 2
      // Predicated region
      $region25: #{vitar_forward.5} parent=5 // pred_check
        %p467 = pneg %p466
      $region26: #{vitar_forward.5} parent=5 // pred_check_branch
        %469 = sbr.rel (%p467) target = $region28
      $region27: #{vitar_forward.5} parent=5 // pred_region
        // Predicated region
        $region29: #{vitar_forward.5} parent=27 // pred_check
          %p470 = pneg %p66
        $region30: #{vitar_forward.5} parent=27 // pred_check_branch
          %472 = sbr.rel (%p470) target = $region32
        $region31: #{vitar_forward.5} parent=27 // pred_region
          %p473 = scmp.lt.s32.totalorder %s25, 1
          %s474 = scalar_select %p473, %s25, 1
          %s475 = smul.addr %s474, 48
          %s476 = smul.addr %s475, 4
          %s477 = scalar_lea.vmem %s1, %s476
        $region32: #{vitar_forward.5} parent=27 // pred_fallthru
          _
        // Predicated region
        $region33: #{vitar_forward.5} parent=27 // pred_check
          %p478 = pneg %p92
        $region34: #{vitar_forward.5} parent=27 // pred_check_branch
          %480 = sbr.rel (%p478) target = $region36
        $region35: #{vitar_forward.5} parent=27 // pred_region
          %p481 = scmp.lt.s32.totalorder %s25, 1
          %s482 = scalar_select %p481, %s25, 1
          %s483 = smul.addr %s482, 3
          %s484 = scalar_lea.vmem %s2, %s483
        $region36: #{vitar_forward.5} parent=27 // pred_fallthru
          _
        // Predicated region
        $region37: #{vitar_forward.5} parent=27 // pred_check
          %p485 = pneg %p118
        $region38: #{vitar_forward.5} parent=27 // pred_check_branch
          %487 = sbr.rel (%p485) target = $region40
        $region39: #{vitar_forward.5} parent=27 // pred_region
          %p488 = scmp.lt.s32.totalorder %s25, 1
          %s489 = scalar_select %p488, %s25, 1
          %s490 = smul.addr %s489, 16
          %s491 = smul.addr %s490, 4
          %s492 = scalar_lea.vmem %s3, %s491
        $region40: #{vitar_forward.5} parent=27 // pred_fallthru
          _
        // Predicated region
        $region41: #{vitar_forward.5} parent=27 // pred_check
          %p493 = pneg %p144
        $region42: #{vitar_forward.5} parent=27 // pred_check_branch
          %495 = sbr.rel (%p493) target = $region44
        $region43: #{vitar_forward.5} parent=27 // pred_region
          %p496 = scmp.lt.s32.totalorder %s25, 1
          %s497 = scalar_select %p496, %s25, 1
          %s498 = scalar_lea.vmem %s4, %s497
        $region44: #{vitar_forward.5} parent=27 // pred_fallthru
          _
        // Predicated region
        $region45: #{vitar_forward.5} parent=27 // pred_check
          %p499 = pneg %p170
        $region46: #{vitar_forward.5} parent=27 // pred_check_branch
          %501 = sbr.rel (%p499) target = $region48
        $region47: #{vitar_forward.5} parent=27 // pred_region
          %p502 = scmp.lt.s32.totalorder %s25, 1
          %s503 = scalar_select %p502, %s25, 1
          %s504 = scalar_lea.vmem %s5, %s503
        $region48: #{vitar_forward.5} parent=27 // pred_fallthru
          _
        // Predicated region
        $region49: #{vitar_forward.5} parent=27 // pred_check
          %p505 = pneg %p196
        $region50: #{vitar_forward.5} parent=27 // pred_check_branch
          %507 = sbr.rel (%p505) target = $region52
        $region51: #{vitar_forward.5} parent=27 // pred_region
          %p508 = scmp.lt.s32.totalorder %s25, 1
          %s509 = scalar_select %p508, %s25, 1
          %s510 = scalar_lea.vmem %s6, %s509
        $region52: #{vitar_forward.5} parent=27 // pred_fallthru
          _
        // Predicated region
        $region53: #{vitar_forward.5} parent=27 // pred_check
          %p511 = pneg %p222
        $region54: #{vitar_forward.5} parent=27 // pred_check_branch
          %513 = sbr.rel (%p511) target = $region56
        $region55: #{vitar_forward.5} parent=27 // pred_region
          %p514 = scmp.lt.s32.totalorder %s25, 1
          %s515 = scalar_select %p514, %s25, 1
          %s516 = smul.addr %s515, 64
          %s517 = smul.addr %s516, 4
          %s518 = scalar_lea.vmem %s7, %s517
        $region56: #{vitar_forward.5} parent=27 // pred_fallthru
          _
        // Predicated region
        $region57: #{vitar_forward.5} parent=27 // pred_check
          %p519 = pneg %p248
        $region58: #{vitar_forward.5} parent=27 // pred_check_branch
          %521 = sbr.rel (%p519) target = $region60
        $region59: #{vitar_forward.5} parent=27 // pred_region
          %p522 = scmp.lt.s32.totalorder %s25, 1
          %s523 = scalar_select %p522, %s25, 1
          %s524 = smul.addr %s523, 4
          %s525 = scalar_lea.vmem %s8, %s524
        $region60: #{vitar_forward.5} parent=27 // pred_fallthru
          _
        // Predicated region
        $region61: #{vitar_forward.5} parent=27 // pred_check
          %p526 = pneg %p274
        $region62: #{vitar_forward.5} parent=27 // pred_check_branch
          %528 = sbr.rel (%p526) target = $region64
        $region63: #{vitar_forward.5} parent=27 // pred_region
          %p529 = scmp.lt.s32.totalorder %s25, 1
          %s530 = scalar_select %p529, %s25, 1
          %s531 = smul.addr %s530, 64
          %s532 = smul.addr %s531, 4
          %s533 = scalar_lea.vmem %s9, %s532
        $region64: #{vitar_forward.5} parent=27 // pred_fallthru
          _
        // Predicated region
        $region65: #{vitar_forward.5} parent=27 // pred_check
          %p534 = pneg %p300
        $region66: #{vitar_forward.5} parent=27 // pred_check_branch
          %536 = sbr.rel (%p534) target = $region68
        $region67: #{vitar_forward.5} parent=27 // pred_region
          %p537 = scmp.lt.s32.totalorder %s25, 1
          %s538 = scalar_select %p537, %s25, 1
          %s539 = scalar_lea.vmem %s10, %s538
        $region68: #{vitar_forward.5} parent=27 // pred_fallthru
          _
        // Predicated region
        $region69: #{vitar_forward.5} parent=27 // pred_check
          %p540 = pneg %p326
        $region70: #{vitar_forward.5} parent=27 // pred_check_branch
          %542 = sbr.rel (%p540) target = $region72
        $region71: #{vitar_forward.5} parent=27 // pred_region
          %p543 = scmp.lt.s32.totalorder %s25, 1
          %s544 = scalar_select %p543, %s25, 1
          %s545 = scalar_lea.vmem %s11, %s544
        $region72: #{vitar_forward.5} parent=27 // pred_fallthru
          _
        // Predicated region
        $region73: #{vitar_forward.5} parent=27 // pred_check
          %p546 = pneg %p352
        $region74: #{vitar_forward.5} parent=27 // pred_check_branch
          %548 = sbr.rel (%p546) target = $region76
        $region75: #{vitar_forward.5} parent=27 // pred_region
          %p549 = scmp.lt.s32.totalorder %s25, 1
          %s550 = scalar_select %p549, %s25, 1
          %s551 = scalar_lea.vmem %s12, %s550
        $region76: #{vitar_forward.5} parent=27 // pred_fallthru
          _
      $region28: #{vitar_forward.5} parent=5 // pred_fallthru
        _
      %p552 = scmp.le.s32.totalorder 1, %s25
      %p553 = scmp.lt.s32.totalorder %s25, 3
      %p554 = pnand %p552, %p553
      %p555 = pneg %p554
      // Predicated region
      $region77: #{vitar_forward.5} parent=5 // pred_check
        _
      $region78: #{vitar_forward.5} parent=5 // pred_check_branch
        %557 = sbr.rel (%p554) target = $region80
      $region79: #{vitar_forward.5} parent=5 // pred_region
        %s558 = ssub.s32 %s25, 1
        %p559 = pneg %p46
        %p560 = pneg %p43
        %p561 = scmp.lt.s32.totalorder %s30, 1
        %s562 = scalar_select %p561, %s30, 1
        %s563 = smul.addr %s562, 48
        %s564 = smul.addr %s563, 4
        %s565 = scalar_lea.vmem %s1, %s564
        %p566 = pneg %p72
        %p567 = pneg %p69
        %p568 = scmp.lt.s32.totalorder %s30, 1
        %s569 = scalar_select %p568, %s30, 1
        %s570 = smul.addr %s569, 3
        %s571 = scalar_lea.vmem %s2, %s570
        %p572 = pneg %p98
        %p573 = pneg %p95
        %p574 = scmp.lt.s32.totalorder %s30, 1
        %s575 = scalar_select %p574, %s30, 1
        %s576 = smul.addr %s575, 16
        %s577 = smul.addr %s576, 4
        %s578 = scalar_lea.vmem %s3, %s577
        %p579 = pneg %p124
        %p580 = pneg %p121
        %p581 = scmp.lt.s32.totalorder %s30, 1
        %s582 = scalar_select %p581, %s30, 1
        %s583 = scalar_lea.vmem %s4, %s582
        %p584 = pneg %p150
        %p585 = pneg %p147
        %p586 = scmp.lt.s32.totalorder %s30, 1
        %s587 = scalar_select %p586, %s30, 1
        %s588 = scalar_lea.vmem %s5, %s587
        %p589 = pneg %p176
        %p590 = pneg %p173
        %p591 = scmp.lt.s32.totalorder %s30, 1
        %s592 = scalar_select %p591, %s30, 1
        %s593 = scalar_lea.vmem %s6, %s592
        %p594 = pneg %p202
        %p595 = pneg %p199
        %p596 = scmp.lt.s32.totalorder %s30, 1
        %s597 = scalar_select %p596, %s30, 1
        %s598 = smul.addr %s597, 64
        %s599 = smul.addr %s598, 4
        %s600 = scalar_lea.vmem %s7, %s599
        %p601 = pneg %p228
        %p602 = pneg %p225
        %p603 = scmp.lt.s32.totalorder %s30, 1
        %s604 = scalar_select %p603, %s30, 1
        %s605 = smul.addr %s604, 4
        %s606 = scalar_lea.vmem %s8, %s605
        %p607 = pneg %p254
        %p608 = pneg %p251
        %p609 = scmp.lt.s32.totalorder %s30, 1
        %s610 = scalar_select %p609, %s30, 1
        %s611 = smul.addr %s610, 64
        %s612 = smul.addr %s611, 4
        %s613 = scalar_lea.vmem %s9, %s612
        %p614 = pneg %p280
        %p615 = pneg %p277
        %p616 = scmp.lt.s32.totalorder %s30, 1
        %s617 = scalar_select %p616, %s30, 1
        %s618 = scalar_lea.vmem %s10, %s617
        %p619 = pneg %p306
        %p620 = pneg %p303
        %p621 = scmp.lt.s32.totalorder %s30, 1
        %s622 = scalar_select %p621, %s30, 1
        %s623 = scalar_lea.vmem %s11, %s622
        %p624 = pneg %p332
        %p625 = pneg %p329
        %p626 = scmp.lt.s32.totalorder %s30, 1
        %s627 = scalar_select %p626, %s30, 1
        %s628 = scalar_lea.vmem %s12, %s627
        %p629 = pneg %p358
        %p630 = pneg %p355
        %p631 = pneg %p379
        %p632 = pneg %p376
        %p633 = pneg %p400
        %p634 = pneg %p397
        %p635 = pneg %p421
        %p636 = pneg %p418
        %p637 = pneg %p442
        %p638 = pneg %p439
        %p639 = scmp.lt.s32.totalorder %s30, 1
        %s640 = scalar_select %p639, %s30, 1
        %s641 = smul.addr %s640, 48
        %s642 = smul.addr %s641, 4
        %s643 = scalar_lea.vmem %s1, %s642
        %p644 = scmp.lt.s32.totalorder %s30, 1
        %s645 = scalar_select %p644, %s30, 1
        %s646 = smul.addr %s645, 3
        %s647 = scalar_lea.vmem %s2, %s646
        %p648 = scmp.lt.s32.totalorder %s30, 1
        %s649 = scalar_select %p648, %s30, 1
        %s650 = smul.addr %s649, 16
        %s651 = smul.addr %s650, 4
        %s652 = scalar_lea.vmem %s3, %s651
        %p653 = scmp.lt.s32.totalorder %s30, 1
        %s654 = scalar_select %p653, %s30, 1
        %s655 = scalar_lea.vmem %s4, %s654
        %p656 = scmp.lt.s32.totalorder %s30, 1
        %s657 = scalar_select %p656, %s30, 1
        %s658 = scalar_lea.vmem %s5, %s657
        %p659 = scmp.lt.s32.totalorder %s30, 1
        %s660 = scalar_select %p659, %s30, 1
        %s661 = scalar_lea.vmem %s6, %s660
        %p662 = scmp.lt.s32.totalorder %s30, 1
        %s663 = scalar_select %p662, %s30, 1
        %s664 = smul.addr %s663, 64
        %s665 = smul.addr %s664, 4
        %s666 = scalar_lea.vmem %s7, %s665
        %p667 = scmp.lt.s32.totalorder %s30, 1
        %s668 = scalar_select %p667, %s30, 1
        %s669 = smul.addr %s668, 4
        %s670 = scalar_lea.vmem %s8, %s669
        %p671 = scmp.lt.s32.totalorder %s30, 1
        %s672 = scalar_select %p671, %s30, 1
        %s673 = smul.addr %s672, 64
        %s674 = smul.addr %s673, 4
        %s675 = scalar_lea.vmem %s9, %s674
        %p676 = scmp.lt.s32.totalorder %s30, 1
        %s677 = scalar_select %p676, %s30, 1
        %s678 = scalar_lea.vmem %s10, %s677
        %p679 = scmp.lt.s32.totalorder %s30, 1
        %s680 = scalar_select %p679, %s30, 1
        %s681 = scalar_lea.vmem %s11, %s680
        %p682 = scmp.lt.s32.totalorder %s30, 1
        %s683 = scalar_select %p682, %s30, 1
        %s684 = scalar_lea.vmem %s12, %s683
        %p686 = scmp.eq.s32.totalorder %s30, 0
        // Predicated region
        $region81: #{vitar_forward.5} parent=79 // pred_check
          %p687 = pneg %p686
        $region82: #{vitar_forward.5} parent=79 // pred_check_branch
          %689 = sbr.rel (%p687) target = $region84
        $region83: #{vitar_forward.5} parent=79 // pred_region
          %v690 = vld [vmem:[%s0] sm:$0x1f]
          %v691 = vld [vmem:[%s0 + $0x8] sm:$0x1f]
          %692 = vst [vmem:[#allocation2] sm:$0x1f] %v690
          %693 = vst [vmem:[#allocation2 + $0x8] sm:$0x1f] %v691
        $region84: #{vitar_forward.5} parent=79 // pred_fallthru
          _
        %v694 = vld [vmem:[#allocation2] sm:$0x1f]
        %v695 = vld [vmem:[#allocation2 + $0x8] sm:$0x1f]
        %v698 = vcombine.high %v694, %v694
        %v700 = vunpack.c.l.s4 1966171168
        %v701 = vunpack.c.0.s8 %v700
        %v702 = vlaneseq
        %v703 = vshrl.u32 %v702, 7
        %v704 = vsub.s32 %v701, %v703
        %v705 = vrot.slane %v694, %v704
        %v707 = vunpack.c.l.s4 1966171168
        %v708 = vunpack.c.0.s8 %v707
        %v709 = vlaneseq
        %v710 = vshrl.u32 %v709, 7
        %v711 = vsub.s32 %v708, %v710
        %v712 = vrot.slane %v698, %v711
        %v713 = vcombine.high %v705, %v705
        %v715 = vunpack.c.l.s4 1966171168
        %v716 = vunpack.c.0.s8 %v715
        %v717 = vlaneseq
        %v718 = vshrl.u32 %v717, 7
        %v719 = vsub.s32 %v716, %v718
        %v720 = vrot.slane %v705, %v719
        %v722 = vunpack.c.l.s4 1966171168
        %v723 = vunpack.c.0.s8 %v722
        %v724 = vlaneseq
        %v725 = vshrl.u32 %v724, 7
        %v726 = vsub.s32 %v723, %v725
        %v727 = vrot.slane %v712, %v726
        %v729 = vunpack.c.l.s4 1966171168
        %v730 = vunpack.c.0.s8 %v729
        %v731 = vlaneseq
        %v732 = vshrl.u32 %v731, 7
        %v733 = vsub.s32 %v730, %v732
        %v734 = vrot.slane %v713, %v733
        %v735 = vcombine.high %v720, %v720
        %v736 = vcombine.high %v734, %v734
        %v737 = vcombine.high %v695, %v695
        %v739 = vunpack.c.l.s4 1966171168
        %v740 = vunpack.c.0.s8 %v739
        %v741 = vlaneseq
        %v742 = vshrl.u32 %v741, 7
        %v743 = vsub.s32 %v740, %v742
        %v744 = vrot.slane %v695, %v743
        %v746 = vunpack.c.l.s4 1966171168
        %v747 = vunpack.c.0.s8 %v746
        %v748 = vlaneseq
        %v749 = vshrl.u32 %v748, 7
        %v750 = vsub.s32 %v747, %v749
        %v751 = vrot.slane %v737, %v750
        %v752 = vcombine.high %v744, %v744
        %v754 = vunpack.c.l.s4 1966171168
        %v755 = vunpack.c.0.s8 %v754
        %v756 = vlaneseq
        %v757 = vshrl.u32 %v756, 7
        %v758 = vsub.s32 %v755, %v757
        %v759 = vrot.slane %v744, %v758
        %v761 = vunpack.c.l.s4 1966171168
        %v762 = vunpack.c.0.s8 %v761
        %v763 = vlaneseq
        %v764 = vshrl.u32 %v763, 7
        %v765 = vsub.s32 %v762, %v764
        %v766 = vrot.slane %v751, %v765
        %v768 = vunpack.c.l.s4 1966171168
        %v769 = vunpack.c.0.s8 %v768
        %v770 = vlaneseq
        %v771 = vshrl.u32 %v770, 7
        %v772 = vsub.s32 %v769, %v771
        %v773 = vrot.slane %v752, %v772
        %v774 = vcombine.high %v759, %v759
        %v775 = vcombine.high %v773, %v773
        %v786 = vcombine.low %v720, %v734
        %v787 = vcombine.low %v735, %v736
        %v788 = vcombine.low %v727, %v759
        %v789 = vcombine.low %v773, %v774
        %v791 = vunpack.c.l.s4 1966171168
        %v792 = vunpack.c.0.s8 %v791
        %v793 = vlaneseq
        %v794 = vshrl.u32 %v793, 7
        %v795 = vsub.s32 %v792, %v794
        %v796 = vrot.slane %v786, %v795
        %v798 = vunpack.c.l.s4 1966171168
        %v799 = vunpack.c.0.s8 %v798
        %v800 = vlaneseq
        %v801 = vshrl.u32 %v800, 7
        %v802 = vsub.s32 %v799, %v801
        %v803 = vrot.slane %v787, %v802
        %v805 = vunpack.c.l.s4 1966171168
        %v806 = vunpack.c.0.s8 %v805
        %v807 = vlaneseq
        %v808 = vshrl.u32 %v807, 7
        %v809 = vsub.s32 %v806, %v808
        %v810 = vrot.slane %v788, %v809
        %v812 = vunpack.c.l.s4 1966171168
        %v813 = vunpack.c.0.s8 %v812
        %v814 = vlaneseq
        %v815 = vshrl.u32 %v814, 7
        %v816 = vsub.s32 %v813, %v815
        %v817 = vrot.slane %v789, %v816
        %v818 = vcombine.low %v796, %v803
        %v819 = vcombine.low %v810, %v817
        %v821 = vunpack.c.l.s4 1966171168
        %v822 = vunpack.c.0.s8 %v821
        %v823 = vlaneseq
        %v824 = vshrl.u32 %v823, 7
        %v825 = vsub.s32 %v822, %v824
        %v826 = vrot.slane %v818, %v825
        %v828 = vunpack.c.l.s4 1966171168
        %v829 = vunpack.c.0.s8 %v828
        %v830 = vlaneseq
        %v831 = vshrl.u32 %v830, 7
        %v832 = vsub.s32 %v829, %v831
        %v833 = vrot.slane %v819, %v832
        %v834 = vcombine.low %v826, %v833
        %v835 = vcombine.low %v775, %v766
        %v837 = vunpack.c.l.s4 1966171168
        %v838 = vunpack.c.0.s8 %v837
        %v839 = vlaneseq
        %v840 = vshrl.u32 %v839, 7
        %v841 = vsub.s32 %v838, %v840
        %v842 = vrot.slane %v835, %v841
        %v844 = vunpack.c.l.s4 1966171168
        %v845 = vunpack.c.0.s8 %v844
        %v846 = vlaneseq
        %v847 = vshrl.u32 %v846, 7
        %v848 = vsub.s32 %v845, %v847
        %v849 = vrot.slane %v842, %v848
        %v852 = vpack.c.bf16 %v849, %v834
        %v853 = vld [vmem:[%s643] sm:$0xff]
        %v854 = vld [vmem:[%s643 + $0x8] sm:$0xf]
        %v855 = vld [vmem:[%s643 + $0xc] sm:$0xff]
        %v856 = vld [vmem:[%s643 + $0x14] sm:$0xf]
        %v857 = vld [vmem:[%s643 + $0x18] sm:$0xff]
        %v858 = vld [vmem:[%s643 + $0x20] sm:$0xf]
        %v859 = vld [vmem:[%s643 + $0x24] sm:$0xff]
        %v860 = vld [vmem:[%s643 + $0x2c] sm:$0xf]
        %v861 = vld [vmem:[%s643 + $0x30] sm:$0xff]
        %v862 = vld [vmem:[%s643 + $0x38] sm:$0xf]
        %v863 = vld [vmem:[%s643 + $0x3c] sm:$0xff]
        %v864 = vld [vmem:[%s643 + $0x44] sm:$0xf]
        %v865 = vld [vmem:[%s643 + $0x48] sm:$0xff]
        %v866 = vld [vmem:[%s643 + $0x50] sm:$0xf]
        %v867 = vld [vmem:[%s643 + $0x54] sm:$0xff]
        %v868 = vld [vmem:[%s643 + $0x5c] sm:$0xf]
        %v869 = vld [vmem:[%s643 + $0x60] sm:$0xff]
        %v870 = vld [vmem:[%s643 + $0x68] sm:$0xf]
        %v871 = vld [vmem:[%s643 + $0x6c] sm:$0xff]
        %v872 = vld [vmem:[%s643 + $0x74] sm:$0xf]
        %v873 = vld [vmem:[%s643 + $0x78] sm:$0xff]
        %v874 = vld [vmem:[%s643 + $0x80] sm:$0xf]
        %v875 = vld [vmem:[%s643 + $0x84] sm:$0xff]
        %v876 = vld [vmem:[%s643 + $0x8c] sm:$0xf]
        %v877 = vld [vmem:[%s643 + $0x90] sm:$0xff]
        %v878 = vld [vmem:[%s643 + $0x98] sm:$0xf]
        %v879 = vld [vmem:[%s643 + $0x9c] sm:$0xff]
        %v880 = vld [vmem:[%s643 + $0xa4] sm:$0xf]
        %v881 = vld [vmem:[%s643 + $0xa8] sm:$0xff]
        %v882 = vld [vmem:[%s643 + $0xb0] sm:$0xf]
        %v883 = vld [vmem:[%s643 + $0xb4] sm:$0xff]
        %v884 = vld [vmem:[%s643 + $0xbc] sm:$0xf]
        %v885 = vld [vmem:[%s647] sm:$0x7]
        %v887 = vlaneseq
        %v888 = vshrl.u32 %v887, 7
        %v889 = vsub.s32 0, %v888
        %v890 = vrot.slane %v885, %v889
        %v891 = vlaneseq
        %v892 = vshrl.u32 %v891, 7
        %v893 = vsub.s32 1, %v892
        %v894 = vrot.slane %v885, %v893
        %v895 = vlaneseq
        %v896 = vshrl.u32 %v895, 7
        %v897 = vsub.s32 2, %v896
        %v898 = vrot.slane %v885, %v897
        %v934 = vunpack.c.l.b16 %v853
        %v935 = vunpack.c.h.b16 %v853
        %v936 = vunpack.c.l.b16 %v854
        %v937 = vunpack.c.l.b16 %v855
        %v938 = vunpack.c.h.b16 %v855
        %v939 = vunpack.c.l.b16 %v856
        %v940 = vunpack.c.l.b16 %v857
        %v941 = vunpack.c.h.b16 %v857
        %v942 = vunpack.c.l.b16 %v858
        %v943 = vunpack.c.l.b16 %v859
        %v944 = vunpack.c.h.b16 %v859
        %v945 = vunpack.c.l.b16 %v860
        %v946 = vunpack.c.l.b16 %v861
        %v947 = vunpack.c.h.b16 %v861
        %v948 = vunpack.c.l.b16 %v862
        %v949 = vunpack.c.l.b16 %v863
        %v950 = vunpack.c.h.b16 %v863
        %v951 = vunpack.c.l.b16 %v864
        %v952 = vunpack.c.l.b16 %v865
        %v953 = vunpack.c.h.b16 %v865
        %v954 = vunpack.c.l.b16 %v866
        %v955 = vunpack.c.l.b16 %v867
        %v956 = vunpack.c.h.b16 %v867
        %v957 = vunpack.c.l.b16 %v868
        %v958 = vunpack.c.l.b16 %v869
        %v959 = vunpack.c.h.b16 %v869
        %v960 = vunpack.c.l.b16 %v870
        %v961 = vunpack.c.l.b16 %v871
        %v962 = vunpack.c.h.b16 %v871
        %v963 = vunpack.c.l.b16 %v872
        %v964 = vunpack.c.l.b16 %v873
        %v965 = vunpack.c.h.b16 %v873
        %v966 = vunpack.c.l.b16 %v874
        %v967 = vunpack.c.l.b16 %v875
        %v968 = vunpack.c.h.b16 %v875
        %v969 = vunpack.c.l.b16 %v876
        %v970 = vunpack.c.l.b16 %v877
        %v971 = vunpack.c.h.b16 %v877
        %v972 = vunpack.c.l.b16 %v878
        %v973 = vunpack.c.l.b16 %v879
        %v974 = vunpack.c.h.b16 %v879
        %v975 = vunpack.c.l.b16 %v880
        %v976 = vunpack.c.l.b16 %v881
        %v977 = vunpack.c.h.b16 %v881
        %v978 = vunpack.c.l.b16 %v882
        %v979 = vunpack.c.l.b16 %v883
        %v980 = vunpack.c.h.b16 %v883
        %v981 = vunpack.c.l.b16 %v884
        %v982 = vpack.c.b16 %v937, %v934
        %v983 = vpack.c.b16 %v938, %v935
        %v984 = vpack.c.b16 %v939, %v936
        %v985 = vpack.c.b16 %v943, %v940
        %v986 = vpack.c.b16 %v944, %v941
        %v987 = vpack.c.b16 %v945, %v942
        %v988 = vpack.c.b16 %v949, %v946
        %v989 = vpack.c.b16 %v950, %v947
        %v990 = vpack.c.b16 %v951, %v948
        %v991 = vpack.c.b16 %v955, %v952
        %v992 = vpack.c.b16 %v956, %v953
        %v993 = vpack.c.b16 %v957, %v954
        %v994 = vpack.c.b16 %v961, %v958
        %v995 = vpack.c.b16 %v962, %v959
        %v996 = vpack.c.b16 %v963, %v960
        %v997 = vpack.c.b16 %v967, %v964
        %v998 = vpack.c.b16 %v968, %v965
        %v999 = vpack.c.b16 %v969, %v966
        %v1000 = vpack.c.b16 %v973, %v970
        %v1001 = vpack.c.b16 %v974, %v971
        %v1002 = vpack.c.b16 %v975, %v972
        %v1003 = vpack.c.b16 %v979, %v976
        %v1004 = vpack.c.b16 %v980, %v977
        %v1005 = vpack.c.b16 %v981, %v978
        %1030 = vmatprep.subr.bf16.mxu0 %v983
        %1031 = vmatpush1.bf16.msra.mxu0 %v982
        %1032 = vmatprep.subr.bf16.mxu0 %v986
        %1033 = vmatpush1.bf16.msra.mxu0 %v985
        %1034 = vmatprep.subr.bf16.mxu0 %v989
        %1035 = vmatpush1.bf16.msra.mxu0 %v988
        %1036 = vmatprep.subr.bf16.mxu0 %v992
        %1037 = vmatpush1.bf16.msra.mxu0 %v991
        %1038 = vmatprep.subr.bf16.mxu0 %v995
        %1039 = vmatpush1.bf16.msra.mxu0 %v994
        %1040 = vmatprep.subr.bf16.mxu0 %v998
        %1041 = vmatpush1.bf16.msra.mxu0 %v997
        %1042 = vmatprep.subr.bf16.mxu0 %v1001
        %1043 = vmatpush1.bf16.msra.mxu0 %v1000
        %1044 = vmatprep.subr.bf16.mxu0 %v1004
        %1045 = vmatpush1.bf16.msra.mxu0 %v1003
        %1046 = vmatprep.subr.bf16.mxu0 0
        %1047 = vmatpush1.bf16.msra.mxu0 0
        %1048 = vmatprep.subr.bf16.mxu0 0
        %1049 = vmatpush1.bf16.msra.mxu0 0
        %1050 = vmatprep.subr.bf16.mxu0 0
        %1051 = vmatpush1.bf16.msra.mxu0 0
        %1052 = vmatprep.subr.bf16.mxu0 0
        %1053 = vmatpush1.bf16.msra.mxu0 0
        %1054 = vmatprep.subr.bf16.mxu0 0
        %1055 = vmatpush1.bf16.msra.mxu0 0
        %1056 = vmatprep.subr.bf16.mxu0 0
        %1057 = vmatpush1.bf16.msra.mxu0 0
        %1058 = vmatprep.subr.bf16.mxu0 0
        %1059 = vmatpush1.bf16.msra.mxu0 0
        %1060 = vmatprep.subr.bf16.mxu0 0
        %1061 = vmatpush1.bf16.msra.mxu0 0
        %1062 = vmatprep.mubr.bf16.mxu0 0
        %1063 = vmatmul.mubr.bf16.gmra.mrb[0].mxu0 %v852
        %v1064 = vpop.f32.mrb[0].mxu0
        %v1065 = vadd.f32 %v890, %v1064
        %v1066 = vpop.f32.mrb[0].mxu0
        %v1067 = vadd.f32 %v894, %v1066
        %v1068 = vpop.f32.mrb[0].mxu0
        %v1069 = vadd.f32 %v890, %v1068
        %v1070 = vpop.f32.mrb[0].mxu0
        %v1071 = vadd.f32 %v894, %v1070
        %1072 = vdwg.mxu0
        %1073 = vmatprep.subr.bf16.mxu0 0
        %1074 = vmatpush1.bf16.msra.mxu0 %v984
        %1075 = vmatprep.subr.bf16.mxu0 0
        %1076 = vmatpush1.bf16.msra.mxu0 %v987
        %1077 = vmatprep.subr.bf16.mxu0 0
        %1078 = vmatpush1.bf16.msra.mxu0 %v990
        %1079 = vmatprep.subr.bf16.mxu0 0
        %1080 = vmatpush1.bf16.msra.mxu0 %v993
        %1081 = vmatprep.subr.bf16.mxu0 0
        %1082 = vmatpush1.bf16.msra.mxu0 %v996
        %1083 = vmatprep.subr.bf16.mxu0 0
        %1084 = vmatpush1.bf16.msra.mxu0 %v999
        %1085 = vmatprep.subr.bf16.mxu0 0
        %1086 = vmatpush1.bf16.msra.mxu0 %v1002
        %1087 = vmatprep.subr.bf16.mxu0 0
        %1088 = vmatpush1.bf16.msra.mxu0 %v1005
        %1089 = vmatprep.subr.bf16.mxu0 0
        %1090 = vmatpush1.bf16.msra.mxu0 0
        %1091 = vmatprep.subr.bf16.mxu0 0
        %1092 = vmatpush1.bf16.msra.mxu0 0
        %1093 = vmatprep.subr.bf16.mxu0 0
        %1094 = vmatpush1.bf16.msra.mxu0 0
        %1095 = vmatprep.subr.bf16.mxu0 0
        %1096 = vmatpush1.bf16.msra.mxu0 0
        %1097 = vmatprep.subr.bf16.mxu0 0
        %1098 = vmatpush1.bf16.msra.mxu0 0
        %1099 = vmatprep.subr.bf16.mxu0 0
        %1100 = vmatpush1.bf16.msra.mxu0 0
        %1101 = vmatprep.subr.bf16.mxu0 0
        %1102 = vmatpush1.bf16.msra.mxu0 0
        %1103 = vmatprep.subr.bf16.mxu0 0
        %1104 = vmatpush1.bf16.msra.mxu0 0
        %1105 = vmatprep.mubr.bf16.mxu0 0
        %1106 = vmatmul.mubr.bf16.gmra.mrb[0].mxu0 %v852
        %v1107 = vpop.f32.mrb[0].mxu0
        %v1108 = vadd.f32 %v898, %v1107
        %v1109 = vpop.f32.mrb[0].mxu0
        %v1110 = vpop.f32.mrb[0].mxu0
        %v1111 = vadd.f32 %v898, %v1110
        %v1112 = vpop.f32.mrb[0].mxu0
        %1113 = vdwg.mxu0
        %v1116 = vcombine.high %v1065, %v1065
        %v1118 = vunpack.c.l.s4 1966171168
        %v1119 = vunpack.c.0.s8 %v1118
        %v1120 = vlaneseq
        %v1121 = vshrl.u32 %v1120, 7
        %v1122 = vsub.s32 %v1119, %v1121
        %v1123 = vrot.slane %v1065, %v1122
        %v1125 = vunpack.c.l.s4 1966171168
        %v1126 = vunpack.c.0.s8 %v1125
        %v1127 = vlaneseq
        %v1128 = vshrl.u32 %v1127, 7
        %v1129 = vsub.s32 %v1126, %v1128
        %v1130 = vrot.slane %v1116, %v1129
        %v1131 = vcombine.high %v1123, %v1123
        %v1132 = vcombine.high %v1130, %v1130
        %v1134 = vunpack.c.l.s4 1966171168
        %v1135 = vunpack.c.0.s8 %v1134
        %v1136 = vlaneseq
        %v1137 = vshrl.u32 %v1136, 7
        %v1138 = vsub.s32 %v1135, %v1137
        %v1139 = vrot.slane %v1123, %v1138
        %v1141 = vunpack.c.l.s4 1966171168
        %v1142 = vunpack.c.0.s8 %v1141
        %v1143 = vlaneseq
        %v1144 = vshrl.u32 %v1143, 7
        %v1145 = vsub.s32 %v1142, %v1144
        %v1146 = vrot.slane %v1130, %v1145
        %v1148 = vunpack.c.l.s4 1966171168
        %v1149 = vunpack.c.0.s8 %v1148
        %v1150 = vlaneseq
        %v1151 = vshrl.u32 %v1150, 7
        %v1152 = vsub.s32 %v1149, %v1151
        %v1153 = vrot.slane %v1131, %v1152
        %v1155 = vunpack.c.l.s4 1966171168
        %v1156 = vunpack.c.0.s8 %v1155
        %v1157 = vlaneseq
        %v1158 = vshrl.u32 %v1157, 7
        %v1159 = vsub.s32 %v1156, %v1158
        %v1160 = vrot.slane %v1132, %v1159
        %v1161 = vcombine.high %v1139, %v1139
        %v1162 = vcombine.high %v1146, %v1146
        %v1163 = vcombine.high %v1153, %v1153
        %v1164 = vcombine.high %v1160, %v1160
        %v1166 = vunpack.c.l.s4 1966171168
        %v1167 = vunpack.c.0.s8 %v1166
        %v1168 = vlaneseq
        %v1169 = vshrl.u32 %v1168, 7
        %v1170 = vsub.s32 %v1167, %v1169
        %v1171 = vrot.slane %v1069, %v1170
        %v1172 = vcombine.high %v1171, %v1171
        %v1174 = vunpack.c.l.s4 1966171168
        %v1175 = vunpack.c.0.s8 %v1174
        %v1176 = vlaneseq
        %v1177 = vshrl.u32 %v1176, 7
        %v1178 = vsub.s32 %v1175, %v1177
        %v1179 = vrot.slane %v1171, %v1178
        %v1181 = vunpack.c.l.s4 1966171168
        %v1182 = vunpack.c.0.s8 %v1181
        %v1183 = vlaneseq
        %v1184 = vshrl.u32 %v1183, 7
        %v1185 = vsub.s32 %v1182, %v1184
        %v1186 = vrot.slane %v1172, %v1185
        %v1187 = vcombine.low %v1139, %v1153
        %v1188 = vcombine.low %v1161, %v1163
        %v1190 = vunpack.c.l.s4 1966171168
        %v1191 = vunpack.c.0.s8 %v1190
        %v1192 = vlaneseq
        %v1193 = vshrl.u32 %v1192, 7
        %v1194 = vsub.s32 %v1191, %v1193
        %v1195 = vrot.slane %v1187, %v1194
        %v1197 = vunpack.c.l.s4 1966171168
        %v1198 = vunpack.c.0.s8 %v1197
        %v1199 = vlaneseq
        %v1200 = vshrl.u32 %v1199, 7
        %v1201 = vsub.s32 %v1198, %v1200
        %v1202 = vrot.slane %v1188, %v1201
        %v1204 = vunpack.c.l.s4 1966171168
        %v1205 = vunpack.c.0.s8 %v1204
        %v1206 = vlaneseq
        %v1207 = vshrl.u32 %v1206, 7
        %v1208 = vsub.s32 %v1205, %v1207
        %v1209 = vrot.slane %v1146, %v1208
        %v1210 = vcombine.low %v1195, %v1202
        %v1212 = vunpack.c.l.s4 1966171168
        %v1213 = vunpack.c.0.s8 %v1212
        %v1214 = vlaneseq
        %v1215 = vshrl.u32 %v1214, 7
        %v1216 = vsub.s32 %v1213, %v1215
        %v1217 = vrot.slane %v1210, %v1216
        %v1219 = vunpack.c.l.s4 1966171168
        %v1220 = vunpack.c.0.s8 %v1219
        %v1221 = vlaneseq
        %v1222 = vshrl.u32 %v1221, 7
        %v1223 = vsub.s32 %v1220, %v1222
        %v1224 = vrot.slane %v1209, %v1223
        %v1225 = vcombine.low %v1217, %v1224
        %v1226 = vcombine.low %v1160, %v1162
        %v1227 = vcombine.low %v1164, %v1179
        %v1229 = vunpack.c.l.s4 1966171168
        %v1230 = vunpack.c.0.s8 %v1229
        %v1231 = vlaneseq
        %v1232 = vshrl.u32 %v1231, 7
        %v1233 = vsub.s32 %v1230, %v1232
        %v1234 = vrot.slane %v1226, %v1233
        %v1236 = vunpack.c.l.s4 1966171168
        %v1237 = vunpack.c.0.s8 %v1236
        %v1238 = vlaneseq
        %v1239 = vshrl.u32 %v1238, 7
        %v1240 = vsub.s32 %v1237, %v1239
        %v1241 = vrot.slane %v1227, %v1240
        %v1243 = vunpack.c.l.s4 1966171168
        %v1244 = vunpack.c.0.s8 %v1243
        %v1245 = vlaneseq
        %v1246 = vshrl.u32 %v1245, 7
        %v1247 = vsub.s32 %v1244, %v1246
        %v1248 = vrot.slane %v1186, %v1247
        %v1249 = vcombine.low %v1234, %v1241
        %v1251 = vunpack.c.l.s4 1966171168
        %v1252 = vunpack.c.0.s8 %v1251
        %v1253 = vlaneseq
        %v1254 = vshrl.u32 %v1253, 7
        %v1255 = vsub.s32 %v1252, %v1254
        %v1256 = vrot.slane %v1249, %v1255
        %v1258 = vunpack.c.l.s4 1966171168
        %v1259 = vunpack.c.0.s8 %v1258
        %v1260 = vlaneseq
        %v1261 = vshrl.u32 %v1260, 7
        %v1262 = vsub.s32 %v1259, %v1261
        %v1263 = vrot.slane %v1248, %v1262
        %v1264 = vcombine.low %v1256, %v1263
        %v1267 = vpack.c.bf16 %v1225, %v1225
        %v1268 = vpack.c.bf16 %v1264, %v1264
        %v1271 = vcombine.high %v1067, %v1067
        %v1273 = vunpack.c.l.s4 1966171168
        %v1274 = vunpack.c.0.s8 %v1273
        %v1275 = vlaneseq
        %v1276 = vshrl.u32 %v1275, 7
        %v1277 = vsub.s32 %v1274, %v1276
        %v1278 = vrot.slane %v1067, %v1277
        %v1280 = vunpack.c.l.s4 1966171168
        %v1281 = vunpack.c.0.s8 %v1280
        %v1282 = vlaneseq
        %v1283 = vshrl.u32 %v1282, 7
        %v1284 = vsub.s32 %v1281, %v1283
        %v1285 = vrot.slane %v1271, %v1284
        %v1286 = vcombine.high %v1278, %v1278
        %v1287 = vcombine.high %v1285, %v1285
        %v1289 = vunpack.c.l.s4 1966171168
        %v1290 = vunpack.c.0.s8 %v1289
        %v1291 = vlaneseq
        %v1292 = vshrl.u32 %v1291, 7
        %v1293 = vsub.s32 %v1290, %v1292
        %v1294 = vrot.slane %v1278, %v1293
        %v1296 = vunpack.c.l.s4 1966171168
        %v1297 = vunpack.c.0.s8 %v1296
        %v1298 = vlaneseq
        %v1299 = vshrl.u32 %v1298, 7
        %v1300 = vsub.s32 %v1297, %v1299
        %v1301 = vrot.slane %v1285, %v1300
        %v1303 = vunpack.c.l.s4 1966171168
        %v1304 = vunpack.c.0.s8 %v1303
        %v1305 = vlaneseq
        %v1306 = vshrl.u32 %v1305, 7
        %v1307 = vsub.s32 %v1304, %v1306
        %v1308 = vrot.slane %v1286, %v1307
        %v1310 = vunpack.c.l.s4 1966171168
        %v1311 = vunpack.c.0.s8 %v1310
        %v1312 = vlaneseq
        %v1313 = vshrl.u32 %v1312, 7
        %v1314 = vsub.s32 %v1311, %v1313
        %v1315 = vrot.slane %v1287, %v1314
        %v1316 = vcombine.high %v1294, %v1294
        %v1317 = vcombine.high %v1301, %v1301
        %v1318 = vcombine.high %v1308, %v1308
        %v1319 = vcombine.high %v1315, %v1315
        %v1321 = vunpack.c.l.s4 1966171168
        %v1322 = vunpack.c.0.s8 %v1321
        %v1323 = vlaneseq
        %v1324 = vshrl.u32 %v1323, 7
        %v1325 = vsub.s32 %v1322, %v1324
        %v1326 = vrot.slane %v1071, %v1325
        %v1327 = vcombine.high %v1326, %v1326
        %v1329 = vunpack.c.l.s4 1966171168
        %v1330 = vunpack.c.0.s8 %v1329
        %v1331 = vlaneseq
        %v1332 = vshrl.u32 %v1331, 7
        %v1333 = vsub.s32 %v1330, %v1332
        %v1334 = vrot.slane %v1326, %v1333
        %v1336 = vunpack.c.l.s4 1966171168
        %v1337 = vunpack.c.0.s8 %v1336
        %v1338 = vlaneseq
        %v1339 = vshrl.u32 %v1338, 7
        %v1340 = vsub.s32 %v1337, %v1339
        %v1341 = vrot.slane %v1327, %v1340
        %v1342 = vcombine.low %v1294, %v1308
        %v1343 = vcombine.low %v1316, %v1318
        %v1345 = vunpack.c.l.s4 1966171168
        %v1346 = vunpack.c.0.s8 %v1345
        %v1347 = vlaneseq
        %v1348 = vshrl.u32 %v1347, 7
        %v1349 = vsub.s32 %v1346, %v1348
        %v1350 = vrot.slane %v1342, %v1349
        %v1352 = vunpack.c.l.s4 1966171168
        %v1353 = vunpack.c.0.s8 %v1352
        %v1354 = vlaneseq
        %v1355 = vshrl.u32 %v1354, 7
        %v1356 = vsub.s32 %v1353, %v1355
        %v1357 = vrot.slane %v1343, %v1356
        %v1359 = vunpack.c.l.s4 1966171168
        %v1360 = vunpack.c.0.s8 %v1359
        %v1361 = vlaneseq
        %v1362 = vshrl.u32 %v1361, 7
        %v1363 = vsub.s32 %v1360, %v1362
        %v1364 = vrot.slane %v1301, %v1363
        %v1365 = vcombine.low %v1350, %v1357
        %v1367 = vunpack.c.l.s4 1966171168
        %v1368 = vunpack.c.0.s8 %v1367
        %v1369 = vlaneseq
        %v1370 = vshrl.u32 %v1369, 7
        %v1371 = vsub.s32 %v1368, %v1370
        %v1372 = vrot.slane %v1365, %v1371
        %v1374 = vunpack.c.l.s4 1966171168
        %v1375 = vunpack.c.0.s8 %v1374
        %v1376 = vlaneseq
        %v1377 = vshrl.u32 %v1376, 7
        %v1378 = vsub.s32 %v1375, %v1377
        %v1379 = vrot.slane %v1364, %v1378
        %v1380 = vcombine.low %v1372, %v1379
        %v1381 = vcombine.low %v1315, %v1317
        %v1382 = vcombine.low %v1319, %v1334
        %v1384 = vunpack.c.l.s4 1966171168
        %v1385 = vunpack.c.0.s8 %v1384
        %v1386 = vlaneseq
        %v1387 = vshrl.u32 %v1386, 7
        %v1388 = vsub.s32 %v1385, %v1387
        %v1389 = vrot.slane %v1381, %v1388
        %v1391 = vunpack.c.l.s4 1966171168
        %v1392 = vunpack.c.0.s8 %v1391
        %v1393 = vlaneseq
        %v1394 = vshrl.u32 %v1393, 7
        %v1395 = vsub.s32 %v1392, %v1394
        %v1396 = vrot.slane %v1382, %v1395
        %v1398 = vunpack.c.l.s4 1966171168
        %v1399 = vunpack.c.0.s8 %v1398
        %v1400 = vlaneseq
        %v1401 = vshrl.u32 %v1400, 7
        %v1402 = vsub.s32 %v1399, %v1401
        %v1403 = vrot.slane %v1341, %v1402
        %v1404 = vcombine.low %v1389, %v1396
        %v1406 = vunpack.c.l.s4 1966171168
        %v1407 = vunpack.c.0.s8 %v1406
        %v1408 = vlaneseq
        %v1409 = vshrl.u32 %v1408, 7
        %v1410 = vsub.s32 %v1407, %v1409
        %v1411 = vrot.slane %v1404, %v1410
        %v1413 = vunpack.c.l.s4 1966171168
        %v1414 = vunpack.c.0.s8 %v1413
        %v1415 = vlaneseq
        %v1416 = vshrl.u32 %v1415, 7
        %v1417 = vsub.s32 %v1414, %v1416
        %v1418 = vrot.slane %v1403, %v1417
        %v1419 = vcombine.low %v1411, %v1418
        %v1422 = vpack.c.bf16 %v1380, %v1380
        %v1423 = vpack.c.bf16 %v1419, %v1419
        %v1426 = vcombine.high %v1108, %v1108
        %v1428 = vunpack.c.l.s4 1966171168
        %v1429 = vunpack.c.0.s8 %v1428
        %v1430 = vlaneseq
        %v1431 = vshrl.u32 %v1430, 7
        %v1432 = vsub.s32 %v1429, %v1431
        %v1433 = vrot.slane %v1108, %v1432
        %v1435 = vunpack.c.l.s4 1966171168
        %v1436 = vunpack.c.0.s8 %v1435
        %v1437 = vlaneseq
        %v1438 = vshrl.u32 %v1437, 7
        %v1439 = vsub.s32 %v1436, %v1438
        %v1440 = vrot.slane %v1426, %v1439
        %v1441 = vcombine.high %v1433, %v1433
        %v1442 = vcombine.high %v1440, %v1440
        %v1444 = vunpack.c.l.s4 1966171168
        %v1445 = vunpack.c.0.s8 %v1444
        %v1446 = vlaneseq
        %v1447 = vshrl.u32 %v1446, 7
        %v1448 = vsub.s32 %v1445, %v1447
        %v1449 = vrot.slane %v1433, %v1448
        %v1451 = vunpack.c.l.s4 1966171168
        %v1452 = vunpack.c.0.s8 %v1451
        %v1453 = vlaneseq
        %v1454 = vshrl.u32 %v1453, 7
        %v1455 = vsub.s32 %v1452, %v1454
        %v1456 = vrot.slane %v1440, %v1455
        %v1458 = vunpack.c.l.s4 1966171168
        %v1459 = vunpack.c.0.s8 %v1458
        %v1460 = vlaneseq
        %v1461 = vshrl.u32 %v1460, 7
        %v1462 = vsub.s32 %v1459, %v1461
        %v1463 = vrot.slane %v1441, %v1462
        %v1465 = vunpack.c.l.s4 1966171168
        %v1466 = vunpack.c.0.s8 %v1465
        %v1467 = vlaneseq
        %v1468 = vshrl.u32 %v1467, 7
        %v1469 = vsub.s32 %v1466, %v1468
        %v1470 = vrot.slane %v1442, %v1469
        %v1471 = vcombine.high %v1449, %v1449
        %v1472 = vcombine.high %v1456, %v1456
        %v1473 = vcombine.high %v1463, %v1463
        %v1474 = vcombine.high %v1470, %v1470
        %v1476 = vunpack.c.l.s4 1966171168
        %v1477 = vunpack.c.0.s8 %v1476
        %v1478 = vlaneseq
        %v1479 = vshrl.u32 %v1478, 7
        %v1480 = vsub.s32 %v1477, %v1479
        %v1481 = vrot.slane %v1111, %v1480
        %v1482 = vcombine.high %v1481, %v1481
        %v1484 = vunpack.c.l.s4 1966171168
        %v1485 = vunpack.c.0.s8 %v1484
        %v1486 = vlaneseq
        %v1487 = vshrl.u32 %v1486, 7
        %v1488 = vsub.s32 %v1485, %v1487
        %v1489 = vrot.slane %v1481, %v1488
        %v1491 = vunpack.c.l.s4 1966171168
        %v1492 = vunpack.c.0.s8 %v1491
        %v1493 = vlaneseq
        %v1494 = vshrl.u32 %v1493, 7
        %v1495 = vsub.s32 %v1492, %v1494
        %v1496 = vrot.slane %v1482, %v1495
        %v1497 = vcombine.low %v1449, %v1463
        %v1498 = vcombine.low %v1471, %v1473
        %v1500 = vunpack.c.l.s4 1966171168
        %v1501 = vunpack.c.0.s8 %v1500
        %v1502 = vlaneseq
        %v1503 = vshrl.u32 %v1502, 7
        %v1504 = vsub.s32 %v1501, %v1503
        %v1505 = vrot.slane %v1497, %v1504
        %v1507 = vunpack.c.l.s4 1966171168
        %v1508 = vunpack.c.0.s8 %v1507
        %v1509 = vlaneseq
        %v1510 = vshrl.u32 %v1509, 7
        %v1511 = vsub.s32 %v1508, %v1510
        %v1512 = vrot.slane %v1498, %v1511
        %v1514 = vunpack.c.l.s4 1966171168
        %v1515 = vunpack.c.0.s8 %v1514
        %v1516 = vlaneseq
        %v1517 = vshrl.u32 %v1516, 7
        %v1518 = vsub.s32 %v1515, %v1517
        %v1519 = vrot.slane %v1456, %v1518
        %v1520 = vcombine.low %v1505, %v1512
        %v1522 = vunpack.c.l.s4 1966171168
        %v1523 = vunpack.c.0.s8 %v1522
        %v1524 = vlaneseq
        %v1525 = vshrl.u32 %v1524, 7
        %v1526 = vsub.s32 %v1523, %v1525
        %v1527 = vrot.slane %v1520, %v1526
        %v1529 = vunpack.c.l.s4 1966171168
        %v1530 = vunpack.c.0.s8 %v1529
        %v1531 = vlaneseq
        %v1532 = vshrl.u32 %v1531, 7
        %v1533 = vsub.s32 %v1530, %v1532
        %v1534 = vrot.slane %v1519, %v1533
        %v1535 = vcombine.low %v1527, %v1534
        %v1536 = vcombine.low %v1470, %v1472
        %v1537 = vcombine.low %v1474, %v1489
        %v1539 = vunpack.c.l.s4 1966171168
        %v1540 = vunpack.c.0.s8 %v1539
        %v1541 = vlaneseq
        %v1542 = vshrl.u32 %v1541, 7
        %v1543 = vsub.s32 %v1540, %v1542
        %v1544 = vrot.slane %v1536, %v1543
        %v1546 = vunpack.c.l.s4 1966171168
        %v1547 = vunpack.c.0.s8 %v1546
        %v1548 = vlaneseq
        %v1549 = vshrl.u32 %v1548, 7
        %v1550 = vsub.s32 %v1547, %v1549
        %v1551 = vrot.slane %v1537, %v1550
        %v1553 = vunpack.c.l.s4 1966171168
        %v1554 = vunpack.c.0.s8 %v1553
        %v1555 = vlaneseq
        %v1556 = vshrl.u32 %v1555, 7
        %v1557 = vsub.s32 %v1554, %v1556
        %v1558 = vrot.slane %v1496, %v1557
        %v1559 = vcombine.low %v1544, %v1551
        %v1561 = vunpack.c.l.s4 1966171168
        %v1562 = vunpack.c.0.s8 %v1561
        %v1563 = vlaneseq
        %v1564 = vshrl.u32 %v1563, 7
        %v1565 = vsub.s32 %v1562, %v1564
        %v1566 = vrot.slane %v1559, %v1565
        %v1568 = vunpack.c.l.s4 1966171168
        %v1569 = vunpack.c.0.s8 %v1568
        %v1570 = vlaneseq
        %v1571 = vshrl.u32 %v1570, 7
        %v1572 = vsub.s32 %v1569, %v1571
        %v1573 = vrot.slane %v1558, %v1572
        %v1574 = vcombine.low %v1566, %v1573
        %v1577 = vpack.c.bf16 %v1535, %v1535
        %v1578 = vpack.c.bf16 %v1574, %v1574
        %vm1579 = vcmask 261120
        %v1581 = vsel %vm1579, %v1267, 0
        %v1584 = vsel %vm1579, %v1422, 0
        %1586 = vmatprep.subr.bf16.mxu0 0
        %1587 = vmatpush1.bf16.xpose.msra.mxu0 %v1584
        %1588 = vmatprep.subr.bf16.mxu0 0
        %1589 = vmatpush1.bf16.xpose.msra.mxu0 0
        %1590 = vmatprep.subr.bf16.mxu0 0
        %1591 = vmatpush1.bf16.xpose.msra.mxu0 0
        %1592 = vmatprep.subr.bf16.mxu0 0
        %1593 = vmatpush1.bf16.xpose.msra.mxu0 0
        %1594 = vmatprep.subr.bf16.mxu0 0
        %1595 = vmatpush1.bf16.xpose.msra.mxu0 0
        %1596 = vmatprep.subr.bf16.mxu0 0
        %1597 = vmatpush1.bf16.xpose.msra.mxu0 0
        %1598 = vmatprep.subr.bf16.mxu0 0
        %1599 = vmatpush1.bf16.xpose.msra.mxu0 0
        %1600 = vmatprep.subr.bf16.mxu0 0
        %1601 = vmatpush1.bf16.xpose.msra.mxu0 0
        %1602 = vmatprep.subr.bf16.mxu0 0
        %1603 = vmatpush1.bf16.xpose.msra.mxu0 0
        %1604 = vmatprep.subr.bf16.mxu0 0
        %1605 = vmatpush1.bf16.xpose.msra.mxu0 0
        %1606 = vmatprep.subr.bf16.mxu0 0
        %1607 = vmatpush1.bf16.xpose.msra.mxu0 0
        %1608 = vmatprep.subr.bf16.mxu0 0
        %1609 = vmatpush1.bf16.xpose.msra.mxu0 0
        %1610 = vmatprep.subr.bf16.mxu0 0
        %1611 = vmatpush1.bf16.xpose.msra.mxu0 0
        %1612 = vmatprep.subr.bf16.mxu0 0
        %1613 = vmatpush1.bf16.xpose.msra.mxu0 0
        %1614 = vmatprep.subr.bf16.mxu0 0
        %1615 = vmatpush1.bf16.xpose.msra.mxu0 0
        %1616 = vmatprep.subr.bf16.mxu0 0
        %1617 = vmatpush1.bf16.xpose.msra.mxu0 0
        %1618 = vmatprep.mubr.bf16.mxu0 0
        %1619 = vmatmul.mubr.bf16.gmra.mrb[0].mxu0 %v1581
        %v1620 = vpop.f32.mrb[0].mxu0
        %v1621 = vadd.f32 0.0, %v1620
        %v1622 = vpop.f32.mrb[0].mxu0
        %v1623 = vpop.f32.mrb[0].mxu0
        %v1624 = vpop.f32.mrb[0].mxu0
        %1625 = vdwg.mxu0
        %v1627 = vsel %vm1579, %v1268, 0
        %v1630 = vsel %vm1579, %v1423, 0
        %1632 = vmatprep.subr.bf16.mxu0 0
        %1633 = vmatpush1.bf16.xpose.msra.mxu0 %v1630
        %1634 = vmatprep.subr.bf16.mxu0 0
        %1635 = vmatpush1.bf16.xpose.msra.mxu0 0
        %1636 = vmatprep.subr.bf16.mxu0 0
        %1637 = vmatpush1.bf16.xpose.msra.mxu0 0
        %1638 = vmatprep.subr.bf16.mxu0 0
        %1639 = vmatpush1.bf16.xpose.msra.mxu0 0
        %1640 = vmatprep.subr.bf16.mxu0 0
        %1641 = vmatpush1.bf16.xpose.msra.mxu0 0
        %1642 = vmatprep.subr.bf16.mxu0 0
        %1643 = vmatpush1.bf16.xpose.msra.mxu0 0
        %1644 = vmatprep.subr.bf16.mxu0 0
        %1645 = vmatpush1.bf16.xpose.msra.mxu0 0
        %1646 = vmatprep.subr.bf16.mxu0 0
        %1647 = vmatpush1.bf16.xpose.msra.mxu0 0
        %1648 = vmatprep.subr.bf16.mxu0 0
        %1649 = vmatpush1.bf16.xpose.msra.mxu0 0
        %1650 = vmatprep.subr.bf16.mxu0 0
        %1651 = vmatpush1.bf16.xpose.msra.mxu0 0
        %1652 = vmatprep.subr.bf16.mxu0 0
        %1653 = vmatpush1.bf16.xpose.msra.mxu0 0
        %1654 = vmatprep.subr.bf16.mxu0 0
        %1655 = vmatpush1.bf16.xpose.msra.mxu0 0
        %1656 = vmatprep.subr.bf16.mxu0 0
        %1657 = vmatpush1.bf16.xpose.msra.mxu0 0
        %1658 = vmatprep.subr.bf16.mxu0 0
        %1659 = vmatpush1.bf16.xpose.msra.mxu0 0
        %1660 = vmatprep.subr.bf16.mxu0 0
        %1661 = vmatpush1.bf16.xpose.msra.mxu0 0
        %1662 = vmatprep.subr.bf16.mxu0 0
        %1663 = vmatpush1.bf16.xpose.msra.mxu0 0
        %1664 = vmatprep.mubr.bf16.mxu0 0
        %1665 = vmatmul.mubr.bf16.gmra.mrb[0].mxu0 %v1627
        %v1666 = vpop.f32.mrb[0].mxu0
        %v1667 = vadd.f32 0.0, %v1666
        %v1668 = vpop.f32.mrb[0].mxu0
        %v1669 = vpop.f32.mrb[0].mxu0
        %v1670 = vpop.f32.mrb[0].mxu0
        %1671 = vdwg.mxu0
        %v1672 = vmul.f32 %v1621, 0.17677669
        %v1673 = vmul.f32 %v1667, 0.17677669
        %vm1674 = vcmask 36864
        %v1675 = vsel %vm1674, %v1672, -inf
        %1676 = vmax.xlane.f32.xlu0 %v1675
        %v1677 = vpop.xlane.xlu0 %1676
        %v1678 = vsel %vm1674, %v1673, -inf
        %1679 = vmax.xlane.f32.xlu0 %v1678
        %v1680 = vpop.xlane.xlu0 %1679
        %v1681 = vsub.f32 %v1672, %v1677
        %v1682 = vsub.f32 %v1673, %v1680
        %v1683 = vmul.f32 %v1681, 1.442695
        %v1684 = vpow.pop %v1683
        %v1685 = vmul.f32 %v1682, 1.442695
        %v1686 = vpow.pop %v1685
        %v1687 = vsel %vm1674, %v1684, 0.0
        %1688 = vadd.xlane.f32.xlu0 %v1687
        %v1689 = vpop.xlane.xlu0 %1688
        %v1690 = vsel %vm1674, %v1686, 0.0
        %1691 = vadd.xlane.f32.xlu0 %v1690
        %v1692 = vpop.xlane.xlu0 %1691
        %v1693 = vrcp.pop %v1689
        %v1694 = vrcp.pop %v1692
        %v1695 = vmul.f32 %v1684, %v1693
        %v1696 = vmul.f32 %v1686, %v1694
        %v1697 = vpack.c.bf16 %v1695, %v1695
        %v1698 = vpack.c.bf16 %v1696, %v1696
        %vm1699 = vcmask 39936
        %v1701 = vsel %vm1699, %v1697, 0
        %vm1703 = vcmask 1041408
        %vm1704 = vcmask 1042432
        %v1705 = vsel %vm1703, 4294967295, 65535
        %v1706 = vsel %vm1704, %v1705, 0
        %v1708 = vand.u32 %v1577, %v1706
        %1710 = vmatprep.subr.bf16.mxu0 0
        %1711 = vmatpush1.bf16.msra.mxu0 %v1708
        %1712 = vmatprep.subr.bf16.mxu0 0
        %1713 = vmatpush1.bf16.msra.mxu0 0
        %1714 = vmatprep.subr.bf16.mxu0 0
        %1715 = vmatpush1.bf16.msra.mxu0 0
        %1716 = vmatprep.subr.bf16.mxu0 0
        %1717 = vmatpush1.bf16.msra.mxu0 0
        %1718 = vmatprep.subr.bf16.mxu0 0
        %1719 = vmatpush1.bf16.msra.mxu0 0
        %1720 = vmatprep.subr.bf16.mxu0 0
        %1721 = vmatpush1.bf16.msra.mxu0 0
        %1722 = vmatprep.subr.bf16.mxu0 0
        %1723 = vmatpush1.bf16.msra.mxu0 0
        %1724 = vmatprep.subr.bf16.mxu0 0
        %1725 = vmatpush1.bf16.msra.mxu0 0
        %1726 = vmatprep.subr.bf16.mxu0 0
        %1727 = vmatpush1.bf16.msra.mxu0 0
        %1728 = vmatprep.subr.bf16.mxu0 0
        %1729 = vmatpush1.bf16.msra.mxu0 0
        %1730 = vmatprep.subr.bf16.mxu0 0
        %1731 = vmatpush1.bf16.msra.mxu0 0
        %1732 = vmatprep.subr.bf16.mxu0 0
        %1733 = vmatpush1.bf16.msra.mxu0 0
        %1734 = vmatprep.subr.bf16.mxu0 0
        %1735 = vmatpush1.bf16.msra.mxu0 0
        %1736 = vmatprep.subr.bf16.mxu0 0
        %1737 = vmatpush1.bf16.msra.mxu0 0
        %1738 = vmatprep.subr.bf16.mxu0 0
        %1739 = vmatpush1.bf16.msra.mxu0 0
        %1740 = vmatprep.subr.bf16.mxu0 0
        %1741 = vmatpush1.bf16.msra.mxu0 0
        %1742 = vmatprep.mubr.bf16.mxu0 0
        %1743 = vmatmul.mubr.bf16.gmra.mrb[0].mxu0 %v1701
        %v1744 = vpop.f32.mrb[0].mxu0
        %v1745 = vadd.f32 0.0, %v1744
        %v1746 = vpop.f32.mrb[0].mxu0
        %v1747 = vpop.f32.mrb[0].mxu0
        %v1748 = vpop.f32.mrb[0].mxu0
        %1749 = vdwg.mxu0
        %v1751 = vsel %vm1699, %v1698, 0
        %v1754 = vand.u32 %v1578, %v1706
        %1756 = vmatprep.subr.bf16.mxu0 0
        %1757 = vmatpush1.bf16.msra.mxu0 %v1754
        %1758 = vmatprep.subr.bf16.mxu0 0
        %1759 = vmatpush1.bf16.msra.mxu0 0
        %1760 = vmatprep.subr.bf16.mxu0 0
        %1761 = vmatpush1.bf16.msra.mxu0 0
        %1762 = vmatprep.subr.bf16.mxu0 0
        %1763 = vmatpush1.bf16.msra.mxu0 0
        %1764 = vmatprep.subr.bf16.mxu0 0
        %1765 = vmatpush1.bf16.msra.mxu0 0
        %1766 = vmatprep.subr.bf16.mxu0 0
        %1767 = vmatpush1.bf16.msra.mxu0 0
        %1768 = vmatprep.subr.bf16.mxu0 0
        %1769 = vmatpush1.bf16.msra.mxu0 0
        %1770 = vmatprep.subr.bf16.mxu0 0
        %1771 = vmatpush1.bf16.msra.mxu0 0
        %1772 = vmatprep.subr.bf16.mxu0 0
        %1773 = vmatpush1.bf16.msra.mxu0 0
        %1774 = vmatprep.subr.bf16.mxu0 0
        %1775 = vmatpush1.bf16.msra.mxu0 0
        %1776 = vmatprep.subr.bf16.mxu0 0
        %1777 = vmatpush1.bf16.msra.mxu0 0
        %1778 = vmatprep.subr.bf16.mxu0 0
        %1779 = vmatpush1.bf16.msra.mxu0 0
        %1780 = vmatprep.subr.bf16.mxu0 0
        %1781 = vmatpush1.bf16.msra.mxu0 0
        %1782 = vmatprep.subr.bf16.mxu0 0
        %1783 = vmatpush1.bf16.msra.mxu0 0
        %1784 = vmatprep.subr.bf16.mxu0 0
        %1785 = vmatpush1.bf16.msra.mxu0 0
        %1786 = vmatprep.subr.bf16.mxu0 0
        %1787 = vmatpush1.bf16.msra.mxu0 0
        %1788 = vmatprep.mubr.bf16.mxu0 0
        %1789 = vmatmul.mubr.bf16.gmra.mrb[0].mxu0 %v1751
        %v1790 = vpop.f32.mrb[0].mxu0
        %v1791 = vadd.f32 0.0, %v1790
        %v1792 = vpop.f32.mrb[0].mxu0
        %v1793 = vpop.f32.mrb[0].mxu0
        %v1794 = vpop.f32.mrb[0].mxu0
        %1795 = vdwg.mxu0
        %v1798 = vcombine.high %v1745, %v1745
        %v1800 = vunpack.c.l.s4 1966171168
        %v1801 = vunpack.c.0.s8 %v1800
        %v1802 = vlaneseq
        %v1803 = vshrl.u32 %v1802, 7
        %v1804 = vsub.s32 %v1801, %v1803
        %v1805 = vrot.slane %v1745, %v1804
        %v1807 = vunpack.c.l.s4 1966171168
        %v1808 = vunpack.c.0.s8 %v1807
        %v1809 = vlaneseq
        %v1810 = vshrl.u32 %v1809, 7
        %v1811 = vsub.s32 %v1808, %v1810
        %v1812 = vrot.slane %v1798, %v1811
        %v1813 = vcombine.high %v1805, %v1805
        %v1815 = vunpack.c.l.s4 1966171168
        %v1816 = vunpack.c.0.s8 %v1815
        %v1817 = vlaneseq
        %v1818 = vshrl.u32 %v1817, 7
        %v1819 = vsub.s32 %v1816, %v1818
        %v1820 = vrot.slane %v1805, %v1819
        %v1822 = vunpack.c.l.s4 1966171168
        %v1823 = vunpack.c.0.s8 %v1822
        %v1824 = vlaneseq
        %v1825 = vshrl.u32 %v1824, 7
        %v1826 = vsub.s32 %v1823, %v1825
        %v1827 = vrot.slane %v1812, %v1826
        %v1829 = vunpack.c.l.s4 1966171168
        %v1830 = vunpack.c.0.s8 %v1829
        %v1831 = vlaneseq
        %v1832 = vshrl.u32 %v1831, 7
        %v1833 = vsub.s32 %v1830, %v1832
        %v1834 = vrot.slane %v1813, %v1833
        %v1835 = vcombine.high %v1820, %v1820
        %v1836 = vcombine.high %v1834, %v1834
        %v1837 = vcombine.high %v1791, %v1791
        %v1839 = vunpack.c.l.s4 1966171168
        %v1840 = vunpack.c.0.s8 %v1839
        %v1841 = vlaneseq
        %v1842 = vshrl.u32 %v1841, 7
        %v1843 = vsub.s32 %v1840, %v1842
        %v1844 = vrot.slane %v1791, %v1843
        %v1846 = vunpack.c.l.s4 1966171168
        %v1847 = vunpack.c.0.s8 %v1846
        %v1848 = vlaneseq
        %v1849 = vshrl.u32 %v1848, 7
        %v1850 = vsub.s32 %v1847, %v1849
        %v1851 = vrot.slane %v1837, %v1850
        %v1852 = vcombine.high %v1844, %v1844
        %v1854 = vunpack.c.l.s4 1966171168
        %v1855 = vunpack.c.0.s8 %v1854
        %v1856 = vlaneseq
        %v1857 = vshrl.u32 %v1856, 7
        %v1858 = vsub.s32 %v1855, %v1857
        %v1859 = vrot.slane %v1844, %v1858
        %v1861 = vunpack.c.l.s4 1966171168
        %v1862 = vunpack.c.0.s8 %v1861
        %v1863 = vlaneseq
        %v1864 = vshrl.u32 %v1863, 7
        %v1865 = vsub.s32 %v1862, %v1864
        %v1866 = vrot.slane %v1851, %v1865
        %v1868 = vunpack.c.l.s4 1966171168
        %v1869 = vunpack.c.0.s8 %v1868
        %v1870 = vlaneseq
        %v1871 = vshrl.u32 %v1870, 7
        %v1872 = vsub.s32 %v1869, %v1871
        %v1873 = vrot.slane %v1852, %v1872
        %v1874 = vcombine.high %v1859, %v1859
        %v1875 = vcombine.high %v1873, %v1873
        %1877 = vrot.lane.b32.xlu0 %v1267, 96
        %v1878 = vpop.permute.xlu0 %1877
        %1880 = vrot.lane.b32.xlu0 %v1422, 96
        %v1881 = vpop.permute.xlu0 %1880
        %v1883 = vsel %vm1579, %v1878, 0
        %v1886 = vsel %vm1579, %v1881, 0
        %1888 = vmatprep.subr.bf16.mxu0 0
        %1889 = vmatpush1.bf16.xpose.msra.mxu0 %v1886
        %1890 = vmatprep.subr.bf16.mxu0 0
        %1891 = vmatpush1.bf16.xpose.msra.mxu0 0
        %1892 = vmatprep.subr.bf16.mxu0 0
        %1893 = vmatpush1.bf16.xpose.msra.mxu0 0
        %1894 = vmatprep.subr.bf16.mxu0 0
        %1895 = vmatpush1.bf16.xpose.msra.mxu0 0
        %1896 = vmatprep.subr.bf16.mxu0 0
        %1897 = vmatpush1.bf16.xpose.msra.mxu0 0
        %1898 = vmatprep.subr.bf16.mxu0 0
        %1899 = vmatpush1.bf16.xpose.msra.mxu0 0
        %1900 = vmatprep.subr.bf16.mxu0 0
        %1901 = vmatpush1.bf16.xpose.msra.mxu0 0
        %1902 = vmatprep.subr.bf16.mxu0 0
        %1903 = vmatpush1.bf16.xpose.msra.mxu0 0
        %1904 = vmatprep.subr.bf16.mxu0 0
        %1905 = vmatpush1.bf16.xpose.msra.mxu0 0
        %1906 = vmatprep.subr.bf16.mxu0 0
        %1907 = vmatpush1.bf16.xpose.msra.mxu0 0
        %1908 = vmatprep.subr.bf16.mxu0 0
        %1909 = vmatpush1.bf16.xpose.msra.mxu0 0
        %1910 = vmatprep.subr.bf16.mxu0 0
        %1911 = vmatpush1.bf16.xpose.msra.mxu0 0
        %1912 = vmatprep.subr.bf16.mxu0 0
        %1913 = vmatpush1.bf16.xpose.msra.mxu0 0
        %1914 = vmatprep.subr.bf16.mxu0 0
        %1915 = vmatpush1.bf16.xpose.msra.mxu0 0
        %1916 = vmatprep.subr.bf16.mxu0 0
        %1917 = vmatpush1.bf16.xpose.msra.mxu0 0
        %1918 = vmatprep.subr.bf16.mxu0 0
        %1919 = vmatpush1.bf16.xpose.msra.mxu0 0
        %1920 = vmatprep.mubr.bf16.mxu0 0
        %1921 = vmatmul.mubr.bf16.gmra.mrb[0].mxu0 %v1883
        %v1922 = vpop.f32.mrb[0].mxu0
        %v1923 = vadd.f32 0.0, %v1922
        %v1924 = vpop.f32.mrb[0].mxu0
        %v1925 = vpop.f32.mrb[0].mxu0
        %v1926 = vpop.f32.mrb[0].mxu0
        %1927 = vdwg.mxu0
        %1929 = vrot.lane.b32.xlu0 %v1268, 96
        %v1930 = vpop.permute.xlu0 %1929
        %1932 = vrot.lane.b32.xlu0 %v1423, 96
        %v1933 = vpop.permute.xlu0 %1932
        %v1935 = vsel %vm1579, %v1930, 0
        %v1938 = vsel %vm1579, %v1933, 0
        %1940 = vmatprep.subr.bf16.mxu0 0
        %1941 = vmatpush1.bf16.xpose.msra.mxu0 %v1938
        %1942 = vmatprep.subr.bf16.mxu0 0
        %1943 = vmatpush1.bf16.xpose.msra.mxu0 0
        %1944 = vmatprep.subr.bf16.mxu0 0
        %1945 = vmatpush1.bf16.xpose.msra.mxu0 0
        %1946 = vmatprep.subr.bf16.mxu0 0
        %1947 = vmatpush1.bf16.xpose.msra.mxu0 0
        %1948 = vmatprep.subr.bf16.mxu0 0
        %1949 = vmatpush1.bf16.xpose.msra.mxu0 0
        %1950 = vmatprep.subr.bf16.mxu0 0
        %1951 = vmatpush1.bf16.xpose.msra.mxu0 0
        %1952 = vmatprep.subr.bf16.mxu0 0
        %1953 = vmatpush1.bf16.xpose.msra.mxu0 0
        %1954 = vmatprep.subr.bf16.mxu0 0
        %1955 = vmatpush1.bf16.xpose.msra.mxu0 0
        %1956 = vmatprep.subr.bf16.mxu0 0
        %1957 = vmatpush1.bf16.xpose.msra.mxu0 0
        %1958 = vmatprep.subr.bf16.mxu0 0
        %1959 = vmatpush1.bf16.xpose.msra.mxu0 0
        %1960 = vmatprep.subr.bf16.mxu0 0
        %1961 = vmatpush1.bf16.xpose.msra.mxu0 0
        %1962 = vmatprep.subr.bf16.mxu0 0
        %1963 = vmatpush1.bf16.xpose.msra.mxu0 0
        %1964 = vmatprep.subr.bf16.mxu0 0
        %1965 = vmatpush1.bf16.xpose.msra.mxu0 0
        %1966 = vmatprep.subr.bf16.mxu0 0
        %1967 = vmatpush1.bf16.xpose.msra.mxu0 0
        %1968 = vmatprep.subr.bf16.mxu0 0
        %1969 = vmatpush1.bf16.xpose.msra.mxu0 0
        %1970 = vmatprep.subr.bf16.mxu0 0
        %1971 = vmatpush1.bf16.xpose.msra.mxu0 0
        %1972 = vmatprep.mubr.bf16.mxu0 0
        %1973 = vmatmul.mubr.bf16.gmra.mrb[0].mxu0 %v1935
        %v1974 = vpop.f32.mrb[0].mxu0
        %v1975 = vadd.f32 0.0, %v1974
        %v1976 = vpop.f32.mrb[0].mxu0
        %v1977 = vpop.f32.mrb[0].mxu0
        %v1978 = vpop.f32.mrb[0].mxu0
        %1979 = vdwg.mxu0
        %v1980 = vmul.f32 %v1923, 0.17677669
        %v1981 = vmul.f32 %v1975, 0.17677669
        %v1982 = vsel %vm1674, %v1980, -inf
        %1983 = vmax.xlane.f32.xlu0 %v1982
        %v1984 = vpop.xlane.xlu0 %1983
        %v1985 = vsel %vm1674, %v1981, -inf
        %1986 = vmax.xlane.f32.xlu0 %v1985
        %v1987 = vpop.xlane.xlu0 %1986
        %v1988 = vsub.f32 %v1980, %v1984
        %v1989 = vsub.f32 %v1981, %v1987
        %v1990 = vmul.f32 %v1988, 1.442695
        %v1991 = vpow.pop %v1990
        %v1992 = vmul.f32 %v1989, 1.442695
        %v1993 = vpow.pop %v1992
        %v1994 = vsel %vm1674, %v1991, 0.0
        %1995 = vadd.xlane.f32.xlu0 %v1994
        %v1996 = vpop.xlane.xlu0 %1995
        %v1997 = vsel %vm1674, %v1993, 0.0
        %1998 = vadd.xlane.f32.xlu0 %v1997
        %v1999 = vpop.xlane.xlu0 %1998
        %v2000 = vrcp.pop %v1996
        %v2001 = vrcp.pop %v1999
        %v2002 = vmul.f32 %v1991, %v2000
        %v2003 = vmul.f32 %v1993, %v2001
        %v2004 = vpack.c.bf16 %v2002, %v2002
        %v2005 = vpack.c.bf16 %v2003, %v2003
        %2007 = vrot.lane.b32.xlu0 %v1577, 96
        %v2008 = vpop.permute.xlu0 %2007
        %v2010 = vsel %vm1699, %v2004, 0
        %v2013 = vand.u32 %v2008, %v1706
        %2015 = vmatprep.subr.bf16.mxu0 0
        %2016 = vmatpush1.bf16.msra.mxu0 %v2013
        %2017 = vmatprep.subr.bf16.mxu0 0
        %2018 = vmatpush1.bf16.msra.mxu0 0
        %2019 = vmatprep.subr.bf16.mxu0 0
        %2020 = vmatpush1.bf16.msra.mxu0 0
        %2021 = vmatprep.subr.bf16.mxu0 0
        %2022 = vmatpush1.bf16.msra.mxu0 0
        %2023 = vmatprep.subr.bf16.mxu0 0
        %2024 = vmatpush1.bf16.msra.mxu0 0
        %2025 = vmatprep.subr.bf16.mxu0 0
        %2026 = vmatpush1.bf16.msra.mxu0 0
        %2027 = vmatprep.subr.bf16.mxu0 0
        %2028 = vmatpush1.bf16.msra.mxu0 0
        %2029 = vmatprep.subr.bf16.mxu0 0
        %2030 = vmatpush1.bf16.msra.mxu0 0
        %2031 = vmatprep.subr.bf16.mxu0 0
        %2032 = vmatpush1.bf16.msra.mxu0 0
        %2033 = vmatprep.subr.bf16.mxu0 0
        %2034 = vmatpush1.bf16.msra.mxu0 0
        %2035 = vmatprep.subr.bf16.mxu0 0
        %2036 = vmatpush1.bf16.msra.mxu0 0
        %2037 = vmatprep.subr.bf16.mxu0 0
        %2038 = vmatpush1.bf16.msra.mxu0 0
        %2039 = vmatprep.subr.bf16.mxu0 0
        %2040 = vmatpush1.bf16.msra.mxu0 0
        %2041 = vmatprep.subr.bf16.mxu0 0
        %2042 = vmatpush1.bf16.msra.mxu0 0
        %2043 = vmatprep.subr.bf16.mxu0 0
        %2044 = vmatpush1.bf16.msra.mxu0 0
        %2045 = vmatprep.subr.bf16.mxu0 0
        %2046 = vmatpush1.bf16.msra.mxu0 0
        %2047 = vmatprep.mubr.bf16.mxu0 0
        %2048 = vmatmul.mubr.bf16.gmra.mrb[0].mxu0 %v2010
        %v2049 = vpop.f32.mrb[0].mxu0
        %v2050 = vadd.f32 0.0, %v2049
        %v2051 = vpop.f32.mrb[0].mxu0
        %v2052 = vpop.f32.mrb[0].mxu0
        %v2053 = vpop.f32.mrb[0].mxu0
        %2054 = vdwg.mxu0
        %2056 = vrot.lane.b32.xlu0 %v1578, 96
        %v2057 = vpop.permute.xlu0 %2056
        %v2059 = vsel %vm1699, %v2005, 0
        %v2062 = vand.u32 %v2057, %v1706
        %2064 = vmatprep.subr.bf16.mxu0 0
        %2065 = vmatpush1.bf16.msra.mxu0 %v2062
        %2066 = vmatprep.subr.bf16.mxu0 0
        %2067 = vmatpush1.bf16.msra.mxu0 0
        %2068 = vmatprep.subr.bf16.mxu0 0
        %2069 = vmatpush1.bf16.msra.mxu0 0
        %2070 = vmatprep.subr.bf16.mxu0 0
        %2071 = vmatpush1.bf16.msra.mxu0 0
        %2072 = vmatprep.subr.bf16.mxu0 0
        %2073 = vmatpush1.bf16.msra.mxu0 0
        %2074 = vmatprep.subr.bf16.mxu0 0
        %2075 = vmatpush1.bf16.msra.mxu0 0
        %2076 = vmatprep.subr.bf16.mxu0 0
        %2077 = vmatpush1.bf16.msra.mxu0 0
        %2078 = vmatprep.subr.bf16.mxu0 0
        %2079 = vmatpush1.bf16.msra.mxu0 0
        %2080 = vmatprep.subr.bf16.mxu0 0
        %2081 = vmatpush1.bf16.msra.mxu0 0
        %2082 = vmatprep.subr.bf16.mxu0 0
        %2083 = vmatpush1.bf16.msra.mxu0 0
        %2084 = vmatprep.subr.bf16.mxu0 0
        %2085 = vmatpush1.bf16.msra.mxu0 0
        %2086 = vmatprep.subr.bf16.mxu0 0
        %2087 = vmatpush1.bf16.msra.mxu0 0
        %2088 = vmatprep.subr.bf16.mxu0 0
        %2089 = vmatpush1.bf16.msra.mxu0 0
        %2090 = vmatprep.subr.bf16.mxu0 0
        %2091 = vmatpush1.bf16.msra.mxu0 0
        %2092 = vmatprep.subr.bf16.mxu0 0
        %2093 = vmatpush1.bf16.msra.mxu0 0
        %2094 = vmatprep.subr.bf16.mxu0 0
        %2095 = vmatpush1.bf16.msra.mxu0 0
        %2096 = vmatprep.mubr.bf16.mxu0 0
        %2097 = vmatmul.mubr.bf16.gmra.mrb[0].mxu0 %v2059
        %v2098 = vpop.f32.mrb[0].mxu0
        %v2099 = vadd.f32 0.0, %v2098
        %v2100 = vpop.f32.mrb[0].mxu0
        %v2101 = vpop.f32.mrb[0].mxu0
        %v2102 = vpop.f32.mrb[0].mxu0
        %2103 = vdwg.mxu0
        %v2106 = vcombine.high %v2050, %v2050
        %v2108 = vunpack.c.l.s4 1966171168
        %v2109 = vunpack.c.0.s8 %v2108
        %v2110 = vlaneseq
        %v2111 = vshrl.u32 %v2110, 7
        %v2112 = vsub.s32 %v2109, %v2111
        %v2113 = vrot.slane %v2050, %v2112
        %v2115 = vunpack.c.l.s4 1966171168
        %v2116 = vunpack.c.0.s8 %v2115
        %v2117 = vlaneseq
        %v2118 = vshrl.u32 %v2117, 7
        %v2119 = vsub.s32 %v2116, %v2118
        %v2120 = vrot.slane %v2106, %v2119
        %v2121 = vcombine.high %v2113, %v2113
        %v2123 = vunpack.c.l.s4 1966171168
        %v2124 = vunpack.c.0.s8 %v2123
        %v2125 = vlaneseq
        %v2126 = vshrl.u32 %v2125, 7
        %v2127 = vsub.s32 %v2124, %v2126
        %v2128 = vrot.slane %v2113, %v2127
        %v2130 = vunpack.c.l.s4 1966171168
        %v2131 = vunpack.c.0.s8 %v2130
        %v2132 = vlaneseq
        %v2133 = vshrl.u32 %v2132, 7
        %v2134 = vsub.s32 %v2131, %v2133
        %v2135 = vrot.slane %v2120, %v2134
        %v2137 = vunpack.c.l.s4 1966171168
        %v2138 = vunpack.c.0.s8 %v2137
        %v2139 = vlaneseq
        %v2140 = vshrl.u32 %v2139, 7
        %v2141 = vsub.s32 %v2138, %v2140
        %v2142 = vrot.slane %v2121, %v2141
        %v2143 = vcombine.high %v2128, %v2128
        %v2144 = vcombine.high %v2142, %v2142
        %v2145 = vcombine.high %v2099, %v2099
        %v2147 = vunpack.c.l.s4 1966171168
        %v2148 = vunpack.c.0.s8 %v2147
        %v2149 = vlaneseq
        %v2150 = vshrl.u32 %v2149, 7
        %v2151 = vsub.s32 %v2148, %v2150
        %v2152 = vrot.slane %v2099, %v2151
        %v2154 = vunpack.c.l.s4 1966171168
        %v2155 = vunpack.c.0.s8 %v2154
        %v2156 = vlaneseq
        %v2157 = vshrl.u32 %v2156, 7
        %v2158 = vsub.s32 %v2155, %v2157
        %v2159 = vrot.slane %v2145, %v2158
        %v2160 = vcombine.high %v2152, %v2152
        %v2162 = vunpack.c.l.s4 1966171168
        %v2163 = vunpack.c.0.s8 %v2162
        %v2164 = vlaneseq
        %v2165 = vshrl.u32 %v2164, 7
        %v2166 = vsub.s32 %v2163, %v2165
        %v2167 = vrot.slane %v2152, %v2166
        %v2169 = vunpack.c.l.s4 1966171168
        %v2170 = vunpack.c.0.s8 %v2169
        %v2171 = vlaneseq
        %v2172 = vshrl.u32 %v2171, 7
        %v2173 = vsub.s32 %v2170, %v2172
        %v2174 = vrot.slane %v2159, %v2173
        %v2176 = vunpack.c.l.s4 1966171168
        %v2177 = vunpack.c.0.s8 %v2176
        %v2178 = vlaneseq
        %v2179 = vshrl.u32 %v2178, 7
        %v2180 = vsub.s32 %v2177, %v2179
        %v2181 = vrot.slane %v2160, %v2180
        %v2182 = vcombine.high %v2167, %v2167
        %v2183 = vcombine.high %v2181, %v2181
        %2184 = vrot.lane.b32.xlu0 %v1267, 64
        %v2185 = vpop.permute.xlu0 %2184
        %2186 = vrot.lane.b32.xlu0 %v1422, 64
        %v2187 = vpop.permute.xlu0 %2186
        %v2189 = vsel %vm1579, %v2185, 0
        %v2192 = vsel %vm1579, %v2187, 0
        %2194 = vmatprep.subr.bf16.mxu0 0
        %2195 = vmatpush1.bf16.xpose.msra.mxu0 %v2192
        %2196 = vmatprep.subr.bf16.mxu0 0
        %2197 = vmatpush1.bf16.xpose.msra.mxu0 0
        %2198 = vmatprep.subr.bf16.mxu0 0
        %2199 = vmatpush1.bf16.xpose.msra.mxu0 0
        %2200 = vmatprep.subr.bf16.mxu0 0
        %2201 = vmatpush1.bf16.xpose.msra.mxu0 0
        %2202 = vmatprep.subr.bf16.mxu0 0
        %2203 = vmatpush1.bf16.xpose.msra.mxu0 0
        %2204 = vmatprep.subr.bf16.mxu0 0
        %2205 = vmatpush1.bf16.xpose.msra.mxu0 0
        %2206 = vmatprep.subr.bf16.mxu0 0
        %2207 = vmatpush1.bf16.xpose.msra.mxu0 0
        %2208 = vmatprep.subr.bf16.mxu0 0
        %2209 = vmatpush1.bf16.xpose.msra.mxu0 0
        %2210 = vmatprep.subr.bf16.mxu0 0
        %2211 = vmatpush1.bf16.xpose.msra.mxu0 0
        %2212 = vmatprep.subr.bf16.mxu0 0
        %2213 = vmatpush1.bf16.xpose.msra.mxu0 0
        %2214 = vmatprep.subr.bf16.mxu0 0
        %2215 = vmatpush1.bf16.xpose.msra.mxu0 0
        %2216 = vmatprep.subr.bf16.mxu0 0
        %2217 = vmatpush1.bf16.xpose.msra.mxu0 0
        %2218 = vmatprep.subr.bf16.mxu0 0
        %2219 = vmatpush1.bf16.xpose.msra.mxu0 0
        %2220 = vmatprep.subr.bf16.mxu0 0
        %2221 = vmatpush1.bf16.xpose.msra.mxu0 0
        %2222 = vmatprep.subr.bf16.mxu0 0
        %2223 = vmatpush1.bf16.xpose.msra.mxu0 0
        %2224 = vmatprep.subr.bf16.mxu0 0
        %2225 = vmatpush1.bf16.xpose.msra.mxu0 0
        %2226 = vmatprep.mubr.bf16.mxu0 0
        %2227 = vmatmul.mubr.bf16.gmra.mrb[0].mxu0 %v2189
        %v2228 = vpop.f32.mrb[0].mxu0
        %v2229 = vadd.f32 0.0, %v2228
        %v2230 = vpop.f32.mrb[0].mxu0
        %v2231 = vpop.f32.mrb[0].mxu0
        %v2232 = vpop.f32.mrb[0].mxu0
        %2233 = vdwg.mxu0
        %2234 = vrot.lane.b32.xlu0 %v1268, 64
        %v2235 = vpop.permute.xlu0 %2234
        %2236 = vrot.lane.b32.xlu0 %v1423, 64
        %v2237 = vpop.permute.xlu0 %2236
        %v2239 = vsel %vm1579, %v2235, 0
        %v2242 = vsel %vm1579, %v2237, 0
        %2244 = vmatprep.subr.bf16.mxu0 0
        %2245 = vmatpush1.bf16.xpose.msra.mxu0 %v2242
        %2246 = vmatprep.subr.bf16.mxu0 0
        %2247 = vmatpush1.bf16.xpose.msra.mxu0 0
        %2248 = vmatprep.subr.bf16.mxu0 0
        %2249 = vmatpush1.bf16.xpose.msra.mxu0 0
        %2250 = vmatprep.subr.bf16.mxu0 0
        %2251 = vmatpush1.bf16.xpose.msra.mxu0 0
        %2252 = vmatprep.subr.bf16.mxu0 0
        %2253 = vmatpush1.bf16.xpose.msra.mxu0 0
        %2254 = vmatprep.subr.bf16.mxu0 0
        %2255 = vmatpush1.bf16.xpose.msra.mxu0 0
        %2256 = vmatprep.subr.bf16.mxu0 0
        %2257 = vmatpush1.bf16.xpose.msra.mxu0 0
        %2258 = vmatprep.subr.bf16.mxu0 0
        %2259 = vmatpush1.bf16.xpose.msra.mxu0 0
        %2260 = vmatprep.subr.bf16.mxu0 0
        %2261 = vmatpush1.bf16.xpose.msra.mxu0 0
        %2262 = vmatprep.subr.bf16.mxu0 0
        %2263 = vmatpush1.bf16.xpose.msra.mxu0 0
        %2264 = vmatprep.subr.bf16.mxu0 0
        %2265 = vmatpush1.bf16.xpose.msra.mxu0 0
        %2266 = vmatprep.subr.bf16.mxu0 0
        %2267 = vmatpush1.bf16.xpose.msra.mxu0 0
        %2268 = vmatprep.subr.bf16.mxu0 0
        %2269 = vmatpush1.bf16.xpose.msra.mxu0 0
        %2270 = vmatprep.subr.bf16.mxu0 0
        %2271 = vmatpush1.bf16.xpose.msra.mxu0 0
        %2272 = vmatprep.subr.bf16.mxu0 0
        %2273 = vmatpush1.bf16.xpose.msra.mxu0 0
        %2274 = vmatprep.subr.bf16.mxu0 0
        %2275 = vmatpush1.bf16.xpose.msra.mxu0 0
        %2276 = vmatprep.mubr.bf16.mxu0 0
        %2277 = vmatmul.mubr.bf16.gmra.mrb[0].mxu0 %v2239
        %v2278 = vpop.f32.mrb[0].mxu0
        %v2279 = vadd.f32 0.0, %v2278
        %v2280 = vpop.f32.mrb[0].mxu0
        %v2281 = vpop.f32.mrb[0].mxu0
        %v2282 = vpop.f32.mrb[0].mxu0
        %2283 = vdwg.mxu0
        %v2284 = vmul.f32 %v2229, 0.17677669
        %v2285 = vmul.f32 %v2279, 0.17677669
        %v2286 = vsel %vm1674, %v2284, -inf
        %2287 = vmax.xlane.f32.xlu0 %v2286
        %v2288 = vpop.xlane.xlu0 %2287
        %v2289 = vsel %vm1674, %v2285, -inf
        %2290 = vmax.xlane.f32.xlu0 %v2289
        %v2291 = vpop.xlane.xlu0 %2290
        %v2292 = vsub.f32 %v2284, %v2288
        %v2293 = vsub.f32 %v2285, %v2291
        %v2294 = vmul.f32 %v2292, 1.442695
        %v2295 = vpow.pop %v2294
        %v2296 = vmul.f32 %v2293, 1.442695
        %v2297 = vpow.pop %v2296
        %v2298 = vsel %vm1674, %v2295, 0.0
        %2299 = vadd.xlane.f32.xlu0 %v2298
        %v2300 = vpop.xlane.xlu0 %2299
        %v2301 = vsel %vm1674, %v2297, 0.0
        %2302 = vadd.xlane.f32.xlu0 %v2301
        %v2303 = vpop.xlane.xlu0 %2302
        %v2304 = vrcp.pop %v2300
        %v2305 = vrcp.pop %v2303
        %v2306 = vmul.f32 %v2295, %v2304
        %v2307 = vmul.f32 %v2297, %v2305
        %v2308 = vpack.c.bf16 %v2306, %v2306
        %v2309 = vpack.c.bf16 %v2307, %v2307
        %2310 = vrot.lane.b32.xlu0 %v1577, 64
        %v2311 = vpop.permute.xlu0 %2310
        %v2313 = vsel %vm1699, %v2308, 0
        %v2316 = vand.u32 %v2311, %v1706
        %2318 = vmatprep.subr.bf16.mxu0 0
        %2319 = vmatpush1.bf16.msra.mxu0 %v2316
        %2320 = vmatprep.subr.bf16.mxu0 0
        %2321 = vmatpush1.bf16.msra.mxu0 0
        %2322 = vmatprep.subr.bf16.mxu0 0
        %2323 = vmatpush1.bf16.msra.mxu0 0
        %2324 = vmatprep.subr.bf16.mxu0 0
        %2325 = vmatpush1.bf16.msra.mxu0 0
        %2326 = vmatprep.subr.bf16.mxu0 0
        %2327 = vmatpush1.bf16.msra.mxu0 0
        %2328 = vmatprep.subr.bf16.mxu0 0
        %2329 = vmatpush1.bf16.msra.mxu0 0
        %2330 = vmatprep.subr.bf16.mxu0 0
        %2331 = vmatpush1.bf16.msra.mxu0 0
        %2332 = vmatprep.subr.bf16.mxu0 0
        %2333 = vmatpush1.bf16.msra.mxu0 0
        %2334 = vmatprep.subr.bf16.mxu0 0
        %2335 = vmatpush1.bf16.msra.mxu0 0
        %2336 = vmatprep.subr.bf16.mxu0 0
        %2337 = vmatpush1.bf16.msra.mxu0 0
        %2338 = vmatprep.subr.bf16.mxu0 0
        %2339 = vmatpush1.bf16.msra.mxu0 0
        %2340 = vmatprep.subr.bf16.mxu0 0
        %2341 = vmatpush1.bf16.msra.mxu0 0
        %2342 = vmatprep.subr.bf16.mxu0 0
        %2343 = vmatpush1.bf16.msra.mxu0 0
        %2344 = vmatprep.subr.bf16.mxu0 0
        %2345 = vmatpush1.bf16.msra.mxu0 0
        %2346 = vmatprep.subr.bf16.mxu0 0
        %2347 = vmatpush1.bf16.msra.mxu0 0
        %2348 = vmatprep.subr.bf16.mxu0 0
        %2349 = vmatpush1.bf16.msra.mxu0 0
        %2350 = vmatprep.mubr.bf16.mxu0 0
        %2351 = vmatmul.mubr.bf16.gmra.mrb[0].mxu0 %v2313
        %v2352 = vpop.f32.mrb[0].mxu0
        %v2353 = vadd.f32 0.0, %v2352
        %v2354 = vpop.f32.mrb[0].mxu0
        %v2355 = vpop.f32.mrb[0].mxu0
        %v2356 = vpop.f32.mrb[0].mxu0
        %2357 = vdwg.mxu0
        %2358 = vrot.lane.b32.xlu0 %v1578, 64
        %v2359 = vpop.permute.xlu0 %2358
        %v2361 = vsel %vm1699, %v2309, 0
        %v2364 = vand.u32 %v2359, %v1706
        %2366 = vmatprep.subr.bf16.mxu0 0
        %2367 = vmatpush1.bf16.msra.mxu0 %v2364
        %2368 = vmatprep.subr.bf16.mxu0 0
        %2369 = vmatpush1.bf16.msra.mxu0 0
        %2370 = vmatprep.subr.bf16.mxu0 0
        %2371 = vmatpush1.bf16.msra.mxu0 0
        %2372 = vmatprep.subr.bf16.mxu0 0
        %2373 = vmatpush1.bf16.msra.mxu0 0
        %2374 = vmatprep.subr.bf16.mxu0 0
        %2375 = vmatpush1.bf16.msra.mxu0 0
        %2376 = vmatprep.subr.bf16.mxu0 0
        %2377 = vmatpush1.bf16.msra.mxu0 0
        %2378 = vmatprep.subr.bf16.mxu0 0
        %2379 = vmatpush1.bf16.msra.mxu0 0
        %2380 = vmatprep.subr.bf16.mxu0 0
        %2381 = vmatpush1.bf16.msra.mxu0 0
        %2382 = vmatprep.subr.bf16.mxu0 0
        %2383 = vmatpush1.bf16.msra.mxu0 0
        %2384 = vmatprep.subr.bf16.mxu0 0
        %2385 = vmatpush1.bf16.msra.mxu0 0
        %2386 = vmatprep.subr.bf16.mxu0 0
        %2387 = vmatpush1.bf16.msra.mxu0 0
        %2388 = vmatprep.subr.bf16.mxu0 0
        %2389 = vmatpush1.bf16.msra.mxu0 0
        %2390 = vmatprep.subr.bf16.mxu0 0
        %2391 = vmatpush1.bf16.msra.mxu0 0
        %2392 = vmatprep.subr.bf16.mxu0 0
        %2393 = vmatpush1.bf16.msra.mxu0 0
        %2394 = vmatprep.subr.bf16.mxu0 0
        %2395 = vmatpush1.bf16.msra.mxu0 0
        %2396 = vmatprep.subr.bf16.mxu0 0
        %2397 = vmatpush1.bf16.msra.mxu0 0
        %2398 = vmatprep.mubr.bf16.mxu0 0
        %2399 = vmatmul.mubr.bf16.gmra.mrb[0].mxu0 %v2361
        %v2400 = vpop.f32.mrb[0].mxu0
        %v2401 = vadd.f32 0.0, %v2400
        %v2402 = vpop.f32.mrb[0].mxu0
        %v2403 = vpop.f32.mrb[0].mxu0
        %v2404 = vpop.f32.mrb[0].mxu0
        %2405 = vdwg.mxu0
        %v2408 = vcombine.high %v2353, %v2353
        %v2410 = vunpack.c.l.s4 1966171168
        %v2411 = vunpack.c.0.s8 %v2410
        %v2412 = vlaneseq
        %v2413 = vshrl.u32 %v2412, 7
        %v2414 = vsub.s32 %v2411, %v2413
        %v2415 = vrot.slane %v2353, %v2414
        %v2417 = vunpack.c.l.s4 1966171168
        %v2418 = vunpack.c.0.s8 %v2417
        %v2419 = vlaneseq
        %v2420 = vshrl.u32 %v2419, 7
        %v2421 = vsub.s32 %v2418, %v2420
        %v2422 = vrot.slane %v2408, %v2421
        %v2423 = vcombine.high %v2415, %v2415
        %v2425 = vunpack.c.l.s4 1966171168
        %v2426 = vunpack.c.0.s8 %v2425
        %v2427 = vlaneseq
        %v2428 = vshrl.u32 %v2427, 7
        %v2429 = vsub.s32 %v2426, %v2428
        %v2430 = vrot.slane %v2415, %v2429
        %v2432 = vunpack.c.l.s4 1966171168
        %v2433 = vunpack.c.0.s8 %v2432
        %v2434 = vlaneseq
        %v2435 = vshrl.u32 %v2434, 7
        %v2436 = vsub.s32 %v2433, %v2435
        %v2437 = vrot.slane %v2422, %v2436
        %v2439 = vunpack.c.l.s4 1966171168
        %v2440 = vunpack.c.0.s8 %v2439
        %v2441 = vlaneseq
        %v2442 = vshrl.u32 %v2441, 7
        %v2443 = vsub.s32 %v2440, %v2442
        %v2444 = vrot.slane %v2423, %v2443
        %v2445 = vcombine.high %v2430, %v2430
        %v2446 = vcombine.high %v2444, %v2444
        %v2447 = vcombine.high %v2401, %v2401
        %v2449 = vunpack.c.l.s4 1966171168
        %v2450 = vunpack.c.0.s8 %v2449
        %v2451 = vlaneseq
        %v2452 = vshrl.u32 %v2451, 7
        %v2453 = vsub.s32 %v2450, %v2452
        %v2454 = vrot.slane %v2401, %v2453
        %v2456 = vunpack.c.l.s4 1966171168
        %v2457 = vunpack.c.0.s8 %v2456
        %v2458 = vlaneseq
        %v2459 = vshrl.u32 %v2458, 7
        %v2460 = vsub.s32 %v2457, %v2459
        %v2461 = vrot.slane %v2447, %v2460
        %v2462 = vcombine.high %v2454, %v2454
        %v2464 = vunpack.c.l.s4 1966171168
        %v2465 = vunpack.c.0.s8 %v2464
        %v2466 = vlaneseq
        %v2467 = vshrl.u32 %v2466, 7
        %v2468 = vsub.s32 %v2465, %v2467
        %v2469 = vrot.slane %v2454, %v2468
        %v2471 = vunpack.c.l.s4 1966171168
        %v2472 = vunpack.c.0.s8 %v2471
        %v2473 = vlaneseq
        %v2474 = vshrl.u32 %v2473, 7
        %v2475 = vsub.s32 %v2472, %v2474
        %v2476 = vrot.slane %v2461, %v2475
        %v2478 = vunpack.c.l.s4 1966171168
        %v2479 = vunpack.c.0.s8 %v2478
        %v2480 = vlaneseq
        %v2481 = vshrl.u32 %v2480, 7
        %v2482 = vsub.s32 %v2479, %v2481
        %v2483 = vrot.slane %v2462, %v2482
        %v2484 = vcombine.high %v2469, %v2469
        %v2485 = vcombine.high %v2483, %v2483
        %2486 = vrot.lane.b32.xlu0 %v1267, 32
        %v2487 = vpop.permute.xlu0 %2486
        %2488 = vrot.lane.b32.xlu0 %v1422, 32
        %v2489 = vpop.permute.xlu0 %2488
        %v2491 = vsel %vm1579, %v2487, 0
        %v2494 = vsel %vm1579, %v2489, 0
        %2496 = vmatprep.subr.bf16.mxu0 0
        %2497 = vmatpush1.bf16.xpose.msra.mxu0 %v2494
        %2498 = vmatprep.subr.bf16.mxu0 0
        %2499 = vmatpush1.bf16.xpose.msra.mxu0 0
        %2500 = vmatprep.subr.bf16.mxu0 0
        %2501 = vmatpush1.bf16.xpose.msra.mxu0 0
        %2502 = vmatprep.subr.bf16.mxu0 0
        %2503 = vmatpush1.bf16.xpose.msra.mxu0 0
        %2504 = vmatprep.subr.bf16.mxu0 0
        %2505 = vmatpush1.bf16.xpose.msra.mxu0 0
        %2506 = vmatprep.subr.bf16.mxu0 0
        %2507 = vmatpush1.bf16.xpose.msra.mxu0 0
        %2508 = vmatprep.subr.bf16.mxu0 0
        %2509 = vmatpush1.bf16.xpose.msra.mxu0 0
        %2510 = vmatprep.subr.bf16.mxu0 0
        %2511 = vmatpush1.bf16.xpose.msra.mxu0 0
        %2512 = vmatprep.subr.bf16.mxu0 0
        %2513 = vmatpush1.bf16.xpose.msra.mxu0 0
        %2514 = vmatprep.subr.bf16.mxu0 0
        %2515 = vmatpush1.bf16.xpose.msra.mxu0 0
        %2516 = vmatprep.subr.bf16.mxu0 0
        %2517 = vmatpush1.bf16.xpose.msra.mxu0 0
        %2518 = vmatprep.subr.bf16.mxu0 0
        %2519 = vmatpush1.bf16.xpose.msra.mxu0 0
        %2520 = vmatprep.subr.bf16.mxu0 0
        %2521 = vmatpush1.bf16.xpose.msra.mxu0 0
        %2522 = vmatprep.subr.bf16.mxu0 0
        %2523 = vmatpush1.bf16.xpose.msra.mxu0 0
        %2524 = vmatprep.subr.bf16.mxu0 0
        %2525 = vmatpush1.bf16.xpose.msra.mxu0 0
        %2526 = vmatprep.subr.bf16.mxu0 0
        %2527 = vmatpush1.bf16.xpose.msra.mxu0 0
        %2528 = vmatprep.mubr.bf16.mxu0 0
        %2529 = vmatmul.mubr.bf16.gmra.mrb[0].mxu0 %v2491
        %v2530 = vpop.f32.mrb[0].mxu0
        %v2531 = vadd.f32 0.0, %v2530
        %v2532 = vpop.f32.mrb[0].mxu0
        %v2533 = vpop.f32.mrb[0].mxu0
        %v2534 = vpop.f32.mrb[0].mxu0
        %2535 = vdwg.mxu0
        %2536 = vrot.lane.b32.xlu0 %v1268, 32
        %v2537 = vpop.permute.xlu0 %2536
        %2538 = vrot.lane.b32.xlu0 %v1423, 32
        %v2539 = vpop.permute.xlu0 %2538
        %v2541 = vsel %vm1579, %v2537, 0
        %v2544 = vsel %vm1579, %v2539, 0
        %2546 = vmatprep.subr.bf16.mxu0 0
        %2547 = vmatpush1.bf16.xpose.msra.mxu0 %v2544
        %2548 = vmatprep.subr.bf16.mxu0 0
        %2549 = vmatpush1.bf16.xpose.msra.mxu0 0
        %2550 = vmatprep.subr.bf16.mxu0 0
        %2551 = vmatpush1.bf16.xpose.msra.mxu0 0
        %2552 = vmatprep.subr.bf16.mxu0 0
        %2553 = vmatpush1.bf16.xpose.msra.mxu0 0
        %2554 = vmatprep.subr.bf16.mxu0 0
        %2555 = vmatpush1.bf16.xpose.msra.mxu0 0
        %2556 = vmatprep.subr.bf16.mxu0 0
        %2557 = vmatpush1.bf16.xpose.msra.mxu0 0
        %2558 = vmatprep.subr.bf16.mxu0 0
        %2559 = vmatpush1.bf16.xpose.msra.mxu0 0
        %2560 = vmatprep.subr.bf16.mxu0 0
        %2561 = vmatpush1.bf16.xpose.msra.mxu0 0
        %2562 = vmatprep.subr.bf16.mxu0 0
        %2563 = vmatpush1.bf16.xpose.msra.mxu0 0
        %2564 = vmatprep.subr.bf16.mxu0 0
        %2565 = vmatpush1.bf16.xpose.msra.mxu0 0
        %2566 = vmatprep.subr.bf16.mxu0 0
        %2567 = vmatpush1.bf16.xpose.msra.mxu0 0
        %2568 = vmatprep.subr.bf16.mxu0 0
        %2569 = vmatpush1.bf16.xpose.msra.mxu0 0
        %2570 = vmatprep.subr.bf16.mxu0 0
        %2571 = vmatpush1.bf16.xpose.msra.mxu0 0
        %2572 = vmatprep.subr.bf16.mxu0 0
        %2573 = vmatpush1.bf16.xpose.msra.mxu0 0
        %2574 = vmatprep.subr.bf16.mxu0 0
        %2575 = vmatpush1.bf16.xpose.msra.mxu0 0
        %2576 = vmatprep.subr.bf16.mxu0 0
        %2577 = vmatpush1.bf16.xpose.msra.mxu0 0
        %2578 = vmatprep.mubr.bf16.mxu0 0
        %2579 = vmatmul.mubr.bf16.gmra.mrb[0].mxu0 %v2541
        %v2580 = vpop.f32.mrb[0].mxu0
        %v2581 = vadd.f32 0.0, %v2580
        %v2582 = vpop.f32.mrb[0].mxu0
        %v2583 = vpop.f32.mrb[0].mxu0
        %v2584 = vpop.f32.mrb[0].mxu0
        %2585 = vdwg.mxu0
        %v2586 = vmul.f32 %v2531, 0.17677669
        %v2587 = vmul.f32 %v2581, 0.17677669
        %v2588 = vsel %vm1674, %v2586, -inf
        %2589 = vmax.xlane.f32.xlu0 %v2588
        %v2590 = vpop.xlane.xlu0 %2589
        %v2591 = vsel %vm1674, %v2587, -inf
        %2592 = vmax.xlane.f32.xlu0 %v2591
        %v2593 = vpop.xlane.xlu0 %2592
        %v2594 = vsub.f32 %v2586, %v2590
        %v2595 = vsub.f32 %v2587, %v2593
        %v2596 = vmul.f32 %v2594, 1.442695
        %v2597 = vpow.pop %v2596
        %v2598 = vmul.f32 %v2595, 1.442695
        %v2599 = vpow.pop %v2598
        %v2600 = vsel %vm1674, %v2597, 0.0
        %2601 = vadd.xlane.f32.xlu0 %v2600
        %v2602 = vpop.xlane.xlu0 %2601
        %v2603 = vsel %vm1674, %v2599, 0.0
        %2604 = vadd.xlane.f32.xlu0 %v2603
        %v2605 = vpop.xlane.xlu0 %2604
        %v2606 = vrcp.pop %v2602
        %v2607 = vrcp.pop %v2605
        %v2608 = vmul.f32 %v2597, %v2606
        %v2609 = vmul.f32 %v2599, %v2607
        %v2610 = vpack.c.bf16 %v2608, %v2608
        %v2611 = vpack.c.bf16 %v2609, %v2609
        %2612 = vrot.lane.b32.xlu0 %v1577, 32
        %v2613 = vpop.permute.xlu0 %2612
        %v2615 = vsel %vm1699, %v2610, 0
        %v2618 = vand.u32 %v2613, %v1706
        %2620 = vmatprep.subr.bf16.mxu0 0
        %2621 = vmatpush1.bf16.msra.mxu0 %v2618
        %2622 = vmatprep.subr.bf16.mxu0 0
        %2623 = vmatpush1.bf16.msra.mxu0 0
        %2624 = vmatprep.subr.bf16.mxu0 0
        %2625 = vmatpush1.bf16.msra.mxu0 0
        %2626 = vmatprep.subr.bf16.mxu0 0
        %2627 = vmatpush1.bf16.msra.mxu0 0
        %2628 = vmatprep.subr.bf16.mxu0 0
        %2629 = vmatpush1.bf16.msra.mxu0 0
        %2630 = vmatprep.subr.bf16.mxu0 0
        %2631 = vmatpush1.bf16.msra.mxu0 0
        %2632 = vmatprep.subr.bf16.mxu0 0
        %2633 = vmatpush1.bf16.msra.mxu0 0
        %2634 = vmatprep.subr.bf16.mxu0 0
        %2635 = vmatpush1.bf16.msra.mxu0 0
        %2636 = vmatprep.subr.bf16.mxu0 0
        %2637 = vmatpush1.bf16.msra.mxu0 0
        %2638 = vmatprep.subr.bf16.mxu0 0
        %2639 = vmatpush1.bf16.msra.mxu0 0
        %2640 = vmatprep.subr.bf16.mxu0 0
        %2641 = vmatpush1.bf16.msra.mxu0 0
        %2642 = vmatprep.subr.bf16.mxu0 0
        %2643 = vmatpush1.bf16.msra.mxu0 0
        %2644 = vmatprep.subr.bf16.mxu0 0
        %2645 = vmatpush1.bf16.msra.mxu0 0
        %2646 = vmatprep.subr.bf16.mxu0 0
        %2647 = vmatpush1.bf16.msra.mxu0 0
        %2648 = vmatprep.subr.bf16.mxu0 0
        %2649 = vmatpush1.bf16.msra.mxu0 0
        %2650 = vmatprep.subr.bf16.mxu0 0
        %2651 = vmatpush1.bf16.msra.mxu0 0
        %2652 = vmatprep.mubr.bf16.mxu0 0
        %2653 = vmatmul.mubr.bf16.gmra.mrb[0].mxu0 %v2615
        %v2654 = vpop.f32.mrb[0].mxu0
        %v2655 = vadd.f32 0.0, %v2654
        %v2656 = vpop.f32.mrb[0].mxu0
        %v2657 = vpop.f32.mrb[0].mxu0
        %v2658 = vpop.f32.mrb[0].mxu0
        %2659 = vdwg.mxu0
        %2660 = vrot.lane.b32.xlu0 %v1578, 32
        %v2661 = vpop.permute.xlu0 %2660
        %v2663 = vsel %vm1699, %v2611, 0
        %v2666 = vand.u32 %v2661, %v1706
        %2668 = vmatprep.subr.bf16.mxu0 0
        %2669 = vmatpush1.bf16.msra.mxu0 %v2666
        %2670 = vmatprep.subr.bf16.mxu0 0
        %2671 = vmatpush1.bf16.msra.mxu0 0
        %2672 = vmatprep.subr.bf16.mxu0 0
        %2673 = vmatpush1.bf16.msra.mxu0 0
        %2674 = vmatprep.subr.bf16.mxu0 0
        %2675 = vmatpush1.bf16.msra.mxu0 0
        %2676 = vmatprep.subr.bf16.mxu0 0
        %2677 = vmatpush1.bf16.msra.mxu0 0
        %2678 = vmatprep.subr.bf16.mxu0 0
        %2679 = vmatpush1.bf16.msra.mxu0 0
        %2680 = vmatprep.subr.bf16.mxu0 0
        %2681 = vmatpush1.bf16.msra.mxu0 0
        %2682 = vmatprep.subr.bf16.mxu0 0
        %2683 = vmatpush1.bf16.msra.mxu0 0
        %2684 = vmatprep.subr.bf16.mxu0 0
        %2685 = vmatpush1.bf16.msra.mxu0 0
        %2686 = vmatprep.subr.bf16.mxu0 0
        %2687 = vmatpush1.bf16.msra.mxu0 0
        %2688 = vmatprep.subr.bf16.mxu0 0
        %2689 = vmatpush1.bf16.msra.mxu0 0
        %2690 = vmatprep.subr.bf16.mxu0 0
        %2691 = vmatpush1.bf16.msra.mxu0 0
        %2692 = vmatprep.subr.bf16.mxu0 0
        %2693 = vmatpush1.bf16.msra.mxu0 0
        %2694 = vmatprep.subr.bf16.mxu0 0
        %2695 = vmatpush1.bf16.msra.mxu0 0
        %2696 = vmatprep.subr.bf16.mxu0 0
        %2697 = vmatpush1.bf16.msra.mxu0 0
        %2698 = vmatprep.subr.bf16.mxu0 0
        %2699 = vmatpush1.bf16.msra.mxu0 0
        %2700 = vmatprep.mubr.bf16.mxu0 0
        %2701 = vmatmul.mubr.bf16.gmra.mrb[0].mxu0 %v2663
        %v2702 = vpop.f32.mrb[0].mxu0
        %v2703 = vadd.f32 0.0, %v2702
        %v2704 = vpop.f32.mrb[0].mxu0
        %v2705 = vpop.f32.mrb[0].mxu0
        %v2706 = vpop.f32.mrb[0].mxu0
        %2707 = vdwg.mxu0
        %v2710 = vcombine.high %v2655, %v2655
        %v2712 = vunpack.c.l.s4 1966171168
        %v2713 = vunpack.c.0.s8 %v2712
        %v2714 = vlaneseq
        %v2715 = vshrl.u32 %v2714, 7
        %v2716 = vsub.s32 %v2713, %v2715
        %v2717 = vrot.slane %v2655, %v2716
        %v2719 = vunpack.c.l.s4 1966171168
        %v2720 = vunpack.c.0.s8 %v2719
        %v2721 = vlaneseq
        %v2722 = vshrl.u32 %v2721, 7
        %v2723 = vsub.s32 %v2720, %v2722
        %v2724 = vrot.slane %v2710, %v2723
        %v2725 = vcombine.high %v2717, %v2717
        %v2727 = vunpack.c.l.s4 1966171168
        %v2728 = vunpack.c.0.s8 %v2727
        %v2729 = vlaneseq
        %v2730 = vshrl.u32 %v2729, 7
        %v2731 = vsub.s32 %v2728, %v2730
        %v2732 = vrot.slane %v2717, %v2731
        %v2734 = vunpack.c.l.s4 1966171168
        %v2735 = vunpack.c.0.s8 %v2734
        %v2736 = vlaneseq
        %v2737 = vshrl.u32 %v2736, 7
        %v2738 = vsub.s32 %v2735, %v2737
        %v2739 = vrot.slane %v2724, %v2738
        %v2741 = vunpack.c.l.s4 1966171168
        %v2742 = vunpack.c.0.s8 %v2741
        %v2743 = vlaneseq
        %v2744 = vshrl.u32 %v2743, 7
        %v2745 = vsub.s32 %v2742, %v2744
        %v2746 = vrot.slane %v2725, %v2745
        %v2747 = vcombine.high %v2732, %v2732
        %v2748 = vcombine.high %v2746, %v2746
        %v2749 = vcombine.high %v2703, %v2703
        %v2751 = vunpack.c.l.s4 1966171168
        %v2752 = vunpack.c.0.s8 %v2751
        %v2753 = vlaneseq
        %v2754 = vshrl.u32 %v2753, 7
        %v2755 = vsub.s32 %v2752, %v2754
        %v2756 = vrot.slane %v2703, %v2755
        %v2758 = vunpack.c.l.s4 1966171168
        %v2759 = vunpack.c.0.s8 %v2758
        %v2760 = vlaneseq
        %v2761 = vshrl.u32 %v2760, 7
        %v2762 = vsub.s32 %v2759, %v2761
        %v2763 = vrot.slane %v2749, %v2762
        %v2764 = vcombine.high %v2756, %v2756
        %v2766 = vunpack.c.l.s4 1966171168
        %v2767 = vunpack.c.0.s8 %v2766
        %v2768 = vlaneseq
        %v2769 = vshrl.u32 %v2768, 7
        %v2770 = vsub.s32 %v2767, %v2769
        %v2771 = vrot.slane %v2756, %v2770
        %v2773 = vunpack.c.l.s4 1966171168
        %v2774 = vunpack.c.0.s8 %v2773
        %v2775 = vlaneseq
        %v2776 = vshrl.u32 %v2775, 7
        %v2777 = vsub.s32 %v2774, %v2776
        %v2778 = vrot.slane %v2763, %v2777
        %v2780 = vunpack.c.l.s4 1966171168
        %v2781 = vunpack.c.0.s8 %v2780
        %v2782 = vlaneseq
        %v2783 = vshrl.u32 %v2782, 7
        %v2784 = vsub.s32 %v2781, %v2783
        %v2785 = vrot.slane %v2764, %v2784
        %v2786 = vcombine.high %v2771, %v2771
        %v2787 = vcombine.high %v2785, %v2785
        %v2788 = vcombine.low %v1820, %v1834
        %v2789 = vcombine.low %v1835, %v1836
        %v2790 = vcombine.low %v1827, %v1859
        %v2791 = vcombine.low %v1873, %v1874
        %v2793 = vunpack.c.l.s4 1966171168
        %v2794 = vunpack.c.0.s8 %v2793
        %v2795 = vlaneseq
        %v2796 = vshrl.u32 %v2795, 7
        %v2797 = vsub.s32 %v2794, %v2796
        %v2798 = vrot.slane %v2788, %v2797
        %v2800 = vunpack.c.l.s4 1966171168
        %v2801 = vunpack.c.0.s8 %v2800
        %v2802 = vlaneseq
        %v2803 = vshrl.u32 %v2802, 7
        %v2804 = vsub.s32 %v2801, %v2803
        %v2805 = vrot.slane %v2789, %v2804
        %v2807 = vunpack.c.l.s4 1966171168
        %v2808 = vunpack.c.0.s8 %v2807
        %v2809 = vlaneseq
        %v2810 = vshrl.u32 %v2809, 7
        %v2811 = vsub.s32 %v2808, %v2810
        %v2812 = vrot.slane %v2790, %v2811
        %v2814 = vunpack.c.l.s4 1966171168
        %v2815 = vunpack.c.0.s8 %v2814
        %v2816 = vlaneseq
        %v2817 = vshrl.u32 %v2816, 7
        %v2818 = vsub.s32 %v2815, %v2817
        %v2819 = vrot.slane %v2791, %v2818
        %v2820 = vcombine.low %v2798, %v2805
        %v2821 = vcombine.low %v2812, %v2819
        %v2823 = vunpack.c.l.s4 1966171168
        %v2824 = vunpack.c.0.s8 %v2823
        %v2825 = vlaneseq
        %v2826 = vshrl.u32 %v2825, 7
        %v2827 = vsub.s32 %v2824, %v2826
        %v2828 = vrot.slane %v2820, %v2827
        %v2830 = vunpack.c.l.s4 1966171168
        %v2831 = vunpack.c.0.s8 %v2830
        %v2832 = vlaneseq
        %v2833 = vshrl.u32 %v2832, 7
        %v2834 = vsub.s32 %v2831, %v2833
        %v2835 = vrot.slane %v2821, %v2834
        %v2836 = vcombine.low %v2828, %v2835
        %v2837 = vcombine.low %v1875, %v1866
        %v2839 = vunpack.c.l.s4 1966171168
        %v2840 = vunpack.c.0.s8 %v2839
        %v2841 = vlaneseq
        %v2842 = vshrl.u32 %v2841, 7
        %v2843 = vsub.s32 %v2840, %v2842
        %v2844 = vrot.slane %v2837, %v2843
        %v2846 = vunpack.c.l.s4 1966171168
        %v2847 = vunpack.c.0.s8 %v2846
        %v2848 = vlaneseq
        %v2849 = vshrl.u32 %v2848, 7
        %v2850 = vsub.s32 %v2847, %v2849
        %v2851 = vrot.slane %v2844, %v2850
        %v2854 = vcombine.low %v2128, %v2142
        %v2855 = vcombine.low %v2143, %v2144
        %v2856 = vcombine.low %v2135, %v2167
        %v2857 = vcombine.low %v2181, %v2182
        %v2859 = vunpack.c.l.s4 1966171168
        %v2860 = vunpack.c.0.s8 %v2859
        %v2861 = vlaneseq
        %v2862 = vshrl.u32 %v2861, 7
        %v2863 = vsub.s32 %v2860, %v2862
        %v2864 = vrot.slane %v2854, %v2863
        %v2866 = vunpack.c.l.s4 1966171168
        %v2867 = vunpack.c.0.s8 %v2866
        %v2868 = vlaneseq
        %v2869 = vshrl.u32 %v2868, 7
        %v2870 = vsub.s32 %v2867, %v2869
        %v2871 = vrot.slane %v2855, %v2870
        %v2873 = vunpack.c.l.s4 1966171168
        %v2874 = vunpack.c.0.s8 %v2873
        %v2875 = vlaneseq
        %v2876 = vshrl.u32 %v2875, 7
        %v2877 = vsub.s32 %v2874, %v2876
        %v2878 = vrot.slane %v2856, %v2877
        %v2880 = vunpack.c.l.s4 1966171168
        %v2881 = vunpack.c.0.s8 %v2880
        %v2882 = vlaneseq
        %v2883 = vshrl.u32 %v2882, 7
        %v2884 = vsub.s32 %v2881, %v2883
        %v2885 = vrot.slane %v2857, %v2884
        %v2886 = vcombine.low %v2864, %v2871
        %v2887 = vcombine.low %v2878, %v2885
        %v2889 = vunpack.c.l.s4 1966171168
        %v2890 = vunpack.c.0.s8 %v2889
        %v2891 = vlaneseq
        %v2892 = vshrl.u32 %v2891, 7
        %v2893 = vsub.s32 %v2890, %v2892
        %v2894 = vrot.slane %v2886, %v2893
        %v2896 = vunpack.c.l.s4 1966171168
        %v2897 = vunpack.c.0.s8 %v2896
        %v2898 = vlaneseq
        %v2899 = vshrl.u32 %v2898, 7
        %v2900 = vsub.s32 %v2897, %v2899
        %v2901 = vrot.slane %v2887, %v2900
        %v2902 = vcombine.low %v2894, %v2901
        %v2903 = vcombine.low %v2183, %v2174
        %v2905 = vunpack.c.l.s4 1966171168
        %v2906 = vunpack.c.0.s8 %v2905
        %v2907 = vlaneseq
        %v2908 = vshrl.u32 %v2907, 7
        %v2909 = vsub.s32 %v2906, %v2908
        %v2910 = vrot.slane %v2903, %v2909
        %v2912 = vunpack.c.l.s4 1966171168
        %v2913 = vunpack.c.0.s8 %v2912
        %v2914 = vlaneseq
        %v2915 = vshrl.u32 %v2914, 7
        %v2916 = vsub.s32 %v2913, %v2915
        %v2917 = vrot.slane %v2910, %v2916
        %2918 = vrot.lane.b32.xlu0 %v2902, 32
        %v2919 = vpop.permute.xlu0 %2918
        %2920 = vrot.lane.b32.xlu0 %v2917, 32
        %v2921 = vpop.permute.xlu0 %2920
        %v2924 = vcombine.low %v2430, %v2444
        %v2925 = vcombine.low %v2445, %v2446
        %v2926 = vcombine.low %v2437, %v2469
        %v2927 = vcombine.low %v2483, %v2484
        %v2929 = vunpack.c.l.s4 1966171168
        %v2930 = vunpack.c.0.s8 %v2929
        %v2931 = vlaneseq
        %v2932 = vshrl.u32 %v2931, 7
        %v2933 = vsub.s32 %v2930, %v2932
        %v2934 = vrot.slane %v2924, %v2933
        %v2936 = vunpack.c.l.s4 1966171168
        %v2937 = vunpack.c.0.s8 %v2936
        %v2938 = vlaneseq
        %v2939 = vshrl.u32 %v2938, 7
        %v2940 = vsub.s32 %v2937, %v2939
        %v2941 = vrot.slane %v2925, %v2940
        %v2943 = vunpack.c.l.s4 1966171168
        %v2944 = vunpack.c.0.s8 %v2943
        %v2945 = vlaneseq
        %v2946 = vshrl.u32 %v2945, 7
        %v2947 = vsub.s32 %v2944, %v2946
        %v2948 = vrot.slane %v2926, %v2947
        %v2950 = vunpack.c.l.s4 1966171168
        %v2951 = vunpack.c.0.s8 %v2950
        %v2952 = vlaneseq
        %v2953 = vshrl.u32 %v2952, 7
        %v2954 = vsub.s32 %v2951, %v2953
        %v2955 = vrot.slane %v2927, %v2954
        %v2956 = vcombine.low %v2934, %v2941
        %v2957 = vcombine.low %v2948, %v2955
        %v2959 = vunpack.c.l.s4 1966171168
        %v2960 = vunpack.c.0.s8 %v2959
        %v2961 = vlaneseq
        %v2962 = vshrl.u32 %v2961, 7
        %v2963 = vsub.s32 %v2960, %v2962
        %v2964 = vrot.slane %v2956, %v2963
        %v2966 = vunpack.c.l.s4 1966171168
        %v2967 = vunpack.c.0.s8 %v2966
        %v2968 = vlaneseq
        %v2969 = vshrl.u32 %v2968, 7
        %v2970 = vsub.s32 %v2967, %v2969
        %v2971 = vrot.slane %v2957, %v2970
        %v2972 = vcombine.low %v2964, %v2971
        %v2973 = vcombine.low %v2485, %v2476
        %v2975 = vunpack.c.l.s4 1966171168
        %v2976 = vunpack.c.0.s8 %v2975
        %v2977 = vlaneseq
        %v2978 = vshrl.u32 %v2977, 7
        %v2979 = vsub.s32 %v2976, %v2978
        %v2980 = vrot.slane %v2973, %v2979
        %v2982 = vunpack.c.l.s4 1966171168
        %v2983 = vunpack.c.0.s8 %v2982
        %v2984 = vlaneseq
        %v2985 = vshrl.u32 %v2984, 7
        %v2986 = vsub.s32 %v2983, %v2985
        %v2987 = vrot.slane %v2980, %v2986
        %2988 = vrot.lane.b32.xlu0 %v2972, 64
        %v2989 = vpop.permute.xlu0 %2988
        %2990 = vrot.lane.b32.xlu0 %v2987, 64
        %v2991 = vpop.permute.xlu0 %2990
        %v2994 = vcombine.low %v2732, %v2746
        %v2995 = vcombine.low %v2747, %v2748
        %v2996 = vcombine.low %v2739, %v2771
        %v2997 = vcombine.low %v2785, %v2786
        %v2999 = vunpack.c.l.s4 1966171168
        %v3000 = vunpack.c.0.s8 %v2999
        %v3001 = vlaneseq
        %v3002 = vshrl.u32 %v3001, 7
        %v3003 = vsub.s32 %v3000, %v3002
        %v3004 = vrot.slane %v2994, %v3003
        %v3006 = vunpack.c.l.s4 1966171168
        %v3007 = vunpack.c.0.s8 %v3006
        %v3008 = vlaneseq
        %v3009 = vshrl.u32 %v3008, 7
        %v3010 = vsub.s32 %v3007, %v3009
        %v3011 = vrot.slane %v2995, %v3010
        %v3013 = vunpack.c.l.s4 1966171168
        %v3014 = vunpack.c.0.s8 %v3013
        %v3015 = vlaneseq
        %v3016 = vshrl.u32 %v3015, 7
        %v3017 = vsub.s32 %v3014, %v3016
        %v3018 = vrot.slane %v2996, %v3017
        %v3020 = vunpack.c.l.s4 1966171168
        %v3021 = vunpack.c.0.s8 %v3020
        %v3022 = vlaneseq
        %v3023 = vshrl.u32 %v3022, 7
        %v3024 = vsub.s32 %v3021, %v3023
        %v3025 = vrot.slane %v2997, %v3024
        %v3026 = vcombine.low %v3004, %v3011
        %v3027 = vcombine.low %v3018, %v3025
        %v3029 = vunpack.c.l.s4 1966171168
        %v3030 = vunpack.c.0.s8 %v3029
        %v3031 = vlaneseq
        %v3032 = vshrl.u32 %v3031, 7
        %v3033 = vsub.s32 %v3030, %v3032
        %v3034 = vrot.slane %v3026, %v3033
        %v3036 = vunpack.c.l.s4 1966171168
        %v3037 = vunpack.c.0.s8 %v3036
        %v3038 = vlaneseq
        %v3039 = vshrl.u32 %v3038, 7
        %v3040 = vsub.s32 %v3037, %v3039
        %v3041 = vrot.slane %v3027, %v3040
        %v3042 = vcombine.low %v3034, %v3041
        %v3043 = vcombine.low %v2787, %v2778
        %v3045 = vunpack.c.l.s4 1966171168
        %v3046 = vunpack.c.0.s8 %v3045
        %v3047 = vlaneseq
        %v3048 = vshrl.u32 %v3047, 7
        %v3049 = vsub.s32 %v3046, %v3048
        %v3050 = vrot.slane %v3043, %v3049
        %v3052 = vunpack.c.l.s4 1966171168
        %v3053 = vunpack.c.0.s8 %v3052
        %v3054 = vlaneseq
        %v3055 = vshrl.u32 %v3054, 7
        %v3056 = vsub.s32 %v3053, %v3055
        %v3057 = vrot.slane %v3050, %v3056
        %3058 = vrot.lane.b32.xlu0 %v3042, 96
        %v3059 = vpop.permute.xlu0 %3058
        %3060 = vrot.lane.b32.xlu0 %v3057, 96
        %v3061 = vpop.permute.xlu0 %3060
        %v3064 = vsel %vm1579, %v2836, %v2919
        %v3065 = vsel %vm1579, %v2851, %v2921
        %vm3066 = vcmask 523264
        %v3067 = vsel %vm3066, %v3064, %v2989
        %v3068 = vsel %vm3066, %v3065, %v2991
        %vm3069 = vcmask 785408
        %v3070 = vsel %vm3069, %v3067, %v3059
        %v3071 = vsel %vm3069, %v3068, %v3061
        %v3072 = vpack.c.bf16 %v3071, %v3070
        %v3073 = vld [vmem:[%s652] sm:$0xf]
        %v3074 = vld [vmem:[%s652 + $0x4] sm:$0xf]
        %v3075 = vld [vmem:[%s652 + $0x8] sm:$0xf]
        %v3076 = vld [vmem:[%s652 + $0xc] sm:$0xf]
        %v3077 = vld [vmem:[%s652 + $0x10] sm:$0xf]
        %v3078 = vld [vmem:[%s652 + $0x14] sm:$0xf]
        %v3079 = vld [vmem:[%s652 + $0x18] sm:$0xf]
        %v3080 = vld [vmem:[%s652 + $0x1c] sm:$0xf]
        %v3081 = vld [vmem:[%s652 + $0x20] sm:$0xf]
        %v3082 = vld [vmem:[%s652 + $0x24] sm:$0xf]
        %v3083 = vld [vmem:[%s652 + $0x28] sm:$0xf]
        %v3084 = vld [vmem:[%s652 + $0x2c] sm:$0xf]
        %v3085 = vld [vmem:[%s652 + $0x30] sm:$0xf]
        %v3086 = vld [vmem:[%s652 + $0x34] sm:$0xf]
        %v3087 = vld [vmem:[%s652 + $0x38] sm:$0xf]
        %v3088 = vld [vmem:[%s652 + $0x3c] sm:$0xf]
        %v3089 = vld [vmem:[%s655] sm:$0x1]
        %v3091 = vlaneseq
        %v3092 = vshrl.u32 %v3091, 7
        %v3093 = vsub.s32 0, %v3092
        %v3094 = vrot.slane %v3089, %v3093
        %v3112 = vunpack.c.l.b16 %v3073
        %v3113 = vunpack.c.l.b16 %v3074
        %v3114 = vunpack.c.l.b16 %v3075
        %v3115 = vunpack.c.l.b16 %v3076
        %v3116 = vunpack.c.l.b16 %v3077
        %v3117 = vunpack.c.l.b16 %v3078
        %v3118 = vunpack.c.l.b16 %v3079
        %v3119 = vunpack.c.l.b16 %v3080
        %v3120 = vunpack.c.l.b16 %v3081
        %v3121 = vunpack.c.l.b16 %v3082
        %v3122 = vunpack.c.l.b16 %v3083
        %v3123 = vunpack.c.l.b16 %v3084
        %v3124 = vunpack.c.l.b16 %v3085
        %v3125 = vunpack.c.l.b16 %v3086
        %v3126 = vunpack.c.l.b16 %v3087
        %v3127 = vunpack.c.l.b16 %v3088
        %v3128 = vpack.c.b16 %v3113, %v3112
        %v3129 = vpack.c.b16 %v3115, %v3114
        %v3130 = vpack.c.b16 %v3117, %v3116
        %v3131 = vpack.c.b16 %v3119, %v3118
        %v3132 = vpack.c.b16 %v3121, %v3120
        %v3133 = vpack.c.b16 %v3123, %v3122
        %v3134 = vpack.c.b16 %v3125, %v3124
        %v3135 = vpack.c.b16 %v3127, %v3126
        %3144 = vmatprep.subr.bf16.mxu0 0
        %3145 = vmatpush1.bf16.msra.mxu0 %v3128
        %3146 = vmatprep.subr.bf16.mxu0 0
        %3147 = vmatpush1.bf16.msra.mxu0 %v3129
        %3148 = vmatprep.subr.bf16.mxu0 0
        %3149 = vmatpush1.bf16.msra.mxu0 %v3130
        %3150 = vmatprep.subr.bf16.mxu0 0
        %3151 = vmatpush1.bf16.msra.mxu0 %v3131
        %3152 = vmatprep.subr.bf16.mxu0 0
        %3153 = vmatpush1.bf16.msra.mxu0 %v3132
        %3154 = vmatprep.subr.bf16.mxu0 0
        %3155 = vmatpush1.bf16.msra.mxu0 %v3133
        %3156 = vmatprep.subr.bf16.mxu0 0
        %3157 = vmatpush1.bf16.msra.mxu0 %v3134
        %3158 = vmatprep.subr.bf16.mxu0 0
        %3159 = vmatpush1.bf16.msra.mxu0 %v3135
        %3160 = vmatprep.subr.bf16.mxu0 0
        %3161 = vmatpush1.bf16.msra.mxu0 0
        %3162 = vmatprep.subr.bf16.mxu0 0
        %3163 = vmatpush1.bf16.msra.mxu0 0
        %3164 = vmatprep.subr.bf16.mxu0 0
        %3165 = vmatpush1.bf16.msra.mxu0 0
        %3166 = vmatprep.subr.bf16.mxu0 0
        %3167 = vmatpush1.bf16.msra.mxu0 0
        %3168 = vmatprep.subr.bf16.mxu0 0
        %3169 = vmatpush1.bf16.msra.mxu0 0
        %3170 = vmatprep.subr.bf16.mxu0 0
        %3171 = vmatpush1.bf16.msra.mxu0 0
        %3172 = vmatprep.subr.bf16.mxu0 0
        %3173 = vmatpush1.bf16.msra.mxu0 0
        %3174 = vmatprep.subr.bf16.mxu0 0
        %3175 = vmatpush1.bf16.msra.mxu0 0
        %3176 = vmatprep.mubr.bf16.mxu0 0
        %3177 = vmatmul.mubr.bf16.gmra.mrb[0].mxu0 %v3072
        %v3178 = vpop.f32.mrb[0].mxu0
        %v3179 = vadd.f32 %v3094, %v3178
        %v3180 = vpop.f32.mrb[0].mxu0
        %v3181 = vpop.f32.mrb[0].mxu0
        %v3182 = vadd.f32 %v3094, %v3181
        %v3183 = vpop.f32.mrb[0].mxu0
        %3184 = vdwg.mxu0
        %v3187 = vcombine.high %v3179, %v3179
        %v3189 = vunpack.c.l.s4 1966171168
        %v3190 = vunpack.c.0.s8 %v3189
        %v3191 = vlaneseq
        %v3192 = vshrl.u32 %v3191, 7
        %v3193 = vsub.s32 %v3190, %v3192
        %v3194 = vrot.slane %v3179, %v3193
        %v3196 = vunpack.c.l.s4 1966171168
        %v3197 = vunpack.c.0.s8 %v3196
        %v3198 = vlaneseq
        %v3199 = vshrl.u32 %v3198, 7
        %v3200 = vsub.s32 %v3197, %v3199
        %v3201 = vrot.slane %v3187, %v3200
        %v3202 = vcombine.high %v3194, %v3194
        %v3203 = vcombine.high %v3201, %v3201
        %v3205 = vunpack.c.l.s4 1966171168
        %v3206 = vunpack.c.0.s8 %v3205
        %v3207 = vlaneseq
        %v3208 = vshrl.u32 %v3207, 7
        %v3209 = vsub.s32 %v3206, %v3208
        %v3210 = vrot.slane %v3194, %v3209
        %v3212 = vunpack.c.l.s4 1966171168
        %v3213 = vunpack.c.0.s8 %v3212
        %v3214 = vlaneseq
        %v3215 = vshrl.u32 %v3214, 7
        %v3216 = vsub.s32 %v3213, %v3215
        %v3217 = vrot.slane %v3201, %v3216
        %v3219 = vunpack.c.l.s4 1966171168
        %v3220 = vunpack.c.0.s8 %v3219
        %v3221 = vlaneseq
        %v3222 = vshrl.u32 %v3221, 7
        %v3223 = vsub.s32 %v3220, %v3222
        %v3224 = vrot.slane %v3202, %v3223
        %v3226 = vunpack.c.l.s4 1966171168
        %v3227 = vunpack.c.0.s8 %v3226
        %v3228 = vlaneseq
        %v3229 = vshrl.u32 %v3228, 7
        %v3230 = vsub.s32 %v3227, %v3229
        %v3231 = vrot.slane %v3203, %v3230
        %v3232 = vcombine.high %v3210, %v3210
        %v3233 = vcombine.high %v3217, %v3217
        %v3234 = vcombine.high %v3224, %v3224
        %v3235 = vcombine.high %v3231, %v3231
        %v3237 = vunpack.c.l.s4 1966171168
        %v3238 = vunpack.c.0.s8 %v3237
        %v3239 = vlaneseq
        %v3240 = vshrl.u32 %v3239, 7
        %v3241 = vsub.s32 %v3238, %v3240
        %v3242 = vrot.slane %v3182, %v3241
        %v3243 = vcombine.high %v3242, %v3242
        %v3245 = vunpack.c.l.s4 1966171168
        %v3246 = vunpack.c.0.s8 %v3245
        %v3247 = vlaneseq
        %v3248 = vshrl.u32 %v3247, 7
        %v3249 = vsub.s32 %v3246, %v3248
        %v3250 = vrot.slane %v3242, %v3249
        %v3252 = vunpack.c.l.s4 1966171168
        %v3253 = vunpack.c.0.s8 %v3252
        %v3254 = vlaneseq
        %v3255 = vshrl.u32 %v3254, 7
        %v3256 = vsub.s32 %v3253, %v3255
        %v3257 = vrot.slane %v3243, %v3256
        %v3268 = vadd.f32 %v720, %v3210
        %v3269 = vadd.f32 %v734, %v3224
        %v3270 = vadd.f32 %v735, %v3232
        %v3271 = vadd.f32 %v736, %v3234
        %v3272 = vadd.f32 %v727, %v3217
        %v3273 = vadd.f32 %v759, %v3231
        %v3274 = vadd.f32 %v773, %v3233
        %v3275 = vadd.f32 %v774, %v3235
        %v3276 = vadd.f32 %v775, %v3250
        %v3277 = vadd.f32 %v766, %v3257
        %v3278 = vld [vmem:[%s658] sm:$0x1]
        %v3279 = vld [vmem:[%s661] sm:$0x1]
        %v3290 = vcombine.low %v3268, %v3269
        %v3291 = vcombine.low %v3270, %v3271
        %v3292 = vcombine.low %v3272, %v3273
        %v3293 = vcombine.low %v3274, %v3275
        %v3295 = vunpack.c.l.s4 1966171168
        %v3296 = vunpack.c.0.s8 %v3295
        %v3297 = vlaneseq
        %v3298 = vshrl.u32 %v3297, 7
        %v3299 = vsub.s32 %v3296, %v3298
        %v3300 = vrot.slane %v3290, %v3299
        %v3302 = vunpack.c.l.s4 1966171168
        %v3303 = vunpack.c.0.s8 %v3302
        %v3304 = vlaneseq
        %v3305 = vshrl.u32 %v3304, 7
        %v3306 = vsub.s32 %v3303, %v3305
        %v3307 = vrot.slane %v3291, %v3306
        %v3309 = vunpack.c.l.s4 1966171168
        %v3310 = vunpack.c.0.s8 %v3309
        %v3311 = vlaneseq
        %v3312 = vshrl.u32 %v3311, 7
        %v3313 = vsub.s32 %v3310, %v3312
        %v3314 = vrot.slane %v3292, %v3313
        %v3316 = vunpack.c.l.s4 1966171168
        %v3317 = vunpack.c.0.s8 %v3316
        %v3318 = vlaneseq
        %v3319 = vshrl.u32 %v3318, 7
        %v3320 = vsub.s32 %v3317, %v3319
        %v3321 = vrot.slane %v3293, %v3320
        %v3322 = vcombine.low %v3300, %v3307
        %v3323 = vcombine.low %v3314, %v3321
        %v3325 = vunpack.c.l.s4 1966171168
        %v3326 = vunpack.c.0.s8 %v3325
        %v3327 = vlaneseq
        %v3328 = vshrl.u32 %v3327, 7
        %v3329 = vsub.s32 %v3326, %v3328
        %v3330 = vrot.slane %v3322, %v3329
        %v3332 = vunpack.c.l.s4 1966171168
        %v3333 = vunpack.c.0.s8 %v3332
        %v3334 = vlaneseq
        %v3335 = vshrl.u32 %v3334, 7
        %v3336 = vsub.s32 %v3333, %v3335
        %v3337 = vrot.slane %v3323, %v3336
        %v3338 = vcombine.low %v3330, %v3337
        %v3339 = vcombine.low %v3276, %v3277
        %v3341 = vunpack.c.l.s4 1966171168
        %v3342 = vunpack.c.0.s8 %v3341
        %v3343 = vlaneseq
        %v3344 = vshrl.u32 %v3343, 7
        %v3345 = vsub.s32 %v3342, %v3344
        %v3346 = vrot.slane %v3339, %v3345
        %v3348 = vunpack.c.l.s4 1966171168
        %v3349 = vunpack.c.0.s8 %v3348
        %v3350 = vlaneseq
        %v3351 = vshrl.u32 %v3350, 7
        %v3352 = vsub.s32 %v3349, %v3351
        %v3353 = vrot.slane %v3346, %v3352
        %3356 = vadd.xlane.f32.xlu0 %v3338
        %v3357 = vpop.xlane.xlu0 %3356
        %v3358 = vsel %vm1703, %v3353, 0.0
        %3359 = vadd.xlane.f32.xlu0 %v3358
        %v3360 = vpop.xlane.xlu0 %3359
        %v3361 = vrcp.pop 128.0
        %v3362 = vmul.f32 %v3357, %v3361
        %v3363 = vmul.f32 %v3360, %v3361
        %v3366 = vlaneseq
        %v3367 = vshrl.u32 %v3366, 7
        %v3368 = vsub.s32 0, %v3367
        %v3369 = vrot.slane %v3362, %v3368
        %v3370 = vlaneseq
        %v3371 = vshrl.u32 %v3370, 7
        %v3372 = vsub.s32 1, %v3371
        %v3373 = vrot.slane %v3362, %v3372
        %v3374 = vlaneseq
        %v3375 = vshrl.u32 %v3374, 7
        %v3376 = vsub.s32 2, %v3375
        %v3377 = vrot.slane %v3362, %v3376
        %v3378 = vlaneseq
        %v3379 = vshrl.u32 %v3378, 7
        %v3380 = vsub.s32 3, %v3379
        %v3381 = vrot.slane %v3362, %v3380
        %v3382 = vlaneseq
        %v3383 = vshrl.u32 %v3382, 7
        %v3384 = vsub.s32 4, %v3383
        %v3385 = vrot.slane %v3362, %v3384
        %v3386 = vlaneseq
        %v3387 = vshrl.u32 %v3386, 7
        %v3388 = vsub.s32 5, %v3387
        %v3389 = vrot.slane %v3362, %v3388
        %v3390 = vlaneseq
        %v3391 = vshrl.u32 %v3390, 7
        %v3392 = vsub.s32 6, %v3391
        %v3393 = vrot.slane %v3362, %v3392
        %v3394 = vlaneseq
        %v3395 = vshrl.u32 %v3394, 7
        %v3396 = vsub.s32 7, %v3395
        %v3397 = vrot.slane %v3362, %v3396
        %v3398 = vlaneseq
        %v3399 = vshrl.u32 %v3398, 7
        %v3400 = vsub.s32 0, %v3399
        %v3401 = vrot.slane %v3363, %v3400
        %v3402 = vlaneseq
        %v3403 = vshrl.u32 %v3402, 7
        %v3404 = vsub.s32 1, %v3403
        %v3405 = vrot.slane %v3363, %v3404
        %v3416 = vsub.f32 %v3268, %v3369
        %v3417 = vsub.f32 %v3269, %v3373
        %v3418 = vsub.f32 %v3270, %v3377
        %v3419 = vsub.f32 %v3271, %v3381
        %v3420 = vsub.f32 %v3272, %v3385
        %v3421 = vsub.f32 %v3273, %v3389
        %v3422 = vsub.f32 %v3274, %v3393
        %v3423 = vsub.f32 %v3275, %v3397
        %v3424 = vsub.f32 %v3276, %v3401
        %v3425 = vsub.f32 %v3277, %v3405
        %v3426 = vmul.f32 %v3416, %v3416
        %v3427 = vmul.f32 %v3417, %v3417
        %v3428 = vmul.f32 %v3418, %v3418
        %v3429 = vmul.f32 %v3419, %v3419
        %v3430 = vmul.f32 %v3420, %v3420
        %v3431 = vmul.f32 %v3421, %v3421
        %v3432 = vmul.f32 %v3422, %v3422
        %v3433 = vmul.f32 %v3423, %v3423
        %v3434 = vmul.f32 %v3424, %v3424
        %v3435 = vmul.f32 %v3425, %v3425
        %v3446 = vcombine.low %v3426, %v3427
        %v3447 = vcombine.low %v3428, %v3429
        %v3448 = vcombine.low %v3430, %v3431
        %v3449 = vcombine.low %v3432, %v3433
        %v3451 = vunpack.c.l.s4 1966171168
        %v3452 = vunpack.c.0.s8 %v3451
        %v3453 = vlaneseq
        %v3454 = vshrl.u32 %v3453, 7
        %v3455 = vsub.s32 %v3452, %v3454
        %v3456 = vrot.slane %v3446, %v3455
        %v3458 = vunpack.c.l.s4 1966171168
        %v3459 = vunpack.c.0.s8 %v3458
        %v3460 = vlaneseq
        %v3461 = vshrl.u32 %v3460, 7
        %v3462 = vsub.s32 %v3459, %v3461
        %v3463 = vrot.slane %v3447, %v3462
        %v3465 = vunpack.c.l.s4 1966171168
        %v3466 = vunpack.c.0.s8 %v3465
        %v3467 = vlaneseq
        %v3468 = vshrl.u32 %v3467, 7
        %v3469 = vsub.s32 %v3466, %v3468
        %v3470 = vrot.slane %v3448, %v3469
        %v3472 = vunpack.c.l.s4 1966171168
        %v3473 = vunpack.c.0.s8 %v3472
        %v3474 = vlaneseq
        %v3475 = vshrl.u32 %v3474, 7
        %v3476 = vsub.s32 %v3473, %v3475
        %v3477 = vrot.slane %v3449, %v3476
        %v3478 = vcombine.low %v3456, %v3463
        %v3479 = vcombine.low %v3470, %v3477
        %v3481 = vunpack.c.l.s4 1966171168
        %v3482 = vunpack.c.0.s8 %v3481
        %v3483 = vlaneseq
        %v3484 = vshrl.u32 %v3483, 7
        %v3485 = vsub.s32 %v3482, %v3484
        %v3486 = vrot.slane %v3478, %v3485
        %v3488 = vunpack.c.l.s4 1966171168
        %v3489 = vunpack.c.0.s8 %v3488
        %v3490 = vlaneseq
        %v3491 = vshrl.u32 %v3490, 7
        %v3492 = vsub.s32 %v3489, %v3491
        %v3493 = vrot.slane %v3479, %v3492
        %v3494 = vcombine.low %v3486, %v3493
        %v3495 = vcombine.low %v3434, %v3435
        %v3497 = vunpack.c.l.s4 1966171168
        %v3498 = vunpack.c.0.s8 %v3497
        %v3499 = vlaneseq
        %v3500 = vshrl.u32 %v3499, 7
        %v3501 = vsub.s32 %v3498, %v3500
        %v3502 = vrot.slane %v3495, %v3501
        %v3504 = vunpack.c.l.s4 1966171168
        %v3505 = vunpack.c.0.s8 %v3504
        %v3506 = vlaneseq
        %v3507 = vshrl.u32 %v3506, 7
        %v3508 = vsub.s32 %v3505, %v3507
        %v3509 = vrot.slane %v3502, %v3508
        %3512 = vadd.xlane.f32.xlu0 %v3494
        %v3513 = vpop.xlane.xlu0 %3512
        %v3514 = vsel %vm1703, %v3509, 0.0
        %3515 = vadd.xlane.f32.xlu0 %v3514
        %v3516 = vpop.xlane.xlu0 %3515
        %v3517 = vmul.f32 %v3513, %v3361
        %v3518 = vmul.f32 %v3516, %v3361
        %v3519 = vadd.f32 %v3517, 1e-05
        %v3520 = vadd.f32 %v3518, 1e-05
        %v3521 = vrsqrt.pop %v3519
        %v3522 = vrsqrt.pop %v3520
        %v3525 = vlaneseq
        %v3526 = vshrl.u32 %v3525, 7
        %v3527 = vsub.s32 0, %v3526
        %v3528 = vrot.slane %v3521, %v3527
        %v3529 = vlaneseq
        %v3530 = vshrl.u32 %v3529, 7
        %v3531 = vsub.s32 1, %v3530
        %v3532 = vrot.slane %v3521, %v3531
        %v3533 = vlaneseq
        %v3534 = vshrl.u32 %v3533, 7
        %v3535 = vsub.s32 2, %v3534
        %v3536 = vrot.slane %v3521, %v3535
        %v3537 = vlaneseq
        %v3538 = vshrl.u32 %v3537, 7
        %v3539 = vsub.s32 3, %v3538
        %v3540 = vrot.slane %v3521, %v3539
        %v3541 = vlaneseq
        %v3542 = vshrl.u32 %v3541, 7
        %v3543 = vsub.s32 4, %v3542
        %v3544 = vrot.slane %v3521, %v3543
        %v3545 = vlaneseq
        %v3546 = vshrl.u32 %v3545, 7
        %v3547 = vsub.s32 5, %v3546
        %v3548 = vrot.slane %v3521, %v3547
        %v3549 = vlaneseq
        %v3550 = vshrl.u32 %v3549, 7
        %v3551 = vsub.s32 6, %v3550
        %v3552 = vrot.slane %v3521, %v3551
        %v3553 = vlaneseq
        %v3554 = vshrl.u32 %v3553, 7
        %v3555 = vsub.s32 7, %v3554
        %v3556 = vrot.slane %v3521, %v3555
        %v3557 = vlaneseq
        %v3558 = vshrl.u32 %v3557, 7
        %v3559 = vsub.s32 0, %v3558
        %v3560 = vrot.slane %v3522, %v3559
        %v3561 = vlaneseq
        %v3562 = vshrl.u32 %v3561, 7
        %v3563 = vsub.s32 1, %v3562
        %v3564 = vrot.slane %v3522, %v3563
        %v3575 = vmul.f32 %v3416, %v3528
        %v3576 = vmul.f32 %v3417, %v3532
        %v3577 = vmul.f32 %v3418, %v3536
        %v3578 = vmul.f32 %v3419, %v3540
        %v3579 = vmul.f32 %v3420, %v3544
        %v3580 = vmul.f32 %v3421, %v3548
        %v3581 = vmul.f32 %v3422, %v3552
        %v3582 = vmul.f32 %v3423, %v3556
        %v3583 = vmul.f32 %v3424, %v3560
        %v3584 = vmul.f32 %v3425, %v3564
        %v3586 = vlaneseq
        %v3587 = vshrl.u32 %v3586, 7
        %v3588 = vsub.s32 0, %v3587
        %v3589 = vrot.slane %v3278, %v3588
        %v3590 = vcombine.high %v3589, %v3589
        %v3592 = vunpack.c.l.s4 1966171168
        %v3593 = vunpack.c.0.s8 %v3592
        %v3594 = vlaneseq
        %v3595 = vshrl.u32 %v3594, 7
        %v3596 = vsub.s32 %v3593, %v3595
        %v3597 = vrot.slane %v3589, %v3596
        %v3599 = vunpack.c.l.s4 1966171168
        %v3600 = vunpack.c.0.s8 %v3599
        %v3601 = vlaneseq
        %v3602 = vshrl.u32 %v3601, 7
        %v3603 = vsub.s32 %v3600, %v3602
        %v3604 = vrot.slane %v3590, %v3603
        %v3605 = vcombine.high %v3597, %v3597
        %v3606 = vcombine.high %v3604, %v3604
        %v3608 = vunpack.c.l.s4 1966171168
        %v3609 = vunpack.c.0.s8 %v3608
        %v3610 = vlaneseq
        %v3611 = vshrl.u32 %v3610, 7
        %v3612 = vsub.s32 %v3609, %v3611
        %v3613 = vrot.slane %v3597, %v3612
        %v3615 = vunpack.c.l.s4 1966171168
        %v3616 = vunpack.c.0.s8 %v3615
        %v3617 = vlaneseq
        %v3618 = vshrl.u32 %v3617, 7
        %v3619 = vsub.s32 %v3616, %v3618
        %v3620 = vrot.slane %v3604, %v3619
        %v3622 = vunpack.c.l.s4 1966171168
        %v3623 = vunpack.c.0.s8 %v3622
        %v3624 = vlaneseq
        %v3625 = vshrl.u32 %v3624, 7
        %v3626 = vsub.s32 %v3623, %v3625
        %v3627 = vrot.slane %v3605, %v3626
        %v3629 = vunpack.c.l.s4 1966171168
        %v3630 = vunpack.c.0.s8 %v3629
        %v3631 = vlaneseq
        %v3632 = vshrl.u32 %v3631, 7
        %v3633 = vsub.s32 %v3630, %v3632
        %v3634 = vrot.slane %v3606, %v3633
        %v3635 = vcombine.high %v3613, %v3613
        %v3636 = vcombine.high %v3620, %v3620
        %v3637 = vcombine.high %v3627, %v3627
        %v3638 = vcombine.high %v3634, %v3634
        %v3647 = vmul.f32 %v3575, %v3613
        %v3648 = vmul.f32 %v3576, %v3627
        %v3649 = vmul.f32 %v3577, %v3635
        %v3650 = vmul.f32 %v3578, %v3637
        %v3651 = vmul.f32 %v3579, %v3620
        %v3652 = vmul.f32 %v3580, %v3634
        %v3653 = vmul.f32 %v3581, %v3636
        %v3654 = vmul.f32 %v3582, %v3638
        %v3655 = vmul.f32 %v3583, %v3613
        %v3656 = vmul.f32 %v3584, %v3627
        %v3658 = vlaneseq
        %v3659 = vshrl.u32 %v3658, 7
        %v3660 = vsub.s32 0, %v3659
        %v3661 = vrot.slane %v3279, %v3660
        %v3662 = vcombine.high %v3661, %v3661
        %v3664 = vunpack.c.l.s4 1966171168
        %v3665 = vunpack.c.0.s8 %v3664
        %v3666 = vlaneseq
        %v3667 = vshrl.u32 %v3666, 7
        %v3668 = vsub.s32 %v3665, %v3667
        %v3669 = vrot.slane %v3661, %v3668
        %v3671 = vunpack.c.l.s4 1966171168
        %v3672 = vunpack.c.0.s8 %v3671
        %v3673 = vlaneseq
        %v3674 = vshrl.u32 %v3673, 7
        %v3675 = vsub.s32 %v3672, %v3674
        %v3676 = vrot.slane %v3662, %v3675
        %v3677 = vcombine.high %v3669, %v3669
        %v3678 = vcombine.high %v3676, %v3676
        %v3680 = vunpack.c.l.s4 1966171168
        %v3681 = vunpack.c.0.s8 %v3680
        %v3682 = vlaneseq
        %v3683 = vshrl.u32 %v3682, 7
        %v3684 = vsub.s32 %v3681, %v3683
        %v3685 = vrot.slane %v3669, %v3684
        %v3687 = vunpack.c.l.s4 1966171168
        %v3688 = vunpack.c.0.s8 %v3687
        %v3689 = vlaneseq
        %v3690 = vshrl.u32 %v3689, 7
        %v3691 = vsub.s32 %v3688, %v3690
        %v3692 = vrot.slane %v3676, %v3691
        %v3694 = vunpack.c.l.s4 1966171168
        %v3695 = vunpack.c.0.s8 %v3694
        %v3696 = vlaneseq
        %v3697 = vshrl.u32 %v3696, 7
        %v3698 = vsub.s32 %v3695, %v3697
        %v3699 = vrot.slane %v3677, %v3698
        %v3701 = vunpack.c.l.s4 1966171168
        %v3702 = vunpack.c.0.s8 %v3701
        %v3703 = vlaneseq
        %v3704 = vshrl.u32 %v3703, 7
        %v3705 = vsub.s32 %v3702, %v3704
        %v3706 = vrot.slane %v3678, %v3705
        %v3707 = vcombine.high %v3685, %v3685
        %v3708 = vcombine.high %v3692, %v3692
        %v3709 = vcombine.high %v3699, %v3699
        %v3710 = vcombine.high %v3706, %v3706
        %v3719 = vadd.f32 %v3647, %v3685
        %v3720 = vadd.f32 %v3648, %v3699
        %v3721 = vadd.f32 %v3649, %v3707
        %v3722 = vadd.f32 %v3650, %v3709
        %v3723 = vadd.f32 %v3651, %v3692
        %v3724 = vadd.f32 %v3652, %v3706
        %v3725 = vadd.f32 %v3653, %v3708
        %v3726 = vadd.f32 %v3654, %v3710
        %v3727 = vadd.f32 %v3655, %v3685
        %v3728 = vadd.f32 %v3656, %v3699
        %v3729 = vld [vmem:[%s666] sm:$0xff]
        %v3730 = vld [vmem:[%s666 + $0x8] sm:$0xff]
        %v3731 = vld [vmem:[%s666 + $0x10] sm:$0xff]
        %v3732 = vld [vmem:[%s666 + $0x18] sm:$0xff]
        %v3733 = vld [vmem:[%s666 + $0x20] sm:$0xff]
        %v3734 = vld [vmem:[%s666 + $0x28] sm:$0xff]
        %v3735 = vld [vmem:[%s666 + $0x30] sm:$0xff]
        %v3736 = vld [vmem:[%s666 + $0x38] sm:$0xff]
        %v3737 = vld [vmem:[%s666 + $0x40] sm:$0xff]
        %v3738 = vld [vmem:[%s666 + $0x48] sm:$0xff]
        %v3739 = vld [vmem:[%s666 + $0x50] sm:$0xff]
        %v3740 = vld [vmem:[%s666 + $0x58] sm:$0xff]
        %v3741 = vld [vmem:[%s666 + $0x60] sm:$0xff]
        %v3742 = vld [vmem:[%s666 + $0x68] sm:$0xff]
        %v3743 = vld [vmem:[%s666 + $0x70] sm:$0xff]
        %v3744 = vld [vmem:[%s666 + $0x78] sm:$0xff]
        %v3745 = vld [vmem:[%s666 + $0x80] sm:$0xff]
        %v3746 = vld [vmem:[%s666 + $0x88] sm:$0xff]
        %v3747 = vld [vmem:[%s666 + $0x90] sm:$0xff]
        %v3748 = vld [vmem:[%s666 + $0x98] sm:$0xff]
        %v3749 = vld [vmem:[%s666 + $0xa0] sm:$0xff]
        %v3750 = vld [vmem:[%s666 + $0xa8] sm:$0xff]
        %v3751 = vld [vmem:[%s666 + $0xb0] sm:$0xff]
        %v3752 = vld [vmem:[%s666 + $0xb8] sm:$0xff]
        %v3753 = vld [vmem:[%s666 + $0xc0] sm:$0xff]
        %v3754 = vld [vmem:[%s666 + $0xc8] sm:$0xff]
        %v3755 = vld [vmem:[%s666 + $0xd0] sm:$0xff]
        %v3756 = vld [vmem:[%s666 + $0xd8] sm:$0xff]
        %v3757 = vld [vmem:[%s666 + $0xe0] sm:$0xff]
        %v3758 = vld [vmem:[%s666 + $0xe8] sm:$0xff]
        %v3759 = vld [vmem:[%s666 + $0xf0] sm:$0xff]
        %v3760 = vld [vmem:[%s666 + $0xf8] sm:$0xff]
        %v3761 = vld [vmem:[%s670] sm:$0xf]
        %v3762 = vld [vmem:[%s675] sm:$0xf]
        %v3763 = vld [vmem:[%s675 + $0x4] sm:$0xf]
        %v3764 = vld [vmem:[%s675 + $0x8] sm:$0xf]
        %v3765 = vld [vmem:[%s675 + $0xc] sm:$0xf]
        %v3766 = vld [vmem:[%s675 + $0x10] sm:$0xf]
        %v3767 = vld [vmem:[%s675 + $0x14] sm:$0xf]
        %v3768 = vld [vmem:[%s675 + $0x18] sm:$0xf]
        %v3769 = vld [vmem:[%s675 + $0x1c] sm:$0xf]
        %v3770 = vld [vmem:[%s675 + $0x20] sm:$0xf]
        %v3771 = vld [vmem:[%s675 + $0x24] sm:$0xf]
        %v3772 = vld [vmem:[%s675 + $0x28] sm:$0xf]
        %v3773 = vld [vmem:[%s675 + $0x2c] sm:$0xf]
        %v3774 = vld [vmem:[%s675 + $0x30] sm:$0xf]
        %v3775 = vld [vmem:[%s675 + $0x34] sm:$0xf]
        %v3776 = vld [vmem:[%s675 + $0x38] sm:$0xf]
        %v3777 = vld [vmem:[%s675 + $0x3c] sm:$0xf]
        %v3778 = vld [vmem:[%s675 + $0x40] sm:$0xf]
        %v3779 = vld [vmem:[%s675 + $0x44] sm:$0xf]
        %v3780 = vld [vmem:[%s675 + $0x48] sm:$0xf]
        %v3781 = vld [vmem:[%s675 + $0x4c] sm:$0xf]
        %v3782 = vld [vmem:[%s675 + $0x50] sm:$0xf]
        %v3783 = vld [vmem:[%s675 + $0x54] sm:$0xf]
        %v3784 = vld [vmem:[%s675 + $0x58] sm:$0xf]
        %v3785 = vld [vmem:[%s675 + $0x5c] sm:$0xf]
        %v3786 = vld [vmem:[%s675 + $0x60] sm:$0xf]
        %v3787 = vld [vmem:[%s675 + $0x64] sm:$0xf]
        %v3788 = vld [vmem:[%s675 + $0x68] sm:$0xf]
        %v3789 = vld [vmem:[%s675 + $0x6c] sm:$0xf]
        %v3790 = vld [vmem:[%s675 + $0x70] sm:$0xf]
        %v3791 = vld [vmem:[%s675 + $0x74] sm:$0xf]
        %v3792 = vld [vmem:[%s675 + $0x78] sm:$0xf]
        %v3793 = vld [vmem:[%s675 + $0x7c] sm:$0xf]
        %v3794 = vld [vmem:[%s675 + $0x80] sm:$0xf]
        %v3795 = vld [vmem:[%s675 + $0x84] sm:$0xf]
        %v3796 = vld [vmem:[%s675 + $0x88] sm:$0xf]
        %v3797 = vld [vmem:[%s675 + $0x8c] sm:$0xf]
        %v3798 = vld [vmem:[%s675 + $0x90] sm:$0xf]
        %v3799 = vld [vmem:[%s675 + $0x94] sm:$0xf]
        %v3800 = vld [vmem:[%s675 + $0x98] sm:$0xf]
        %v3801 = vld [vmem:[%s675 + $0x9c] sm:$0xf]
        %v3802 = vld [vmem:[%s675 + $0xa0] sm:$0xf]
        %v3803 = vld [vmem:[%s675 + $0xa4] sm:$0xf]
        %v3804 = vld [vmem:[%s675 + $0xa8] sm:$0xf]
        %v3805 = vld [vmem:[%s675 + $0xac] sm:$0xf]
        %v3806 = vld [vmem:[%s675 + $0xb0] sm:$0xf]
        %v3807 = vld [vmem:[%s675 + $0xb4] sm:$0xf]
        %v3808 = vld [vmem:[%s675 + $0xb8] sm:$0xf]
        %v3809 = vld [vmem:[%s675 + $0xbc] sm:$0xf]
        %v3810 = vld [vmem:[%s675 + $0xc0] sm:$0xf]
        %v3811 = vld [vmem:[%s675 + $0xc4] sm:$0xf]
        %v3812 = vld [vmem:[%s675 + $0xc8] sm:$0xf]
        %v3813 = vld [vmem:[%s675 + $0xcc] sm:$0xf]
        %v3814 = vld [vmem:[%s675 + $0xd0] sm:$0xf]
        %v3815 = vld [vmem:[%s675 + $0xd4] sm:$0xf]
        %v3816 = vld [vmem:[%s675 + $0xd8] sm:$0xf]
        %v3817 = vld [vmem:[%s675 + $0xdc] sm:$0xf]
        %v3818 = vld [vmem:[%s675 + $0xe0] sm:$0xf]
        %v3819 = vld [vmem:[%s675 + $0xe4] sm:$0xf]
        %v3820 = vld [vmem:[%s675 + $0xe8] sm:$0xf]
        %v3821 = vld [vmem:[%s675 + $0xec] sm:$0xf]
        %v3822 = vld [vmem:[%s675 + $0xf0] sm:$0xf]
        %v3823 = vld [vmem:[%s675 + $0xf4] sm:$0xf]
        %v3824 = vld [vmem:[%s675 + $0xf8] sm:$0xf]
        %v3825 = vld [vmem:[%s675 + $0xfc] sm:$0xf]
        %v3826 = vld [vmem:[%s678] sm:$0x1]
        %v3837 = vcombine.low %v3719, %v3720
        %v3838 = vcombine.low %v3721, %v3722
        %v3839 = vcombine.low %v3723, %v3724
        %v3840 = vcombine.low %v3725, %v3726
        %v3842 = vunpack.c.l.s4 1966171168
        %v3843 = vunpack.c.0.s8 %v3842
        %v3844 = vlaneseq
        %v3845 = vshrl.u32 %v3844, 7
        %v3846 = vsub.s32 %v3843, %v3845
        %v3847 = vrot.slane %v3837, %v3846
        %v3849 = vunpack.c.l.s4 1966171168
        %v3850 = vunpack.c.0.s8 %v3849
        %v3851 = vlaneseq
        %v3852 = vshrl.u32 %v3851, 7
        %v3853 = vsub.s32 %v3850, %v3852
        %v3854 = vrot.slane %v3838, %v3853
        %v3856 = vunpack.c.l.s4 1966171168
        %v3857 = vunpack.c.0.s8 %v3856
        %v3858 = vlaneseq
        %v3859 = vshrl.u32 %v3858, 7
        %v3860 = vsub.s32 %v3857, %v3859
        %v3861 = vrot.slane %v3839, %v3860
        %v3863 = vunpack.c.l.s4 1966171168
        %v3864 = vunpack.c.0.s8 %v3863
        %v3865 = vlaneseq
        %v3866 = vshrl.u32 %v3865, 7
        %v3867 = vsub.s32 %v3864, %v3866
        %v3868 = vrot.slane %v3840, %v3867
        %v3869 = vcombine.low %v3847, %v3854
        %v3870 = vcombine.low %v3861, %v3868
        %v3872 = vunpack.c.l.s4 1966171168
        %v3873 = vunpack.c.0.s8 %v3872
        %v3874 = vlaneseq
        %v3875 = vshrl.u32 %v3874, 7
        %v3876 = vsub.s32 %v3873, %v3875
        %v3877 = vrot.slane %v3869, %v3876
        %v3879 = vunpack.c.l.s4 1966171168
        %v3880 = vunpack.c.0.s8 %v3879
        %v3881 = vlaneseq
        %v3882 = vshrl.u32 %v3881, 7
        %v3883 = vsub.s32 %v3880, %v3882
        %v3884 = vrot.slane %v3870, %v3883
        %v3885 = vcombine.low %v3877, %v3884
        %v3886 = vcombine.low %v3727, %v3728
        %v3888 = vunpack.c.l.s4 1966171168
        %v3889 = vunpack.c.0.s8 %v3888
        %v3890 = vlaneseq
        %v3891 = vshrl.u32 %v3890, 7
        %v3892 = vsub.s32 %v3889, %v3891
        %v3893 = vrot.slane %v3886, %v3892
        %v3895 = vunpack.c.l.s4 1966171168
        %v3896 = vunpack.c.0.s8 %v3895
        %v3897 = vlaneseq
        %v3898 = vshrl.u32 %v3897, 7
        %v3899 = vsub.s32 %v3896, %v3898
        %v3900 = vrot.slane %v3893, %v3899
        %v3903 = vpack.c.bf16 %v3900, %v3885
        %v3905 = vlaneseq
        %v3906 = vshrl.u32 %v3905, 7
        %v3907 = vsub.s32 0, %v3906
        %v3908 = vrot.slane %v3761, %v3907
        %v3909 = vlaneseq
        %v3910 = vshrl.u32 %v3909, 7
        %v3911 = vsub.s32 1, %v3910
        %v3912 = vrot.slane %v3761, %v3911
        %v3913 = vlaneseq
        %v3914 = vshrl.u32 %v3913, 7
        %v3915 = vsub.s32 2, %v3914
        %v3916 = vrot.slane %v3761, %v3915
        %v3917 = vlaneseq
        %v3918 = vshrl.u32 %v3917, 7
        %v3919 = vsub.s32 3, %v3918
        %v3920 = vrot.slane %v3761, %v3919
        %v3957 = vunpack.c.l.b16 %v3729
        %v3958 = vunpack.c.h.b16 %v3729
        %v3959 = vunpack.c.l.b16 %v3730
        %v3960 = vunpack.c.h.b16 %v3730
        %v3961 = vunpack.c.l.b16 %v3731
        %v3962 = vunpack.c.h.b16 %v3731
        %v3963 = vunpack.c.l.b16 %v3732
        %v3964 = vunpack.c.h.b16 %v3732
        %v3965 = vunpack.c.l.b16 %v3733
        %v3966 = vunpack.c.h.b16 %v3733
        %v3967 = vunpack.c.l.b16 %v3734
        %v3968 = vunpack.c.h.b16 %v3734
        %v3969 = vunpack.c.l.b16 %v3735
        %v3970 = vunpack.c.h.b16 %v3735
        %v3971 = vunpack.c.l.b16 %v3736
        %v3972 = vunpack.c.h.b16 %v3736
        %v3973 = vunpack.c.l.b16 %v3737
        %v3974 = vunpack.c.h.b16 %v3737
        %v3975 = vunpack.c.l.b16 %v3738
        %v3976 = vunpack.c.h.b16 %v3738
        %v3977 = vunpack.c.l.b16 %v3739
        %v3978 = vunpack.c.h.b16 %v3739
        %v3979 = vunpack.c.l.b16 %v3740
        %v3980 = vunpack.c.h.b16 %v3740
        %v3981 = vunpack.c.l.b16 %v3741
        %v3982 = vunpack.c.h.b16 %v3741
        %v3983 = vunpack.c.l.b16 %v3742
        %v3984 = vunpack.c.h.b16 %v3742
        %v3985 = vunpack.c.l.b16 %v3743
        %v3986 = vunpack.c.h.b16 %v3743
        %v3987 = vunpack.c.l.b16 %v3744
        %v3988 = vunpack.c.h.b16 %v3744
        %v3989 = vunpack.c.l.b16 %v3745
        %v3990 = vunpack.c.h.b16 %v3745
        %v3991 = vunpack.c.l.b16 %v3746
        %v3992 = vunpack.c.h.b16 %v3746
        %v3993 = vunpack.c.l.b16 %v3747
        %v3994 = vunpack.c.h.b16 %v3747
        %v3995 = vunpack.c.l.b16 %v3748
        %v3996 = vunpack.c.h.b16 %v3748
        %v3997 = vunpack.c.l.b16 %v3749
        %v3998 = vunpack.c.h.b16 %v3749
        %v3999 = vunpack.c.l.b16 %v3750
        %v4000 = vunpack.c.h.b16 %v3750
        %v4001 = vunpack.c.l.b16 %v3751
        %v4002 = vunpack.c.h.b16 %v3751
        %v4003 = vunpack.c.l.b16 %v3752
        %v4004 = vunpack.c.h.b16 %v3752
        %v4005 = vunpack.c.l.b16 %v3753
        %v4006 = vunpack.c.h.b16 %v3753
        %v4007 = vunpack.c.l.b16 %v3754
        %v4008 = vunpack.c.h.b16 %v3754
        %v4009 = vunpack.c.l.b16 %v3755
        %v4010 = vunpack.c.h.b16 %v3755
        %v4011 = vunpack.c.l.b16 %v3756
        %v4012 = vunpack.c.h.b16 %v3756
        %v4013 = vunpack.c.l.b16 %v3757
        %v4014 = vunpack.c.h.b16 %v3757
        %v4015 = vunpack.c.l.b16 %v3758
        %v4016 = vunpack.c.h.b16 %v3758
        %v4017 = vunpack.c.l.b16 %v3759
        %v4018 = vunpack.c.h.b16 %v3759
        %v4019 = vunpack.c.l.b16 %v3760
        %v4020 = vunpack.c.h.b16 %v3760
        %v4021 = vpack.c.b16 %v3961, %v3957
        %v4022 = vpack.c.b16 %v3962, %v3958
        %v4023 = vpack.c.b16 %v3963, %v3959
        %v4024 = vpack.c.b16 %v3964, %v3960
        %v4025 = vpack.c.b16 %v3969, %v3965
        %v4026 = vpack.c.b16 %v3970, %v3966
        %v4027 = vpack.c.b16 %v3971, %v3967
        %v4028 = vpack.c.b16 %v3972, %v3968
        %v4029 = vpack.c.b16 %v3977, %v3973
        %v4030 = vpack.c.b16 %v3978, %v3974
        %v4031 = vpack.c.b16 %v3979, %v3975
        %v4032 = vpack.c.b16 %v3980, %v3976
        %v4033 = vpack.c.b16 %v3985, %v3981
        %v4034 = vpack.c.b16 %v3986, %v3982
        %v4035 = vpack.c.b16 %v3987, %v3983
        %v4036 = vpack.c.b16 %v3988, %v3984
        %v4037 = vpack.c.b16 %v3993, %v3989
        %v4038 = vpack.c.b16 %v3994, %v3990
        %v4039 = vpack.c.b16 %v3995, %v3991
        %v4040 = vpack.c.b16 %v3996, %v3992
        %v4041 = vpack.c.b16 %v4001, %v3997
        %v4042 = vpack.c.b16 %v4002, %v3998
        %v4043 = vpack.c.b16 %v4003, %v3999
        %v4044 = vpack.c.b16 %v4004, %v4000
        %v4045 = vpack.c.b16 %v4009, %v4005
        %v4046 = vpack.c.b16 %v4010, %v4006
        %v4047 = vpack.c.b16 %v4011, %v4007
        %v4048 = vpack.c.b16 %v4012, %v4008
        %v4049 = vpack.c.b16 %v4017, %v4013
        %v4050 = vpack.c.b16 %v4018, %v4014
        %v4051 = vpack.c.b16 %v4019, %v4015
        %v4052 = vpack.c.b16 %v4020, %v4016
        %4085 = vmatprep.subr.bf16.mxu0 %v4022
        %4086 = vmatpush1.bf16.msra.mxu0 %v4021
        %4087 = vmatprep.subr.bf16.mxu0 %v4026
        %4088 = vmatpush1.bf16.msra.mxu0 %v4025
        %4089 = vmatprep.subr.bf16.mxu0 %v4030
        %4090 = vmatpush1.bf16.msra.mxu0 %v4029
        %4091 = vmatprep.subr.bf16.mxu0 %v4034
        %4092 = vmatpush1.bf16.msra.mxu0 %v4033
        %4093 = vmatprep.subr.bf16.mxu0 %v4038
        %4094 = vmatpush1.bf16.msra.mxu0 %v4037
        %4095 = vmatprep.subr.bf16.mxu0 %v4042
        %4096 = vmatpush1.bf16.msra.mxu0 %v4041
        %4097 = vmatprep.subr.bf16.mxu0 %v4046
        %4098 = vmatpush1.bf16.msra.mxu0 %v4045
        %4099 = vmatprep.subr.bf16.mxu0 %v4050
        %4100 = vmatpush1.bf16.msra.mxu0 %v4049
        %4101 = vmatprep.subr.bf16.mxu0 0
        %4102 = vmatpush1.bf16.msra.mxu0 0
        %4103 = vmatprep.subr.bf16.mxu0 0
        %4104 = vmatpush1.bf16.msra.mxu0 0
        %4105 = vmatprep.subr.bf16.mxu0 0
        %4106 = vmatpush1.bf16.msra.mxu0 0
        %4107 = vmatprep.subr.bf16.mxu0 0
        %4108 = vmatpush1.bf16.msra.mxu0 0
        %4109 = vmatprep.subr.bf16.mxu0 0
        %4110 = vmatpush1.bf16.msra.mxu0 0
        %4111 = vmatprep.subr.bf16.mxu0 0
        %4112 = vmatpush1.bf16.msra.mxu0 0
        %4113 = vmatprep.subr.bf16.mxu0 0
        %4114 = vmatpush1.bf16.msra.mxu0 0
        %4115 = vmatprep.subr.bf16.mxu0 0
        %4116 = vmatpush1.bf16.msra.mxu0 0
        %4117 = vmatprep.mubr.bf16.mxu0 0
        %4118 = vmatmul.mubr.bf16.gmra.mrb[0].mxu0 %v3903
        %v4119 = vpop.f32.mrb[0].mxu0
        %v4120 = vadd.f32 %v3908, %v4119
        %v4121 = vpop.f32.mrb[0].mxu0
        %v4122 = vadd.f32 %v3912, %v4121
        %v4123 = vpop.f32.mrb[0].mxu0
        %v4124 = vadd.f32 %v3908, %v4123
        %v4125 = vpop.f32.mrb[0].mxu0
        %v4126 = vadd.f32 %v3912, %v4125
        %4127 = vdwg.mxu0
        %4128 = vmatprep.subr.bf16.mxu0 %v4024
        %4129 = vmatpush1.bf16.msra.mxu0 %v4023
        %4130 = vmatprep.subr.bf16.mxu0 %v4028
        %4131 = vmatpush1.bf16.msra.mxu0 %v4027
        %4132 = vmatprep.subr.bf16.mxu0 %v4032
        %4133 = vmatpush1.bf16.msra.mxu0 %v4031
        %4134 = vmatprep.subr.bf16.mxu0 %v4036
        %4135 = vmatpush1.bf16.msra.mxu0 %v4035
        %4136 = vmatprep.subr.bf16.mxu0 %v4040
        %4137 = vmatpush1.bf16.msra.mxu0 %v4039
        %4138 = vmatprep.subr.bf16.mxu0 %v4044
        %4139 = vmatpush1.bf16.msra.mxu0 %v4043
        %4140 = vmatprep.subr.bf16.mxu0 %v4048
        %4141 = vmatpush1.bf16.msra.mxu0 %v4047
        %4142 = vmatprep.subr.bf16.mxu0 %v4052
        %4143 = vmatpush1.bf16.msra.mxu0 %v4051
        %4144 = vmatprep.subr.bf16.mxu0 0
        %4145 = vmatpush1.bf16.msra.mxu0 0
        %4146 = vmatprep.subr.bf16.mxu0 0
        %4147 = vmatpush1.bf16.msra.mxu0 0
        %4148 = vmatprep.subr.bf16.mxu0 0
        %4149 = vmatpush1.bf16.msra.mxu0 0
        %4150 = vmatprep.subr.bf16.mxu0 0
        %4151 = vmatpush1.bf16.msra.mxu0 0
        %4152 = vmatprep.subr.bf16.mxu0 0
        %4153 = vmatpush1.bf16.msra.mxu0 0
        %4154 = vmatprep.subr.bf16.mxu0 0
        %4155 = vmatpush1.bf16.msra.mxu0 0
        %4156 = vmatprep.subr.bf16.mxu0 0
        %4157 = vmatpush1.bf16.msra.mxu0 0
        %4158 = vmatprep.subr.bf16.mxu0 0
        %4159 = vmatpush1.bf16.msra.mxu0 0
        %4160 = vmatprep.mubr.bf16.mxu0 0
        %4161 = vmatmul.mubr.bf16.gmra.mrb[0].mxu0 %v3903
        %v4162 = vpop.f32.mrb[0].mxu0
        %v4163 = vadd.f32 %v3916, %v4162
        %v4164 = vpop.f32.mrb[0].mxu0
        %v4165 = vadd.f32 %v3920, %v4164
        %v4166 = vpop.f32.mrb[0].mxu0
        %v4167 = vadd.f32 %v3916, %v4166
        %v4168 = vpop.f32.mrb[0].mxu0
        %v4169 = vadd.f32 %v3920, %v4168
        %4170 = vdwg.mxu0
        %v4171 = vmax.f32 %v4120, 0.0
        %v4172 = vmax.f32 %v4122, 0.0
        %v4173 = vmax.f32 %v4163, 0.0
        %v4174 = vmax.f32 %v4165, 0.0
        %v4175 = vmax.f32 %v4124, 0.0
        %v4176 = vmax.f32 %v4126, 0.0
        %v4177 = vmax.f32 %v4167, 0.0
        %v4178 = vmax.f32 %v4169, 0.0
        %v4179 = vpack.c.bf16 %v4175, %v4171
        %v4180 = vpack.c.bf16 %v4176, %v4172
        %v4181 = vpack.c.bf16 %v4177, %v4173
        %v4182 = vpack.c.bf16 %v4178, %v4174
        %v4184 = vlaneseq
        %v4185 = vshrl.u32 %v4184, 7
        %v4186 = vsub.s32 0, %v4185
        %v4187 = vrot.slane %v3826, %v4186
        %v4253 = vunpack.c.l.b16 %v3762
        %v4254 = vunpack.c.l.b16 %v3763
        %v4255 = vunpack.c.l.b16 %v3764
        %v4256 = vunpack.c.l.b16 %v3765
        %v4257 = vunpack.c.l.b16 %v3766
        %v4258 = vunpack.c.l.b16 %v3767
        %v4259 = vunpack.c.l.b16 %v3768
        %v4260 = vunpack.c.l.b16 %v3769
        %v4261 = vunpack.c.l.b16 %v3770
        %v4262 = vunpack.c.l.b16 %v3771
        %v4263 = vunpack.c.l.b16 %v3772
        %v4264 = vunpack.c.l.b16 %v3773
        %v4265 = vunpack.c.l.b16 %v3774
        %v4266 = vunpack.c.l.b16 %v3775
        %v4267 = vunpack.c.l.b16 %v3776
        %v4268 = vunpack.c.l.b16 %v3777
        %v4269 = vunpack.c.l.b16 %v3778
        %v4270 = vunpack.c.l.b16 %v3779
        %v4271 = vunpack.c.l.b16 %v3780
        %v4272 = vunpack.c.l.b16 %v3781
        %v4273 = vunpack.c.l.b16 %v3782
        %v4274 = vunpack.c.l.b16 %v3783
        %v4275 = vunpack.c.l.b16 %v3784
        %v4276 = vunpack.c.l.b16 %v3785
        %v4277 = vunpack.c.l.b16 %v3786
        %v4278 = vunpack.c.l.b16 %v3787
        %v4279 = vunpack.c.l.b16 %v3788
        %v4280 = vunpack.c.l.b16 %v3789
        %v4281 = vunpack.c.l.b16 %v3790
        %v4282 = vunpack.c.l.b16 %v3791
        %v4283 = vunpack.c.l.b16 %v3792
        %v4284 = vunpack.c.l.b16 %v3793
        %v4285 = vunpack.c.l.b16 %v3794
        %v4286 = vunpack.c.l.b16 %v3795
        %v4287 = vunpack.c.l.b16 %v3796
        %v4288 = vunpack.c.l.b16 %v3797
        %v4289 = vunpack.c.l.b16 %v3798
        %v4290 = vunpack.c.l.b16 %v3799
        %v4291 = vunpack.c.l.b16 %v3800
        %v4292 = vunpack.c.l.b16 %v3801
        %v4293 = vunpack.c.l.b16 %v3802
        %v4294 = vunpack.c.l.b16 %v3803
        %v4295 = vunpack.c.l.b16 %v3804
        %v4296 = vunpack.c.l.b16 %v3805
        %v4297 = vunpack.c.l.b16 %v3806
        %v4298 = vunpack.c.l.b16 %v3807
        %v4299 = vunpack.c.l.b16 %v3808
        %v4300 = vunpack.c.l.b16 %v3809
        %v4301 = vunpack.c.l.b16 %v3810
        %v4302 = vunpack.c.l.b16 %v3811
        %v4303 = vunpack.c.l.b16 %v3812
        %v4304 = vunpack.c.l.b16 %v3813
        %v4305 = vunpack.c.l.b16 %v3814
        %v4306 = vunpack.c.l.b16 %v3815
        %v4307 = vunpack.c.l.b16 %v3816
        %v4308 = vunpack.c.l.b16 %v3817
        %v4309 = vunpack.c.l.b16 %v3818
        %v4310 = vunpack.c.l.b16 %v3819
        %v4311 = vunpack.c.l.b16 %v3820
        %v4312 = vunpack.c.l.b16 %v3821
        %v4313 = vunpack.c.l.b16 %v3822
        %v4314 = vunpack.c.l.b16 %v3823
        %v4315 = vunpack.c.l.b16 %v3824
        %v4316 = vunpack.c.l.b16 %v3825
        %v4317 = vpack.c.b16 %v4254, %v4253
        %v4318 = vpack.c.b16 %v4256, %v4255
        %v4319 = vpack.c.b16 %v4258, %v4257
        %v4320 = vpack.c.b16 %v4260, %v4259
        %v4321 = vpack.c.b16 %v4262, %v4261
        %v4322 = vpack.c.b16 %v4264, %v4263
        %v4323 = vpack.c.b16 %v4266, %v4265
        %v4324 = vpack.c.b16 %v4268, %v4267
        %v4325 = vpack.c.b16 %v4270, %v4269
        %v4326 = vpack.c.b16 %v4272, %v4271
        %v4327 = vpack.c.b16 %v4274, %v4273
        %v4328 = vpack.c.b16 %v4276, %v4275
        %v4329 = vpack.c.b16 %v4278, %v4277
        %v4330 = vpack.c.b16 %v4280, %v4279
        %v4331 = vpack.c.b16 %v4282, %v4281
        %v4332 = vpack.c.b16 %v4284, %v4283
        %v4333 = vpack.c.b16 %v4286, %v4285
        %v4334 = vpack.c.b16 %v4288, %v4287
        %v4335 = vpack.c.b16 %v4290, %v4289
        %v4336 = vpack.c.b16 %v4292, %v4291
        %v4337 = vpack.c.b16 %v4294, %v4293
        %v4338 = vpack.c.b16 %v4296, %v4295
        %v4339 = vpack.c.b16 %v4298, %v4297
        %v4340 = vpack.c.b16 %v4300, %v4299
        %v4341 = vpack.c.b16 %v4302, %v4301
        %v4342 = vpack.c.b16 %v4304, %v4303
        %v4343 = vpack.c.b16 %v4306, %v4305
        %v4344 = vpack.c.b16 %v4308, %v4307
        %v4345 = vpack.c.b16 %v4310, %v4309
        %v4346 = vpack.c.b16 %v4312, %v4311
        %v4347 = vpack.c.b16 %v4314, %v4313
        %v4348 = vpack.c.b16 %v4316, %v4315
        %4381 = vmatprep.subr.bf16.mxu0 0
        %4382 = vmatpush1.bf16.msra.mxu0 %v4317
        %4383 = vmatprep.subr.bf16.mxu0 0
        %4384 = vmatpush1.bf16.msra.mxu0 %v4318
        %4385 = vmatprep.subr.bf16.mxu0 0
        %4386 = vmatpush1.bf16.msra.mxu0 %v4319
        %4387 = vmatprep.subr.bf16.mxu0 0
        %4388 = vmatpush1.bf16.msra.mxu0 %v4320
        %4389 = vmatprep.subr.bf16.mxu0 0
        %4390 = vmatpush1.bf16.msra.mxu0 %v4321
        %4391 = vmatprep.subr.bf16.mxu0 0
        %4392 = vmatpush1.bf16.msra.mxu0 %v4322
        %4393 = vmatprep.subr.bf16.mxu0 0
        %4394 = vmatpush1.bf16.msra.mxu0 %v4323
        %4395 = vmatprep.subr.bf16.mxu0 0
        %4396 = vmatpush1.bf16.msra.mxu0 %v4324
        %4397 = vmatprep.subr.bf16.mxu0 0
        %4398 = vmatpush1.bf16.msra.mxu0 %v4325
        %4399 = vmatprep.subr.bf16.mxu0 0
        %4400 = vmatpush1.bf16.msra.mxu0 %v4326
        %4401 = vmatprep.subr.bf16.mxu0 0
        %4402 = vmatpush1.bf16.msra.mxu0 %v4327
        %4403 = vmatprep.subr.bf16.mxu0 0
        %4404 = vmatpush1.bf16.msra.mxu0 %v4328
        %4405 = vmatprep.subr.bf16.mxu0 0
        %4406 = vmatpush1.bf16.msra.mxu0 %v4329
        %4407 = vmatprep.subr.bf16.mxu0 0
        %4408 = vmatpush1.bf16.msra.mxu0 %v4330
        %4409 = vmatprep.subr.bf16.mxu0 0
        %4410 = vmatpush1.bf16.msra.mxu0 %v4331
        %4411 = vmatprep.subr.bf16.mxu0 0
        %4412 = vmatpush1.bf16.msra.mxu0 %v4332
        %4413 = vmatprep.mubr.bf16.mxu0 %v4180
        %4414 = vmatmul.mubr.bf16.gmra.mrb[0].mxu0 %v4179
        %v4415 = vpop.f32.mrb[0].mxu0
        %v4416 = vadd.f32 %v4187, %v4415
        %v4417 = vpop.f32.mrb[0].mxu0
        %v4418 = vpop.f32.mrb[0].mxu0
        %v4419 = vadd.f32 %v4187, %v4418
        %v4420 = vpop.f32.mrb[0].mxu0
        %4421 = vdwg.mxu0
        %4422 = vmatprep.subr.bf16.mxu0 0
        %4423 = vmatpush1.bf16.msra.mxu0 %v4333
        %4424 = vmatprep.subr.bf16.mxu0 0
        %4425 = vmatpush1.bf16.msra.mxu0 %v4334
        %4426 = vmatprep.subr.bf16.mxu0 0
        %4427 = vmatpush1.bf16.msra.mxu0 %v4335
        %4428 = vmatprep.subr.bf16.mxu0 0
        %4429 = vmatpush1.bf16.msra.mxu0 %v4336
        %4430 = vmatprep.subr.bf16.mxu0 0
        %4431 = vmatpush1.bf16.msra.mxu0 %v4337
        %4432 = vmatprep.subr.bf16.mxu0 0
        %4433 = vmatpush1.bf16.msra.mxu0 %v4338
        %4434 = vmatprep.subr.bf16.mxu0 0
        %4435 = vmatpush1.bf16.msra.mxu0 %v4339
        %4436 = vmatprep.subr.bf16.mxu0 0
        %4437 = vmatpush1.bf16.msra.mxu0 %v4340
        %4438 = vmatprep.subr.bf16.mxu0 0
        %4439 = vmatpush1.bf16.msra.mxu0 %v4341
        %4440 = vmatprep.subr.bf16.mxu0 0
        %4441 = vmatpush1.bf16.msra.mxu0 %v4342
        %4442 = vmatprep.subr.bf16.mxu0 0
        %4443 = vmatpush1.bf16.msra.mxu0 %v4343
        %4444 = vmatprep.subr.bf16.mxu0 0
        %4445 = vmatpush1.bf16.msra.mxu0 %v4344
        %4446 = vmatprep.subr.bf16.mxu0 0
        %4447 = vmatpush1.bf16.msra.mxu0 %v4345
        %4448 = vmatprep.subr.bf16.mxu0 0
        %4449 = vmatpush1.bf16.msra.mxu0 %v4346
        %4450 = vmatprep.subr.bf16.mxu0 0
        %4451 = vmatpush1.bf16.msra.mxu0 %v4347
        %4452 = vmatprep.subr.bf16.mxu0 0
        %4453 = vmatpush1.bf16.msra.mxu0 %v4348
        %4454 = vmatprep.mubr.bf16.mxu0 %v4182
        %4455 = vmatmul.mubr.bf16.gmra.mrb[0].mxu0 %v4181
        %v4456 = vpop.f32.mrb[0].mxu0
        %v4457 = vadd.f32 %v4416, %v4456
        %v4458 = vpop.f32.mrb[0].mxu0
        %v4459 = vpop.f32.mrb[0].mxu0
        %v4460 = vadd.f32 %v4419, %v4459
        %v4461 = vpop.f32.mrb[0].mxu0
        %4462 = vdwg.mxu0
        %v4465 = vcombine.high %v4457, %v4457
        %v4467 = vunpack.c.l.s4 1966171168
        %v4468 = vunpack.c.0.s8 %v4467
        %v4469 = vlaneseq
        %v4470 = vshrl.u32 %v4469, 7
        %v4471 = vsub.s32 %v4468, %v4470
        %v4472 = vrot.slane %v4457, %v4471
        %v4474 = vunpack.c.l.s4 1966171168
        %v4475 = vunpack.c.0.s8 %v4474
        %v4476 = vlaneseq
        %v4477 = vshrl.u32 %v4476, 7
        %v4478 = vsub.s32 %v4475, %v4477
        %v4479 = vrot.slane %v4465, %v4478
        %v4480 = vcombine.high %v4472, %v4472
        %v4481 = vcombine.high %v4479, %v4479
        %v4483 = vunpack.c.l.s4 1966171168
        %v4484 = vunpack.c.0.s8 %v4483
        %v4485 = vlaneseq
        %v4486 = vshrl.u32 %v4485, 7
        %v4487 = vsub.s32 %v4484, %v4486
        %v4488 = vrot.slane %v4472, %v4487
        %v4490 = vunpack.c.l.s4 1966171168
        %v4491 = vunpack.c.0.s8 %v4490
        %v4492 = vlaneseq
        %v4493 = vshrl.u32 %v4492, 7
        %v4494 = vsub.s32 %v4491, %v4493
        %v4495 = vrot.slane %v4479, %v4494
        %v4497 = vunpack.c.l.s4 1966171168
        %v4498 = vunpack.c.0.s8 %v4497
        %v4499 = vlaneseq
        %v4500 = vshrl.u32 %v4499, 7
        %v4501 = vsub.s32 %v4498, %v4500
        %v4502 = vrot.slane %v4480, %v4501
        %v4504 = vunpack.c.l.s4 1966171168
        %v4505 = vunpack.c.0.s8 %v4504
        %v4506 = vlaneseq
        %v4507 = vshrl.u32 %v4506, 7
        %v4508 = vsub.s32 %v4505, %v4507
        %v4509 = vrot.slane %v4481, %v4508
        %v4510 = vcombine.high %v4488, %v4488
        %v4511 = vcombine.high %v4495, %v4495
        %v4512 = vcombine.high %v4502, %v4502
        %v4513 = vcombine.high %v4509, %v4509
        %v4515 = vunpack.c.l.s4 1966171168
        %v4516 = vunpack.c.0.s8 %v4515
        %v4517 = vlaneseq
        %v4518 = vshrl.u32 %v4517, 7
        %v4519 = vsub.s32 %v4516, %v4518
        %v4520 = vrot.slane %v4460, %v4519
        %v4521 = vcombine.high %v4520, %v4520
        %v4523 = vunpack.c.l.s4 1966171168
        %v4524 = vunpack.c.0.s8 %v4523
        %v4525 = vlaneseq
        %v4526 = vshrl.u32 %v4525, 7
        %v4527 = vsub.s32 %v4524, %v4526
        %v4528 = vrot.slane %v4520, %v4527
        %v4530 = vunpack.c.l.s4 1966171168
        %v4531 = vunpack.c.0.s8 %v4530
        %v4532 = vlaneseq
        %v4533 = vshrl.u32 %v4532, 7
        %v4534 = vsub.s32 %v4531, %v4533
        %v4535 = vrot.slane %v4521, %v4534
        %v4546 = vadd.f32 %v3719, %v4488
        %v4547 = vadd.f32 %v3720, %v4502
        %v4548 = vadd.f32 %v3721, %v4510
        %v4549 = vadd.f32 %v3722, %v4512
        %v4550 = vadd.f32 %v3723, %v4495
        %v4551 = vadd.f32 %v3724, %v4509
        %v4552 = vadd.f32 %v3725, %v4511
        %v4553 = vadd.f32 %v3726, %v4513
        %v4554 = vadd.f32 %v3727, %v4528
        %v4555 = vadd.f32 %v3728, %v4535
        %v4556 = vld [vmem:[%s681] sm:$0x1]
        %v4557 = vld [vmem:[%s684] sm:$0x1]
        %v4568 = vcombine.low %v4546, %v4547
        %v4569 = vcombine.low %v4548, %v4549
        %v4570 = vcombine.low %v4550, %v4551
        %v4571 = vcombine.low %v4552, %v4553
        %v4573 = vunpack.c.l.s4 1966171168
        %v4574 = vunpack.c.0.s8 %v4573
        %v4575 = vlaneseq
        %v4576 = vshrl.u32 %v4575, 7
        %v4577 = vsub.s32 %v4574, %v4576
        %v4578 = vrot.slane %v4568, %v4577
        %v4580 = vunpack.c.l.s4 1966171168
        %v4581 = vunpack.c.0.s8 %v4580
        %v4582 = vlaneseq
        %v4583 = vshrl.u32 %v4582, 7
        %v4584 = vsub.s32 %v4581, %v4583
        %v4585 = vrot.slane %v4569, %v4584
        %v4587 = vunpack.c.l.s4 1966171168
        %v4588 = vunpack.c.0.s8 %v4587
        %v4589 = vlaneseq
        %v4590 = vshrl.u32 %v4589, 7
        %v4591 = vsub.s32 %v4588, %v4590
        %v4592 = vrot.slane %v4570, %v4591
        %v4594 = vunpack.c.l.s4 1966171168
        %v4595 = vunpack.c.0.s8 %v4594
        %v4596 = vlaneseq
        %v4597 = vshrl.u32 %v4596, 7
        %v4598 = vsub.s32 %v4595, %v4597
        %v4599 = vrot.slane %v4571, %v4598
        %v4600 = vcombine.low %v4578, %v4585
        %v4601 = vcombine.low %v4592, %v4599
        %v4603 = vunpack.c.l.s4 1966171168
        %v4604 = vunpack.c.0.s8 %v4603
        %v4605 = vlaneseq
        %v4606 = vshrl.u32 %v4605, 7
        %v4607 = vsub.s32 %v4604, %v4606
        %v4608 = vrot.slane %v4600, %v4607
        %v4610 = vunpack.c.l.s4 1966171168
        %v4611 = vunpack.c.0.s8 %v4610
        %v4612 = vlaneseq
        %v4613 = vshrl.u32 %v4612, 7
        %v4614 = vsub.s32 %v4611, %v4613
        %v4615 = vrot.slane %v4601, %v4614
        %v4616 = vcombine.low %v4608, %v4615
        %v4617 = vcombine.low %v4554, %v4555
        %v4619 = vunpack.c.l.s4 1966171168
        %v4620 = vunpack.c.0.s8 %v4619
        %v4621 = vlaneseq
        %v4622 = vshrl.u32 %v4621, 7
        %v4623 = vsub.s32 %v4620, %v4622
        %v4624 = vrot.slane %v4617, %v4623
        %v4626 = vunpack.c.l.s4 1966171168
        %v4627 = vunpack.c.0.s8 %v4626
        %v4628 = vlaneseq
        %v4629 = vshrl.u32 %v4628, 7
        %v4630 = vsub.s32 %v4627, %v4629
        %v4631 = vrot.slane %v4624, %v4630
        %4634 = vadd.xlane.f32.xlu0 %v4616
        %v4635 = vpop.xlane.xlu0 %4634
        %v4636 = vsel %vm1703, %v4631, 0.0
        %4637 = vadd.xlane.f32.xlu0 %v4636
        %v4638 = vpop.xlane.xlu0 %4637
        %v4639 = vmul.f32 %v4635, %v3361
        %v4640 = vmul.f32 %v4638, %v3361
        %v4643 = vlaneseq
        %v4644 = vshrl.u32 %v4643, 7
        %v4645 = vsub.s32 0, %v4644
        %v4646 = vrot.slane %v4639, %v4645
        %v4647 = vlaneseq
        %v4648 = vshrl.u32 %v4647, 7
        %v4649 = vsub.s32 1, %v4648
        %v4650 = vrot.slane %v4639, %v4649
        %v4651 = vlaneseq
        %v4652 = vshrl.u32 %v4651, 7
        %v4653 = vsub.s32 2, %v4652
        %v4654 = vrot.slane %v4639, %v4653
        %v4655 = vlaneseq
        %v4656 = vshrl.u32 %v4655, 7
        %v4657 = vsub.s32 3, %v4656
        %v4658 = vrot.slane %v4639, %v4657
        %v4659 = vlaneseq
        %v4660 = vshrl.u32 %v4659, 7
        %v4661 = vsub.s32 4, %v4660
        %v4662 = vrot.slane %v4639, %v4661
        %v4663 = vlaneseq
        %v4664 = vshrl.u32 %v4663, 7
        %v4665 = vsub.s32 5, %v4664
        %v4666 = vrot.slane %v4639, %v4665
        %v4667 = vlaneseq
        %v4668 = vshrl.u32 %v4667, 7
        %v4669 = vsub.s32 6, %v4668
        %v4670 = vrot.slane %v4639, %v4669
        %v4671 = vlaneseq
        %v4672 = vshrl.u32 %v4671, 7
        %v4673 = vsub.s32 7, %v4672
        %v4674 = vrot.slane %v4639, %v4673
        %v4675 = vlaneseq
        %v4676 = vshrl.u32 %v4675, 7
        %v4677 = vsub.s32 0, %v4676
        %v4678 = vrot.slane %v4640, %v4677
        %v4679 = vlaneseq
        %v4680 = vshrl.u32 %v4679, 7
        %v4681 = vsub.s32 1, %v4680
        %v4682 = vrot.slane %v4640, %v4681
        %v4693 = vsub.f32 %v4546, %v4646
        %v4694 = vsub.f32 %v4547, %v4650
        %v4695 = vsub.f32 %v4548, %v4654
        %v4696 = vsub.f32 %v4549, %v4658
        %v4697 = vsub.f32 %v4550, %v4662
        %v4698 = vsub.f32 %v4551, %v4666
        %v4699 = vsub.f32 %v4552, %v4670
        %v4700 = vsub.f32 %v4553, %v4674
        %v4701 = vsub.f32 %v4554, %v4678
        %v4702 = vsub.f32 %v4555, %v4682
        %v4703 = vmul.f32 %v4693, %v4693
        %v4704 = vmul.f32 %v4694, %v4694
        %v4705 = vmul.f32 %v4695, %v4695
        %v4706 = vmul.f32 %v4696, %v4696
        %v4707 = vmul.f32 %v4697, %v4697
        %v4708 = vmul.f32 %v4698, %v4698
        %v4709 = vmul.f32 %v4699, %v4699
        %v4710 = vmul.f32 %v4700, %v4700
        %v4711 = vmul.f32 %v4701, %v4701
        %v4712 = vmul.f32 %v4702, %v4702
        %v4723 = vcombine.low %v4703, %v4704
        %v4724 = vcombine.low %v4705, %v4706
        %v4725 = vcombine.low %v4707, %v4708
        %v4726 = vcombine.low %v4709, %v4710
        %v4728 = vunpack.c.l.s4 1966171168
        %v4729 = vunpack.c.0.s8 %v4728
        %v4730 = vlaneseq
        %v4731 = vshrl.u32 %v4730, 7
        %v4732 = vsub.s32 %v4729, %v4731
        %v4733 = vrot.slane %v4723, %v4732
        %v4735 = vunpack.c.l.s4 1966171168
        %v4736 = vunpack.c.0.s8 %v4735
        %v4737 = vlaneseq
        %v4738 = vshrl.u32 %v4737, 7
        %v4739 = vsub.s32 %v4736, %v4738
        %v4740 = vrot.slane %v4724, %v4739
        %v4742 = vunpack.c.l.s4 1966171168
        %v4743 = vunpack.c.0.s8 %v4742
        %v4744 = vlaneseq
        %v4745 = vshrl.u32 %v4744, 7
        %v4746 = vsub.s32 %v4743, %v4745
        %v4747 = vrot.slane %v4725, %v4746
        %v4749 = vunpack.c.l.s4 1966171168
        %v4750 = vunpack.c.0.s8 %v4749
        %v4751 = vlaneseq
        %v4752 = vshrl.u32 %v4751, 7
        %v4753 = vsub.s32 %v4750, %v4752
        %v4754 = vrot.slane %v4726, %v4753
        %v4755 = vcombine.low %v4733, %v4740
        %v4756 = vcombine.low %v4747, %v4754
        %v4758 = vunpack.c.l.s4 1966171168
        %v4759 = vunpack.c.0.s8 %v4758
        %v4760 = vlaneseq
        %v4761 = vshrl.u32 %v4760, 7
        %v4762 = vsub.s32 %v4759, %v4761
        %v4763 = vrot.slane %v4755, %v4762
        %v4765 = vunpack.c.l.s4 1966171168
        %v4766 = vunpack.c.0.s8 %v4765
        %v4767 = vlaneseq
        %v4768 = vshrl.u32 %v4767, 7
        %v4769 = vsub.s32 %v4766, %v4768
        %v4770 = vrot.slane %v4756, %v4769
        %v4771 = vcombine.low %v4763, %v4770
        %v4772 = vcombine.low %v4711, %v4712
        %v4774 = vunpack.c.l.s4 1966171168
        %v4775 = vunpack.c.0.s8 %v4774
        %v4776 = vlaneseq
        %v4777 = vshrl.u32 %v4776, 7
        %v4778 = vsub.s32 %v4775, %v4777
        %v4779 = vrot.slane %v4772, %v4778
        %v4781 = vunpack.c.l.s4 1966171168
        %v4782 = vunpack.c.0.s8 %v4781
        %v4783 = vlaneseq
        %v4784 = vshrl.u32 %v4783, 7
        %v4785 = vsub.s32 %v4782, %v4784
        %v4786 = vrot.slane %v4779, %v4785
        %4789 = vadd.xlane.f32.xlu0 %v4771
        %v4790 = vpop.xlane.xlu0 %4789
        %v4791 = vsel %vm1703, %v4786, 0.0
        %4792 = vadd.xlane.f32.xlu0 %v4791
        %v4793 = vpop.xlane.xlu0 %4792
        %v4794 = vmul.f32 %v4790, %v3361
        %v4795 = vmul.f32 %v4793, %v3361
        %v4796 = vadd.f32 %v4794, 1e-05
        %v4797 = vadd.f32 %v4795, 1e-05
        %v4798 = vrsqrt.pop %v4796
        %v4799 = vrsqrt.pop %v4797
        %v4802 = vlaneseq
        %v4803 = vshrl.u32 %v4802, 7
        %v4804 = vsub.s32 0, %v4803
        %v4805 = vrot.slane %v4798, %v4804
        %v4806 = vlaneseq
        %v4807 = vshrl.u32 %v4806, 7
        %v4808 = vsub.s32 1, %v4807
        %v4809 = vrot.slane %v4798, %v4808
        %v4810 = vlaneseq
        %v4811 = vshrl.u32 %v4810, 7
        %v4812 = vsub.s32 2, %v4811
        %v4813 = vrot.slane %v4798, %v4812
        %v4814 = vlaneseq
        %v4815 = vshrl.u32 %v4814, 7
        %v4816 = vsub.s32 3, %v4815
        %v4817 = vrot.slane %v4798, %v4816
        %v4818 = vlaneseq
        %v4819 = vshrl.u32 %v4818, 7
        %v4820 = vsub.s32 4, %v4819
        %v4821 = vrot.slane %v4798, %v4820
        %v4822 = vlaneseq
        %v4823 = vshrl.u32 %v4822, 7
        %v4824 = vsub.s32 5, %v4823
        %v4825 = vrot.slane %v4798, %v4824
        %v4826 = vlaneseq
        %v4827 = vshrl.u32 %v4826, 7
        %v4828 = vsub.s32 6, %v4827
        %v4829 = vrot.slane %v4798, %v4828
        %v4830 = vlaneseq
        %v4831 = vshrl.u32 %v4830, 7
        %v4832 = vsub.s32 7, %v4831
        %v4833 = vrot.slane %v4798, %v4832
        %v4834 = vlaneseq
        %v4835 = vshrl.u32 %v4834, 7
        %v4836 = vsub.s32 0, %v4835
        %v4837 = vrot.slane %v4799, %v4836
        %v4838 = vlaneseq
        %v4839 = vshrl.u32 %v4838, 7
        %v4840 = vsub.s32 1, %v4839
        %v4841 = vrot.slane %v4799, %v4840
        %v4852 = vmul.f32 %v4693, %v4805
        %v4853 = vmul.f32 %v4694, %v4809
        %v4854 = vmul.f32 %v4695, %v4813
        %v4855 = vmul.f32 %v4696, %v4817
        %v4856 = vmul.f32 %v4697, %v4821
        %v4857 = vmul.f32 %v4698, %v4825
        %v4858 = vmul.f32 %v4699, %v4829
        %v4859 = vmul.f32 %v4700, %v4833
        %v4860 = vmul.f32 %v4701, %v4837
        %v4861 = vmul.f32 %v4702, %v4841
        %v4863 = vlaneseq
        %v4864 = vshrl.u32 %v4863, 7
        %v4865 = vsub.s32 0, %v4864
        %v4866 = vrot.slane %v4556, %v4865
        %v4867 = vcombine.high %v4866, %v4866
        %v4869 = vunpack.c.l.s4 1966171168
        %v4870 = vunpack.c.0.s8 %v4869
        %v4871 = vlaneseq
        %v4872 = vshrl.u32 %v4871, 7
        %v4873 = vsub.s32 %v4870, %v4872
        %v4874 = vrot.slane %v4866, %v4873
        %v4876 = vunpack.c.l.s4 1966171168
        %v4877 = vunpack.c.0.s8 %v4876
        %v4878 = vlaneseq
        %v4879 = vshrl.u32 %v4878, 7
        %v4880 = vsub.s32 %v4877, %v4879
        %v4881 = vrot.slane %v4867, %v4880
        %v4882 = vcombine.high %v4874, %v4874
        %v4883 = vcombine.high %v4881, %v4881
        %v4885 = vunpack.c.l.s4 1966171168
        %v4886 = vunpack.c.0.s8 %v4885
        %v4887 = vlaneseq
        %v4888 = vshrl.u32 %v4887, 7
        %v4889 = vsub.s32 %v4886, %v4888
        %v4890 = vrot.slane %v4874, %v4889
        %v4892 = vunpack.c.l.s4 1966171168
        %v4893 = vunpack.c.0.s8 %v4892
        %v4894 = vlaneseq
        %v4895 = vshrl.u32 %v4894, 7
        %v4896 = vsub.s32 %v4893, %v4895
        %v4897 = vrot.slane %v4881, %v4896
        %v4899 = vunpack.c.l.s4 1966171168
        %v4900 = vunpack.c.0.s8 %v4899
        %v4901 = vlaneseq
        %v4902 = vshrl.u32 %v4901, 7
        %v4903 = vsub.s32 %v4900, %v4902
        %v4904 = vrot.slane %v4882, %v4903
        %v4906 = vunpack.c.l.s4 1966171168
        %v4907 = vunpack.c.0.s8 %v4906
        %v4908 = vlaneseq
        %v4909 = vshrl.u32 %v4908, 7
        %v4910 = vsub.s32 %v4907, %v4909
        %v4911 = vrot.slane %v4883, %v4910
        %v4912 = vcombine.high %v4890, %v4890
        %v4913 = vcombine.high %v4897, %v4897
        %v4914 = vcombine.high %v4904, %v4904
        %v4915 = vcombine.high %v4911, %v4911
        %v4924 = vmul.f32 %v4852, %v4890
        %v4925 = vmul.f32 %v4853, %v4904
        %v4926 = vmul.f32 %v4854, %v4912
        %v4927 = vmul.f32 %v4855, %v4914
        %v4928 = vmul.f32 %v4856, %v4897
        %v4929 = vmul.f32 %v4857, %v4911
        %v4930 = vmul.f32 %v4858, %v4913
        %v4931 = vmul.f32 %v4859, %v4915
        %v4932 = vmul.f32 %v4860, %v4890
        %v4933 = vmul.f32 %v4861, %v4904
        %v4935 = vlaneseq
        %v4936 = vshrl.u32 %v4935, 7
        %v4937 = vsub.s32 0, %v4936
        %v4938 = vrot.slane %v4557, %v4937
        %v4939 = vcombine.high %v4938, %v4938
        %v4941 = vunpack.c.l.s4 1966171168
        %v4942 = vunpack.c.0.s8 %v4941
        %v4943 = vlaneseq
        %v4944 = vshrl.u32 %v4943, 7
        %v4945 = vsub.s32 %v4942, %v4944
        %v4946 = vrot.slane %v4938, %v4945
        %v4948 = vunpack.c.l.s4 1966171168
        %v4949 = vunpack.c.0.s8 %v4948
        %v4950 = vlaneseq
        %v4951 = vshrl.u32 %v4950, 7
        %v4952 = vsub.s32 %v4949, %v4951
        %v4953 = vrot.slane %v4939, %v4952
        %v4954 = vcombine.high %v4946, %v4946
        %v4955 = vcombine.high %v4953, %v4953
        %v4957 = vunpack.c.l.s4 1966171168
        %v4958 = vunpack.c.0.s8 %v4957
        %v4959 = vlaneseq
        %v4960 = vshrl.u32 %v4959, 7
        %v4961 = vsub.s32 %v4958, %v4960
        %v4962 = vrot.slane %v4946, %v4961
        %v4964 = vunpack.c.l.s4 1966171168
        %v4965 = vunpack.c.0.s8 %v4964
        %v4966 = vlaneseq
        %v4967 = vshrl.u32 %v4966, 7
        %v4968 = vsub.s32 %v4965, %v4967
        %v4969 = vrot.slane %v4953, %v4968
        %v4971 = vunpack.c.l.s4 1966171168
        %v4972 = vunpack.c.0.s8 %v4971
        %v4973 = vlaneseq
        %v4974 = vshrl.u32 %v4973, 7
        %v4975 = vsub.s32 %v4972, %v4974
        %v4976 = vrot.slane %v4954, %v4975
        %v4978 = vunpack.c.l.s4 1966171168
        %v4979 = vunpack.c.0.s8 %v4978
        %v4980 = vlaneseq
        %v4981 = vshrl.u32 %v4980, 7
        %v4982 = vsub.s32 %v4979, %v4981
        %v4983 = vrot.slane %v4955, %v4982
        %v4984 = vcombine.high %v4962, %v4962
        %v4985 = vcombine.high %v4969, %v4969
        %v4986 = vcombine.high %v4976, %v4976
        %v4987 = vcombine.high %v4983, %v4983
        %v4996 = vadd.f32 %v4924, %v4962
        %v4997 = vadd.f32 %v4925, %v4976
        %v4998 = vadd.f32 %v4926, %v4984
        %v4999 = vadd.f32 %v4927, %v4986
        %v5000 = vadd.f32 %v4928, %v4969
        %v5001 = vadd.f32 %v4929, %v4983
        %v5002 = vadd.f32 %v4930, %v4985
        %v5003 = vadd.f32 %v4931, %v4987
        %v5004 = vadd.f32 %v4932, %v4962
        %v5005 = vadd.f32 %v4933, %v4976
        %v5016 = vcombine.low %v4996, %v4997
        %v5017 = vcombine.low %v4998, %v4999
        %v5019 = vunpack.c.l.s4 1966171168
        %v5020 = vunpack.c.0.s8 %v5019
        %v5021 = vlaneseq
        %v5022 = vshrl.u32 %v5021, 7
        %v5023 = vsub.s32 %v5020, %v5022
        %v5024 = vrot.slane %v5016, %v5023
        %v5026 = vunpack.c.l.s4 1966171168
        %v5027 = vunpack.c.0.s8 %v5026
        %v5028 = vlaneseq
        %v5029 = vshrl.u32 %v5028, 7
        %v5030 = vsub.s32 %v5027, %v5029
        %v5031 = vrot.slane %v5017, %v5030
        %v5033 = vunpack.c.l.s4 1966171168
        %v5034 = vunpack.c.0.s8 %v5033
        %v5035 = vlaneseq
        %v5036 = vshrl.u32 %v5035, 7
        %v5037 = vsub.s32 %v5034, %v5036
        %v5038 = vrot.slane %v5000, %v5037
        %v5039 = vcombine.low %v5024, %v5031
        %v5041 = vunpack.c.l.s4 1966171168
        %v5042 = vunpack.c.0.s8 %v5041
        %v5043 = vlaneseq
        %v5044 = vshrl.u32 %v5043, 7
        %v5045 = vsub.s32 %v5042, %v5044
        %v5046 = vrot.slane %v5039, %v5045
        %v5048 = vunpack.c.l.s4 1966171168
        %v5049 = vunpack.c.0.s8 %v5048
        %v5050 = vlaneseq
        %v5051 = vshrl.u32 %v5050, 7
        %v5052 = vsub.s32 %v5049, %v5051
        %v5053 = vrot.slane %v5038, %v5052
        %v5054 = vcombine.low %v5046, %v5053
        %v5055 = vcombine.low %v5001, %v5002
        %v5056 = vcombine.low %v5003, %v5004
        %v5058 = vunpack.c.l.s4 1966171168
        %v5059 = vunpack.c.0.s8 %v5058
        %v5060 = vlaneseq
        %v5061 = vshrl.u32 %v5060, 7
        %v5062 = vsub.s32 %v5059, %v5061
        %v5063 = vrot.slane %v5055, %v5062
        %v5065 = vunpack.c.l.s4 1966171168
        %v5066 = vunpack.c.0.s8 %v5065
        %v5067 = vlaneseq
        %v5068 = vshrl.u32 %v5067, 7
        %v5069 = vsub.s32 %v5066, %v5068
        %v5070 = vrot.slane %v5056, %v5069
        %v5072 = vunpack.c.l.s4 1966171168
        %v5073 = vunpack.c.0.s8 %v5072
        %v5074 = vlaneseq
        %v5075 = vshrl.u32 %v5074, 7
        %v5076 = vsub.s32 %v5073, %v5075
        %v5077 = vrot.slane %v5005, %v5076
        %v5078 = vcombine.low %v5063, %v5070
        %v5080 = vunpack.c.l.s4 1966171168
        %v5081 = vunpack.c.0.s8 %v5080
        %v5082 = vlaneseq
        %v5083 = vshrl.u32 %v5082, 7
        %v5084 = vsub.s32 %v5081, %v5083
        %v5085 = vrot.slane %v5078, %v5084
        %v5087 = vunpack.c.l.s4 1966171168
        %v5088 = vunpack.c.0.s8 %v5087
        %v5089 = vlaneseq
        %v5090 = vshrl.u32 %v5089, 7
        %v5091 = vsub.s32 %v5088, %v5090
        %v5092 = vrot.slane %v5077, %v5091
        %v5093 = vcombine.low %v5085, %v5092
        %5096 = vst [vmem:[#allocation2] sm:$0x1f] %v5054
        %5097 = vst [vmem:[#allocation2 + $0x8] sm:$0x1f] %v5093
        %p5098 = scmp.eq.s32.totalorder %s30, 1
        // Predicated region
        $region85: #{vitar_forward.5} parent=79 // pred_check
          %p5099 = pneg %p5098
        $region86: #{vitar_forward.5} parent=79 // pred_check_branch
          %5101 = sbr.rel (%p5099) target = $region88
        $region87: #{vitar_forward.5} parent=79 // pred_region
          %v5102 = vpack.c.bf16 %v4996, %v4996
          %v5103 = vpack.c.bf16 %v5001, %v5001
          %v5104 = vld [vmem:[%s13] sm:$0xf]
          %v5105 = vld [vmem:[%s13 + $0x4] sm:$0xf]
          %v5106 = vld [vmem:[%s13 + $0x8] sm:$0xf]
          %v5107 = vld [vmem:[%s13 + $0xc] sm:$0xf]
          %v5108 = vld [vmem:[%s13 + $0x10] sm:$0xf]
          %v5109 = vld [vmem:[%s13 + $0x14] sm:$0xf]
          %v5110 = vld [vmem:[%s13 + $0x18] sm:$0xf]
          %v5111 = vld [vmem:[%s13 + $0x1c] sm:$0xf]
          %v5112 = vld [vmem:[%s13 + $0x20] sm:$0xf]
          %v5113 = vld [vmem:[%s13 + $0x24] sm:$0xf]
          %v5114 = vld [vmem:[%s13 + $0x28] sm:$0xf]
          %v5115 = vld [vmem:[%s13 + $0x2c] sm:$0xf]
          %v5116 = vld [vmem:[%s13 + $0x30] sm:$0xf]
          %v5117 = vld [vmem:[%s13 + $0x34] sm:$0xf]
          %v5118 = vld [vmem:[%s13 + $0x38] sm:$0xf]
          %v5119 = vld [vmem:[%s13 + $0x3c] sm:$0xf]
          %v5120 = vld [vmem:[%s14] sm:$0x1]
          %v5122 = vlaneseq
          %v5123 = vshrl.u32 %v5122, 7
          %v5124 = vsub.s32 0, %v5123
          %v5125 = vrot.slane %v5120, %v5124
          %v5129 = vunpack.c.l.b16 %v5102
          %v5130 = vunpack.c.l.b16 %v5103
          %v5131 = vrot.slane %v5130, 7
          %vm5132 = vcmask 1041409
          %v5133 = vsel %vm5132, %v5131, %v5129
          %v5134 = vpack.c.b16 %v5133, %v5133
          %v5152 = vunpack.c.l.b16 %v5104
          %v5153 = vunpack.c.l.b16 %v5105
          %v5154 = vunpack.c.l.b16 %v5106
          %v5155 = vunpack.c.l.b16 %v5107
          %v5156 = vunpack.c.l.b16 %v5108
          %v5157 = vunpack.c.l.b16 %v5109
          %v5158 = vunpack.c.l.b16 %v5110
          %v5159 = vunpack.c.l.b16 %v5111
          %v5160 = vunpack.c.l.b16 %v5112
          %v5161 = vunpack.c.l.b16 %v5113
          %v5162 = vunpack.c.l.b16 %v5114
          %v5163 = vunpack.c.l.b16 %v5115
          %v5164 = vunpack.c.l.b16 %v5116
          %v5165 = vunpack.c.l.b16 %v5117
          %v5166 = vunpack.c.l.b16 %v5118
          %v5167 = vunpack.c.l.b16 %v5119
          %v5168 = vpack.c.b16 %v5153, %v5152
          %v5169 = vpack.c.b16 %v5155, %v5154
          %v5170 = vpack.c.b16 %v5157, %v5156
          %v5171 = vpack.c.b16 %v5159, %v5158
          %v5172 = vpack.c.b16 %v5161, %v5160
          %v5173 = vpack.c.b16 %v5163, %v5162
          %v5174 = vpack.c.b16 %v5165, %v5164
          %v5175 = vpack.c.b16 %v5167, %v5166
          %5184 = vmatprep.subr.bf16.mxu0 0
          %5185 = vmatpush1.bf16.msra.mxu0 %v5168
          %5186 = vmatprep.subr.bf16.mxu0 0
          %5187 = vmatpush1.bf16.msra.mxu0 %v5169
          %5188 = vmatprep.subr.bf16.mxu0 0
          %5189 = vmatpush1.bf16.msra.mxu0 %v5170
          %5190 = vmatprep.subr.bf16.mxu0 0
          %5191 = vmatpush1.bf16.msra.mxu0 %v5171
          %5192 = vmatprep.subr.bf16.mxu0 0
          %5193 = vmatpush1.bf16.msra.mxu0 %v5172
          %5194 = vmatprep.subr.bf16.mxu0 0
          %5195 = vmatpush1.bf16.msra.mxu0 %v5173
          %5196 = vmatprep.subr.bf16.mxu0 0
          %5197 = vmatpush1.bf16.msra.mxu0 %v5174
          %5198 = vmatprep.subr.bf16.mxu0 0
          %5199 = vmatpush1.bf16.msra.mxu0 %v5175
          %5200 = vmatprep.subr.bf16.mxu0 0
          %5201 = vmatpush1.bf16.msra.mxu0 0
          %5202 = vmatprep.subr.bf16.mxu0 0
          %5203 = vmatpush1.bf16.msra.mxu0 0
          %5204 = vmatprep.subr.bf16.mxu0 0
          %5205 = vmatpush1.bf16.msra.mxu0 0
          %5206 = vmatprep.subr.bf16.mxu0 0
          %5207 = vmatpush1.bf16.msra.mxu0 0
          %5208 = vmatprep.subr.bf16.mxu0 0
          %5209 = vmatpush1.bf16.msra.mxu0 0
          %5210 = vmatprep.subr.bf16.mxu0 0
          %5211 = vmatpush1.bf16.msra.mxu0 0
          %5212 = vmatprep.subr.bf16.mxu0 0
          %5213 = vmatpush1.bf16.msra.mxu0 0
          %5214 = vmatprep.subr.bf16.mxu0 0
          %5215 = vmatpush1.bf16.msra.mxu0 0
          %5216 = vmatprep.mubr.bf16.mxu0 0
          %5217 = vmatmul.mubr.bf16.gmra.mrb[0].mxu0 %v5134
          %v5218 = vpop.f32.mrb[0].mxu0
          %v5219 = vadd.f32 %v5125, %v5218
          %v5220 = vpop.f32.mrb[0].mxu0
          %v5221 = vpop.f32.mrb[0].mxu0
          %v5222 = vpop.f32.mrb[0].mxu0
          %5223 = vdwg.mxu0
          %5224 = vst [vmem:[#allocation4] sm:$0x3] %v5219
        $region88: #{vitar_forward.5} parent=79 // pred_fallthru
          _
        // Predicated region
        $region89: #{vitar_forward.5} parent=79 // pred_check
          %p5225 = pneg %p418
        $region90: #{vitar_forward.5} parent=79 // pred_check_branch
          %5227 = sbr.rel (%p5225) target = $region92
        $region91: #{vitar_forward.5} parent=79 // pred_region
          %s5229 = ssub.s32 256, 256
          %5230 = vsyncadd [#allocation3], %s5229
          %s5231 = sshll.u32 [#allocation2], 4
          %s5232 = int_to_ptr.vmem [resolvable:$true] %s5231
          %5237 = dma.vmem_to_hbm [thread:$0]  %s5232, 256, %s15, [#allocation3], 128, 128, 8
        $region92: #{vitar_forward.5} parent=79 // pred_fallthru
          _
        // Predicated region
        $region93: #{vitar_forward.5} parent=79 // pred_check
          %p5238 = pneg %p439
        $region94: #{vitar_forward.5} parent=79 // pred_check_branch
          %5240 = sbr.rel (%p5238) target = $region96
        $region95: #{vitar_forward.5} parent=79 // pred_region
          %s5242 = ssub.s32 32, 32
          %5243 = vsyncadd [#allocation5], %s5242
          %s5245 = sshll.u32 [#allocation4], 4
          %s5246 = int_to_ptr.vmem [resolvable:$true] %s5245
          %5248 = dma.vmem_to_hbm [thread:$0]  %s5246, 32, %s16, [#allocation5]
        $region96: #{vitar_forward.5} parent=79 // pred_fallthru
          _
        // Predicated region
        $region97: #{vitar_forward.5} parent=79 // pred_check
          %p5249 = pneg %p418
        $region98: #{vitar_forward.5} parent=79 // pred_check_branch
          %5251 = sbr.rel (%p5249) target = $region100
        $region99: #{vitar_forward.5} parent=79 // pred_region
          %5252 = dma.done [#allocation3], 256
        $region100: #{vitar_forward.5} parent=79 // pred_fallthru
          _
        // Predicated region
        $region101: #{vitar_forward.5} parent=79 // pred_check
          %p5253 = pneg %p439
        $region102: #{vitar_forward.5} parent=79 // pred_check_branch
          %5255 = sbr.rel (%p5253) target = $region104
        $region103: #{vitar_forward.5} parent=79 // pred_region
          %5256 = dma.done [#allocation5], 32
        $region104: #{vitar_forward.5} parent=79 // pred_fallthru
          _
      $region80: #{vitar_forward.5} parent=5 // pred_fallthru
        _
      %p5257 = scmp.le.s32.totalorder 2, %s25
      // Predicated region
      $region105: #{vitar_forward.5} parent=5 // pred_check
        %p5258 = pneg %p5257
      $region106: #{vitar_forward.5} parent=5 // pred_check_branch
        %5260 = sbr.rel (%p5258) target = $region108
      $region107: #{vitar_forward.5} parent=5 // pred_region
        %s5261 = ssub.s32 %s25, 2
      $region108: #{vitar_forward.5} parent=5 // pred_fallthru
        _
    $region6: #{vitar_forward.5} parent=1 // loop_footer
      %s29 = sadd.s32 1, %s25
    $region7: #{vitar_forward.5} parent=1 // loop_footer_branch
      %24 = sbr.rel target = $region3
    $region8: #{vitar_forward.5} parent=1 // loop_exit
      _
    %5262 = vsyncpa [#allocation3], 1
    %s5263 = scalar_lea.sflag [#allocation3], 1
    %5264 = vsyncpa %s5263, 1
    %5265 = vsyncpa [#allocation5], 1

</llo_original>
